<compile_context>
chip_gen: v6e
topology: v6e:2x2x1
jax: 0.10.0
libtpu: 0.0.40
codegen_flags: <defaults>
</compile_context>

<pallas_src>
import functools

import jax
import jax.numpy as jnp
import numpy as np
from jax.experimental import pallas as pl
from jax.experimental.pallas import tpu as pltpu

NEG_SLOPE = 0.2  # nn.LeakyReLU(negative_slope=0.2)


def _leaky_relu(x):
    # single VALU max instead of compare+select
    return jnp.maximum(x, NEG_SLOPE * x)


def _deform_kernel(
    src_ref, dst_ref,
    # RawDictNetV0 ('MLP' arch = create_conv_stack): Conv1d(k=1) == pointwise matmul
    wd1, bd1, wd2, bd2, wd3, bd3,
    # RawCoefficientNetV0 (PointNetCls): shared point-MLP -> global max-pool -> FC head
    wc1, bc1, wc2, bc2, wf1, bf1, wf2, bf2,
    out_ref,
    *, num_coeff, norm_column, use_tanh, matmul_dtype,
):
    K = num_coeff
    bt, _, n = src_ref.shape          # (batch tile, 3, points) -- channels-first
    md = matmul_dtype

    # Hoist weight loads / casts out of the per-element loop (weights are tiny).
    wd1v, wd2v, wd3v = wd1[...].astype(md), wd2[...].astype(md), wd3[...].astype(md)
    wc1v, wc2v = wc1[...].astype(md), wc2[...].astype(md)
    wf1v, wf2v = wf1[...].astype(md), wf2[...].astype(md)
    bd1v, bd2v, bd3v = bd1[...], bd2[...], bd3[...]
    bc1v, bc2v, bf1v, bf2v = bc1[...], bc2[...], bf1[...], bf2[...]

    def mm(w, x):
        # bf16 (or f32) operands, f32 accumulation on the MXU
        return jnp.dot(w, x.astype(md), preferred_element_type=jnp.float32)

    for b in range(bt):               # static unroll over the batch tile
        src_b = src_ref[b]            # (3, n)  lane-dense point cloud
        dst_b = dst_ref[b]            # (3, n)

        # ---------- RawCoefficientNetV0: shared PointNet MLP on [src | dst] ----------
        # TODO(synk): PointNetCls is not provided; implemented as shared point-MLP +
        # global max-pool + FC head (no batch-norm / T-Net), its standard shape.
        pc2 = jnp.concatenate([src_b, dst_b], axis=1)                       # (3, 2n)
        g = _leaky_relu(mm(wc1v, pc2) + bc1v)                               # (32, 2n)
        g = _leaky_relu(mm(wc2v, g) + bc2v)                                 # (64, 2n)
        pooled = jnp.concatenate(
            [jnp.max(g[:, :n], axis=1, keepdims=True),                      # src pool
             jnp.max(g[:, n:], axis=1, keepdims=True)], axis=1)             # (64, 2)
        f = _leaky_relu(mm(wf1v, pooled) + bf1v)                            # (32, 2)
        c = mm(wf2v, f) + bf2v                                              # (K, 2)
        if use_tanh:
            c = jnp.tanh(c)
        coeff = c[:, 1:2] - c[:, 0:1]                                       # (K, 1) dst - src

        # ---------------- RawDictNetV0.feat(src): per-point MLP -> (3K, n) ----------------
        # TODO(synk): create_conv_stack is not provided; activation applied to every
        # layer except the last (common convention for feature heads).
        h = _leaky_relu(mm(wd1v, src_b) + bd1v)                             # (32, n)
        h = _leaky_relu(mm(wd2v, h) + bd2v)                                 # (64, n)
        feat = mm(wd3v, h) + bd3v                                           # (3K, n)

        # dictionary[3p + d, m] == feat[d*K + m, p]
        if norm_column:
            # column norm over the 3N dictionary rows == lane-sum over points of the
            # three d-chunks; fold 1/||col|| into the coefficient vector.
            sq = jnp.sum(feat * feat, axis=1, keepdims=True)                # (3K, 1)
            norm_sq = sq[0:K] + sq[K:2 * K] + sq[2 * K:3 * K]               # (K, 1)
            coeff = coeff / jnp.sqrt(norm_sq)

        # offset row d: off[d, p] = sum_m feat[d*K + m, p] * coeff[m]
        off = jnp.concatenate(
            [jnp.sum(feat[d * K:(d + 1) * K, :] * coeff, axis=0, keepdims=True)
             for d in range(3)], axis=0)                                    # (3, n)

        out_ref[b] = src_b + off      # pc_deformed, lane-dense unmasked store


def raw_deformation_dict_net_v0(pc_source, pc_target, params, *, num_coeff,
                                norm_column=True, use_tanh=True,
                                block_b=4, matmul_dtype=jnp.bfloat16):
    """pc_source, pc_target: (B, 3, N) float32 (PyTorch layout). Returns (B, 3, N)."""
    B, C, N = pc_source.shape
    assert C == 3
    src = pc_source.astype(jnp.float32)
    dst = pc_target.astype(jnp.float32)

    # Largest batch tile <= block_b that divides B (exact grid; with B >= 2*bt the
    # grid has >= 2 steps so v7x can split it across its two TensorCores).
    bt = max(1, min(block_b, B))
    while B % bt:
        bt -= 1

    # Channels-first kernel weights: W^T (C_out, C_in); biases (C_out, 1).
    weight_names = ("wd1", "bd1", "wd2", "bd2", "wd3", "bd3",
                    "wc1", "bc1", "wc2", "bc2", "wf1", "bf1", "wf2", "bf2")
    weights = [jnp.asarray(params[k], jnp.float32).T for k in weight_names]

    pc_spec = pl.BlockSpec((bt, 3, N), lambda i: (i, 0, 0))
    w_specs = [pl.BlockSpec(w.shape, lambda i, _nd=w.ndim: (0,) * _nd) for w in weights]

    # Advisory cost estimate so XLA schedules surrounding ops sensibly.
    c_in, c_h1 = params["wd1"].shape
    _, c_h2 = params["wd2"].shape
    _, c_out = params["wd3"].shape                      # 3K
    p_in, p_h1 = params["wc1"].shape
    _, p_h2 = params["wc2"].shape
    f_in, f_h = params["wf1"].shape
    _, k_out = params["wf2"].shape
    flops = 2 * B * N * (c_in * c_h1 + c_h1 * c_h2 + c_h2 * c_out + c_out)   # dict + offset
    flops += 2 * B * (2 * N) * (p_in * p_h1 + p_h1 * p_h2)                   # shared PointNet MLP
    flops += 2 * B * 2 * (f_in * f_h + f_h * k_out)                          # FC heads
    bytes_accessed = 3 * B * 3 * N * 4 + sum(int(np.prod(w.shape)) * 4 for w in weights)
    cost = pl.CostEstimate(flops=int(flops), transcendentals=int(2 * B * k_out),
                           bytes_accessed=int(bytes_accessed))

    kernel = functools.partial(_deform_kernel, num_coeff=num_coeff,
                               norm_column=norm_column, use_tanh=use_tanh,
                               matmul_dtype=matmul_dtype)

    out = pl.pallas_call(
        kernel,
        out_shape=jax.ShapeDtypeStruct((B, 3, N), jnp.float32),
        grid_spec=pltpu.PrefetchScalarGridSpec(
            num_scalar_prefetch=0,
            grid=(B // bt,),
            in_specs=[pc_spec, pc_spec] + w_specs,
            out_specs=pl.BlockSpec((bt, 3, N), lambda i: (i, 0, 0)),
        ),
        compiler_params=pltpu.CompilerParams(dimension_semantics=("parallel",)),
        cost_estimate=cost,
    )(src, dst, *weights)

    return out  # already in PyTorch (B, 3, N) layout


# ----------------------------- deterministic params -----------------------------
def _linear_init(key, fan_in, fan_out):
    kw, kb = jax.random.split(key)
    bound = 1.0 / np.sqrt(fan_in)
    w = jax.random.uniform(kw, (fan_in, fan_out), jnp.float32, -bound, bound)
    b = jax.random.uniform(kb, (1, fan_out), jnp.float32, -bound, bound)
    return w, b


def init_params(key, num_coeff):
    dict_ch = [3, 32, 64, 3 * num_coeff]  # opt['dict']['point_conv_channel']
    pn_conv = [3, 32, 64]                 # PointNetCls shared MLP
    pn_fc = [64, 32, num_coeff]           # PointNetCls FC head -> K coefficients
    keys = jax.random.split(key, 7)
    p = {}
    p["wd1"], p["bd1"] = _linear_init(keys[0], dict_ch[0], dict_ch[1])
    p["wd2"], p["bd2"] = _linear_init(keys[1], dict_ch[1], dict_ch[2])
    p["wd3"], p["bd3"] = _linear_init(keys[2], dict_ch[2], dict_ch[3])
    p["wc1"], p["bc1"] = _linear_init(keys[3], pn_conv[0], pn_conv[1])
    p["wc2"], p["bc2"] = _linear_init(keys[4], pn_conv[1], pn_conv[2])
    p["wf1"], p["bf1"] = _linear_init(keys[5], pn_fc[0], pn_fc[1])
    p["wf2"], p["bf2"] = _linear_init(keys[6], pn_fc[1], pn_fc[2])
    return p


# ------------------------- pure-JAX reference (torch semantics) -------------------------
def _reference(pc_source, pc_target, p, num_coeff, norm_column, use_tanh):
    B, _, N = pc_source.shape
    leaky = lambda x: jnp.where(x > 0, x, NEG_SLOPE * x)
    src = jnp.transpose(pc_source, (0, 2, 1))
    dst = jnp.transpose(pc_target, (0, 2, 1))

    def feat_stack(x):
        h = leaky(x @ p["wd1"] + p["bd1"])
        h = leaky(h @ p["wd2"] + p["bd2"])
        return h @ p["wd3"] + p["bd3"]  # (B, N, 3K) == conv output .transpose(1, 2)

    def pointnet(x):
        g = leaky(x @ p["wc1"] + p["bc1"])
        g = leaky(g @ p["wc2"] + p["bc2"])
        g = jnp.max(g, axis=1)
        g = leaky(g @ p["wf1"] + p["bf1"])
        return g @ p["wf2"] + p["bf2"]  # (B, K)

    dictionary = feat_stack(src).reshape(B, 3 * N, num_coeff)
    if norm_column:
        dictionary = dictionary / jnp.sqrt(jnp.sum(dictionary ** 2, axis=1, keepdims=True))
    sc, dc = pointnet(src), pointnet(dst)
    if use_tanh:
        sc, dc = jnp.tanh(sc), jnp.tanh(dc)
    coeff = dc - sc
    off = jnp.einsum("brk,bk->br", dictionary, coeff)            # bmm(dict, coeff[..., None])
    off = off.reshape(B, N, 3).transpose(0, 2, 1)                # view(B, -1, 3).transpose(1, 2)
    return pc_source + off


if __name__ == "__main__":
    B, N, K = 8, 256, 16  # batch, points, number of dictionary columns / coefficients
    key = jax.random.PRNGKey(0)
    k_par, k_src, k_dst = jax.random.split(key, 3)

    params = init_params(k_par, num_coeff=K)
    pc_source = jax.random.normal(k_src, (B, 3, N), dtype=jnp.float32)
    pc_target = jax.random.normal(k_dst, (B, 3, N), dtype=jnp.float32)

    ref = _reference(pc_source, pc_target, params, K, True, True)

    # f32 matmul path: tight check against the pure-JAX reference.
    out_f32 = raw_deformation_dict_net_v0(pc_source, pc_target, params, num_coeff=K,
                                          norm_column=True, use_tanh=True,
                                          matmul_dtype=jnp.float32)
    out_f32 = jax.block_until_ready(out_f32)
    np.testing.assert_allclose(np.asarray(out_f32), np.asarray(ref), rtol=1e-2, atol=1e-2)

    # default fast path: bf16 MXU operands with f32 accumulation.
    out_bf16 = raw_deformation_dict_net_v0(pc_source, pc_target, params, num_coeff=K,
                                           norm_column=True, use_tanh=True,
                                           matmul_dtype=jnp.bfloat16)
    out_bf16 = jax.block_until_ready(out_bf16)
    np.testing.assert_allclose(np.asarray(out_bf16), np.asarray(ref), rtol=5e-2, atol=5e-2)

    assert out_f32.shape == (B, 3, N) and out_bf16.shape == (B, 3, N)
    print("KERNEL_OK")
</pallas_src>

<mosaic_0001>
module attributes {stable_mosaic.version = 11 : i64} {
  func.func @_deform_kernel(%arg0: i32, %arg1: memref<4x3x256xf32, #tpu.memory_space<vmem>>, %arg2: memref<4x3x256xf32, #tpu.memory_space<vmem>>, %arg3: memref<32x3xf32, #tpu.memory_space<vmem>>, %arg4: memref<32x1xf32, #tpu.memory_space<vmem>>, %arg5: memref<64x32xf32, #tpu.memory_space<vmem>>, %arg6: memref<64x1xf32, #tpu.memory_space<vmem>>, %arg7: memref<48x64xf32, #tpu.memory_space<vmem>>, %arg8: memref<48x1xf32, #tpu.memory_space<vmem>>, %arg9: memref<32x3xf32, #tpu.memory_space<vmem>>, %arg10: memref<32x1xf32, #tpu.memory_space<vmem>>, %arg11: memref<64x32xf32, #tpu.memory_space<vmem>>, %arg12: memref<64x1xf32, #tpu.memory_space<vmem>>, %arg13: memref<32x64xf32, #tpu.memory_space<vmem>>, %arg14: memref<32x1xf32, #tpu.memory_space<vmem>>, %arg15: memref<16x32xf32, #tpu.memory_space<vmem>>, %arg16: memref<16x1xf32, #tpu.memory_space<vmem>>, %arg17: memref<4x3x256xf32, #tpu.memory_space<vmem>>) attributes {dimension_semantics = [#tpu.dimension_semantics<parallel>], iteration_bounds = array<i64: 2>, scalar_prefetch = 0 : i64, scratch_operands = 0 : i64, tpu.core_type = #tpu.core_type<tc>, window_params = [{transform_indices = @transform_0, window_bounds = array<i64: 4, 3, 256>}, {transform_indices = @transform_1, window_bounds = array<i64: 4, 3, 256>}, {pipeline_mode = #tpu.pipeline_mode<synchronous>, transform_indices = @transform_2, window_bounds = array<i64: 32, 3>}, {pipeline_mode = #tpu.pipeline_mode<synchronous>, transform_indices = @transform_3, window_bounds = array<i64: 32, 1>}, {pipeline_mode = #tpu.pipeline_mode<synchronous>, transform_indices = @transform_4, window_bounds = array<i64: 64, 32>}, {pipeline_mode = #tpu.pipeline_mode<synchronous>, transform_indices = @transform_5, window_bounds = array<i64: 64, 1>}, {pipeline_mode = #tpu.pipeline_mode<synchronous>, transform_indices = @transform_6, window_bounds = array<i64: 48, 64>}, {pipeline_mode = #tpu.pipeline_mode<synchronous>, transform_indices = @transform_7, window_bounds = array<i64: 48, 1>}, {pipeline_mode = #tpu.pipeline_mode<synchronous>, transform_indices = @transform_8, window_bounds = array<i64: 32, 3>}, {pipeline_mode = #tpu.pipeline_mode<synchronous>, transform_indices = @transform_9, window_bounds = array<i64: 32, 1>}, {pipeline_mode = #tpu.pipeline_mode<synchronous>, transform_indices = @transform_10, window_bounds = array<i64: 64, 32>}, {pipeline_mode = #tpu.pipeline_mode<synchronous>, transform_indices = @transform_11, window_bounds = array<i64: 64, 1>}, {pipeline_mode = #tpu.pipeline_mode<synchronous>, transform_indices = @transform_12, window_bounds = array<i64: 32, 64>}, {pipeline_mode = #tpu.pipeline_mode<synchronous>, transform_indices = @transform_13, window_bounds = array<i64: 32, 1>}, {pipeline_mode = #tpu.pipeline_mode<synchronous>, transform_indices = @transform_14, window_bounds = array<i64: 16, 32>}, {pipeline_mode = #tpu.pipeline_mode<synchronous>, transform_indices = @transform_15, window_bounds = array<i64: 16, 1>}, {transform_indices = @transform_16, window_bounds = array<i64: 4, 3, 256>}]} {
    %c0 = arith.constant 0 : index
    %c0_0 = arith.constant 0 : index
    %0 = vector.load %arg3[%c0, %c0_0] : memref<32x3xf32, #tpu.memory_space<vmem>>, vector<32x3xf32>
    %c0_1 = arith.constant 0 : index
    %c0_2 = arith.constant 0 : index
    %1 = vector.load %arg5[%c0_1, %c0_2] : memref<64x32xf32, #tpu.memory_space<vmem>>, vector<64x32xf32>
    %c0_3 = arith.constant 0 : index
    %c0_4 = arith.constant 0 : index
    %2 = vector.load %arg7[%c0_3, %c0_4] : memref<48x64xf32, #tpu.memory_space<vmem>>, vector<48x64xf32>
    %c0_5 = arith.constant 0 : index
    %c0_6 = arith.constant 0 : index
    %3 = vector.load %arg9[%c0_5, %c0_6] : memref<32x3xf32, #tpu.memory_space<vmem>>, vector<32x3xf32>
    %c0_7 = arith.constant 0 : index
    %c0_8 = arith.constant 0 : index
    %4 = vector.load %arg11[%c0_7, %c0_8] : memref<64x32xf32, #tpu.memory_space<vmem>>, vector<64x32xf32>
    %c0_9 = arith.constant 0 : index
    %c0_10 = arith.constant 0 : index
    %5 = vector.load %arg13[%c0_9, %c0_10] : memref<32x64xf32, #tpu.memory_space<vmem>>, vector<32x64xf32>
    %c0_11 = arith.constant 0 : index
    %c0_12 = arith.constant 0 : index
    %6 = vector.load %arg15[%c0_11, %c0_12] : memref<16x32xf32, #tpu.memory_space<vmem>>, vector<16x32xf32>
    %c0_13 = arith.constant 0 : index
    %c0_14 = arith.constant 0 : index
    %7 = vector.load %arg4[%c0_13, %c0_14] : memref<32x1xf32, #tpu.memory_space<vmem>>, vector<32x1xf32>
    %c0_15 = arith.constant 0 : index
    %c0_16 = arith.constant 0 : index
    %8 = vector.load %arg6[%c0_15, %c0_16] : memref<64x1xf32, #tpu.memory_space<vmem>>, vector<64x1xf32>
    %c0_17 = arith.constant 0 : index
    %c0_18 = arith.constant 0 : index
    %9 = vector.load %arg8[%c0_17, %c0_18] : memref<48x1xf32, #tpu.memory_space<vmem>>, vector<48x1xf32>
    %c0_19 = arith.constant 0 : index
    %c0_20 = arith.constant 0 : index
    %10 = vector.load %arg10[%c0_19, %c0_20] : memref<32x1xf32, #tpu.memory_space<vmem>>, vector<32x1xf32>
    %c0_21 = arith.constant 0 : index
    %c0_22 = arith.constant 0 : index
    %11 = vector.load %arg12[%c0_21, %c0_22] : memref<64x1xf32, #tpu.memory_space<vmem>>, vector<64x1xf32>
    %c0_23 = arith.constant 0 : index
    %c0_24 = arith.constant 0 : index
    %12 = vector.load %arg14[%c0_23, %c0_24] : memref<32x1xf32, #tpu.memory_space<vmem>>, vector<32x1xf32>
    %c0_25 = arith.constant 0 : index
    %c0_26 = arith.constant 0 : index
    %13 = vector.load %arg16[%c0_25, %c0_26] : memref<16x1xf32, #tpu.memory_space<vmem>>, vector<16x1xf32>
    %c0_27 = arith.constant 0 : index
    %c0_28 = arith.constant 0 : index
    %c0_29 = arith.constant 0 : index
    %14 = vector.load %arg1[%c0_27, %c0_28, %c0_29] : memref<4x3x256xf32, #tpu.memory_space<vmem>>, vector<1x3x256xf32>
    %15 = vector.shape_cast %14 : vector<1x3x256xf32> to vector<3x256xf32>
    %c0_30 = arith.constant 0 : index
    %c0_31 = arith.constant 0 : index
    %c0_32 = arith.constant 0 : index
    %16 = vector.load %arg2[%c0_30, %c0_31, %c0_32] : memref<4x3x256xf32, #tpu.memory_space<vmem>>, vector<1x3x256xf32>
    %17 = vector.shape_cast %16 : vector<1x3x256xf32> to vector<3x256xf32>
    %18 = tpu.concatenate %15, %17 in 1 : vector<3x256xf32>, vector<3x256xf32> -> vector<3x512xf32>
    %cst = arith.constant dense<0.000000e+00> : vector<32x512xf32>
    %19 = tpu.matmul %3, %18, %cst {dimension_numbers = #tpu.dot_dimension_numbers<[1], [0], [0], [1], [0, 0, 1, 1], [], []>} : vector<32x3xf32>, vector<3x512xf32>, vector<32x512xf32> -> vector<32x512xf32>
    %20 = vector.broadcast %10 : vector<32x1xf32> to vector<32x512xf32>
    %21 = arith.addf %19, %20 : vector<32x512xf32>
    %cst_33 = arith.constant 2.000000e-01 : f32
    %22 = vector.broadcast %cst_33 : f32 to vector<32x512xf32>
    %23 = arith.mulf %22, %21 : vector<32x512xf32>
    %24 = arith.maximumf %21, %23 : vector<32x512xf32>
    %cst_34 = arith.constant dense<0.000000e+00> : vector<64x512xf32>
    %25 = tpu.matmul %4, %24, %cst_34 {dimension_numbers = #tpu.dot_dimension_numbers<[1], [0], [0], [1], [0, 0, 1, 1], [], []>} : vector<64x32xf32>, vector<32x512xf32>, vector<64x512xf32> -> vector<64x512xf32>
    %26 = vector.broadcast %11 : vector<64x1xf32> to vector<64x512xf32>
    %27 = arith.addf %25, %26 : vector<64x512xf32>
    %cst_35 = arith.constant 2.000000e-01 : f32
    %28 = vector.broadcast %cst_35 : f32 to vector<64x512xf32>
    %29 = arith.mulf %28, %27 : vector<64x512xf32>
    %30 = arith.maximumf %27, %29 : vector<64x512xf32>
    %31 = vector.extract_strided_slice %30 {offsets = [0, 0], sizes = [64, 256], strides = [1, 1]} : vector<64x512xf32> to vector<64x256xf32>
    %cst_36 = arith.constant dense<0xFF800000> : vector<64xf32>
    %32 = vector.multi_reduction <maximumf>, %31, %cst_36 [1] : vector<64x256xf32> to vector<64xf32>
    %33 = vector.shape_cast %32 : vector<64xf32> to vector<64x1xf32>
    %34 = vector.extract_strided_slice %30 {offsets = [0, 256], sizes = [64, 256], strides = [1, 1]} : vector<64x512xf32> to vector<64x256xf32>
    %cst_37 = arith.constant dense<0xFF800000> : vector<64xf32>
    %35 = vector.multi_reduction <maximumf>, %34, %cst_37 [1] : vector<64x256xf32> to vector<64xf32>
    %36 = vector.shape_cast %35 : vector<64xf32> to vector<64x1xf32>
    %37 = tpu.concatenate %33, %36 in 1 : vector<64x1xf32>, vector<64x1xf32> -> vector<64x2xf32>
    %cst_38 = arith.constant dense<0.000000e+00> : vector<32x2xf32>
    %38 = tpu.matmul %5, %37, %cst_38 {dimension_numbers = #tpu.dot_dimension_numbers<[1], [0], [0], [1], [0, 0, 1, 1], [], []>} : vector<32x64xf32>, vector<64x2xf32>, vector<32x2xf32> -> vector<32x2xf32>
    %39 = vector.broadcast %12 : vector<32x1xf32> to vector<32x2xf32>
    %40 = arith.addf %38, %39 : vector<32x2xf32>
    %cst_39 = arith.constant 2.000000e-01 : f32
    %41 = vector.broadcast %cst_39 : f32 to vector<32x2xf32>
    %42 = arith.mulf %41, %40 : vector<32x2xf32>
    %43 = arith.maximumf %40, %42 : vector<32x2xf32>
    %cst_40 = arith.constant dense<0.000000e+00> : vector<16x2xf32>
    %44 = tpu.matmul %6, %43, %cst_40 {dimension_numbers = #tpu.dot_dimension_numbers<[1], [0], [0], [1], [0, 0, 1, 1], [], []>} : vector<16x32xf32>, vector<32x2xf32>, vector<16x2xf32> -> vector<16x2xf32>
    %45 = vector.broadcast %13 : vector<16x1xf32> to vector<16x2xf32>
    %46 = arith.addf %44, %45 : vector<16x2xf32>
    %47 = math.tanh %46 : vector<16x2xf32>
    %48 = vector.extract_strided_slice %47 {offsets = [0, 1], sizes = [16, 1], strides = [1, 1]} : vector<16x2xf32> to vector<16x1xf32>
    %49 = vector.extract_strided_slice %47 {offsets = [0, 0], sizes = [16, 1], strides = [1, 1]} : vector<16x2xf32> to vector<16x1xf32>
    %50 = arith.subf %48, %49 : vector<16x1xf32>
    %cst_41 = arith.constant dense<0.000000e+00> : vector<32x256xf32>
    %51 = tpu.matmul %0, %15, %cst_41 {dimension_numbers = #tpu.dot_dimension_numbers<[1], [0], [0], [1], [0, 0, 1, 1], [], []>} : vector<32x3xf32>, vector<3x256xf32>, vector<32x256xf32> -> vector<32x256xf32>
    %52 = vector.broadcast %7 : vector<32x1xf32> to vector<32x256xf32>
    %53 = arith.addf %51, %52 : vector<32x256xf32>
    %cst_42 = arith.constant 2.000000e-01 : f32
    %54 = vector.broadcast %cst_42 : f32 to vector<32x256xf32>
    %55 = arith.mulf %54, %53 : vector<32x256xf32>
    %56 = arith.maximumf %53, %55 : vector<32x256xf32>
    %cst_43 = arith.constant dense<0.000000e+00> : vector<64x256xf32>
    %57 = tpu.matmul %1, %56, %cst_43 {dimension_numbers = #tpu.dot_dimension_numbers<[1], [0], [0], [1], [0, 0, 1, 1], [], []>} : vector<64x32xf32>, vector<32x256xf32>, vector<64x256xf32> -> vector<64x256xf32>
    %58 = vector.broadcast %8 : vector<64x1xf32> to vector<64x256xf32>
    %59 = arith.addf %57, %58 : vector<64x256xf32>
    %cst_44 = arith.constant 2.000000e-01 : f32
    %60 = vector.broadcast %cst_44 : f32 to vector<64x256xf32>
    %61 = arith.mulf %60, %59 : vector<64x256xf32>
    %62 = arith.maximumf %59, %61 : vector<64x256xf32>
    %cst_45 = arith.constant dense<0.000000e+00> : vector<48x256xf32>
    %63 = tpu.matmul %2, %62, %cst_45 {dimension_numbers = #tpu.dot_dimension_numbers<[1], [0], [0], [1], [0, 0, 1, 1], [], []>} : vector<48x64xf32>, vector<64x256xf32>, vector<48x256xf32> -> vector<48x256xf32>
    %64 = vector.broadcast %9 : vector<48x1xf32> to vector<48x256xf32>
    %65 = arith.addf %63, %64 : vector<48x256xf32>
    %66 = arith.mulf %65, %65 : vector<48x256xf32>
    %cst_46 = arith.constant dense<0.000000e+00> : vector<48xf32>
    %67 = vector.multi_reduction <add>, %66, %cst_46 [1] : vector<48x256xf32> to vector<48xf32>
    %68 = vector.shape_cast %67 : vector<48xf32> to vector<48x1xf32>
    %69 = vector.extract_strided_slice %68 {offsets = [0, 0], sizes = [16, 1], strides = [1, 1]} : vector<48x1xf32> to vector<16x1xf32>
    %70 = vector.extract_strided_slice %68 {offsets = [16, 0], sizes = [16, 1], strides = [1, 1]} : vector<48x1xf32> to vector<16x1xf32>
    %71 = arith.addf %69, %70 : vector<16x1xf32>
    %72 = vector.extract_strided_slice %68 {offsets = [32, 0], sizes = [16, 1], strides = [1, 1]} : vector<48x1xf32> to vector<16x1xf32>
    %73 = arith.addf %71, %72 : vector<16x1xf32>
    %74 = math.sqrt %73 : vector<16x1xf32>
    %75 = arith.divf %50, %74 : vector<16x1xf32>
    %76 = vector.extract_strided_slice %65 {offsets = [0, 0], sizes = [16, 256], strides = [1, 1]} : vector<48x256xf32> to vector<16x256xf32>
    %77 = vector.broadcast %75 : vector<16x1xf32> to vector<16x256xf32>
    %78 = arith.mulf %76, %77 : vector<16x256xf32>
    %cst_47 = arith.constant dense<0.000000e+00> : vector<256xf32>
    %79 = vector.multi_reduction <add>, %78, %cst_47 [0] : vector<16x256xf32> to vector<256xf32>
    %80 = vector.shape_cast %79 : vector<256xf32> to vector<1x256xf32>
    %81 = vector.extract_strided_slice %65 {offsets = [16, 0], sizes = [16, 256], strides = [1, 1]} : vector<48x256xf32> to vector<16x256xf32>
    %82 = vector.broadcast %75 : vector<16x1xf32> to vector<16x256xf32>
    %83 = arith.mulf %81, %82 : vector<16x256xf32>
    %cst_48 = arith.constant dense<0.000000e+00> : vector<256xf32>
    %84 = vector.multi_reduction <add>, %83, %cst_48 [0] : vector<16x256xf32> to vector<256xf32>
    %85 = vector.shape_cast %84 : vector<256xf32> to vector<1x256xf32>
    %86 = vector.extract_strided_slice %65 {offsets = [32, 0], sizes = [16, 256], strides = [1, 1]} : vector<48x256xf32> to vector<16x256xf32>
    %87 = vector.broadcast %75 : vector<16x1xf32> to vector<16x256xf32>
    %88 = arith.mulf %86, %87 : vector<16x256xf32>
    %cst_49 = arith.constant dense<0.000000e+00> : vector<256xf32>
    %89 = vector.multi_reduction <add>, %88, %cst_49 [0] : vector<16x256xf32> to vector<256xf32>
    %90 = vector.shape_cast %89 : vector<256xf32> to vector<1x256xf32>
    %91 = tpu.concatenate %80, %85, %90 in 0 : vector<1x256xf32>, vector<1x256xf32>, vector<1x256xf32> -> vector<3x256xf32>
    %92 = arith.addf %15, %91 : vector<3x256xf32>
    %c0_50 = arith.constant 0 : index
    %c0_51 = arith.constant 0 : index
    %c0_52 = arith.constant 0 : index
    %93 = vector.load %arg17[%c0_50, %c0_51, %c0_52] : memref<4x3x256xf32, #tpu.memory_space<vmem>>, vector<1x3x256xf32>
    %94 = vector.shape_cast %93 : vector<1x3x256xf32> to vector<3x256xf32>
    %95 = vector.shape_cast %92 : vector<3x256xf32> to vector<1x3x256xf32>
    tpu.vector_store %arg17[%c0_50, %c0_51, %c0_52], %95 {strides = array<i32>} : memref<4x3x256xf32, #tpu.memory_space<vmem>>, vector<1x3x256xf32>,
    %c1 = arith.constant 1 : index
    %c0_53 = arith.constant 0 : index
    %c0_54 = arith.constant 0 : index
    %96 = vector.load %arg1[%c1, %c0_53, %c0_54] : memref<4x3x256xf32, #tpu.memory_space<vmem>>, vector<1x3x256xf32>
    %97 = vector.shape_cast %96 : vector<1x3x256xf32> to vector<3x256xf32>
    %c1_55 = arith.constant 1 : index
    %c0_56 = arith.constant 0 : index
    %c0_57 = arith.constant 0 : index
    %98 = vector.load %arg2[%c1_55, %c0_56, %c0_57] : memref<4x3x256xf32, #tpu.memory_space<vmem>>, vector<1x3x256xf32>
    %99 = vector.shape_cast %98 : vector<1x3x256xf32> to vector<3x256xf32>
    %100 = tpu.concatenate %97, %99 in 1 : vector<3x256xf32>, vector<3x256xf32> -> vector<3x512xf32>
    %cst_58 = arith.constant dense<0.000000e+00> : vector<32x512xf32>
    %101 = tpu.matmul %3, %100, %cst_58 {dimension_numbers = #tpu.dot_dimension_numbers<[1], [0], [0], [1], [0, 0, 1, 1], [], []>} : vector<32x3xf32>, vector<3x512xf32>, vector<32x512xf32> -> vector<32x512xf32>
    %102 = vector.broadcast %10 : vector<32x1xf32> to vector<32x512xf32>
    %103 = arith.addf %101, %102 : vector<32x512xf32>
    %cst_59 = arith.constant 2.000000e-01 : f32
    %104 = vector.broadcast %cst_59 : f32 to vector<32x512xf32>
    %105 = arith.mulf %104, %103 : vector<32x512xf32>
    %106 = arith.maximumf %103, %105 : vector<32x512xf32>
    %cst_60 = arith.constant dense<0.000000e+00> : vector<64x512xf32>
    %107 = tpu.matmul %4, %106, %cst_60 {dimension_numbers = #tpu.dot_dimension_numbers<[1], [0], [0], [1], [0, 0, 1, 1], [], []>} : vector<64x32xf32>, vector<32x512xf32>, vector<64x512xf32> -> vector<64x512xf32>
    %108 = vector.broadcast %11 : vector<64x1xf32> to vector<64x512xf32>
    %109 = arith.addf %107, %108 : vector<64x512xf32>
    %cst_61 = arith.constant 2.000000e-01 : f32
    %110 = vector.broadcast %cst_61 : f32 to vector<64x512xf32>
    %111 = arith.mulf %110, %109 : vector<64x512xf32>
    %112 = arith.maximumf %109, %111 : vector<64x512xf32>
    %113 = vector.extract_strided_slice %112 {offsets = [0, 0], sizes = [64, 256], strides = [1, 1]} : vector<64x512xf32> to vector<64x256xf32>
    %cst_62 = arith.constant dense<0xFF800000> : vector<64xf32>
    %114 = vector.multi_reduction <maximumf>, %113, %cst_62 [1] : vector<64x256xf32> to vector<64xf32>
    %115 = vector.shape_cast %114 : vector<64xf32> to vector<64x1xf32>
    %116 = vector.extract_strided_slice %112 {offsets = [0, 256], sizes = [64, 256], strides = [1, 1]} : vector<64x512xf32> to vector<64x256xf32>
    %cst_63 = arith.constant dense<0xFF800000> : vector<64xf32>
    %117 = vector.multi_reduction <maximumf>, %116, %cst_63 [1] : vector<64x256xf32> to vector<64xf32>
    %118 = vector.shape_cast %117 : vector<64xf32> to vector<64x1xf32>
    %119 = tpu.concatenate %115, %118 in 1 : vector<64x1xf32>, vector<64x1xf32> -> vector<64x2xf32>
    %cst_64 = arith.constant dense<0.000000e+00> : vector<32x2xf32>
    %120 = tpu.matmul %5, %119, %cst_64 {dimension_numbers = #tpu.dot_dimension_numbers<[1], [0], [0], [1], [0, 0, 1, 1], [], []>} : vector<32x64xf32>, vector<64x2xf32>, vector<32x2xf32> -> vector<32x2xf32>
    %121 = vector.broadcast %12 : vector<32x1xf32> to vector<32x2xf32>
    %122 = arith.addf %120, %121 : vector<32x2xf32>
    %cst_65 = arith.constant 2.000000e-01 : f32
    %123 = vector.broadcast %cst_65 : f32 to vector<32x2xf32>
    %124 = arith.mulf %123, %122 : vector<32x2xf32>
    %125 = arith.maximumf %122, %124 : vector<32x2xf32>
    %cst_66 = arith.constant dense<0.000000e+00> : vector<16x2xf32>
    %126 = tpu.matmul %6, %125, %cst_66 {dimension_numbers = #tpu.dot_dimension_numbers<[1], [0], [0], [1], [0, 0, 1, 1], [], []>} : vector<16x32xf32>, vector<32x2xf32>, vector<16x2xf32> -> vector<16x2xf32>
    %127 = vector.broadcast %13 : vector<16x1xf32> to vector<16x2xf32>
    %128 = arith.addf %126, %127 : vector<16x2xf32>
    %129 = math.tanh %128 : vector<16x2xf32>
    %130 = vector.extract_strided_slice %129 {offsets = [0, 1], sizes = [16, 1], strides = [1, 1]} : vector<16x2xf32> to vector<16x1xf32>
    %131 = vector.extract_strided_slice %129 {offsets = [0, 0], sizes = [16, 1], strides = [1, 1]} : vector<16x2xf32> to vector<16x1xf32>
    %132 = arith.subf %130, %131 : vector<16x1xf32>
    %cst_67 = arith.constant dense<0.000000e+00> : vector<32x256xf32>
    %133 = tpu.matmul %0, %97, %cst_67 {dimension_numbers = #tpu.dot_dimension_numbers<[1], [0], [0], [1], [0, 0, 1, 1], [], []>} : vector<32x3xf32>, vector<3x256xf32>, vector<32x256xf32> -> vector<32x256xf32>
    %134 = vector.broadcast %7 : vector<32x1xf32> to vector<32x256xf32>
    %135 = arith.addf %133, %134 : vector<32x256xf32>
    %cst_68 = arith.constant 2.000000e-01 : f32
    %136 = vector.broadcast %cst_68 : f32 to vector<32x256xf32>
    %137 = arith.mulf %136, %135 : vector<32x256xf32>
    %138 = arith.maximumf %135, %137 : vector<32x256xf32>
    %cst_69 = arith.constant dense<0.000000e+00> : vector<64x256xf32>
    %139 = tpu.matmul %1, %138, %cst_69 {dimension_numbers = #tpu.dot_dimension_numbers<[1], [0], [0], [1], [0, 0, 1, 1], [], []>} : vector<64x32xf32>, vector<32x256xf32>, vector<64x256xf32> -> vector<64x256xf32>
    %140 = vector.broadcast %8 : vector<64x1xf32> to vector<64x256xf32>
    %141 = arith.addf %139, %140 : vector<64x256xf32>
    %cst_70 = arith.constant 2.000000e-01 : f32
    %142 = vector.broadcast %cst_70 : f32 to vector<64x256xf32>
    %143 = arith.mulf %142, %141 : vector<64x256xf32>
    %144 = arith.maximumf %141, %143 : vector<64x256xf32>
    %cst_71 = arith.constant dense<0.000000e+00> : vector<48x256xf32>
    %145 = tpu.matmul %2, %144, %cst_71 {dimension_numbers = #tpu.dot_dimension_numbers<[1], [0], [0], [1], [0, 0, 1, 1], [], []>} : vector<48x64xf32>, vector<64x256xf32>, vector<48x256xf32> -> vector<48x256xf32>
    %146 = vector.broadcast %9 : vector<48x1xf32> to vector<48x256xf32>
    %147 = arith.addf %145, %146 : vector<48x256xf32>
    %148 = arith.mulf %147, %147 : vector<48x256xf32>
    %cst_72 = arith.constant dense<0.000000e+00> : vector<48xf32>
    %149 = vector.multi_reduction <add>, %148, %cst_72 [1] : vector<48x256xf32> to vector<48xf32>
    %150 = vector.shape_cast %149 : vector<48xf32> to vector<48x1xf32>
    %151 = vector.extract_strided_slice %150 {offsets = [0, 0], sizes = [16, 1], strides = [1, 1]} : vector<48x1xf32> to vector<16x1xf32>
    %152 = vector.extract_strided_slice %150 {offsets = [16, 0], sizes = [16, 1], strides = [1, 1]} : vector<48x1xf32> to vector<16x1xf32>
    %153 = arith.addf %151, %152 : vector<16x1xf32>
    %154 = vector.extract_strided_slice %150 {offsets = [32, 0], sizes = [16, 1], strides = [1, 1]} : vector<48x1xf32> to vector<16x1xf32>
    %155 = arith.addf %153, %154 : vector<16x1xf32>
    %156 = math.sqrt %155 : vector<16x1xf32>
    %157 = arith.divf %132, %156 : vector<16x1xf32>
    %158 = vector.extract_strided_slice %147 {offsets = [0, 0], sizes = [16, 256], strides = [1, 1]} : vector<48x256xf32> to vector<16x256xf32>
    %159 = vector.broadcast %157 : vector<16x1xf32> to vector<16x256xf32>
    %160 = arith.mulf %158, %159 : vector<16x256xf32>
    %cst_73 = arith.constant dense<0.000000e+00> : vector<256xf32>
    %161 = vector.multi_reduction <add>, %160, %cst_73 [0] : vector<16x256xf32> to vector<256xf32>
    %162 = vector.shape_cast %161 : vector<256xf32> to vector<1x256xf32>
    %163 = vector.extract_strided_slice %147 {offsets = [16, 0], sizes = [16, 256], strides = [1, 1]} : vector<48x256xf32> to vector<16x256xf32>
    %164 = vector.broadcast %157 : vector<16x1xf32> to vector<16x256xf32>
    %165 = arith.mulf %163, %164 : vector<16x256xf32>
    %cst_74 = arith.constant dense<0.000000e+00> : vector<256xf32>
    %166 = vector.multi_reduction <add>, %165, %cst_74 [0] : vector<16x256xf32> to vector<256xf32>
    %167 = vector.shape_cast %166 : vector<256xf32> to vector<1x256xf32>
    %168 = vector.extract_strided_slice %147 {offsets = [32, 0], sizes = [16, 256], strides = [1, 1]} : vector<48x256xf32> to vector<16x256xf32>
    %169 = vector.broadcast %157 : vector<16x1xf32> to vector<16x256xf32>
    %170 = arith.mulf %168, %169 : vector<16x256xf32>
    %cst_75 = arith.constant dense<0.000000e+00> : vector<256xf32>
    %171 = vector.multi_reduction <add>, %170, %cst_75 [0] : vector<16x256xf32> to vector<256xf32>
    %172 = vector.shape_cast %171 : vector<256xf32> to vector<1x256xf32>
    %173 = tpu.concatenate %162, %167, %172 in 0 : vector<1x256xf32>, vector<1x256xf32>, vector<1x256xf32> -> vector<3x256xf32>
    %174 = arith.addf %97, %173 : vector<3x256xf32>
    %c1_76 = arith.constant 1 : index
    %c0_77 = arith.constant 0 : index
    %c0_78 = arith.constant 0 : index
    %175 = vector.load %arg17[%c1_76, %c0_77, %c0_78] : memref<4x3x256xf32, #tpu.memory_space<vmem>>, vector<1x3x256xf32>
    %176 = vector.shape_cast %175 : vector<1x3x256xf32> to vector<3x256xf32>
    %177 = vector.shape_cast %174 : vector<3x256xf32> to vector<1x3x256xf32>
    tpu.vector_store %arg17[%c1_76, %c0_77, %c0_78], %177 {strides = array<i32>} : memref<4x3x256xf32, #tpu.memory_space<vmem>>, vector<1x3x256xf32>,
    %c2 = arith.constant 2 : index
    %c0_79 = arith.constant 0 : index
    %c0_80 = arith.constant 0 : index
    %178 = vector.load %arg1[%c2, %c0_79, %c0_80] : memref<4x3x256xf32, #tpu.memory_space<vmem>>, vector<1x3x256xf32>
    %179 = vector.shape_cast %178 : vector<1x3x256xf32> to vector<3x256xf32>
    %c2_81 = arith.constant 2 : index
    %c0_82 = arith.constant 0 : index
    %c0_83 = arith.constant 0 : index
    %180 = vector.load %arg2[%c2_81, %c0_82, %c0_83] : memref<4x3x256xf32, #tpu.memory_space<vmem>>, vector<1x3x256xf32>
    %181 = vector.shape_cast %180 : vector<1x3x256xf32> to vector<3x256xf32>
    %182 = tpu.concatenate %179, %181 in 1 : vector<3x256xf32>, vector<3x256xf32> -> vector<3x512xf32>
    %cst_84 = arith.constant dense<0.000000e+00> : vector<32x512xf32>
    %183 = tpu.matmul %3, %182, %cst_84 {dimension_numbers = #tpu.dot_dimension_numbers<[1], [0], [0], [1], [0, 0, 1, 1], [], []>} : vector<32x3xf32>, vector<3x512xf32>, vector<32x512xf32> -> vector<32x512xf32>
    %184 = vector.broadcast %10 : vector<32x1xf32> to vector<32x512xf32>
    %185 = arith.addf %183, %184 : vector<32x512xf32>
    %cst_85 = arith.constant 2.000000e-01 : f32
    %186 = vector.broadcast %cst_85 : f32 to vector<32x512xf32>
    %187 = arith.mulf %186, %185 : vector<32x512xf32>
    %188 = arith.maximumf %185, %187 : vector<32x512xf32>
    %cst_86 = arith.constant dense<0.000000e+00> : vector<64x512xf32>
    %189 = tpu.matmul %4, %188, %cst_86 {dimension_numbers = #tpu.dot_dimension_numbers<[1], [0], [0], [1], [0, 0, 1, 1], [], []>} : vector<64x32xf32>, vector<32x512xf32>, vector<64x512xf32> -> vector<64x512xf32>
    %190 = vector.broadcast %11 : vector<64x1xf32> to vector<64x512xf32>
    %191 = arith.addf %189, %190 : vector<64x512xf32>
    %cst_87 = arith.constant 2.000000e-01 : f32
    %192 = vector.broadcast %cst_87 : f32 to vector<64x512xf32>
    %193 = arith.mulf %192, %191 : vector<64x512xf32>
    %194 = arith.maximumf %191, %193 : vector<64x512xf32>
    %195 = vector.extract_strided_slice %194 {offsets = [0, 0], sizes = [64, 256], strides = [1, 1]} : vector<64x512xf32> to vector<64x256xf32>
    %cst_88 = arith.constant dense<0xFF800000> : vector<64xf32>
    %196 = vector.multi_reduction <maximumf>, %195, %cst_88 [1] : vector<64x256xf32> to vector<64xf32>
    %197 = vector.shape_cast %196 : vector<64xf32> to vector<64x1xf32>
    %198 = vector.extract_strided_slice %194 {offsets = [0, 256], sizes = [64, 256], strides = [1, 1]} : vector<64x512xf32> to vector<64x256xf32>
    %cst_89 = arith.constant dense<0xFF800000> : vector<64xf32>
    %199 = vector.multi_reduction <maximumf>, %198, %cst_89 [1] : vector<64x256xf32> to vector<64xf32>
    %200 = vector.shape_cast %199 : vector<64xf32> to vector<64x1xf32>
    %201 = tpu.concatenate %197, %200 in 1 : vector<64x1xf32>, vector<64x1xf32> -> vector<64x2xf32>
    %cst_90 = arith.constant dense<0.000000e+00> : vector<32x2xf32>
    %202 = tpu.matmul %5, %201, %cst_90 {dimension_numbers = #tpu.dot_dimension_numbers<[1], [0], [0], [1], [0, 0, 1, 1], [], []>} : vector<32x64xf32>, vector<64x2xf32>, vector<32x2xf32> -> vector<32x2xf32>
    %203 = vector.broadcast %12 : vector<32x1xf32> to vector<32x2xf32>
    %204 = arith.addf %202, %203 : vector<32x2xf32>
    %cst_91 = arith.constant 2.000000e-01 : f32
    %205 = vector.broadcast %cst_91 : f32 to vector<32x2xf32>
    %206 = arith.mulf %205, %204 : vector<32x2xf32>
    %207 = arith.maximumf %204, %206 : vector<32x2xf32>
    %cst_92 = arith.constant dense<0.000000e+00> : vector<16x2xf32>
    %208 = tpu.matmul %6, %207, %cst_92 {dimension_numbers = #tpu.dot_dimension_numbers<[1], [0], [0], [1], [0, 0, 1, 1], [], []>} : vector<16x32xf32>, vector<32x2xf32>, vector<16x2xf32> -> vector<16x2xf32>
    %209 = vector.broadcast %13 : vector<16x1xf32> to vector<16x2xf32>
    %210 = arith.addf %208, %209 : vector<16x2xf32>
    %211 = math.tanh %210 : vector<16x2xf32>
    %212 = vector.extract_strided_slice %211 {offsets = [0, 1], sizes = [16, 1], strides = [1, 1]} : vector<16x2xf32> to vector<16x1xf32>
    %213 = vector.extract_strided_slice %211 {offsets = [0, 0], sizes = [16, 1], strides = [1, 1]} : vector<16x2xf32> to vector<16x1xf32>
    %214 = arith.subf %212, %213 : vector<16x1xf32>
    %cst_93 = arith.constant dense<0.000000e+00> : vector<32x256xf32>
    %215 = tpu.matmul %0, %179, %cst_93 {dimension_numbers = #tpu.dot_dimension_numbers<[1], [0], [0], [1], [0, 0, 1, 1], [], []>} : vector<32x3xf32>, vector<3x256xf32>, vector<32x256xf32> -> vector<32x256xf32>
    %216 = vector.broadcast %7 : vector<32x1xf32> to vector<32x256xf32>
    %217 = arith.addf %215, %216 : vector<32x256xf32>
    %cst_94 = arith.constant 2.000000e-01 : f32
    %218 = vector.broadcast %cst_94 : f32 to vector<32x256xf32>
    %219 = arith.mulf %218, %217 : vector<32x256xf32>
    %220 = arith.maximumf %217, %219 : vector<32x256xf32>
    %cst_95 = arith.constant dense<0.000000e+00> : vector<64x256xf32>
    %221 = tpu.matmul %1, %220, %cst_95 {dimension_numbers = #tpu.dot_dimension_numbers<[1], [0], [0], [1], [0, 0, 1, 1], [], []>} : vector<64x32xf32>, vector<32x256xf32>, vector<64x256xf32> -> vector<64x256xf32>
    %222 = vector.broadcast %8 : vector<64x1xf32> to vector<64x256xf32>
    %223 = arith.addf %221, %222 : vector<64x256xf32>
    %cst_96 = arith.constant 2.000000e-01 : f32
    %224 = vector.broadcast %cst_96 : f32 to vector<64x256xf32>
    %225 = arith.mulf %224, %223 : vector<64x256xf32>
    %226 = arith.maximumf %223, %225 : vector<64x256xf32>
    %cst_97 = arith.constant dense<0.000000e+00> : vector<48x256xf32>
    %227 = tpu.matmul %2, %226, %cst_97 {dimension_numbers = #tpu.dot_dimension_numbers<[1], [0], [0], [1], [0, 0, 1, 1], [], []>} : vector<48x64xf32>, vector<64x256xf32>, vector<48x256xf32> -> vector<48x256xf32>
    %228 = vector.broadcast %9 : vector<48x1xf32> to vector<48x256xf32>
    %229 = arith.addf %227, %228 : vector<48x256xf32>
    %230 = arith.mulf %229, %229 : vector<48x256xf32>
    %cst_98 = arith.constant dense<0.000000e+00> : vector<48xf32>
    %231 = vector.multi_reduction <add>, %230, %cst_98 [1] : vector<48x256xf32> to vector<48xf32>
    %232 = vector.shape_cast %231 : vector<48xf32> to vector<48x1xf32>
    %233 = vector.extract_strided_slice %232 {offsets = [0, 0], sizes = [16, 1], strides = [1, 1]} : vector<48x1xf32> to vector<16x1xf32>
    %234 = vector.extract_strided_slice %232 {offsets = [16, 0], sizes = [16, 1], strides = [1, 1]} : vector<48x1xf32> to vector<16x1xf32>
    %235 = arith.addf %233, %234 : vector<16x1xf32>
    %236 = vector.extract_strided_slice %232 {offsets = [32, 0], sizes = [16, 1], strides = [1, 1]} : vector<48x1xf32> to vector<16x1xf32>
    %237 = arith.addf %235, %236 : vector<16x1xf32>
    %238 = math.sqrt %237 : vector<16x1xf32>
    %239 = arith.divf %214, %238 : vector<16x1xf32>
    %240 = vector.extract_strided_slice %229 {offsets = [0, 0], sizes = [16, 256], strides = [1, 1]} : vector<48x256xf32> to vector<16x256xf32>
    %241 = vector.broadcast %239 : vector<16x1xf32> to vector<16x256xf32>
    %242 = arith.mulf %240, %241 : vector<16x256xf32>
    %cst_99 = arith.constant dense<0.000000e+00> : vector<256xf32>
    %243 = vector.multi_reduction <add>, %242, %cst_99 [0] : vector<16x256xf32> to vector<256xf32>
    %244 = vector.shape_cast %243 : vector<256xf32> to vector<1x256xf32>
    %245 = vector.extract_strided_slice %229 {offsets = [16, 0], sizes = [16, 256], strides = [1, 1]} : vector<48x256xf32> to vector<16x256xf32>
    %246 = vector.broadcast %239 : vector<16x1xf32> to vector<16x256xf32>
    %247 = arith.mulf %245, %246 : vector<16x256xf32>
    %cst_100 = arith.constant dense<0.000000e+00> : vector<256xf32>
    %248 = vector.multi_reduction <add>, %247, %cst_100 [0] : vector<16x256xf32> to vector<256xf32>
    %249 = vector.shape_cast %248 : vector<256xf32> to vector<1x256xf32>
    %250 = vector.extract_strided_slice %229 {offsets = [32, 0], sizes = [16, 256], strides = [1, 1]} : vector<48x256xf32> to vector<16x256xf32>
    %251 = vector.broadcast %239 : vector<16x1xf32> to vector<16x256xf32>
    %252 = arith.mulf %250, %251 : vector<16x256xf32>
    %cst_101 = arith.constant dense<0.000000e+00> : vector<256xf32>
    %253 = vector.multi_reduction <add>, %252, %cst_101 [0] : vector<16x256xf32> to vector<256xf32>
    %254 = vector.shape_cast %253 : vector<256xf32> to vector<1x256xf32>
    %255 = tpu.concatenate %244, %249, %254 in 0 : vector<1x256xf32>, vector<1x256xf32>, vector<1x256xf32> -> vector<3x256xf32>
    %256 = arith.addf %179, %255 : vector<3x256xf32>
    %c2_102 = arith.constant 2 : index
    %c0_103 = arith.constant 0 : index
    %c0_104 = arith.constant 0 : index
    %257 = vector.load %arg17[%c2_102, %c0_103, %c0_104] : memref<4x3x256xf32, #tpu.memory_space<vmem>>, vector<1x3x256xf32>
    %258 = vector.shape_cast %257 : vector<1x3x256xf32> to vector<3x256xf32>
    %259 = vector.shape_cast %256 : vector<3x256xf32> to vector<1x3x256xf32>
    tpu.vector_store %arg17[%c2_102, %c0_103, %c0_104], %259 {strides = array<i32>} : memref<4x3x256xf32, #tpu.memory_space<vmem>>, vector<1x3x256xf32>,
    %c3 = arith.constant 3 : index
    %c0_105 = arith.constant 0 : index
    %c0_106 = arith.constant 0 : index
    %260 = vector.load %arg1[%c3, %c0_105, %c0_106] : memref<4x3x256xf32, #tpu.memory_space<vmem>>, vector<1x3x256xf32>
    %261 = vector.shape_cast %260 : vector<1x3x256xf32> to vector<3x256xf32>
    %c3_107 = arith.constant 3 : index
    %c0_108 = arith.constant 0 : index
    %c0_109 = arith.constant 0 : index
    %262 = vector.load %arg2[%c3_107, %c0_108, %c0_109] : memref<4x3x256xf32, #tpu.memory_space<vmem>>, vector<1x3x256xf32>
    %263 = vector.shape_cast %262 : vector<1x3x256xf32> to vector<3x256xf32>
    %264 = tpu.concatenate %261, %263 in 1 : vector<3x256xf32>, vector<3x256xf32> -> vector<3x512xf32>
    %cst_110 = arith.constant dense<0.000000e+00> : vector<32x512xf32>
    %265 = tpu.matmul %3, %264, %cst_110 {dimension_numbers = #tpu.dot_dimension_numbers<[1], [0], [0], [1], [0, 0, 1, 1], [], []>} : vector<32x3xf32>, vector<3x512xf32>, vector<32x512xf32> -> vector<32x512xf32>
    %266 = vector.broadcast %10 : vector<32x1xf32> to vector<32x512xf32>
    %267 = arith.addf %265, %266 : vector<32x512xf32>
    %cst_111 = arith.constant 2.000000e-01 : f32
    %268 = vector.broadcast %cst_111 : f32 to vector<32x512xf32>
    %269 = arith.mulf %268, %267 : vector<32x512xf32>
    %270 = arith.maximumf %267, %269 : vector<32x512xf32>
    %cst_112 = arith.constant dense<0.000000e+00> : vector<64x512xf32>
    %271 = tpu.matmul %4, %270, %cst_112 {dimension_numbers = #tpu.dot_dimension_numbers<[1], [0], [0], [1], [0, 0, 1, 1], [], []>} : vector<64x32xf32>, vector<32x512xf32>, vector<64x512xf32> -> vector<64x512xf32>
    %272 = vector.broadcast %11 : vector<64x1xf32> to vector<64x512xf32>
    %273 = arith.addf %271, %272 : vector<64x512xf32>
    %cst_113 = arith.constant 2.000000e-01 : f32
    %274 = vector.broadcast %cst_113 : f32 to vector<64x512xf32>
    %275 = arith.mulf %274, %273 : vector<64x512xf32>
    %276 = arith.maximumf %273, %275 : vector<64x512xf32>
    %277 = vector.extract_strided_slice %276 {offsets = [0, 0], sizes = [64, 256], strides = [1, 1]} : vector<64x512xf32> to vector<64x256xf32>
    %cst_114 = arith.constant dense<0xFF800000> : vector<64xf32>
    %278 = vector.multi_reduction <maximumf>, %277, %cst_114 [1] : vector<64x256xf32> to vector<64xf32>
    %279 = vector.shape_cast %278 : vector<64xf32> to vector<64x1xf32>
    %280 = vector.extract_strided_slice %276 {offsets = [0, 256], sizes = [64, 256], strides = [1, 1]} : vector<64x512xf32> to vector<64x256xf32>
    %cst_115 = arith.constant dense<0xFF800000> : vector<64xf32>
    %281 = vector.multi_reduction <maximumf>, %280, %cst_115 [1] : vector<64x256xf32> to vector<64xf32>
    %282 = vector.shape_cast %281 : vector<64xf32> to vector<64x1xf32>
    %283 = tpu.concatenate %279, %282 in 1 : vector<64x1xf32>, vector<64x1xf32> -> vector<64x2xf32>
    %cst_116 = arith.constant dense<0.000000e+00> : vector<32x2xf32>
    %284 = tpu.matmul %5, %283, %cst_116 {dimension_numbers = #tpu.dot_dimension_numbers<[1], [0], [0], [1], [0, 0, 1, 1], [], []>} : vector<32x64xf32>, vector<64x2xf32>, vector<32x2xf32> -> vector<32x2xf32>
    %285 = vector.broadcast %12 : vector<32x1xf32> to vector<32x2xf32>
    %286 = arith.addf %284, %285 : vector<32x2xf32>
    %cst_117 = arith.constant 2.000000e-01 : f32
    %287 = vector.broadcast %cst_117 : f32 to vector<32x2xf32>
    %288 = arith.mulf %287, %286 : vector<32x2xf32>
    %289 = arith.maximumf %286, %288 : vector<32x2xf32>
    %cst_118 = arith.constant dense<0.000000e+00> : vector<16x2xf32>
    %290 = tpu.matmul %6, %289, %cst_118 {dimension_numbers = #tpu.dot_dimension_numbers<[1], [0], [0], [1], [0, 0, 1, 1], [], []>} : vector<16x32xf32>, vector<32x2xf32>, vector<16x2xf32> -> vector<16x2xf32>
    %291 = vector.broadcast %13 : vector<16x1xf32> to vector<16x2xf32>
    %292 = arith.addf %290, %291 : vector<16x2xf32>
    %293 = math.tanh %292 : vector<16x2xf32>
    %294 = vector.extract_strided_slice %293 {offsets = [0, 1], sizes = [16, 1], strides = [1, 1]} : vector<16x2xf32> to vector<16x1xf32>
    %295 = vector.extract_strided_slice %293 {offsets = [0, 0], sizes = [16, 1], strides = [1, 1]} : vector<16x2xf32> to vector<16x1xf32>
    %296 = arith.subf %294, %295 : vector<16x1xf32>
    %cst_119 = arith.constant dense<0.000000e+00> : vector<32x256xf32>
    %297 = tpu.matmul %0, %261, %cst_119 {dimension_numbers = #tpu.dot_dimension_numbers<[1], [0], [0], [1], [0, 0, 1, 1], [], []>} : vector<32x3xf32>, vector<3x256xf32>, vector<32x256xf32> -> vector<32x256xf32>
    %298 = vector.broadcast %7 : vector<32x1xf32> to vector<32x256xf32>
    %299 = arith.addf %297, %298 : vector<32x256xf32>
    %cst_120 = arith.constant 2.000000e-01 : f32
    %300 = vector.broadcast %cst_120 : f32 to vector<32x256xf32>
    %301 = arith.mulf %300, %299 : vector<32x256xf32>
    %302 = arith.maximumf %299, %301 : vector<32x256xf32>
    %cst_121 = arith.constant dense<0.000000e+00> : vector<64x256xf32>
    %303 = tpu.matmul %1, %302, %cst_121 {dimension_numbers = #tpu.dot_dimension_numbers<[1], [0], [0], [1], [0, 0, 1, 1], [], []>} : vector<64x32xf32>, vector<32x256xf32>, vector<64x256xf32> -> vector<64x256xf32>
    %304 = vector.broadcast %8 : vector<64x1xf32> to vector<64x256xf32>
    %305 = arith.addf %303, %304 : vector<64x256xf32>
    %cst_122 = arith.constant 2.000000e-01 : f32
    %306 = vector.broadcast %cst_122 : f32 to vector<64x256xf32>
    %307 = arith.mulf %306, %305 : vector<64x256xf32>
    %308 = arith.maximumf %305, %307 : vector<64x256xf32>
    %cst_123 = arith.constant dense<0.000000e+00> : vector<48x256xf32>
    %309 = tpu.matmul %2, %308, %cst_123 {dimension_numbers = #tpu.dot_dimension_numbers<[1], [0], [0], [1], [0, 0, 1, 1], [], []>} : vector<48x64xf32>, vector<64x256xf32>, vector<48x256xf32> -> vector<48x256xf32>
    %310 = vector.broadcast %9 : vector<48x1xf32> to vector<48x256xf32>
    %311 = arith.addf %309, %310 : vector<48x256xf32>
    %312 = arith.mulf %311, %311 : vector<48x256xf32>
    %cst_124 = arith.constant dense<0.000000e+00> : vector<48xf32>
    %313 = vector.multi_reduction <add>, %312, %cst_124 [1] : vector<48x256xf32> to vector<48xf32>
    %314 = vector.shape_cast %313 : vector<48xf32> to vector<48x1xf32>
    %315 = vector.extract_strided_slice %314 {offsets = [0, 0], sizes = [16, 1], strides = [1, 1]} : vector<48x1xf32> to vector<16x1xf32>
    %316 = vector.extract_strided_slice %314 {offsets = [16, 0], sizes = [16, 1], strides = [1, 1]} : vector<48x1xf32> to vector<16x1xf32>
    %317 = arith.addf %315, %316 : vector<16x1xf32>
    %318 = vector.extract_strided_slice %314 {offsets = [32, 0], sizes = [16, 1], strides = [1, 1]} : vector<48x1xf32> to vector<16x1xf32>
    %319 = arith.addf %317, %318 : vector<16x1xf32>
    %320 = math.sqrt %319 : vector<16x1xf32>
    %321 = arith.divf %296, %320 : vector<16x1xf32>
    %322 = vector.extract_strided_slice %311 {offsets = [0, 0], sizes = [16, 256], strides = [1, 1]} : vector<48x256xf32> to vector<16x256xf32>
    %323 = vector.broadcast %321 : vector<16x1xf32> to vector<16x256xf32>
    %324 = arith.mulf %322, %323 : vector<16x256xf32>
    %cst_125 = arith.constant dense<0.000000e+00> : vector<256xf32>
    %325 = vector.multi_reduction <add>, %324, %cst_125 [0] : vector<16x256xf32> to vector<256xf32>
    %326 = vector.shape_cast %325 : vector<256xf32> to vector<1x256xf32>
    %327 = vector.extract_strided_slice %311 {offsets = [16, 0], sizes = [16, 256], strides = [1, 1]} : vector<48x256xf32> to vector<16x256xf32>
    %328 = vector.broadcast %321 : vector<16x1xf32> to vector<16x256xf32>
    %329 = arith.mulf %327, %328 : vector<16x256xf32>
    %cst_126 = arith.constant dense<0.000000e+00> : vector<256xf32>
    %330 = vector.multi_reduction <add>, %329, %cst_126 [0] : vector<16x256xf32> to vector<256xf32>
    %331 = vector.shape_cast %330 : vector<256xf32> to vector<1x256xf32>
    %332 = vector.extract_strided_slice %311 {offsets = [32, 0], sizes = [16, 256], strides = [1, 1]} : vector<48x256xf32> to vector<16x256xf32>
    %333 = vector.broadcast %321 : vector<16x1xf32> to vector<16x256xf32>
    %334 = arith.mulf %332, %333 : vector<16x256xf32>
    %cst_127 = arith.constant dense<0.000000e+00> : vector<256xf32>
    %335 = vector.multi_reduction <add>, %334, %cst_127 [0] : vector<16x256xf32> to vector<256xf32>
    %336 = vector.shape_cast %335 : vector<256xf32> to vector<1x256xf32>
    %337 = tpu.concatenate %326, %331, %336 in 0 : vector<1x256xf32>, vector<1x256xf32>, vector<1x256xf32> -> vector<3x256xf32>
    %338 = arith.addf %261, %337 : vector<3x256xf32>
    %c3_128 = arith.constant 3 : index
    %c0_129 = arith.constant 0 : index
    %c0_130 = arith.constant 0 : index
    %339 = vector.load %arg17[%c3_128, %c0_129, %c0_130] : memref<4x3x256xf32, #tpu.memory_space<vmem>>, vector<1x3x256xf32>
    %340 = vector.shape_cast %339 : vector<1x3x256xf32> to vector<3x256xf32>
    %341 = vector.shape_cast %338 : vector<3x256xf32> to vector<1x3x256xf32>
    tpu.vector_store %arg17[%c3_128, %c0_129, %c0_130], %341 {strides = array<i32>} : memref<4x3x256xf32, #tpu.memory_space<vmem>>, vector<1x3x256xf32>,
    return
  }
  func.func @transform_0(%arg0: i32) -> (i32, i32, i32) {
    %c0_i32 = arith.constant 0 : i32
    %c0_i32_0 = arith.constant 0 : i32
    %c0_i32_1 = arith.constant 0 : i32
    return %arg0, %c0_i32, %c0_i32_0 : i32, i32, i32
  }
  func.func @transform_1(%arg0: i32) -> (i32, i32, i32) {
    %c0_i32 = arith.constant 0 : i32
    %c0_i32_0 = arith.constant 0 : i32
    %c0_i32_1 = arith.constant 0 : i32
    return %arg0, %c0_i32, %c0_i32_0 : i32, i32, i32
  }
  func.func @transform_2(%arg0: i32) -> (i32, i32) {
    %c0_i32 = arith.constant 0 : i32
    %c0_i32_0 = arith.constant 0 : i32
    %c0_i32_1 = arith.constant 0 : i32
    return %c0_i32, %c0_i32_0 : i32, i32
  }
  func.func @transform_3(%arg0: i32) -> (i32, i32) {
    %c0_i32 = arith.constant 0 : i32
    %c0_i32_0 = arith.constant 0 : i32
    %c0_i32_1 = arith.constant 0 : i32
    return %c0_i32, %c0_i32_0 : i32, i32
  }
  func.func @transform_4(%arg0: i32) -> (i32, i32) {
    %c0_i32 = arith.constant 0 : i32
    %c0_i32_0 = arith.constant 0 : i32
    %c0_i32_1 = arith.constant 0 : i32
    return %c0_i32, %c0_i32_0 : i32, i32
  }
  func.func @transform_5(%arg0: i32) -> (i32, i32) {
    %c0_i32 = arith.constant 0 : i32
    %c0_i32_0 = arith.constant 0 : i32
    %c0_i32_1 = arith.constant 0 : i32
    return %c0_i32, %c0_i32_0 : i32, i32
  }
  func.func @transform_6(%arg0: i32) -> (i32, i32) {
    %c0_i32 = arith.constant 0 : i32
    %c0_i32_0 = arith.constant 0 : i32
    %c0_i32_1 = arith.constant 0 : i32
    return %c0_i32, %c0_i32_0 : i32, i32
  }
  func.func @transform_7(%arg0: i32) -> (i32, i32) {
    %c0_i32 = arith.constant 0 : i32
    %c0_i32_0 = arith.constant 0 : i32
    %c0_i32_1 = arith.constant 0 : i32
    return %c0_i32, %c0_i32_0 : i32, i32
  }
  func.func @transform_8(%arg0: i32) -> (i32, i32) {
    %c0_i32 = arith.constant 0 : i32
    %c0_i32_0 = arith.constant 0 : i32
    %c0_i32_1 = arith.constant 0 : i32
    return %c0_i32, %c0_i32_0 : i32, i32
  }
  func.func @transform_9(%arg0: i32) -> (i32, i32) {
    %c0_i32 = arith.constant 0 : i32
    %c0_i32_0 = arith.constant 0 : i32
    %c0_i32_1 = arith.constant 0 : i32
    return %c0_i32, %c0_i32_0 : i32, i32
  }
  func.func @transform_10(%arg0: i32) -> (i32, i32) {
    %c0_i32 = arith.constant 0 : i32
    %c0_i32_0 = arith.constant 0 : i32
    %c0_i32_1 = arith.constant 0 : i32
    return %c0_i32, %c0_i32_0 : i32, i32
  }
  func.func @transform_11(%arg0: i32) -> (i32, i32) {
    %c0_i32 = arith.constant 0 : i32
    %c0_i32_0 = arith.constant 0 : i32
    %c0_i32_1 = arith.constant 0 : i32
    return %c0_i32, %c0_i32_0 : i32, i32
  }
  func.func @transform_12(%arg0: i32) -> (i32, i32) {
    %c0_i32 = arith.constant 0 : i32
    %c0_i32_0 = arith.constant 0 : i32
    %c0_i32_1 = arith.constant 0 : i32
    return %c0_i32, %c0_i32_0 : i32, i32
  }
  func.func @transform_13(%arg0: i32) -> (i32, i32) {
    %c0_i32 = arith.constant 0 : i32
    %c0_i32_0 = arith.constant 0 : i32
    %c0_i32_1 = arith.constant 0 : i32
    return %c0_i32, %c0_i32_0 : i32, i32
  }
  func.func @transform_14(%arg0: i32) -> (i32, i32) {
    %c0_i32 = arith.constant 0 : i32
    %c0_i32_0 = arith.constant 0 : i32
    %c0_i32_1 = arith.constant 0 : i32
    return %c0_i32, %c0_i32_0 : i32, i32
  }
  func.func @transform_15(%arg0: i32) -> (i32, i32) {
    %c0_i32 = arith.constant 0 : i32
    %c0_i32_0 = arith.constant 0 : i32
    %c0_i32_1 = arith.constant 0 : i32
    return %c0_i32, %c0_i32_0 : i32, i32
  }
  func.func @transform_16(%arg0: i32) -> (i32, i32, i32) {
    %c0_i32 = arith.constant 0 : i32
    %c0_i32_0 = arith.constant 0 : i32
    %c0_i32_1 = arith.constant 0 : i32
    return %arg0, %c0_i32, %c0_i32_0 : i32, i32, i32
  }
}

</mosaic_0001>

<llo_original>
// kernel: tpu_custom_call.1
$region0: #{tpu_custom_call.1}
  #allocation0 [shape = 'u32[]', space=smem, size = 0x4, offset = 0x4, fixed_abs, tag = 'smem constant byte address 0x4 - core index']
  #allocation1 [shape = 'u32[144,128]{1,0:T(1,128)}', space=vmem, size = 0x12000, scoped, tag = 'internal scratch']
  %s0 = inlined_call_operand.vmem [shape: f32[8,3,256], index: 0, kind: input, shape index: {}]
  %s1 = inlined_call_operand.vmem [shape: f32[8,3,256], index: 1, kind: input, shape index: {}]
  %s2 = inlined_call_operand.vmem [shape: f32[32,3], index: 2, kind: input, shape index: {}]
  %s3 = inlined_call_operand.vmem [shape: f32[32,1], index: 3, kind: input, shape index: {}]
  %s4 = inlined_call_operand.vmem [shape: f32[64,32], index: 4, kind: input, shape index: {}]
  %s5 = inlined_call_operand.vmem [shape: f32[64,1], index: 5, kind: input, shape index: {}]
  %s6 = inlined_call_operand.vmem [shape: f32[48,64], index: 6, kind: input, shape index: {}]
  %s7 = inlined_call_operand.vmem [shape: f32[48,1], index: 7, kind: input, shape index: {}]
  %s8 = inlined_call_operand.vmem [shape: f32[32,3], index: 8, kind: input, shape index: {}]
  %s9 = inlined_call_operand.vmem [shape: f32[32,1], index: 9, kind: input, shape index: {}]
  %s10 = inlined_call_operand.vmem [shape: f32[64,32], index: 10, kind: input, shape index: {}]
  %s11 = inlined_call_operand.vmem [shape: f32[64,1], index: 11, kind: input, shape index: {}]
  %s12 = inlined_call_operand.vmem [shape: f32[32,64], index: 12, kind: input, shape index: {}]
  %s13 = inlined_call_operand.vmem [shape: f32[32,1], index: 13, kind: input, shape index: {}]
  %s14 = inlined_call_operand.vmem [shape: f32[16,32], index: 14, kind: input, shape index: {}]
  %s15 = inlined_call_operand.vmem [shape: f32[16,1], index: 15, kind: input, shape index: {}]
  %s16 = inlined_call_operand.vmem [shape: f32[8,3,256], index: 16, kind: output, shape index: {}]
  %s17 = sld [smem:[#allocation0]]
  $region97: #{tpu_custom_call.1} parent=0
    _
  %s19 = ssub.s32 1, %s17
  %s20 = scalar_select 0, %s19, %s17
  loop: start=0, step=1, limit=4
  $region2: #{tpu_custom_call.1} parent=0 // loop_pre_header
    _
  $region3: #{tpu_custom_call.1} parent=0 // loop_header
    %s22 = sphi 0, %s26
    %p23 = scmp.ge.s32.totalorder %s22, 4
    %s32 = sphi 0, %s34
    %s35 = sphi 0, %s32
    %s36 = sphi 0, %s35
    %s52 = sphi 0, %s36
    %s58 = sphi 0, %s60
    %s61 = sphi 0, %s58
    %s62 = sphi 0, %s61
    %s78 = sphi 0, %s62
    %s82 = sphi 0, %s82
    %s84 = sphi 0, %s82
    %s85 = sphi 0, %s84
    %s99 = sphi 0, %s85
    %s103 = sphi 0, %s103
    %s105 = sphi 0, %s103
    %s106 = sphi 0, %s105
    %s120 = sphi 0, %s106
    %s124 = sphi 0, %s124
    %s126 = sphi 0, %s124
    %s127 = sphi 0, %s126
    %s141 = sphi 0, %s127
    %s145 = sphi 0, %s145
    %s147 = sphi 0, %s145
    %s148 = sphi 0, %s147
    %s162 = sphi 0, %s148
    %s166 = sphi 0, %s166
    %s168 = sphi 0, %s166
    %s169 = sphi 0, %s168
    %s183 = sphi 0, %s169
    %s187 = sphi 0, %s187
    %s189 = sphi 0, %s187
    %s190 = sphi 0, %s189
    %s204 = sphi 0, %s190
    %s208 = sphi 0, %s208
    %s210 = sphi 0, %s208
    %s211 = sphi 0, %s210
    %s225 = sphi 0, %s211
    %s229 = sphi 0, %s229
    %s231 = sphi 0, %s229
    %s232 = sphi 0, %s231
    %s246 = sphi 0, %s232
    %s250 = sphi 0, %s250
    %s252 = sphi 0, %s250
    %s253 = sphi 0, %s252
    %s267 = sphi 0, %s253
    %s271 = sphi 0, %s271
    %s273 = sphi 0, %s271
    %s274 = sphi 0, %s273
    %s288 = sphi 0, %s274
    %s292 = sphi 0, %s292
    %s294 = sphi 0, %s292
    %s295 = sphi 0, %s294
    %s309 = sphi 0, %s295
    %s313 = sphi 0, %s313
    %s315 = sphi 0, %s313
    %s316 = sphi 0, %s315
    %s330 = sphi 0, %s316
    %s334 = sphi 0, %s334
    %s336 = sphi 0, %s334
    %s337 = sphi 0, %s336
    %s351 = sphi 0, %s337
    %s355 = sphi 0, %s355
    %s357 = sphi 0, %s355
    %s358 = sphi 0, %s357
    %s372 = sphi 0, %s358
    %s378 = sphi 0, %s380
    %s381 = sphi 0, %s378
    %s382 = sphi 0, %s381
    %s398 = sphi 0, %s382
  $region4: #{tpu_custom_call.1} parent=0 // loop_header_branch
    %25 = sbr.rel (%p23) target = $region8
  $region5: #{tpu_custom_call.1} parent=0 // loop_body
    %s27 = ssub.s32 %s22, 1
    %s28 = ssub.s32 %s22, 2
    %s29 = sadd.s32 %s22, 1
    %s30 = ssub.s32 %s22, %s29
    %p31 = scmp.eq.s32.totalorder %s30, 0
    %s33 = sadd.s32 %s32, 1
    %s34 = scalar_select %p31, %s32, %s33
    %p37 = pneg %p31
    %p38 = scmp.eq.s32.totalorder %s22, 1
    %p39 = por %p37, %p38
    %p40 = scmp.ne.s32.totalorder %s32, %s35
    %p41 = scmp.eq.s32.totalorder %s22, 0
    %p42 = por %p40, %p41
    %p43 = scmp.ne.s32.totalorder %s32, %s35
    %p44 = scmp.eq.s32.totalorder %s27, 1
    %p45 = por %p43, %p44
    %p46 = scmp.ne.s32.totalorder %s35, %s36
    %p47 = scmp.eq.s32.totalorder %s27, 0
    %p48 = por %p46, %p47
    %p49 = scmp.ne.s32.totalorder %s35, %s36
    %p50 = scmp.eq.s32.totalorder %s28, 1
    %p51 = por %p49, %p50
    %p53 = scmp.ne.s32.totalorder %s36, %s52
    %p54 = scmp.eq.s32.totalorder %s28, 0
    %p55 = por %p53, %p54
    %s56 = ssub.s32 %s22, %s29
    %p57 = scmp.eq.s32.totalorder %s56, 0
    %s59 = sadd.s32 %s58, 1
    %s60 = scalar_select %p57, %s58, %s59
    %p63 = pneg %p57
    %p64 = scmp.eq.s32.totalorder %s22, 1
    %p65 = por %p63, %p64
    %p66 = scmp.ne.s32.totalorder %s58, %s61
    %p67 = scmp.eq.s32.totalorder %s22, 0
    %p68 = por %p66, %p67
    %p69 = scmp.ne.s32.totalorder %s58, %s61
    %p70 = scmp.eq.s32.totalorder %s27, 1
    %p71 = por %p69, %p70
    %p72 = scmp.ne.s32.totalorder %s61, %s62
    %p73 = scmp.eq.s32.totalorder %s27, 0
    %p74 = por %p72, %p73
    %p75 = scmp.ne.s32.totalorder %s61, %s62
    %p76 = scmp.eq.s32.totalorder %s28, 1
    %p77 = por %p75, %p76
    %p79 = scmp.ne.s32.totalorder %s62, %s78
    %p80 = scmp.eq.s32.totalorder %s28, 0
    %p81 = por %p79, %p80
    %s83 = sadd.s32 %s82, 1
    %p86 = scmp.eq.s32.totalorder %s22, 1
    %p87 = scmp.ne.s32.totalorder %s82, %s84
    %p88 = scmp.eq.s32.totalorder %s22, 0
    %p89 = por %p87, %p88
    %p90 = scmp.ne.s32.totalorder %s82, %s84
    %p91 = scmp.eq.s32.totalorder %s27, 1
    %p92 = por %p90, %p91
    %p93 = scmp.ne.s32.totalorder %s84, %s85
    %p94 = scmp.eq.s32.totalorder %s27, 0
    %p95 = por %p93, %p94
    %p96 = scmp.ne.s32.totalorder %s84, %s85
    %p97 = scmp.eq.s32.totalorder %s28, 1
    %p98 = por %p96, %p97
    %p100 = scmp.ne.s32.totalorder %s85, %s99
    %p101 = scmp.eq.s32.totalorder %s28, 0
    %p102 = por %p100, %p101
    %s104 = sadd.s32 %s103, 1
    %p107 = scmp.eq.s32.totalorder %s22, 1
    %p108 = scmp.ne.s32.totalorder %s103, %s105
    %p109 = scmp.eq.s32.totalorder %s22, 0
    %p110 = por %p108, %p109
    %p111 = scmp.ne.s32.totalorder %s103, %s105
    %p112 = scmp.eq.s32.totalorder %s27, 1
    %p113 = por %p111, %p112
    %p114 = scmp.ne.s32.totalorder %s105, %s106
    %p115 = scmp.eq.s32.totalorder %s27, 0
    %p116 = por %p114, %p115
    %p117 = scmp.ne.s32.totalorder %s105, %s106
    %p118 = scmp.eq.s32.totalorder %s28, 1
    %p119 = por %p117, %p118
    %p121 = scmp.ne.s32.totalorder %s106, %s120
    %p122 = scmp.eq.s32.totalorder %s28, 0
    %p123 = por %p121, %p122
    %s125 = sadd.s32 %s124, 1
    %p128 = scmp.eq.s32.totalorder %s22, 1
    %p129 = scmp.ne.s32.totalorder %s124, %s126
    %p130 = scmp.eq.s32.totalorder %s22, 0
    %p131 = por %p129, %p130
    %p132 = scmp.ne.s32.totalorder %s124, %s126
    %p133 = scmp.eq.s32.totalorder %s27, 1
    %p134 = por %p132, %p133
    %p135 = scmp.ne.s32.totalorder %s126, %s127
    %p136 = scmp.eq.s32.totalorder %s27, 0
    %p137 = por %p135, %p136
    %p138 = scmp.ne.s32.totalorder %s126, %s127
    %p139 = scmp.eq.s32.totalorder %s28, 1
    %p140 = por %p138, %p139
    %p142 = scmp.ne.s32.totalorder %s127, %s141
    %p143 = scmp.eq.s32.totalorder %s28, 0
    %p144 = por %p142, %p143
    %s146 = sadd.s32 %s145, 1
    %p149 = scmp.eq.s32.totalorder %s22, 1
    %p150 = scmp.ne.s32.totalorder %s145, %s147
    %p151 = scmp.eq.s32.totalorder %s22, 0
    %p152 = por %p150, %p151
    %p153 = scmp.ne.s32.totalorder %s145, %s147
    %p154 = scmp.eq.s32.totalorder %s27, 1
    %p155 = por %p153, %p154
    %p156 = scmp.ne.s32.totalorder %s147, %s148
    %p157 = scmp.eq.s32.totalorder %s27, 0
    %p158 = por %p156, %p157
    %p159 = scmp.ne.s32.totalorder %s147, %s148
    %p160 = scmp.eq.s32.totalorder %s28, 1
    %p161 = por %p159, %p160
    %p163 = scmp.ne.s32.totalorder %s148, %s162
    %p164 = scmp.eq.s32.totalorder %s28, 0
    %p165 = por %p163, %p164
    %s167 = sadd.s32 %s166, 1
    %p170 = scmp.eq.s32.totalorder %s22, 1
    %p171 = scmp.ne.s32.totalorder %s166, %s168
    %p172 = scmp.eq.s32.totalorder %s22, 0
    %p173 = por %p171, %p172
    %p174 = scmp.ne.s32.totalorder %s166, %s168
    %p175 = scmp.eq.s32.totalorder %s27, 1
    %p176 = por %p174, %p175
    %p177 = scmp.ne.s32.totalorder %s168, %s169
    %p178 = scmp.eq.s32.totalorder %s27, 0
    %p179 = por %p177, %p178
    %p180 = scmp.ne.s32.totalorder %s168, %s169
    %p181 = scmp.eq.s32.totalorder %s28, 1
    %p182 = por %p180, %p181
    %p184 = scmp.ne.s32.totalorder %s169, %s183
    %p185 = scmp.eq.s32.totalorder %s28, 0
    %p186 = por %p184, %p185
    %s188 = sadd.s32 %s187, 1
    %p191 = scmp.eq.s32.totalorder %s22, 1
    %p192 = scmp.ne.s32.totalorder %s187, %s189
    %p193 = scmp.eq.s32.totalorder %s22, 0
    %p194 = por %p192, %p193
    %p195 = scmp.ne.s32.totalorder %s187, %s189
    %p196 = scmp.eq.s32.totalorder %s27, 1
    %p197 = por %p195, %p196
    %p198 = scmp.ne.s32.totalorder %s189, %s190
    %p199 = scmp.eq.s32.totalorder %s27, 0
    %p200 = por %p198, %p199
    %p201 = scmp.ne.s32.totalorder %s189, %s190
    %p202 = scmp.eq.s32.totalorder %s28, 1
    %p203 = por %p201, %p202
    %p205 = scmp.ne.s32.totalorder %s190, %s204
    %p206 = scmp.eq.s32.totalorder %s28, 0
    %p207 = por %p205, %p206
    %s209 = sadd.s32 %s208, 1
    %p212 = scmp.eq.s32.totalorder %s22, 1
    %p213 = scmp.ne.s32.totalorder %s208, %s210
    %p214 = scmp.eq.s32.totalorder %s22, 0
    %p215 = por %p213, %p214
    %p216 = scmp.ne.s32.totalorder %s208, %s210
    %p217 = scmp.eq.s32.totalorder %s27, 1
    %p218 = por %p216, %p217
    %p219 = scmp.ne.s32.totalorder %s210, %s211
    %p220 = scmp.eq.s32.totalorder %s27, 0
    %p221 = por %p219, %p220
    %p222 = scmp.ne.s32.totalorder %s210, %s211
    %p223 = scmp.eq.s32.totalorder %s28, 1
    %p224 = por %p222, %p223
    %p226 = scmp.ne.s32.totalorder %s211, %s225
    %p227 = scmp.eq.s32.totalorder %s28, 0
    %p228 = por %p226, %p227
    %s230 = sadd.s32 %s229, 1
    %p233 = scmp.eq.s32.totalorder %s22, 1
    %p234 = scmp.ne.s32.totalorder %s229, %s231
    %p235 = scmp.eq.s32.totalorder %s22, 0
    %p236 = por %p234, %p235
    %p237 = scmp.ne.s32.totalorder %s229, %s231
    %p238 = scmp.eq.s32.totalorder %s27, 1
    %p239 = por %p237, %p238
    %p240 = scmp.ne.s32.totalorder %s231, %s232
    %p241 = scmp.eq.s32.totalorder %s27, 0
    %p242 = por %p240, %p241
    %p243 = scmp.ne.s32.totalorder %s231, %s232
    %p244 = scmp.eq.s32.totalorder %s28, 1
    %p245 = por %p243, %p244
    %p247 = scmp.ne.s32.totalorder %s232, %s246
    %p248 = scmp.eq.s32.totalorder %s28, 0
    %p249 = por %p247, %p248
    %s251 = sadd.s32 %s250, 1
    %p254 = scmp.eq.s32.totalorder %s22, 1
    %p255 = scmp.ne.s32.totalorder %s250, %s252
    %p256 = scmp.eq.s32.totalorder %s22, 0
    %p257 = por %p255, %p256
    %p258 = scmp.ne.s32.totalorder %s250, %s252
    %p259 = scmp.eq.s32.totalorder %s27, 1
    %p260 = por %p258, %p259
    %p261 = scmp.ne.s32.totalorder %s252, %s253
    %p262 = scmp.eq.s32.totalorder %s27, 0
    %p263 = por %p261, %p262
    %p264 = scmp.ne.s32.totalorder %s252, %s253
    %p265 = scmp.eq.s32.totalorder %s28, 1
    %p266 = por %p264, %p265
    %p268 = scmp.ne.s32.totalorder %s253, %s267
    %p269 = scmp.eq.s32.totalorder %s28, 0
    %p270 = por %p268, %p269
    %s272 = sadd.s32 %s271, 1
    %p275 = scmp.eq.s32.totalorder %s22, 1
    %p276 = scmp.ne.s32.totalorder %s271, %s273
    %p277 = scmp.eq.s32.totalorder %s22, 0
    %p278 = por %p276, %p277
    %p279 = scmp.ne.s32.totalorder %s271, %s273
    %p280 = scmp.eq.s32.totalorder %s27, 1
    %p281 = por %p279, %p280
    %p282 = scmp.ne.s32.totalorder %s273, %s274
    %p283 = scmp.eq.s32.totalorder %s27, 0
    %p284 = por %p282, %p283
    %p285 = scmp.ne.s32.totalorder %s273, %s274
    %p286 = scmp.eq.s32.totalorder %s28, 1
    %p287 = por %p285, %p286
    %p289 = scmp.ne.s32.totalorder %s274, %s288
    %p290 = scmp.eq.s32.totalorder %s28, 0
    %p291 = por %p289, %p290
    %s293 = sadd.s32 %s292, 1
    %p296 = scmp.eq.s32.totalorder %s22, 1
    %p297 = scmp.ne.s32.totalorder %s292, %s294
    %p298 = scmp.eq.s32.totalorder %s22, 0
    %p299 = por %p297, %p298
    %p300 = scmp.ne.s32.totalorder %s292, %s294
    %p301 = scmp.eq.s32.totalorder %s27, 1
    %p302 = por %p300, %p301
    %p303 = scmp.ne.s32.totalorder %s294, %s295
    %p304 = scmp.eq.s32.totalorder %s27, 0
    %p305 = por %p303, %p304
    %p306 = scmp.ne.s32.totalorder %s294, %s295
    %p307 = scmp.eq.s32.totalorder %s28, 1
    %p308 = por %p306, %p307
    %p310 = scmp.ne.s32.totalorder %s295, %s309
    %p311 = scmp.eq.s32.totalorder %s28, 0
    %p312 = por %p310, %p311
    %s314 = sadd.s32 %s313, 1
    %p317 = scmp.eq.s32.totalorder %s22, 1
    %p318 = scmp.ne.s32.totalorder %s313, %s315
    %p319 = scmp.eq.s32.totalorder %s22, 0
    %p320 = por %p318, %p319
    %p321 = scmp.ne.s32.totalorder %s313, %s315
    %p322 = scmp.eq.s32.totalorder %s27, 1
    %p323 = por %p321, %p322
    %p324 = scmp.ne.s32.totalorder %s315, %s316
    %p325 = scmp.eq.s32.totalorder %s27, 0
    %p326 = por %p324, %p325
    %p327 = scmp.ne.s32.totalorder %s315, %s316
    %p328 = scmp.eq.s32.totalorder %s28, 1
    %p329 = por %p327, %p328
    %p331 = scmp.ne.s32.totalorder %s316, %s330
    %p332 = scmp.eq.s32.totalorder %s28, 0
    %p333 = por %p331, %p332
    %s335 = sadd.s32 %s334, 1
    %p338 = scmp.eq.s32.totalorder %s22, 1
    %p339 = scmp.ne.s32.totalorder %s334, %s336
    %p340 = scmp.eq.s32.totalorder %s22, 0
    %p341 = por %p339, %p340
    %p342 = scmp.ne.s32.totalorder %s334, %s336
    %p343 = scmp.eq.s32.totalorder %s27, 1
    %p344 = por %p342, %p343
    %p345 = scmp.ne.s32.totalorder %s336, %s337
    %p346 = scmp.eq.s32.totalorder %s27, 0
    %p347 = por %p345, %p346
    %p348 = scmp.ne.s32.totalorder %s336, %s337
    %p349 = scmp.eq.s32.totalorder %s28, 1
    %p350 = por %p348, %p349
    %p352 = scmp.ne.s32.totalorder %s337, %s351
    %p353 = scmp.eq.s32.totalorder %s28, 0
    %p354 = por %p352, %p353
    %s356 = sadd.s32 %s355, 1
    %p359 = scmp.eq.s32.totalorder %s22, 1
    %p360 = scmp.ne.s32.totalorder %s355, %s357
    %p361 = scmp.eq.s32.totalorder %s22, 0
    %p362 = por %p360, %p361
    %p363 = scmp.ne.s32.totalorder %s355, %s357
    %p364 = scmp.eq.s32.totalorder %s27, 1
    %p365 = por %p363, %p364
    %p366 = scmp.ne.s32.totalorder %s357, %s358
    %p367 = scmp.eq.s32.totalorder %s27, 0
    %p368 = por %p366, %p367
    %p369 = scmp.ne.s32.totalorder %s357, %s358
    %p370 = scmp.eq.s32.totalorder %s28, 1
    %p371 = por %p369, %p370
    %p373 = scmp.ne.s32.totalorder %s358, %s372
    %p374 = scmp.eq.s32.totalorder %s28, 0
    %p375 = por %p373, %p374
    %s376 = ssub.s32 %s22, %s29
    %p377 = scmp.eq.s32.totalorder %s376, 0
    %s379 = sadd.s32 %s378, 1
    %s380 = scalar_select %p377, %s378, %s379
    %p383 = pneg %p377
    %p384 = scmp.eq.s32.totalorder %s22, 1
    %p385 = por %p383, %p384
    %p386 = scmp.ne.s32.totalorder %s378, %s381
    %p387 = scmp.eq.s32.totalorder %s22, 0
    %p388 = por %p386, %p387
    %p389 = scmp.ne.s32.totalorder %s378, %s381
    %p390 = scmp.eq.s32.totalorder %s27, 1
    %p391 = por %p389, %p390
    %p392 = scmp.ne.s32.totalorder %s381, %s382
    %p393 = scmp.eq.s32.totalorder %s27, 0
    %p394 = por %p392, %p393
    %p395 = scmp.ne.s32.totalorder %s381, %s382
    %p396 = scmp.eq.s32.totalorder %s28, 1
    %p397 = por %p395, %p396
    %p399 = scmp.ne.s32.totalorder %s382, %s398
    %p400 = scmp.eq.s32.totalorder %s28, 0
    %p401 = por %p399, %p400
    %p402 = scmp.le.s32.totalorder 1, %s22
    %p403 = scmp.lt.s32.totalorder %s22, 3
    %p404 = pnand %p402, %p403
    %p405 = pneg %p404
    // Predicated region
    $region9: #{tpu_custom_call.1} parent=5 // pred_check
      _
    $region10: #{tpu_custom_call.1} parent=5 // pred_check_branch
      %407 = sbr.rel (%p404) target = $region12
    $region11: #{tpu_custom_call.1} parent=5 // pred_region
      %s408 = ssub.s32 %s22, 1
      // Predicated region
      $region13: #{tpu_custom_call.1} parent=11 // pred_check
        %p409 = pneg %p95
      $region14: #{tpu_custom_call.1} parent=11 // pred_check_branch
        %411 = sbr.rel (%p409) target = $region16
      $region15: #{tpu_custom_call.1} parent=11 // pred_region
        _
      $region16: #{tpu_custom_call.1} parent=11 // pred_fallthru
        _
      // Predicated region
      $region17: #{tpu_custom_call.1} parent=11 // pred_check
        %p412 = pneg %p116
      $region18: #{tpu_custom_call.1} parent=11 // pred_check_branch
        %414 = sbr.rel (%p412) target = $region20
      $region19: #{tpu_custom_call.1} parent=11 // pred_region
        _
      $region20: #{tpu_custom_call.1} parent=11 // pred_fallthru
        _
      // Predicated region
      $region21: #{tpu_custom_call.1} parent=11 // pred_check
        %p415 = pneg %p137
      $region22: #{tpu_custom_call.1} parent=11 // pred_check_branch
        %417 = sbr.rel (%p415) target = $region24
      $region23: #{tpu_custom_call.1} parent=11 // pred_region
        _
      $region24: #{tpu_custom_call.1} parent=11 // pred_fallthru
        _
      // Predicated region
      $region25: #{tpu_custom_call.1} parent=11 // pred_check
        %p418 = pneg %p158
      $region26: #{tpu_custom_call.1} parent=11 // pred_check_branch
        %420 = sbr.rel (%p418) target = $region28
      $region27: #{tpu_custom_call.1} parent=11 // pred_region
        _
      $region28: #{tpu_custom_call.1} parent=11 // pred_fallthru
        _
      // Predicated region
      $region29: #{tpu_custom_call.1} parent=11 // pred_check
        %p421 = pneg %p179
      $region30: #{tpu_custom_call.1} parent=11 // pred_check_branch
        %423 = sbr.rel (%p421) target = $region32
      $region31: #{tpu_custom_call.1} parent=11 // pred_region
        _
      $region32: #{tpu_custom_call.1} parent=11 // pred_fallthru
        _
      // Predicated region
      $region33: #{tpu_custom_call.1} parent=11 // pred_check
        %p424 = pneg %p200
      $region34: #{tpu_custom_call.1} parent=11 // pred_check_branch
        %426 = sbr.rel (%p424) target = $region36
      $region35: #{tpu_custom_call.1} parent=11 // pred_region
        _
      $region36: #{tpu_custom_call.1} parent=11 // pred_fallthru
        _
      // Predicated region
      $region37: #{tpu_custom_call.1} parent=11 // pred_check
        %p427 = pneg %p221
      $region38: #{tpu_custom_call.1} parent=11 // pred_check_branch
        %429 = sbr.rel (%p427) target = $region40
      $region39: #{tpu_custom_call.1} parent=11 // pred_region
        _
      $region40: #{tpu_custom_call.1} parent=11 // pred_fallthru
        _
      // Predicated region
      $region41: #{tpu_custom_call.1} parent=11 // pred_check
        %p430 = pneg %p242
      $region42: #{tpu_custom_call.1} parent=11 // pred_check_branch
        %432 = sbr.rel (%p430) target = $region44
      $region43: #{tpu_custom_call.1} parent=11 // pred_region
        _
      $region44: #{tpu_custom_call.1} parent=11 // pred_fallthru
        _
      // Predicated region
      $region45: #{tpu_custom_call.1} parent=11 // pred_check
        %p433 = pneg %p263
      $region46: #{tpu_custom_call.1} parent=11 // pred_check_branch
        %435 = sbr.rel (%p433) target = $region48
      $region47: #{tpu_custom_call.1} parent=11 // pred_region
        _
      $region48: #{tpu_custom_call.1} parent=11 // pred_fallthru
        _
      // Predicated region
      $region49: #{tpu_custom_call.1} parent=11 // pred_check
        %p436 = pneg %p284
      $region50: #{tpu_custom_call.1} parent=11 // pred_check_branch
        %438 = sbr.rel (%p436) target = $region52
      $region51: #{tpu_custom_call.1} parent=11 // pred_region
        _
      $region52: #{tpu_custom_call.1} parent=11 // pred_fallthru
        _
      // Predicated region
      $region53: #{tpu_custom_call.1} parent=11 // pred_check
        %p439 = pneg %p305
      $region54: #{tpu_custom_call.1} parent=11 // pred_check_branch
        %441 = sbr.rel (%p439) target = $region56
      $region55: #{tpu_custom_call.1} parent=11 // pred_region
        _
      $region56: #{tpu_custom_call.1} parent=11 // pred_fallthru
        _
      // Predicated region
      $region57: #{tpu_custom_call.1} parent=11 // pred_check
        %p442 = pneg %p326
      $region58: #{tpu_custom_call.1} parent=11 // pred_check_branch
        %444 = sbr.rel (%p442) target = $region60
      $region59: #{tpu_custom_call.1} parent=11 // pred_region
        _
      $region60: #{tpu_custom_call.1} parent=11 // pred_fallthru
        _
      // Predicated region
      $region61: #{tpu_custom_call.1} parent=11 // pred_check
        %p445 = pneg %p347
      $region62: #{tpu_custom_call.1} parent=11 // pred_check_branch
        %447 = sbr.rel (%p445) target = $region64
      $region63: #{tpu_custom_call.1} parent=11 // pred_region
        _
      $region64: #{tpu_custom_call.1} parent=11 // pred_fallthru
        _
      // Predicated region
      $region65: #{tpu_custom_call.1} parent=11 // pred_check
        %p448 = pneg %p368
      $region66: #{tpu_custom_call.1} parent=11 // pred_check_branch
        %450 = sbr.rel (%p448) target = $region68
      $region67: #{tpu_custom_call.1} parent=11 // pred_region
        _
      $region68: #{tpu_custom_call.1} parent=11 // pred_fallthru
        _
    $region12: #{tpu_custom_call.1} parent=5 // pred_fallthru
      _
    %p451 = scmp.lt.s32.totalorder %s22, 2
    // Predicated region
    $region69: #{tpu_custom_call.1} parent=5 // pred_check
      %p452 = pneg %p451
    $region70: #{tpu_custom_call.1} parent=5 // pred_check_branch
      %454 = sbr.rel (%p452) target = $region72
    $region71: #{tpu_custom_call.1} parent=5 // pred_region
      // Predicated region
      $region73: #{tpu_custom_call.1} parent=71 // pred_check
        %p455 = pneg %p42
      $region74: #{tpu_custom_call.1} parent=71 // pred_check_branch
        %457 = sbr.rel (%p455) target = $region76
      $region75: #{tpu_custom_call.1} parent=71 // pred_region
        %s458 = smul.u32 4, %s22
        %p459 = scmp.lt.s32.totalorder %s458, 7
        %s460 = scalar_select %p459, %s458, 7
        %s461 = smul.addr %s460, 2
        %s462 = smul.addr %s461, 4
        %s463 = scalar_lea.vmem %s0, %s462
        %s464 = smul.u32 4, %s22
      $region76: #{tpu_custom_call.1} parent=71 // pred_fallthru
        _
      // Predicated region
      $region77: #{tpu_custom_call.1} parent=71 // pred_check
        %p465 = pneg %p68
      $region78: #{tpu_custom_call.1} parent=71 // pred_check_branch
        %467 = sbr.rel (%p465) target = $region80
      $region79: #{tpu_custom_call.1} parent=71 // pred_region
        %s468 = smul.u32 4, %s22
        %p469 = scmp.lt.s32.totalorder %s468, 7
        %s470 = scalar_select %p469, %s468, 7
        %s471 = smul.addr %s470, 2
        %s472 = smul.addr %s471, 4
        %s473 = scalar_lea.vmem %s1, %s472
        %s474 = smul.u32 4, %s22
      $region80: #{tpu_custom_call.1} parent=71 // pred_fallthru
        _
    $region72: #{tpu_custom_call.1} parent=5 // pred_fallthru
      _
    %p475 = scmp.le.s32.totalorder 1, %s22
    %p476 = scmp.lt.s32.totalorder %s22, 3
    %p477 = pnand %p475, %p476
    %p478 = pneg %p477
    // Predicated region
    $region81: #{tpu_custom_call.1} parent=5 // pred_check
      _
    $region82: #{tpu_custom_call.1} parent=5 // pred_check_branch
      %480 = sbr.rel (%p477) target = $region84
    $region83: #{tpu_custom_call.1} parent=5 // pred_region
      %s481 = ssub.s32 %s22, 1
      %s482 = smul.u32 4, %s27
      %p483 = scmp.lt.s32.totalorder %s482, 7
      %s484 = scalar_select %p483, %s482, 7
      %s485 = smul.addr %s484, 2
      %s486 = smul.addr %s485, 4
      %s487 = scalar_lea.vmem %s0, %s486
      %p488 = pneg %p48
      %p489 = pneg %p45
      %s490 = smul.u32 4, %s27
      %p491 = scmp.lt.s32.totalorder %s490, 7
      %s492 = scalar_select %p491, %s490, 7
      %s493 = smul.addr %s492, 2
      %s494 = smul.addr %s493, 4
      %s495 = scalar_lea.vmem %s1, %s494
      %p496 = pneg %p74
      %p497 = pneg %p71
      %p498 = pneg %p95
      %p499 = pneg %p92
      %p500 = pneg %p116
      %p501 = pneg %p113
      %p502 = pneg %p137
      %p503 = pneg %p134
      %p504 = pneg %p158
      %p505 = pneg %p155
      %p506 = pneg %p179
      %p507 = pneg %p176
      %p508 = pneg %p200
      %p509 = pneg %p197
      %p510 = pneg %p221
      %p511 = pneg %p218
      %p512 = pneg %p242
      %p513 = pneg %p239
      %p514 = pneg %p263
      %p515 = pneg %p260
      %p516 = pneg %p284
      %p517 = pneg %p281
      %p518 = pneg %p305
      %p519 = pneg %p302
      %p520 = pneg %p326
      %p521 = pneg %p323
      %p522 = pneg %p347
      %p523 = pneg %p344
      %p524 = pneg %p368
      %p525 = pneg %p365
      %p526 = pneg %p394
      %p527 = pneg %p391
      %s528 = smul.u32 4, %s27
      %p529 = scmp.lt.s32.totalorder %s528, 7
      %s530 = scalar_select %p529, %s528, 7
      %s531 = smul.addr %s530, 2
      %s532 = smul.addr %s531, 4
      %s533 = scalar_lea.vmem %s16, %s532
      %s534 = smul.u32 4, %s27
      %p535 = scmp.lt.s32.totalorder %s534, 7
      %s536 = scalar_select %p535, %s534, 7
      %s537 = smul.addr %s536, 2
      %s538 = smul.addr %s537, 4
      %s539 = scalar_lea.vmem %s0, %s538
      %s540 = smul.u32 4, %s27
      %s541 = smul.u32 4, %s27
      %p542 = scmp.lt.s32.totalorder %s541, 7
      %s543 = scalar_select %p542, %s541, 7
      %s544 = smul.addr %s543, 2
      %s545 = smul.addr %s544, 4
      %s546 = scalar_lea.vmem %s1, %s545
      %s547 = smul.u32 4, %s27
      %s548 = smul.u32 4, %s27
      %p549 = scmp.lt.s32.totalorder %s548, 7
      %s550 = scalar_select %p549, %s548, 7
      %s551 = smul.addr %s550, 2
      %s552 = smul.addr %s551, 4
      %s553 = scalar_lea.vmem %s16, %s552
      %s554 = smul.u32 4, %s27
      %v555 = vld [vmem:[%s2] sm:$0xff]
      %v556 = vld [vmem:[%s2 + $0x8] sm:$0xff]
      %v557 = vld [vmem:[%s2 + $0x10] sm:$0xff]
      %v558 = vld [vmem:[%s2 + $0x18] sm:$0xff]
      %v559 = vld [vmem:[%s4] sm:$0xff]
      %v560 = vld [vmem:[%s4 + $0x8] sm:$0xff]
      %v561 = vld [vmem:[%s4 + $0x10] sm:$0xff]
      %v562 = vld [vmem:[%s4 + $0x18] sm:$0xff]
      %v563 = vld [vmem:[%s4 + $0x20] sm:$0xff]
      %v564 = vld [vmem:[%s4 + $0x28] sm:$0xff]
      %v565 = vld [vmem:[%s4 + $0x30] sm:$0xff]
      %v566 = vld [vmem:[%s4 + $0x38] sm:$0xff]
      %v567 = vld [vmem:[%s6] sm:$0xff]
      %v568 = vld [vmem:[%s6 + $0x8] sm:$0xff]
      %v569 = vld [vmem:[%s6 + $0x10] sm:$0xff]
      %v570 = vld [vmem:[%s6 + $0x18] sm:$0xff]
      %v571 = vld [vmem:[%s6 + $0x20] sm:$0xff]
      %v572 = vld [vmem:[%s6 + $0x28] sm:$0xff]
      %v573 = vld [vmem:[%s8] sm:$0xff]
      %v574 = vld [vmem:[%s8 + $0x8] sm:$0xff]
      %v575 = vld [vmem:[%s8 + $0x10] sm:$0xff]
      %v576 = vld [vmem:[%s8 + $0x18] sm:$0xff]
      %v577 = vld [vmem:[%s10] sm:$0xff]
      %v578 = vld [vmem:[%s10 + $0x8] sm:$0xff]
      %v579 = vld [vmem:[%s10 + $0x10] sm:$0xff]
      %v580 = vld [vmem:[%s10 + $0x18] sm:$0xff]
      %v581 = vld [vmem:[%s10 + $0x20] sm:$0xff]
      %v582 = vld [vmem:[%s10 + $0x28] sm:$0xff]
      %v583 = vld [vmem:[%s10 + $0x30] sm:$0xff]
      %v584 = vld [vmem:[%s10 + $0x38] sm:$0xff]
      %v585 = vld [vmem:[%s12] sm:$0xff]
      %v586 = vld [vmem:[%s12 + $0x8] sm:$0xff]
      %v587 = vld [vmem:[%s12 + $0x10] sm:$0xff]
      %v588 = vld [vmem:[%s12 + $0x18] sm:$0xff]
      %v589 = vld [vmem:[%s14] sm:$0xff]
      %v590 = vld [vmem:[%s14 + $0x8] sm:$0xff]
      %v591 = vld [vmem:[%s3] sm:$0xff]
      %v592 = vld [vmem:[%s3 + $0x8] sm:$0xff]
      %v593 = vld [vmem:[%s3 + $0x10] sm:$0xff]
      %v594 = vld [vmem:[%s3 + $0x18] sm:$0xff]
      %v595 = vld [vmem:[%s5] sm:$0xff]
      %v596 = vld [vmem:[%s5 + $0x8] sm:$0xff]
      %v597 = vld [vmem:[%s5 + $0x10] sm:$0xff]
      %v598 = vld [vmem:[%s5 + $0x18] sm:$0xff]
      %v599 = vld [vmem:[%s5 + $0x20] sm:$0xff]
      %v600 = vld [vmem:[%s5 + $0x28] sm:$0xff]
      %v601 = vld [vmem:[%s5 + $0x30] sm:$0xff]
      %v602 = vld [vmem:[%s5 + $0x38] sm:$0xff]
      %v603 = vld [vmem:[%s7] sm:$0xff]
      %v604 = vld [vmem:[%s7 + $0x8] sm:$0xff]
      %v605 = vld [vmem:[%s7 + $0x10] sm:$0xff]
      %v606 = vld [vmem:[%s7 + $0x18] sm:$0xff]
      %v607 = vld [vmem:[%s7 + $0x20] sm:$0xff]
      %v608 = vld [vmem:[%s7 + $0x28] sm:$0xff]
      %v609 = vld [vmem:[%s9] sm:$0xff]
      %v610 = vld [vmem:[%s9 + $0x8] sm:$0xff]
      %v611 = vld [vmem:[%s9 + $0x10] sm:$0xff]
      %v612 = vld [vmem:[%s9 + $0x18] sm:$0xff]
      %v613 = vld [vmem:[%s11] sm:$0xff]
      %v614 = vld [vmem:[%s11 + $0x8] sm:$0xff]
      %v615 = vld [vmem:[%s11 + $0x10] sm:$0xff]
      %v616 = vld [vmem:[%s11 + $0x18] sm:$0xff]
      %v617 = vld [vmem:[%s11 + $0x20] sm:$0xff]
      %v618 = vld [vmem:[%s11 + $0x28] sm:$0xff]
      %v619 = vld [vmem:[%s11 + $0x30] sm:$0xff]
      %v620 = vld [vmem:[%s11 + $0x38] sm:$0xff]
      %v621 = vld [vmem:[%s13] sm:$0xff]
      %v622 = vld [vmem:[%s13 + $0x8] sm:$0xff]
      %v623 = vld [vmem:[%s13 + $0x10] sm:$0xff]
      %v624 = vld [vmem:[%s13 + $0x18] sm:$0xff]
      %v625 = vld [vmem:[%s15] sm:$0xff]
      %v626 = vld [vmem:[%s15 + $0x8] sm:$0xff]
      %v627 = vld [vmem:[%s539] sm:$0x77]
      %v628 = vld [vmem:[%s546] sm:$0x77]
      %v630 = vcombine.high %v627, %v627
      %v632 = vcombine.high %v628, %v628
      %634 = vset.pattern.permute.xlu0 0
      %635 = vperm.xlu0 %634, %v609
      %v636 = vpop.permute.xlu0 %635
      %639 = vset.pattern.permute.xlu0 0
      %640 = vperm.xlu0 %639, %v610
      %v641 = vpop.permute.xlu0 %640
      %644 = vset.pattern.permute.xlu0 0
      %645 = vperm.xlu0 %644, %v611
      %v646 = vpop.permute.xlu0 %645
      %649 = vset.pattern.permute.xlu0 0
      %650 = vperm.xlu0 %649, %v612
      %v651 = vpop.permute.xlu0 %650
      %vm653 = vcmask 23552
      %v655 = vsel %vm653, %v573, 0
      %v658 = vsel %vm653, %v574, 0
      %v661 = vsel %vm653, %v575, 0
      %v664 = vsel %vm653, %v576, 0
      %vm666 = vcmask 1042432
      %v667 = vsel %vm666, %v627, 0
      %v669 = vsel %vm666, %v630, 0
      %v671 = vsel %vm666, %v628, 0
      %v673 = vsel %vm666, %v632, 0
      %675 = vmatprep.subr.mxu0 0.0
      %676 = vmatpush1.msra.mxu0 0.0
      %677 = vmatprep.subr.mxu0 0.0
      %678 = vmatpush1.msra.mxu0 0.0
      %679 = vmatprep.subr.mxu0 0.0
      %680 = vmatpush1.msra.mxu0 0.0
      %681 = vmatprep.subr.mxu0 0.0
      %682 = vmatpush1.msra.mxu0 0.0
      %683 = vmatprep.subr.mxu0 0.0
      %684 = vmatpush1.msra.mxu0 0.0
      %685 = vmatprep.subr.mxu0 0.0
      %686 = vmatpush1.msra.mxu0 0.0
      %687 = vmatprep.subr.mxu0 0.0
      %688 = vmatpush1.msra.mxu0 0.0
      %689 = vmatprep.subr.mxu0 0.0
      %690 = vmatpush1.msra.mxu0 0.0
      %691 = vmatprep.subr.mxu0 0.0
      %692 = vmatpush1.msra.mxu0 0.0
      %693 = vmatprep.subr.mxu0 0.0
      %694 = vmatpush1.msra.mxu0 0.0
      %695 = vmatprep.subr.mxu0 0.0
      %696 = vmatpush1.msra.mxu0 0.0
      %697 = vmatprep.subr.mxu0 0.0
      %698 = vmatpush1.msra.mxu0 0.0
      %699 = vmatprep.subr.mxu0 0.0
      %700 = vmatpush1.msra.mxu0 0.0
      %701 = vmatprep.subr.mxu0 0.0
      %702 = vmatpush1.msra.mxu0 0.0
      %703 = vmatprep.subr.mxu0 0.0
      %704 = vmatpush1.msra.mxu0 0.0
      %705 = vmatprep.subr.mxu0 %v669
      %706 = vmatpush1.msra.mxu0 %v667
      %707 = vmatprep.subr.mxu0 0.0
      %708 = vmatpush2.msra.mxu0 0.0
      %709 = vmatprep.subr.mxu0 0.0
      %710 = vmatpush2.msra.mxu0 0.0
      %711 = vmatprep.subr.mxu0 0.0
      %712 = vmatpush2.msra.mxu0 0.0
      %713 = vmatprep.subr.mxu0 0.0
      %714 = vmatpush2.msra.mxu0 0.0
      %715 = vmatprep.subr.mxu0 0.0
      %716 = vmatpush2.msra.mxu0 0.0
      %717 = vmatprep.subr.mxu0 0.0
      %718 = vmatpush2.msra.mxu0 0.0
      %719 = vmatprep.subr.mxu0 0.0
      %720 = vmatpush2.msra.mxu0 0.0
      %721 = vmatprep.subr.mxu0 0.0
      %722 = vmatpush2.msra.mxu0 0.0
      %723 = vmatprep.subr.mxu0 0.0
      %724 = vmatpush2.msra.mxu0 0.0
      %725 = vmatprep.subr.mxu0 0.0
      %726 = vmatpush2.msra.mxu0 0.0
      %727 = vmatprep.subr.mxu0 0.0
      %728 = vmatpush2.msra.mxu0 0.0
      %729 = vmatprep.subr.mxu0 0.0
      %730 = vmatpush2.msra.mxu0 0.0
      %731 = vmatprep.subr.mxu0 0.0
      %732 = vmatpush2.msra.mxu0 0.0
      %733 = vmatprep.subr.mxu0 0.0
      %734 = vmatpush2.msra.mxu0 0.0
      %735 = vmatprep.subr.mxu0 0.0
      %736 = vmatpush2.msra.mxu0 0.0
      %737 = vmatprep.subr.mxu0 0.0
      %738 = vmatpush2.msra.mxu0 0.0
      %739 = vmatprep.mubr.f32.mxu0 0.0
      %740 = vmatmul.mubr.f32.gmra.mxu0 %v655
      %v741 = vpop.f32.mrf.mxu0
      %v742 = vadd.f32 %v636, %v741
      %v743 = vpop.f32.mrf.mxu0
      %v744 = vadd.f32 %v636, %v743
      %745 = vmatprep.mubr.f32.mxu0 0.0
      %746 = vmatmul.mubr.f32.gmra.mxu0 %v658
      %v747 = vpop.f32.mrf.mxu0
      %v748 = vadd.f32 %v641, %v747
      %v749 = vpop.f32.mrf.mxu0
      %v750 = vadd.f32 %v641, %v749
      %751 = vmatprep.mubr.f32.mxu0 0.0
      %752 = vmatmul.mubr.f32.gmra.mxu0 %v661
      %v753 = vpop.f32.mrf.mxu0
      %v754 = vadd.f32 %v646, %v753
      %v755 = vpop.f32.mrf.mxu0
      %v756 = vadd.f32 %v646, %v755
      %757 = vmatprep.mubr.f32.mxu0 0.0
      %758 = vmatmul.mubr.f32.gmra.mxu0 %v664
      %v759 = vpop.f32.mrf.mxu0
      %v760 = vadd.f32 %v651, %v759
      %v761 = vpop.f32.mrf.mxu0
      %v762 = vadd.f32 %v651, %v761
      %763 = vdwg.mxu0
      %764 = vmatprep.subr.mxu0 0.0
      %765 = vmatpush1.msra.mxu0 0.0
      %766 = vmatprep.subr.mxu0 0.0
      %767 = vmatpush1.msra.mxu0 0.0
      %768 = vmatprep.subr.mxu0 0.0
      %769 = vmatpush1.msra.mxu0 0.0
      %770 = vmatprep.subr.mxu0 0.0
      %771 = vmatpush1.msra.mxu0 0.0
      %772 = vmatprep.subr.mxu0 0.0
      %773 = vmatpush1.msra.mxu0 0.0
      %774 = vmatprep.subr.mxu0 0.0
      %775 = vmatpush1.msra.mxu0 0.0
      %776 = vmatprep.subr.mxu0 0.0
      %777 = vmatpush1.msra.mxu0 0.0
      %778 = vmatprep.subr.mxu0 0.0
      %779 = vmatpush1.msra.mxu0 0.0
      %780 = vmatprep.subr.mxu0 0.0
      %781 = vmatpush1.msra.mxu0 0.0
      %782 = vmatprep.subr.mxu0 0.0
      %783 = vmatpush1.msra.mxu0 0.0
      %784 = vmatprep.subr.mxu0 0.0
      %785 = vmatpush1.msra.mxu0 0.0
      %786 = vmatprep.subr.mxu0 0.0
      %787 = vmatpush1.msra.mxu0 0.0
      %788 = vmatprep.subr.mxu0 0.0
      %789 = vmatpush1.msra.mxu0 0.0
      %790 = vmatprep.subr.mxu0 0.0
      %791 = vmatpush1.msra.mxu0 0.0
      %792 = vmatprep.subr.mxu0 0.0
      %793 = vmatpush1.msra.mxu0 0.0
      %794 = vmatprep.subr.mxu0 %v673
      %795 = vmatpush1.msra.mxu0 %v671
      %796 = vmatprep.subr.mxu0 0.0
      %797 = vmatpush2.msra.mxu0 0.0
      %798 = vmatprep.subr.mxu0 0.0
      %799 = vmatpush2.msra.mxu0 0.0
      %800 = vmatprep.subr.mxu0 0.0
      %801 = vmatpush2.msra.mxu0 0.0
      %802 = vmatprep.subr.mxu0 0.0
      %803 = vmatpush2.msra.mxu0 0.0
      %804 = vmatprep.subr.mxu0 0.0
      %805 = vmatpush2.msra.mxu0 0.0
      %806 = vmatprep.subr.mxu0 0.0
      %807 = vmatpush2.msra.mxu0 0.0
      %808 = vmatprep.subr.mxu0 0.0
      %809 = vmatpush2.msra.mxu0 0.0
      %810 = vmatprep.subr.mxu0 0.0
      %811 = vmatpush2.msra.mxu0 0.0
      %812 = vmatprep.subr.mxu0 0.0
      %813 = vmatpush2.msra.mxu0 0.0
      %814 = vmatprep.subr.mxu0 0.0
      %815 = vmatpush2.msra.mxu0 0.0
      %816 = vmatprep.subr.mxu0 0.0
      %817 = vmatpush2.msra.mxu0 0.0
      %818 = vmatprep.subr.mxu0 0.0
      %819 = vmatpush2.msra.mxu0 0.0
      %820 = vmatprep.subr.mxu0 0.0
      %821 = vmatpush2.msra.mxu0 0.0
      %822 = vmatprep.subr.mxu0 0.0
      %823 = vmatpush2.msra.mxu0 0.0
      %824 = vmatprep.subr.mxu0 0.0
      %825 = vmatpush2.msra.mxu0 0.0
      %826 = vmatprep.subr.mxu0 0.0
      %827 = vmatpush2.msra.mxu0 0.0
      %828 = vmatprep.mubr.f32.mxu0 0.0
      %829 = vmatmul.mubr.f32.gmra.mxu0 %v655
      %v830 = vpop.f32.mrf.mxu0
      %v831 = vadd.f32 %v636, %v830
      %v832 = vpop.f32.mrf.mxu0
      %v833 = vadd.f32 %v636, %v832
      %834 = vmatprep.mubr.f32.mxu0 0.0
      %835 = vmatmul.mubr.f32.gmra.mxu0 %v658
      %v836 = vpop.f32.mrf.mxu0
      %v837 = vadd.f32 %v641, %v836
      %v838 = vpop.f32.mrf.mxu0
      %v839 = vadd.f32 %v641, %v838
      %840 = vmatprep.mubr.f32.mxu0 0.0
      %841 = vmatmul.mubr.f32.gmra.mxu0 %v661
      %v842 = vpop.f32.mrf.mxu0
      %v843 = vadd.f32 %v646, %v842
      %v844 = vpop.f32.mrf.mxu0
      %v845 = vadd.f32 %v646, %v844
      %846 = vmatprep.mubr.f32.mxu0 0.0
      %847 = vmatmul.mubr.f32.gmra.mxu0 %v664
      %v848 = vpop.f32.mrf.mxu0
      %v849 = vadd.f32 %v651, %v848
      %v850 = vpop.f32.mrf.mxu0
      %v851 = vadd.f32 %v651, %v850
      %852 = vdwg.mxu0
      %v853 = vmul.f32 %v742, 0.2
      %v854 = vmul.f32 %v744, 0.2
      %v855 = vmul.f32 %v831, 0.2
      %v856 = vmul.f32 %v833, 0.2
      %v857 = vmul.f32 %v748, 0.2
      %v858 = vmul.f32 %v750, 0.2
      %v859 = vmul.f32 %v837, 0.2
      %v860 = vmul.f32 %v839, 0.2
      %v861 = vmul.f32 %v754, 0.2
      %v862 = vmul.f32 %v756, 0.2
      %v863 = vmul.f32 %v843, 0.2
      %v864 = vmul.f32 %v845, 0.2
      %v865 = vmul.f32 %v760, 0.2
      %v866 = vmul.f32 %v762, 0.2
      %v867 = vmul.f32 %v849, 0.2
      %v868 = vmul.f32 %v851, 0.2
      %v869 = vmax.f32 %v742, %v853
      %v870 = vmax.f32 %v744, %v854
      %v871 = vmax.f32 %v831, %v855
      %v872 = vmax.f32 %v833, %v856
      %v873 = vmax.f32 %v748, %v857
      %v874 = vmax.f32 %v750, %v858
      %v875 = vmax.f32 %v837, %v859
      %v876 = vmax.f32 %v839, %v860
      %v877 = vmax.f32 %v754, %v861
      %v878 = vmax.f32 %v756, %v862
      %v879 = vmax.f32 %v843, %v863
      %v880 = vmax.f32 %v845, %v864
      %v881 = vmax.f32 %v760, %v865
      %v882 = vmax.f32 %v762, %v866
      %v883 = vmax.f32 %v849, %v867
      %v884 = vmax.f32 %v851, %v868
      %886 = vset.pattern.permute.xlu0 0
      %887 = vperm.xlu0 %886, %v613
      %v888 = vpop.permute.xlu0 %887
      %891 = vset.pattern.permute.xlu0 0
      %892 = vperm.xlu0 %891, %v614
      %v893 = vpop.permute.xlu0 %892
      %896 = vset.pattern.permute.xlu0 0
      %897 = vperm.xlu0 %896, %v615
      %v898 = vpop.permute.xlu0 %897
      %901 = vset.pattern.permute.xlu0 0
      %902 = vperm.xlu0 %901, %v616
      %v903 = vpop.permute.xlu0 %902
      %906 = vset.pattern.permute.xlu0 0
      %907 = vperm.xlu0 %906, %v617
      %v908 = vpop.permute.xlu0 %907
      %911 = vset.pattern.permute.xlu0 0
      %912 = vperm.xlu0 %911, %v618
      %v913 = vpop.permute.xlu0 %912
      %916 = vset.pattern.permute.xlu0 0
      %917 = vperm.xlu0 %916, %v619
      %v918 = vpop.permute.xlu0 %917
      %921 = vset.pattern.permute.xlu0 0
      %922 = vperm.xlu0 %921, %v620
      %v923 = vpop.permute.xlu0 %922
      %vm925 = vcmask 261120
      %v927 = vsel %vm925, %v577, 0
      %v930 = vsel %vm925, %v578, 0
      %v933 = vsel %vm925, %v579, 0
      %v936 = vsel %vm925, %v580, 0
      %v939 = vsel %vm925, %v581, 0
      %v942 = vsel %vm925, %v582, 0
      %v945 = vsel %vm925, %v583, 0
      %v948 = vsel %vm925, %v584, 0
      %950 = vmatprep.subr.mxu0 0.0
      %951 = vmatpush1.msra.mxu0 0.0
      %952 = vmatprep.subr.mxu0 0.0
      %953 = vmatpush1.msra.mxu0 0.0
      %954 = vmatprep.subr.mxu0 0.0
      %955 = vmatpush1.msra.mxu0 0.0
      %956 = vmatprep.subr.mxu0 0.0
      %957 = vmatpush1.msra.mxu0 0.0
      %958 = vmatprep.subr.mxu0 0.0
      %959 = vmatpush1.msra.mxu0 0.0
      %960 = vmatprep.subr.mxu0 0.0
      %961 = vmatpush1.msra.mxu0 0.0
      %962 = vmatprep.subr.mxu0 0.0
      %963 = vmatpush1.msra.mxu0 0.0
      %964 = vmatprep.subr.mxu0 0.0
      %965 = vmatpush1.msra.mxu0 0.0
      %966 = vmatprep.subr.mxu0 0.0
      %967 = vmatpush1.msra.mxu0 0.0
      %968 = vmatprep.subr.mxu0 0.0
      %969 = vmatpush1.msra.mxu0 0.0
      %970 = vmatprep.subr.mxu0 0.0
      %971 = vmatpush1.msra.mxu0 0.0
      %972 = vmatprep.subr.mxu0 0.0
      %973 = vmatpush1.msra.mxu0 0.0
      %974 = vmatprep.subr.mxu0 %v882
      %975 = vmatpush1.msra.mxu0 %v881
      %976 = vmatprep.subr.mxu0 %v878
      %977 = vmatpush1.msra.mxu0 %v877
      %978 = vmatprep.subr.mxu0 %v874
      %979 = vmatpush1.msra.mxu0 %v873
      %980 = vmatprep.subr.mxu0 %v870
      %981 = vmatpush1.msra.mxu0 %v869
      %982 = vmatprep.subr.mxu0 0.0
      %983 = vmatpush2.msra.mxu0 0.0
      %984 = vmatprep.subr.mxu0 0.0
      %985 = vmatpush2.msra.mxu0 0.0
      %986 = vmatprep.subr.mxu0 0.0
      %987 = vmatpush2.msra.mxu0 0.0
      %988 = vmatprep.subr.mxu0 0.0
      %989 = vmatpush2.msra.mxu0 0.0
      %990 = vmatprep.subr.mxu0 0.0
      %991 = vmatpush2.msra.mxu0 0.0
      %992 = vmatprep.subr.mxu0 0.0
      %993 = vmatpush2.msra.mxu0 0.0
      %994 = vmatprep.subr.mxu0 0.0
      %995 = vmatpush2.msra.mxu0 0.0
      %996 = vmatprep.subr.mxu0 0.0
      %997 = vmatpush2.msra.mxu0 0.0
      %998 = vmatprep.subr.mxu0 0.0
      %999 = vmatpush2.msra.mxu0 0.0
      %1000 = vmatprep.subr.mxu0 0.0
      %1001 = vmatpush2.msra.mxu0 0.0
      %1002 = vmatprep.subr.mxu0 0.0
      %1003 = vmatpush2.msra.mxu0 0.0
      %1004 = vmatprep.subr.mxu0 0.0
      %1005 = vmatpush2.msra.mxu0 0.0
      %1006 = vmatprep.subr.mxu0 0.0
      %1007 = vmatpush2.msra.mxu0 0.0
      %1008 = vmatprep.subr.mxu0 0.0
      %1009 = vmatpush2.msra.mxu0 0.0
      %1010 = vmatprep.subr.mxu0 0.0
      %1011 = vmatpush2.msra.mxu0 0.0
      %1012 = vmatprep.subr.mxu0 0.0
      %1013 = vmatpush2.msra.mxu0 0.0
      %1014 = vmatprep.mubr.f32.mxu0 0.0
      %1015 = vmatmul.mubr.f32.gmra.mxu0 %v927
      %v1016 = vpop.f32.mrf.mxu0
      %v1017 = vadd.f32 %v888, %v1016
      %v1018 = vpop.f32.mrf.mxu0
      %v1019 = vadd.f32 %v888, %v1018
      %1020 = vmatprep.mubr.f32.mxu0 0.0
      %1021 = vmatmul.mubr.f32.gmra.mxu0 %v930
      %v1022 = vpop.f32.mrf.mxu0
      %v1023 = vadd.f32 %v893, %v1022
      %v1024 = vpop.f32.mrf.mxu0
      %v1025 = vadd.f32 %v893, %v1024
      %1026 = vmatprep.mubr.f32.mxu0 0.0
      %1027 = vmatmul.mubr.f32.gmra.mxu0 %v933
      %v1028 = vpop.f32.mrf.mxu0
      %v1029 = vadd.f32 %v898, %v1028
      %v1030 = vpop.f32.mrf.mxu0
      %v1031 = vadd.f32 %v898, %v1030
      %1032 = vmatprep.mubr.f32.mxu0 0.0
      %1033 = vmatmul.mubr.f32.gmra.mxu0 %v936
      %v1034 = vpop.f32.mrf.mxu0
      %v1035 = vadd.f32 %v903, %v1034
      %v1036 = vpop.f32.mrf.mxu0
      %v1037 = vadd.f32 %v903, %v1036
      %1038 = vmatprep.mubr.f32.mxu0 0.0
      %1039 = vmatmul.mubr.f32.gmra.mxu0 %v939
      %v1040 = vpop.f32.mrf.mxu0
      %v1041 = vadd.f32 %v908, %v1040
      %v1042 = vpop.f32.mrf.mxu0
      %v1043 = vadd.f32 %v908, %v1042
      %1044 = vmatprep.mubr.f32.mxu0 0.0
      %1045 = vmatmul.mubr.f32.gmra.mxu0 %v942
      %v1046 = vpop.f32.mrf.mxu0
      %v1047 = vadd.f32 %v913, %v1046
      %v1048 = vpop.f32.mrf.mxu0
      %v1049 = vadd.f32 %v913, %v1048
      %1050 = vmatprep.mubr.f32.mxu0 0.0
      %1051 = vmatmul.mubr.f32.gmra.mxu0 %v945
      %v1052 = vpop.f32.mrf.mxu0
      %v1053 = vadd.f32 %v918, %v1052
      %v1054 = vpop.f32.mrf.mxu0
      %v1055 = vadd.f32 %v918, %v1054
      %1056 = vmatprep.mubr.f32.mxu0 0.0
      %1057 = vmatmul.mubr.f32.gmra.mxu0 %v948
      %v1058 = vpop.f32.mrf.mxu0
      %v1059 = vadd.f32 %v923, %v1058
      %v1060 = vpop.f32.mrf.mxu0
      %v1061 = vadd.f32 %v923, %v1060
      %1062 = vdwg.mxu0
      %1063 = vmatprep.subr.mxu0 0.0
      %1064 = vmatpush1.msra.mxu0 0.0
      %1065 = vmatprep.subr.mxu0 0.0
      %1066 = vmatpush1.msra.mxu0 0.0
      %1067 = vmatprep.subr.mxu0 0.0
      %1068 = vmatpush1.msra.mxu0 0.0
      %1069 = vmatprep.subr.mxu0 0.0
      %1070 = vmatpush1.msra.mxu0 0.0
      %1071 = vmatprep.subr.mxu0 0.0
      %1072 = vmatpush1.msra.mxu0 0.0
      %1073 = vmatprep.subr.mxu0 0.0
      %1074 = vmatpush1.msra.mxu0 0.0
      %1075 = vmatprep.subr.mxu0 0.0
      %1076 = vmatpush1.msra.mxu0 0.0
      %1077 = vmatprep.subr.mxu0 0.0
      %1078 = vmatpush1.msra.mxu0 0.0
      %1079 = vmatprep.subr.mxu0 0.0
      %1080 = vmatpush1.msra.mxu0 0.0
      %1081 = vmatprep.subr.mxu0 0.0
      %1082 = vmatpush1.msra.mxu0 0.0
      %1083 = vmatprep.subr.mxu0 0.0
      %1084 = vmatpush1.msra.mxu0 0.0
      %1085 = vmatprep.subr.mxu0 0.0
      %1086 = vmatpush1.msra.mxu0 0.0
      %1087 = vmatprep.subr.mxu0 %v884
      %1088 = vmatpush1.msra.mxu0 %v883
      %1089 = vmatprep.subr.mxu0 %v880
      %1090 = vmatpush1.msra.mxu0 %v879
      %1091 = vmatprep.subr.mxu0 %v876
      %1092 = vmatpush1.msra.mxu0 %v875
      %1093 = vmatprep.subr.mxu0 %v872
      %1094 = vmatpush1.msra.mxu0 %v871
      %1095 = vmatprep.subr.mxu0 0.0
      %1096 = vmatpush2.msra.mxu0 0.0
      %1097 = vmatprep.subr.mxu0 0.0
      %1098 = vmatpush2.msra.mxu0 0.0
      %1099 = vmatprep.subr.mxu0 0.0
      %1100 = vmatpush2.msra.mxu0 0.0
      %1101 = vmatprep.subr.mxu0 0.0
      %1102 = vmatpush2.msra.mxu0 0.0
      %1103 = vmatprep.subr.mxu0 0.0
      %1104 = vmatpush2.msra.mxu0 0.0
      %1105 = vmatprep.subr.mxu0 0.0
      %1106 = vmatpush2.msra.mxu0 0.0
      %1107 = vmatprep.subr.mxu0 0.0
      %1108 = vmatpush2.msra.mxu0 0.0
      %1109 = vmatprep.subr.mxu0 0.0
      %1110 = vmatpush2.msra.mxu0 0.0
      %1111 = vmatprep.subr.mxu0 0.0
      %1112 = vmatpush2.msra.mxu0 0.0
      %1113 = vmatprep.subr.mxu0 0.0
      %1114 = vmatpush2.msra.mxu0 0.0
      %1115 = vmatprep.subr.mxu0 0.0
      %1116 = vmatpush2.msra.mxu0 0.0
      %1117 = vmatprep.subr.mxu0 0.0
      %1118 = vmatpush2.msra.mxu0 0.0
      %1119 = vmatprep.subr.mxu0 0.0
      %1120 = vmatpush2.msra.mxu0 0.0
      %1121 = vmatprep.subr.mxu0 0.0
      %1122 = vmatpush2.msra.mxu0 0.0
      %1123 = vmatprep.subr.mxu0 0.0
      %1124 = vmatpush2.msra.mxu0 0.0
      %1125 = vmatprep.subr.mxu0 0.0
      %1126 = vmatpush2.msra.mxu0 0.0
      %1127 = vmatprep.mubr.f32.mxu0 0.0
      %1128 = vmatmul.mubr.f32.gmra.mxu0 %v927
      %v1129 = vpop.f32.mrf.mxu0
      %v1130 = vadd.f32 %v888, %v1129
      %v1131 = vpop.f32.mrf.mxu0
      %v1132 = vadd.f32 %v888, %v1131
      %1133 = vmatprep.mubr.f32.mxu0 0.0
      %1134 = vmatmul.mubr.f32.gmra.mxu0 %v930
      %v1135 = vpop.f32.mrf.mxu0
      %v1136 = vadd.f32 %v893, %v1135
      %v1137 = vpop.f32.mrf.mxu0
      %v1138 = vadd.f32 %v893, %v1137
      %1139 = vmatprep.mubr.f32.mxu0 0.0
      %1140 = vmatmul.mubr.f32.gmra.mxu0 %v933
      %v1141 = vpop.f32.mrf.mxu0
      %v1142 = vadd.f32 %v898, %v1141
      %v1143 = vpop.f32.mrf.mxu0
      %v1144 = vadd.f32 %v898, %v1143
      %1145 = vmatprep.mubr.f32.mxu0 0.0
      %1146 = vmatmul.mubr.f32.gmra.mxu0 %v936
      %v1147 = vpop.f32.mrf.mxu0
      %v1148 = vadd.f32 %v903, %v1147
      %v1149 = vpop.f32.mrf.mxu0
      %v1150 = vadd.f32 %v903, %v1149
      %1151 = vmatprep.mubr.f32.mxu0 0.0
      %1152 = vmatmul.mubr.f32.gmra.mxu0 %v939
      %v1153 = vpop.f32.mrf.mxu0
      %v1154 = vadd.f32 %v908, %v1153
      %v1155 = vpop.f32.mrf.mxu0
      %v1156 = vadd.f32 %v908, %v1155
      %1157 = vmatprep.mubr.f32.mxu0 0.0
      %1158 = vmatmul.mubr.f32.gmra.mxu0 %v942
      %v1159 = vpop.f32.mrf.mxu0
      %v1160 = vadd.f32 %v913, %v1159
      %v1161 = vpop.f32.mrf.mxu0
      %v1162 = vadd.f32 %v913, %v1161
      %1163 = vmatprep.mubr.f32.mxu0 0.0
      %1164 = vmatmul.mubr.f32.gmra.mxu0 %v945
      %v1165 = vpop.f32.mrf.mxu0
      %v1166 = vadd.f32 %v918, %v1165
      %v1167 = vpop.f32.mrf.mxu0
      %v1168 = vadd.f32 %v918, %v1167
      %1169 = vmatprep.mubr.f32.mxu0 0.0
      %1170 = vmatmul.mubr.f32.gmra.mxu0 %v948
      %v1171 = vpop.f32.mrf.mxu0
      %v1172 = vadd.f32 %v923, %v1171
      %v1173 = vpop.f32.mrf.mxu0
      %v1174 = vadd.f32 %v923, %v1173
      %1175 = vdwg.mxu0
      %v1176 = vmul.f32 %v1017, 0.2
      %v1177 = vmul.f32 %v1019, 0.2
      %v1178 = vmul.f32 %v1130, 0.2
      %v1179 = vmul.f32 %v1132, 0.2
      %v1180 = vmul.f32 %v1023, 0.2
      %v1181 = vmul.f32 %v1025, 0.2
      %v1182 = vmul.f32 %v1136, 0.2
      %v1183 = vmul.f32 %v1138, 0.2
      %v1184 = vmul.f32 %v1029, 0.2
      %v1185 = vmul.f32 %v1031, 0.2
      %v1186 = vmul.f32 %v1142, 0.2
      %v1187 = vmul.f32 %v1144, 0.2
      %v1188 = vmul.f32 %v1035, 0.2
      %v1189 = vmul.f32 %v1037, 0.2
      %v1190 = vmul.f32 %v1148, 0.2
      %v1191 = vmul.f32 %v1150, 0.2
      %v1192 = vmul.f32 %v1041, 0.2
      %v1193 = vmul.f32 %v1043, 0.2
      %v1194 = vmul.f32 %v1154, 0.2
      %v1195 = vmul.f32 %v1156, 0.2
      %v1196 = vmul.f32 %v1047, 0.2
      %v1197 = vmul.f32 %v1049, 0.2
      %v1198 = vmul.f32 %v1160, 0.2
      %v1199 = vmul.f32 %v1162, 0.2
      %v1200 = vmul.f32 %v1053, 0.2
      %v1201 = vmul.f32 %v1055, 0.2
      %v1202 = vmul.f32 %v1166, 0.2
      %v1203 = vmul.f32 %v1168, 0.2
      %v1204 = vmul.f32 %v1059, 0.2
      %v1205 = vmul.f32 %v1061, 0.2
      %v1206 = vmul.f32 %v1172, 0.2
      %v1207 = vmul.f32 %v1174, 0.2
      %v1208 = vmax.f32 %v1017, %v1176
      %v1209 = vmax.f32 %v1019, %v1177
      %v1210 = vmax.f32 %v1130, %v1178
      %v1211 = vmax.f32 %v1132, %v1179
      %v1212 = vmax.f32 %v1023, %v1180
      %v1213 = vmax.f32 %v1025, %v1181
      %v1214 = vmax.f32 %v1136, %v1182
      %v1215 = vmax.f32 %v1138, %v1183
      %v1216 = vmax.f32 %v1029, %v1184
      %v1217 = vmax.f32 %v1031, %v1185
      %v1218 = vmax.f32 %v1142, %v1186
      %v1219 = vmax.f32 %v1144, %v1187
      %v1220 = vmax.f32 %v1035, %v1188
      %v1221 = vmax.f32 %v1037, %v1189
      %v1222 = vmax.f32 %v1148, %v1190
      %v1223 = vmax.f32 %v1150, %v1191
      %v1224 = vmax.f32 %v1041, %v1192
      %v1225 = vmax.f32 %v1043, %v1193
      %v1226 = vmax.f32 %v1154, %v1194
      %v1227 = vmax.f32 %v1156, %v1195
      %v1228 = vmax.f32 %v1047, %v1196
      %v1229 = vmax.f32 %v1049, %v1197
      %v1230 = vmax.f32 %v1160, %v1198
      %v1231 = vmax.f32 %v1162, %v1199
      %v1232 = vmax.f32 %v1053, %v1200
      %v1233 = vmax.f32 %v1055, %v1201
      %v1234 = vmax.f32 %v1166, %v1202
      %v1235 = vmax.f32 %v1168, %v1203
      %v1236 = vmax.f32 %v1059, %v1204
      %v1237 = vmax.f32 %v1061, %v1205
      %v1238 = vmax.f32 %v1172, %v1206
      %v1239 = vmax.f32 %v1174, %v1207
      %v1240 = vmax.f32 %v1208, %v1209
      %1241 = vmax.xlane.f32.xlu0 %v1240
      %v1242 = vpop.xlane.xlu0 %1241
      %v1243 = vmax.f32 %v1212, %v1213
      %1244 = vmax.xlane.f32.xlu0 %v1243
      %v1245 = vpop.xlane.xlu0 %1244
      %v1246 = vmax.f32 %v1216, %v1217
      %1247 = vmax.xlane.f32.xlu0 %v1246
      %v1248 = vpop.xlane.xlu0 %1247
      %v1249 = vmax.f32 %v1220, %v1221
      %1250 = vmax.xlane.f32.xlu0 %v1249
      %v1251 = vpop.xlane.xlu0 %1250
      %v1252 = vmax.f32 %v1224, %v1225
      %1253 = vmax.xlane.f32.xlu0 %v1252
      %v1254 = vpop.xlane.xlu0 %1253
      %v1255 = vmax.f32 %v1228, %v1229
      %1256 = vmax.xlane.f32.xlu0 %v1255
      %v1257 = vpop.xlane.xlu0 %1256
      %v1258 = vmax.f32 %v1232, %v1233
      %1259 = vmax.xlane.f32.xlu0 %v1258
      %v1260 = vpop.xlane.xlu0 %1259
      %v1261 = vmax.f32 %v1236, %v1237
      %1262 = vmax.xlane.f32.xlu0 %v1261
      %v1263 = vpop.xlane.xlu0 %1262
      %v1264 = vmax.f32 %v1210, %v1211
      %1265 = vmax.xlane.f32.xlu0 %v1264
      %v1266 = vpop.xlane.xlu0 %1265
      %v1267 = vmax.f32 %v1214, %v1215
      %1268 = vmax.xlane.f32.xlu0 %v1267
      %v1269 = vpop.xlane.xlu0 %1268
      %v1270 = vmax.f32 %v1218, %v1219
      %1271 = vmax.xlane.f32.xlu0 %v1270
      %v1272 = vpop.xlane.xlu0 %1271
      %v1273 = vmax.f32 %v1222, %v1223
      %1274 = vmax.xlane.f32.xlu0 %v1273
      %v1275 = vpop.xlane.xlu0 %1274
      %v1276 = vmax.f32 %v1226, %v1227
      %1277 = vmax.xlane.f32.xlu0 %v1276
      %v1278 = vpop.xlane.xlu0 %1277
      %v1279 = vmax.f32 %v1230, %v1231
      %1280 = vmax.xlane.f32.xlu0 %v1279
      %v1281 = vpop.xlane.xlu0 %1280
      %v1282 = vmax.f32 %v1234, %v1235
      %1283 = vmax.xlane.f32.xlu0 %v1282
      %v1284 = vpop.xlane.xlu0 %1283
      %v1285 = vmax.f32 %v1238, %v1239
      %1286 = vmax.xlane.f32.xlu0 %v1285
      %v1287 = vpop.xlane.xlu0 %1286
      %vm1288 = vcmask 7168
      %v1289 = vsel %vm1288, %v1242, %v1266
      %v1290 = vsel %vm1288, %v1245, %v1269
      %v1291 = vsel %vm1288, %v1248, %v1272
      %v1292 = vsel %vm1288, %v1251, %v1275
      %v1293 = vsel %vm1288, %v1254, %v1278
      %v1294 = vsel %vm1288, %v1257, %v1281
      %v1295 = vsel %vm1288, %v1260, %v1284
      %v1296 = vsel %vm1288, %v1263, %v1287
      %1298 = vset.pattern.permute.xlu0 0
      %1299 = vperm.xlu0 %1298, %v621
      %v1300 = vpop.permute.xlu0 %1299
      %1303 = vset.pattern.permute.xlu0 0
      %1304 = vperm.xlu0 %1303, %v622
      %v1305 = vpop.permute.xlu0 %1304
      %1308 = vset.pattern.permute.xlu0 0
      %1309 = vperm.xlu0 %1308, %v623
      %v1310 = vpop.permute.xlu0 %1309
      %1313 = vset.pattern.permute.xlu0 0
      %1314 = vperm.xlu0 %1313, %v624
      %v1315 = vpop.permute.xlu0 %1314
      %vm1317 = vcmask 523264
      %v1319 = vsel %vm1317, %v585, 0
      %v1322 = vsel %vm1317, %v586, 0
      %v1325 = vsel %vm1317, %v587, 0
      %v1328 = vsel %vm1317, %v588, 0
      %1330 = vmatprep.subr.mxu0 0.0
      %1331 = vmatpush1.msra.mxu0 0.0
      %1332 = vmatprep.subr.mxu0 0.0
      %1333 = vmatpush1.msra.mxu0 0.0
      %1334 = vmatprep.subr.mxu0 0.0
      %1335 = vmatpush1.msra.mxu0 0.0
      %1336 = vmatprep.subr.mxu0 0.0
      %1337 = vmatpush1.msra.mxu0 0.0
      %1338 = vmatprep.subr.mxu0 0.0
      %1339 = vmatpush1.msra.mxu0 0.0
      %1340 = vmatprep.subr.mxu0 0.0
      %1341 = vmatpush1.msra.mxu0 0.0
      %1342 = vmatprep.subr.mxu0 0.0
      %1343 = vmatpush1.msra.mxu0 0.0
      %1344 = vmatprep.subr.mxu0 0.0
      %1345 = vmatpush1.msra.mxu0 0.0
      %1346 = vmatprep.subr.mxu0 0.0
      %1347 = vmatpush1.msra.mxu0 %v1296
      %1348 = vmatprep.subr.mxu0 0.0
      %1349 = vmatpush1.msra.mxu0 %v1295
      %1350 = vmatprep.subr.mxu0 0.0
      %1351 = vmatpush1.msra.mxu0 %v1294
      %1352 = vmatprep.subr.mxu0 0.0
      %1353 = vmatpush1.msra.mxu0 %v1293
      %1354 = vmatprep.subr.mxu0 0.0
      %1355 = vmatpush1.msra.mxu0 %v1292
      %1356 = vmatprep.subr.mxu0 0.0
      %1357 = vmatpush1.msra.mxu0 %v1291
      %1358 = vmatprep.subr.mxu0 0.0
      %1359 = vmatpush1.msra.mxu0 %v1290
      %1360 = vmatprep.subr.mxu0 0.0
      %1361 = vmatpush1.msra.mxu0 %v1289
      %1362 = vmatprep.subr.mxu0 0.0
      %1363 = vmatpush2.msra.mxu0 0.0
      %1364 = vmatprep.subr.mxu0 0.0
      %1365 = vmatpush2.msra.mxu0 0.0
      %1366 = vmatprep.subr.mxu0 0.0
      %1367 = vmatpush2.msra.mxu0 0.0
      %1368 = vmatprep.subr.mxu0 0.0
      %1369 = vmatpush2.msra.mxu0 0.0
      %1370 = vmatprep.subr.mxu0 0.0
      %1371 = vmatpush2.msra.mxu0 0.0
      %1372 = vmatprep.subr.mxu0 0.0
      %1373 = vmatpush2.msra.mxu0 0.0
      %1374 = vmatprep.subr.mxu0 0.0
      %1375 = vmatpush2.msra.mxu0 0.0
      %1376 = vmatprep.subr.mxu0 0.0
      %1377 = vmatpush2.msra.mxu0 0.0
      %1378 = vmatprep.subr.mxu0 0.0
      %1379 = vmatpush2.msra.mxu0 0.0
      %1380 = vmatprep.subr.mxu0 0.0
      %1381 = vmatpush2.msra.mxu0 0.0
      %1382 = vmatprep.subr.mxu0 0.0
      %1383 = vmatpush2.msra.mxu0 0.0
      %1384 = vmatprep.subr.mxu0 0.0
      %1385 = vmatpush2.msra.mxu0 0.0
      %1386 = vmatprep.subr.mxu0 0.0
      %1387 = vmatpush2.msra.mxu0 0.0
      %1388 = vmatprep.subr.mxu0 0.0
      %1389 = vmatpush2.msra.mxu0 0.0
      %1390 = vmatprep.subr.mxu0 0.0
      %1391 = vmatpush2.msra.mxu0 0.0
      %1392 = vmatprep.subr.mxu0 0.0
      %1393 = vmatpush2.msra.mxu0 0.0
      %1394 = vmatprep.mubr.f32.mxu0 0.0
      %1395 = vmatmul.mubr.f32.gmra.mxu0 %v1319
      %v1396 = vpop.f32.mrf.mxu0
      %v1397 = vadd.f32 %v1300, %v1396
      %v1398 = vpop.f32.mrf.mxu0
      %1399 = vmatprep.mubr.f32.mxu0 0.0
      %1400 = vmatmul.mubr.f32.gmra.mxu0 %v1322
      %v1401 = vpop.f32.mrf.mxu0
      %v1402 = vadd.f32 %v1305, %v1401
      %v1403 = vpop.f32.mrf.mxu0
      %1404 = vmatprep.mubr.f32.mxu0 0.0
      %1405 = vmatmul.mubr.f32.gmra.mxu0 %v1325
      %v1406 = vpop.f32.mrf.mxu0
      %v1407 = vadd.f32 %v1310, %v1406
      %v1408 = vpop.f32.mrf.mxu0
      %1409 = vmatprep.mubr.f32.mxu0 0.0
      %1410 = vmatmul.mubr.f32.gmra.mxu0 %v1328
      %v1411 = vpop.f32.mrf.mxu0
      %v1412 = vadd.f32 %v1315, %v1411
      %v1413 = vpop.f32.mrf.mxu0
      %1414 = vdwg.mxu0
      %v1415 = vmul.f32 %v1397, 0.2
      %v1416 = vmul.f32 %v1402, 0.2
      %v1417 = vmul.f32 %v1407, 0.2
      %v1418 = vmul.f32 %v1412, 0.2
      %v1419 = vmax.f32 %v1397, %v1415
      %v1420 = vmax.f32 %v1402, %v1416
      %v1421 = vmax.f32 %v1407, %v1417
      %v1422 = vmax.f32 %v1412, %v1418
      %1424 = vset.pattern.permute.xlu0 0
      %1425 = vperm.xlu0 %1424, %v625
      %v1426 = vpop.permute.xlu0 %1425
      %1429 = vset.pattern.permute.xlu0 0
      %1430 = vperm.xlu0 %1429, %v626
      %v1431 = vpop.permute.xlu0 %1430
      %v1434 = vsel %vm925, %v589, 0
      %v1437 = vsel %vm925, %v590, 0
      %1439 = vmatprep.subr.mxu0 0.0
      %1440 = vmatpush1.msra.mxu0 0.0
      %1441 = vmatprep.subr.mxu0 0.0
      %1442 = vmatpush1.msra.mxu0 0.0
      %1443 = vmatprep.subr.mxu0 0.0
      %1444 = vmatpush1.msra.mxu0 0.0
      %1445 = vmatprep.subr.mxu0 0.0
      %1446 = vmatpush1.msra.mxu0 0.0
      %1447 = vmatprep.subr.mxu0 0.0
      %1448 = vmatpush1.msra.mxu0 0.0
      %1449 = vmatprep.subr.mxu0 0.0
      %1450 = vmatpush1.msra.mxu0 0.0
      %1451 = vmatprep.subr.mxu0 0.0
      %1452 = vmatpush1.msra.mxu0 0.0
      %1453 = vmatprep.subr.mxu0 0.0
      %1454 = vmatpush1.msra.mxu0 0.0
      %1455 = vmatprep.subr.mxu0 0.0
      %1456 = vmatpush1.msra.mxu0 0.0
      %1457 = vmatprep.subr.mxu0 0.0
      %1458 = vmatpush1.msra.mxu0 0.0
      %1459 = vmatprep.subr.mxu0 0.0
      %1460 = vmatpush1.msra.mxu0 0.0
      %1461 = vmatprep.subr.mxu0 0.0
      %1462 = vmatpush1.msra.mxu0 0.0
      %1463 = vmatprep.subr.mxu0 0.0
      %1464 = vmatpush1.msra.mxu0 %v1422
      %1465 = vmatprep.subr.mxu0 0.0
      %1466 = vmatpush1.msra.mxu0 %v1421
      %1467 = vmatprep.subr.mxu0 0.0
      %1468 = vmatpush1.msra.mxu0 %v1420
      %1469 = vmatprep.subr.mxu0 0.0
      %1470 = vmatpush1.msra.mxu0 %v1419
      %1471 = vmatprep.subr.mxu0 0.0
      %1472 = vmatpush2.msra.mxu0 0.0
      %1473 = vmatprep.subr.mxu0 0.0
      %1474 = vmatpush2.msra.mxu0 0.0
      %1475 = vmatprep.subr.mxu0 0.0
      %1476 = vmatpush2.msra.mxu0 0.0
      %1477 = vmatprep.subr.mxu0 0.0
      %1478 = vmatpush2.msra.mxu0 0.0
      %1479 = vmatprep.subr.mxu0 0.0
      %1480 = vmatpush2.msra.mxu0 0.0
      %1481 = vmatprep.subr.mxu0 0.0
      %1482 = vmatpush2.msra.mxu0 0.0
      %1483 = vmatprep.subr.mxu0 0.0
      %1484 = vmatpush2.msra.mxu0 0.0
      %1485 = vmatprep.subr.mxu0 0.0
      %1486 = vmatpush2.msra.mxu0 0.0
      %1487 = vmatprep.subr.mxu0 0.0
      %1488 = vmatpush2.msra.mxu0 0.0
      %1489 = vmatprep.subr.mxu0 0.0
      %1490 = vmatpush2.msra.mxu0 0.0
      %1491 = vmatprep.subr.mxu0 0.0
      %1492 = vmatpush2.msra.mxu0 0.0
      %1493 = vmatprep.subr.mxu0 0.0
      %1494 = vmatpush2.msra.mxu0 0.0
      %1495 = vmatprep.subr.mxu0 0.0
      %1496 = vmatpush2.msra.mxu0 0.0
      %1497 = vmatprep.subr.mxu0 0.0
      %1498 = vmatpush2.msra.mxu0 0.0
      %1499 = vmatprep.subr.mxu0 0.0
      %1500 = vmatpush2.msra.mxu0 0.0
      %1501 = vmatprep.subr.mxu0 0.0
      %1502 = vmatpush2.msra.mxu0 0.0
      %1503 = vmatprep.mubr.f32.mxu0 0.0
      %1504 = vmatmul.mubr.f32.gmra.mxu0 %v1434
      %v1505 = vpop.f32.mrf.mxu0
      %v1506 = vadd.f32 %v1426, %v1505
      %v1507 = vpop.f32.mrf.mxu0
      %1508 = vmatprep.mubr.f32.mxu0 0.0
      %1509 = vmatmul.mubr.f32.gmra.mxu0 %v1437
      %v1510 = vpop.f32.mrf.mxu0
      %v1511 = vadd.f32 %v1431, %v1510
      %v1512 = vpop.f32.mrf.mxu0
      %1513 = vdwg.mxu0
      %v1514 = vtanh.pop %v1506
      %v1515 = vtanh.pop %v1511
      %1518 = vrot.lane.b32.xlu0 %v1514, 1
      %v1519 = vpop.permute.xlu0 %1518
      %1520 = vrot.lane.b32.xlu0 %v1515, 1
      %v1521 = vpop.permute.xlu0 %1520
      %v1524 = vsub.f32 %v1514, %v1519
      %v1525 = vsub.f32 %v1515, %v1521
      %1527 = vset.pattern.permute.xlu0 0
      %1528 = vperm.xlu0 %1527, %v591
      %v1529 = vpop.permute.xlu0 %1528
      %1532 = vset.pattern.permute.xlu0 0
      %1533 = vperm.xlu0 %1532, %v592
      %v1534 = vpop.permute.xlu0 %1533
      %1537 = vset.pattern.permute.xlu0 0
      %1538 = vperm.xlu0 %1537, %v593
      %v1539 = vpop.permute.xlu0 %1538
      %1542 = vset.pattern.permute.xlu0 0
      %1543 = vperm.xlu0 %1542, %v594
      %v1544 = vpop.permute.xlu0 %1543
      %v1547 = vsel %vm653, %v555, 0
      %v1550 = vsel %vm653, %v556, 0
      %v1553 = vsel %vm653, %v557, 0
      %v1556 = vsel %vm653, %v558, 0
      %1558 = vmatprep.subr.mxu0 0.0
      %1559 = vmatpush1.msra.mxu0 0.0
      %1560 = vmatprep.subr.mxu0 0.0
      %1561 = vmatpush1.msra.mxu0 0.0
      %1562 = vmatprep.subr.mxu0 0.0
      %1563 = vmatpush1.msra.mxu0 0.0
      %1564 = vmatprep.subr.mxu0 0.0
      %1565 = vmatpush1.msra.mxu0 0.0
      %1566 = vmatprep.subr.mxu0 0.0
      %1567 = vmatpush1.msra.mxu0 0.0
      %1568 = vmatprep.subr.mxu0 0.0
      %1569 = vmatpush1.msra.mxu0 0.0
      %1570 = vmatprep.subr.mxu0 0.0
      %1571 = vmatpush1.msra.mxu0 0.0
      %1572 = vmatprep.subr.mxu0 0.0
      %1573 = vmatpush1.msra.mxu0 0.0
      %1574 = vmatprep.subr.mxu0 0.0
      %1575 = vmatpush1.msra.mxu0 0.0
      %1576 = vmatprep.subr.mxu0 0.0
      %1577 = vmatpush1.msra.mxu0 0.0
      %1578 = vmatprep.subr.mxu0 0.0
      %1579 = vmatpush1.msra.mxu0 0.0
      %1580 = vmatprep.subr.mxu0 0.0
      %1581 = vmatpush1.msra.mxu0 0.0
      %1582 = vmatprep.subr.mxu0 0.0
      %1583 = vmatpush1.msra.mxu0 0.0
      %1584 = vmatprep.subr.mxu0 0.0
      %1585 = vmatpush1.msra.mxu0 0.0
      %1586 = vmatprep.subr.mxu0 0.0
      %1587 = vmatpush1.msra.mxu0 0.0
      %1588 = vmatprep.subr.mxu0 %v669
      %1589 = vmatpush1.msra.mxu0 %v667
      %1590 = vmatprep.subr.mxu0 0.0
      %1591 = vmatpush2.msra.mxu0 0.0
      %1592 = vmatprep.subr.mxu0 0.0
      %1593 = vmatpush2.msra.mxu0 0.0
      %1594 = vmatprep.subr.mxu0 0.0
      %1595 = vmatpush2.msra.mxu0 0.0
      %1596 = vmatprep.subr.mxu0 0.0
      %1597 = vmatpush2.msra.mxu0 0.0
      %1598 = vmatprep.subr.mxu0 0.0
      %1599 = vmatpush2.msra.mxu0 0.0
      %1600 = vmatprep.subr.mxu0 0.0
      %1601 = vmatpush2.msra.mxu0 0.0
      %1602 = vmatprep.subr.mxu0 0.0
      %1603 = vmatpush2.msra.mxu0 0.0
      %1604 = vmatprep.subr.mxu0 0.0
      %1605 = vmatpush2.msra.mxu0 0.0
      %1606 = vmatprep.subr.mxu0 0.0
      %1607 = vmatpush2.msra.mxu0 0.0
      %1608 = vmatprep.subr.mxu0 0.0
      %1609 = vmatpush2.msra.mxu0 0.0
      %1610 = vmatprep.subr.mxu0 0.0
      %1611 = vmatpush2.msra.mxu0 0.0
      %1612 = vmatprep.subr.mxu0 0.0
      %1613 = vmatpush2.msra.mxu0 0.0
      %1614 = vmatprep.subr.mxu0 0.0
      %1615 = vmatpush2.msra.mxu0 0.0
      %1616 = vmatprep.subr.mxu0 0.0
      %1617 = vmatpush2.msra.mxu0 0.0
      %1618 = vmatprep.subr.mxu0 0.0
      %1619 = vmatpush2.msra.mxu0 0.0
      %1620 = vmatprep.subr.mxu0 0.0
      %1621 = vmatpush2.msra.mxu0 0.0
      %1622 = vmatprep.mubr.f32.mxu0 0.0
      %1623 = vmatmul.mubr.f32.gmra.mxu0 %v1547
      %v1624 = vpop.f32.mrf.mxu0
      %v1625 = vadd.f32 %v1529, %v1624
      %v1626 = vpop.f32.mrf.mxu0
      %v1627 = vadd.f32 %v1529, %v1626
      %1628 = vmatprep.mubr.f32.mxu0 0.0
      %1629 = vmatmul.mubr.f32.gmra.mxu0 %v1550
      %v1630 = vpop.f32.mrf.mxu0
      %v1631 = vadd.f32 %v1534, %v1630
      %v1632 = vpop.f32.mrf.mxu0
      %v1633 = vadd.f32 %v1534, %v1632
      %1634 = vmatprep.mubr.f32.mxu0 0.0
      %1635 = vmatmul.mubr.f32.gmra.mxu0 %v1553
      %v1636 = vpop.f32.mrf.mxu0
      %v1637 = vadd.f32 %v1539, %v1636
      %v1638 = vpop.f32.mrf.mxu0
      %v1639 = vadd.f32 %v1539, %v1638
      %1640 = vmatprep.mubr.f32.mxu0 0.0
      %1641 = vmatmul.mubr.f32.gmra.mxu0 %v1556
      %v1642 = vpop.f32.mrf.mxu0
      %v1643 = vadd.f32 %v1544, %v1642
      %v1644 = vpop.f32.mrf.mxu0
      %v1645 = vadd.f32 %v1544, %v1644
      %1646 = vdwg.mxu0
      %v1647 = vmul.f32 %v1625, 0.2
      %v1648 = vmul.f32 %v1627, 0.2
      %v1649 = vmul.f32 %v1631, 0.2
      %v1650 = vmul.f32 %v1633, 0.2
      %v1651 = vmul.f32 %v1637, 0.2
      %v1652 = vmul.f32 %v1639, 0.2
      %v1653 = vmul.f32 %v1643, 0.2
      %v1654 = vmul.f32 %v1645, 0.2
      %v1655 = vmax.f32 %v1625, %v1647
      %v1656 = vmax.f32 %v1627, %v1648
      %v1657 = vmax.f32 %v1631, %v1649
      %v1658 = vmax.f32 %v1633, %v1650
      %v1659 = vmax.f32 %v1637, %v1651
      %v1660 = vmax.f32 %v1639, %v1652
      %v1661 = vmax.f32 %v1643, %v1653
      %v1662 = vmax.f32 %v1645, %v1654
      %1664 = vset.pattern.permute.xlu0 0
      %1665 = vperm.xlu0 %1664, %v595
      %v1666 = vpop.permute.xlu0 %1665
      %1669 = vset.pattern.permute.xlu0 0
      %1670 = vperm.xlu0 %1669, %v596
      %v1671 = vpop.permute.xlu0 %1670
      %1674 = vset.pattern.permute.xlu0 0
      %1675 = vperm.xlu0 %1674, %v597
      %v1676 = vpop.permute.xlu0 %1675
      %1679 = vset.pattern.permute.xlu0 0
      %1680 = vperm.xlu0 %1679, %v598
      %v1681 = vpop.permute.xlu0 %1680
      %1684 = vset.pattern.permute.xlu0 0
      %1685 = vperm.xlu0 %1684, %v599
      %v1686 = vpop.permute.xlu0 %1685
      %1689 = vset.pattern.permute.xlu0 0
      %1690 = vperm.xlu0 %1689, %v600
      %v1691 = vpop.permute.xlu0 %1690
      %1694 = vset.pattern.permute.xlu0 0
      %1695 = vperm.xlu0 %1694, %v601
      %v1696 = vpop.permute.xlu0 %1695
      %1699 = vset.pattern.permute.xlu0 0
      %1700 = vperm.xlu0 %1699, %v602
      %v1701 = vpop.permute.xlu0 %1700
      %v1704 = vsel %vm925, %v559, 0
      %v1707 = vsel %vm925, %v560, 0
      %v1710 = vsel %vm925, %v561, 0
      %v1713 = vsel %vm925, %v562, 0
      %v1716 = vsel %vm925, %v563, 0
      %v1719 = vsel %vm925, %v564, 0
      %v1722 = vsel %vm925, %v565, 0
      %v1725 = vsel %vm925, %v566, 0
      %1727 = vmatprep.subr.mxu0 0.0
      %1728 = vmatpush1.msra.mxu0 0.0
      %1729 = vmatprep.subr.mxu0 0.0
      %1730 = vmatpush1.msra.mxu0 0.0
      %1731 = vmatprep.subr.mxu0 0.0
      %1732 = vmatpush1.msra.mxu0 0.0
      %1733 = vmatprep.subr.mxu0 0.0
      %1734 = vmatpush1.msra.mxu0 0.0
      %1735 = vmatprep.subr.mxu0 0.0
      %1736 = vmatpush1.msra.mxu0 0.0
      %1737 = vmatprep.subr.mxu0 0.0
      %1738 = vmatpush1.msra.mxu0 0.0
      %1739 = vmatprep.subr.mxu0 0.0
      %1740 = vmatpush1.msra.mxu0 0.0
      %1741 = vmatprep.subr.mxu0 0.0
      %1742 = vmatpush1.msra.mxu0 0.0
      %1743 = vmatprep.subr.mxu0 0.0
      %1744 = vmatpush1.msra.mxu0 0.0
      %1745 = vmatprep.subr.mxu0 0.0
      %1746 = vmatpush1.msra.mxu0 0.0
      %1747 = vmatprep.subr.mxu0 0.0
      %1748 = vmatpush1.msra.mxu0 0.0
      %1749 = vmatprep.subr.mxu0 0.0
      %1750 = vmatpush1.msra.mxu0 0.0
      %1751 = vmatprep.subr.mxu0 %v1662
      %1752 = vmatpush1.msra.mxu0 %v1661
      %1753 = vmatprep.subr.mxu0 %v1660
      %1754 = vmatpush1.msra.mxu0 %v1659
      %1755 = vmatprep.subr.mxu0 %v1658
      %1756 = vmatpush1.msra.mxu0 %v1657
      %1757 = vmatprep.subr.mxu0 %v1656
      %1758 = vmatpush1.msra.mxu0 %v1655
      %1759 = vmatprep.subr.mxu0 0.0
      %1760 = vmatpush2.msra.mxu0 0.0
      %1761 = vmatprep.subr.mxu0 0.0
      %1762 = vmatpush2.msra.mxu0 0.0
      %1763 = vmatprep.subr.mxu0 0.0
      %1764 = vmatpush2.msra.mxu0 0.0
      %1765 = vmatprep.subr.mxu0 0.0
      %1766 = vmatpush2.msra.mxu0 0.0
      %1767 = vmatprep.subr.mxu0 0.0
      %1768 = vmatpush2.msra.mxu0 0.0
      %1769 = vmatprep.subr.mxu0 0.0
      %1770 = vmatpush2.msra.mxu0 0.0
      %1771 = vmatprep.subr.mxu0 0.0
      %1772 = vmatpush2.msra.mxu0 0.0
      %1773 = vmatprep.subr.mxu0 0.0
      %1774 = vmatpush2.msra.mxu0 0.0
      %1775 = vmatprep.subr.mxu0 0.0
      %1776 = vmatpush2.msra.mxu0 0.0
      %1777 = vmatprep.subr.mxu0 0.0
      %1778 = vmatpush2.msra.mxu0 0.0
      %1779 = vmatprep.subr.mxu0 0.0
      %1780 = vmatpush2.msra.mxu0 0.0
      %1781 = vmatprep.subr.mxu0 0.0
      %1782 = vmatpush2.msra.mxu0 0.0
      %1783 = vmatprep.subr.mxu0 0.0
      %1784 = vmatpush2.msra.mxu0 0.0
      %1785 = vmatprep.subr.mxu0 0.0
      %1786 = vmatpush2.msra.mxu0 0.0
      %1787 = vmatprep.subr.mxu0 0.0
      %1788 = vmatpush2.msra.mxu0 0.0
      %1789 = vmatprep.subr.mxu0 0.0
      %1790 = vmatpush2.msra.mxu0 0.0
      %1791 = vmatprep.mubr.f32.mxu0 0.0
      %1792 = vmatmul.mubr.f32.gmra.mxu0 %v1704
      %v1793 = vpop.f32.mrf.mxu0
      %v1794 = vadd.f32 %v1666, %v1793
      %v1795 = vpop.f32.mrf.mxu0
      %v1796 = vadd.f32 %v1666, %v1795
      %1797 = vmatprep.mubr.f32.mxu0 0.0
      %1798 = vmatmul.mubr.f32.gmra.mxu0 %v1707
      %v1799 = vpop.f32.mrf.mxu0
      %v1800 = vadd.f32 %v1671, %v1799
      %v1801 = vpop.f32.mrf.mxu0
      %v1802 = vadd.f32 %v1671, %v1801
      %1803 = vmatprep.mubr.f32.mxu0 0.0
      %1804 = vmatmul.mubr.f32.gmra.mxu0 %v1710
      %v1805 = vpop.f32.mrf.mxu0
      %v1806 = vadd.f32 %v1676, %v1805
      %v1807 = vpop.f32.mrf.mxu0
      %v1808 = vadd.f32 %v1676, %v1807
      %1809 = vmatprep.mubr.f32.mxu0 0.0
      %1810 = vmatmul.mubr.f32.gmra.mxu0 %v1713
      %v1811 = vpop.f32.mrf.mxu0
      %v1812 = vadd.f32 %v1681, %v1811
      %v1813 = vpop.f32.mrf.mxu0
      %v1814 = vadd.f32 %v1681, %v1813
      %1815 = vmatprep.mubr.f32.mxu0 0.0
      %1816 = vmatmul.mubr.f32.gmra.mxu0 %v1716
      %v1817 = vpop.f32.mrf.mxu0
      %v1818 = vadd.f32 %v1686, %v1817
      %v1819 = vpop.f32.mrf.mxu0
      %v1820 = vadd.f32 %v1686, %v1819
      %1821 = vmatprep.mubr.f32.mxu0 0.0
      %1822 = vmatmul.mubr.f32.gmra.mxu0 %v1719
      %v1823 = vpop.f32.mrf.mxu0
      %v1824 = vadd.f32 %v1691, %v1823
      %v1825 = vpop.f32.mrf.mxu0
      %v1826 = vadd.f32 %v1691, %v1825
      %1827 = vmatprep.mubr.f32.mxu0 0.0
      %1828 = vmatmul.mubr.f32.gmra.mxu0 %v1722
      %v1829 = vpop.f32.mrf.mxu0
      %v1830 = vadd.f32 %v1696, %v1829
      %v1831 = vpop.f32.mrf.mxu0
      %v1832 = vadd.f32 %v1696, %v1831
      %1833 = vmatprep.mubr.f32.mxu0 0.0
      %1834 = vmatmul.mubr.f32.gmra.mxu0 %v1725
      %v1835 = vpop.f32.mrf.mxu0
      %v1836 = vadd.f32 %v1701, %v1835
      %v1837 = vpop.f32.mrf.mxu0
      %v1838 = vadd.f32 %v1701, %v1837
      %1839 = vdwg.mxu0
      %v1840 = vmul.f32 %v1794, 0.2
      %v1841 = vmul.f32 %v1796, 0.2
      %v1842 = vmul.f32 %v1800, 0.2
      %v1843 = vmul.f32 %v1802, 0.2
      %v1844 = vmul.f32 %v1806, 0.2
      %v1845 = vmul.f32 %v1808, 0.2
      %v1846 = vmul.f32 %v1812, 0.2
      %v1847 = vmul.f32 %v1814, 0.2
      %v1848 = vmul.f32 %v1818, 0.2
      %v1849 = vmul.f32 %v1820, 0.2
      %v1850 = vmul.f32 %v1824, 0.2
      %v1851 = vmul.f32 %v1826, 0.2
      %v1852 = vmul.f32 %v1830, 0.2
      %v1853 = vmul.f32 %v1832, 0.2
      %v1854 = vmul.f32 %v1836, 0.2
      %v1855 = vmul.f32 %v1838, 0.2
      %v1856 = vmax.f32 %v1794, %v1840
      %v1857 = vmax.f32 %v1796, %v1841
      %v1858 = vmax.f32 %v1800, %v1842
      %v1859 = vmax.f32 %v1802, %v1843
      %v1860 = vmax.f32 %v1806, %v1844
      %v1861 = vmax.f32 %v1808, %v1845
      %v1862 = vmax.f32 %v1812, %v1846
      %v1863 = vmax.f32 %v1814, %v1847
      %v1864 = vmax.f32 %v1818, %v1848
      %v1865 = vmax.f32 %v1820, %v1849
      %v1866 = vmax.f32 %v1824, %v1850
      %v1867 = vmax.f32 %v1826, %v1851
      %v1868 = vmax.f32 %v1830, %v1852
      %v1869 = vmax.f32 %v1832, %v1853
      %v1870 = vmax.f32 %v1836, %v1854
      %v1871 = vmax.f32 %v1838, %v1855
      %1873 = vset.pattern.permute.xlu0 0
      %1874 = vperm.xlu0 %1873, %v603
      %v1875 = vpop.permute.xlu0 %1874
      %1878 = vset.pattern.permute.xlu0 0
      %1879 = vperm.xlu0 %1878, %v604
      %v1880 = vpop.permute.xlu0 %1879
      %1883 = vset.pattern.permute.xlu0 0
      %1884 = vperm.xlu0 %1883, %v605
      %v1885 = vpop.permute.xlu0 %1884
      %1888 = vset.pattern.permute.xlu0 0
      %1889 = vperm.xlu0 %1888, %v606
      %v1890 = vpop.permute.xlu0 %1889
      %1893 = vset.pattern.permute.xlu0 0
      %1894 = vperm.xlu0 %1893, %v607
      %v1895 = vpop.permute.xlu0 %1894
      %1898 = vset.pattern.permute.xlu0 0
      %1899 = vperm.xlu0 %1898, %v608
      %v1900 = vpop.permute.xlu0 %1899
      %v1903 = vsel %vm1317, %v567, 0
      %v1906 = vsel %vm1317, %v568, 0
      %v1909 = vsel %vm1317, %v569, 0
      %v1912 = vsel %vm1317, %v570, 0
      %v1915 = vsel %vm1317, %v571, 0
      %v1918 = vsel %vm1317, %v572, 0
      %1920 = vmatprep.subr.mxu0 0.0
      %1921 = vmatpush1.msra.mxu0 0.0
      %1922 = vmatprep.subr.mxu0 0.0
      %1923 = vmatpush1.msra.mxu0 0.0
      %1924 = vmatprep.subr.mxu0 0.0
      %1925 = vmatpush1.msra.mxu0 0.0
      %1926 = vmatprep.subr.mxu0 0.0
      %1927 = vmatpush1.msra.mxu0 0.0
      %1928 = vmatprep.subr.mxu0 0.0
      %1929 = vmatpush1.msra.mxu0 0.0
      %1930 = vmatprep.subr.mxu0 0.0
      %1931 = vmatpush1.msra.mxu0 0.0
      %1932 = vmatprep.subr.mxu0 0.0
      %1933 = vmatpush1.msra.mxu0 0.0
      %1934 = vmatprep.subr.mxu0 0.0
      %1935 = vmatpush1.msra.mxu0 0.0
      %1936 = vmatprep.subr.mxu0 %v1871
      %1937 = vmatpush1.msra.mxu0 %v1870
      %1938 = vmatprep.subr.mxu0 %v1869
      %1939 = vmatpush1.msra.mxu0 %v1868
      %1940 = vmatprep.subr.mxu0 %v1867
      %1941 = vmatpush1.msra.mxu0 %v1866
      %1942 = vmatprep.subr.mxu0 %v1865
      %1943 = vmatpush1.msra.mxu0 %v1864
      %1944 = vmatprep.subr.mxu0 %v1863
      %1945 = vmatpush1.msra.mxu0 %v1862
      %1946 = vmatprep.subr.mxu0 %v1861
      %1947 = vmatpush1.msra.mxu0 %v1860
      %1948 = vmatprep.subr.mxu0 %v1859
      %1949 = vmatpush1.msra.mxu0 %v1858
      %1950 = vmatprep.subr.mxu0 %v1857
      %1951 = vmatpush1.msra.mxu0 %v1856
      %1952 = vmatprep.subr.mxu0 0.0
      %1953 = vmatpush2.msra.mxu0 0.0
      %1954 = vmatprep.subr.mxu0 0.0
      %1955 = vmatpush2.msra.mxu0 0.0
      %1956 = vmatprep.subr.mxu0 0.0
      %1957 = vmatpush2.msra.mxu0 0.0
      %1958 = vmatprep.subr.mxu0 0.0
      %1959 = vmatpush2.msra.mxu0 0.0
      %1960 = vmatprep.subr.mxu0 0.0
      %1961 = vmatpush2.msra.mxu0 0.0
      %1962 = vmatprep.subr.mxu0 0.0
      %1963 = vmatpush2.msra.mxu0 0.0
      %1964 = vmatprep.subr.mxu0 0.0
      %1965 = vmatpush2.msra.mxu0 0.0
      %1966 = vmatprep.subr.mxu0 0.0
      %1967 = vmatpush2.msra.mxu0 0.0
      %1968 = vmatprep.subr.mxu0 0.0
      %1969 = vmatpush2.msra.mxu0 0.0
      %1970 = vmatprep.subr.mxu0 0.0
      %1971 = vmatpush2.msra.mxu0 0.0
      %1972 = vmatprep.subr.mxu0 0.0
      %1973 = vmatpush2.msra.mxu0 0.0
      %1974 = vmatprep.subr.mxu0 0.0
      %1975 = vmatpush2.msra.mxu0 0.0
      %1976 = vmatprep.subr.mxu0 0.0
      %1977 = vmatpush2.msra.mxu0 0.0
      %1978 = vmatprep.subr.mxu0 0.0
      %1979 = vmatpush2.msra.mxu0 0.0
      %1980 = vmatprep.subr.mxu0 0.0
      %1981 = vmatpush2.msra.mxu0 0.0
      %1982 = vmatprep.subr.mxu0 0.0
      %1983 = vmatpush2.msra.mxu0 0.0
      %1984 = vmatprep.mubr.f32.mxu0 0.0
      %1985 = vmatmul.mubr.f32.gmra.mxu0 %v1903
      %v1986 = vpop.f32.mrf.mxu0
      %v1987 = vadd.f32 %v1875, %v1986
      %v1988 = vpop.f32.mrf.mxu0
      %v1989 = vadd.f32 %v1875, %v1988
      %1990 = vmatprep.mubr.f32.mxu0 0.0
      %1991 = vmatmul.mubr.f32.gmra.mxu0 %v1906
      %v1992 = vpop.f32.mrf.mxu0
      %v1993 = vadd.f32 %v1880, %v1992
      %v1994 = vpop.f32.mrf.mxu0
      %v1995 = vadd.f32 %v1880, %v1994
      %1996 = vmatprep.mubr.f32.mxu0 0.0
      %1997 = vmatmul.mubr.f32.gmra.mxu0 %v1909
      %v1998 = vpop.f32.mrf.mxu0
      %v1999 = vadd.f32 %v1885, %v1998
      %v2000 = vpop.f32.mrf.mxu0
      %v2001 = vadd.f32 %v1885, %v2000
      %2002 = vmatprep.mubr.f32.mxu0 0.0
      %2003 = vmatmul.mubr.f32.gmra.mxu0 %v1912
      %v2004 = vpop.f32.mrf.mxu0
      %v2005 = vadd.f32 %v1890, %v2004
      %v2006 = vpop.f32.mrf.mxu0
      %v2007 = vadd.f32 %v1890, %v2006
      %2008 = vmatprep.mubr.f32.mxu0 0.0
      %2009 = vmatmul.mubr.f32.gmra.mxu0 %v1915
      %v2010 = vpop.f32.mrf.mxu0
      %v2011 = vadd.f32 %v1895, %v2010
      %v2012 = vpop.f32.mrf.mxu0
      %v2013 = vadd.f32 %v1895, %v2012
      %2014 = vmatprep.mubr.f32.mxu0 0.0
      %2015 = vmatmul.mubr.f32.gmra.mxu0 %v1918
      %v2016 = vpop.f32.mrf.mxu0
      %v2017 = vadd.f32 %v1900, %v2016
      %v2018 = vpop.f32.mrf.mxu0
      %v2019 = vadd.f32 %v1900, %v2018
      %2020 = vdwg.mxu0
      %v2021 = vmul.f32 %v1987, %v1987
      %v2022 = vmul.f32 %v1989, %v1989
      %v2023 = vmul.f32 %v1993, %v1993
      %v2024 = vmul.f32 %v1995, %v1995
      %v2025 = vmul.f32 %v1999, %v1999
      %v2026 = vmul.f32 %v2001, %v2001
      %v2027 = vmul.f32 %v2005, %v2005
      %v2028 = vmul.f32 %v2007, %v2007
      %v2029 = vmul.f32 %v2011, %v2011
      %v2030 = vmul.f32 %v2013, %v2013
      %v2031 = vmul.f32 %v2017, %v2017
      %v2032 = vmul.f32 %v2019, %v2019
      %v2033 = vadd.f32 %v2021, %v2022
      %2034 = vadd.xlane.f32.xlu0 %v2033
      %v2035 = vpop.xlane.xlu0 %2034
      %v2036 = vadd.f32 %v2023, %v2024
      %2037 = vadd.xlane.f32.xlu0 %v2036
      %v2038 = vpop.xlane.xlu0 %2037
      %v2039 = vadd.f32 %v2025, %v2026
      %2040 = vadd.xlane.f32.xlu0 %v2039
      %v2041 = vpop.xlane.xlu0 %2040
      %v2042 = vadd.f32 %v2027, %v2028
      %2043 = vadd.xlane.f32.xlu0 %v2042
      %v2044 = vpop.xlane.xlu0 %2043
      %v2045 = vadd.f32 %v2029, %v2030
      %2046 = vadd.xlane.f32.xlu0 %v2045
      %v2047 = vpop.xlane.xlu0 %2046
      %v2048 = vadd.f32 %v2031, %v2032
      %2049 = vadd.xlane.f32.xlu0 %v2048
      %v2050 = vpop.xlane.xlu0 %2049
      %v2051 = vadd.f32 %v2035, %v2041
      %v2052 = vadd.f32 %v2038, %v2044
      %v2053 = vadd.f32 %v2051, %v2047
      %v2054 = vadd.f32 %v2052, %v2050
      %v2055 = vrsqrt.pop %v2053
      %v2056 = vmul.f32 %v2053, %v2055
      %vm2057 = vcmp.eq.f32.partialorder %v2053, inf
      %v2058 = vsel %vm2057, %v2053, %v2056
      %vm2059 = vcmp.eq.f32.partialorder %v2053, 0.0
      %v2060 = vand.u32 %v2053, 2147483648
      %v2061 = vsel %vm2059, %v2060, %v2058
      %v2062 = vrsqrt.pop %v2054
      %v2063 = vmul.f32 %v2054, %v2062
      %vm2064 = vcmp.eq.f32.partialorder %v2054, inf
      %v2065 = vsel %vm2064, %v2054, %v2063
      %vm2066 = vcmp.eq.f32.partialorder %v2054, 0.0
      %v2067 = vand.u32 %v2054, 2147483648
      %v2068 = vsel %vm2066, %v2067, %v2065
      %v2069 = vrcp.pop %v2061
      %v2070 = vmul.f32 %v1524, %v2069
      %v2071 = vrcp.pop %v2068
      %v2072 = vmul.f32 %v1525, %v2071
      %2074 = vset.pattern.permute.xlu0 1
      %2075 = vperm.xlu0 %2074, %v2070
      %v2076 = vpop.permute.xlu0 %2075
      %2079 = vset.pattern.permute.xlu0 1
      %2080 = vperm.xlu0 %2079, %v2072
      %v2081 = vpop.permute.xlu0 %2080
      %v2083 = vmul.f32 %v1987, %v2076
      %v2084 = vmul.f32 %v1989, %v2076
      %v2085 = vmul.f32 %v1993, %v2081
      %v2086 = vmul.f32 %v1995, %v2081
      %v2087 = vadd.f32 %v2083, %v2085
      %v2088 = vrot.slane %v2087, 4
      %v2089 = vadd.f32 %v2087, %v2088
      %v2090 = vrot.slane %v2089, 2
      %v2091 = vadd.f32 %v2089, %v2090
      %v2092 = vrot.slane %v2091, 1
      %v2093 = vadd.f32 %v2091, %v2092
      %v2094 = vadd.f32 %v2084, %v2086
      %v2095 = vrot.slane %v2094, 4
      %v2096 = vadd.f32 %v2094, %v2095
      %v2097 = vrot.slane %v2096, 2
      %v2098 = vadd.f32 %v2096, %v2097
      %v2099 = vrot.slane %v2098, 1
      %v2100 = vadd.f32 %v2098, %v2099
      %v2101 = vmul.f32 %v1999, %v2076
      %v2102 = vmul.f32 %v2001, %v2076
      %v2103 = vmul.f32 %v2005, %v2081
      %v2104 = vmul.f32 %v2007, %v2081
      %v2105 = vadd.f32 %v2101, %v2103
      %v2106 = vrot.slane %v2105, 4
      %v2107 = vadd.f32 %v2105, %v2106
      %v2108 = vrot.slane %v2107, 2
      %v2109 = vadd.f32 %v2107, %v2108
      %v2110 = vrot.slane %v2109, 1
      %v2111 = vadd.f32 %v2109, %v2110
      %v2112 = vadd.f32 %v2102, %v2104
      %v2113 = vrot.slane %v2112, 4
      %v2114 = vadd.f32 %v2112, %v2113
      %v2115 = vrot.slane %v2114, 2
      %v2116 = vadd.f32 %v2114, %v2115
      %v2117 = vrot.slane %v2116, 1
      %v2118 = vadd.f32 %v2116, %v2117
      %v2119 = vmul.f32 %v2011, %v2076
      %v2120 = vmul.f32 %v2013, %v2076
      %v2121 = vmul.f32 %v2017, %v2081
      %v2122 = vmul.f32 %v2019, %v2081
      %v2123 = vadd.f32 %v2119, %v2121
      %v2124 = vrot.slane %v2123, 4
      %v2125 = vadd.f32 %v2123, %v2124
      %v2126 = vrot.slane %v2125, 2
      %v2127 = vadd.f32 %v2125, %v2126
      %v2128 = vrot.slane %v2127, 1
      %v2129 = vadd.f32 %v2127, %v2128
      %v2130 = vadd.f32 %v2120, %v2122
      %v2131 = vrot.slane %v2130, 4
      %v2132 = vadd.f32 %v2130, %v2131
      %v2133 = vrot.slane %v2132, 2
      %v2134 = vadd.f32 %v2132, %v2133
      %v2135 = vrot.slane %v2134, 1
      %v2136 = vadd.f32 %v2134, %v2135
      %vm2137 = vcmask 1040384
      %v2138 = vsel %vm2137, %v2093, %v2111
      %v2139 = vsel %vm2137, %v2100, %v2118
      %vm2140 = vcmask 1041408
      %v2141 = vsel %vm2140, %v2138, %v2129
      %v2142 = vsel %vm2140, %v2139, %v2136
      %v2145 = vcombine.low %v2141, %v2142
      %v2147 = vadd.f32 %v627, %v2145
      %2148 = vst [vmem:[%s553] sm:$0x77] %v2147
      %s2149 = scalar_lea.vmem %s539, 8
      %v2150 = vld [vmem:[%s2149] sm:$0x77]
      %s2151 = scalar_lea.vmem %s546, 8
      %v2152 = vld [vmem:[%s2151] sm:$0x77]
      %v2154 = vcombine.high %v2150, %v2150
      %v2156 = vcombine.high %v2152, %v2152
      %v2157 = vsel %vm666, %v2150, 0
      %v2159 = vsel %vm666, %v2154, 0
      %v2161 = vsel %vm666, %v2152, 0
      %v2163 = vsel %vm666, %v2156, 0
      %2165 = vmatprep.subr.mxu0 0.0
      %2166 = vmatpush1.msra.mxu0 0.0
      %2167 = vmatprep.subr.mxu0 0.0
      %2168 = vmatpush1.msra.mxu0 0.0
      %2169 = vmatprep.subr.mxu0 0.0
      %2170 = vmatpush1.msra.mxu0 0.0
      %2171 = vmatprep.subr.mxu0 0.0
      %2172 = vmatpush1.msra.mxu0 0.0
      %2173 = vmatprep.subr.mxu0 0.0
      %2174 = vmatpush1.msra.mxu0 0.0
      %2175 = vmatprep.subr.mxu0 0.0
      %2176 = vmatpush1.msra.mxu0 0.0
      %2177 = vmatprep.subr.mxu0 0.0
      %2178 = vmatpush1.msra.mxu0 0.0
      %2179 = vmatprep.subr.mxu0 0.0
      %2180 = vmatpush1.msra.mxu0 0.0
      %2181 = vmatprep.subr.mxu0 0.0
      %2182 = vmatpush1.msra.mxu0 0.0
      %2183 = vmatprep.subr.mxu0 0.0
      %2184 = vmatpush1.msra.mxu0 0.0
      %2185 = vmatprep.subr.mxu0 0.0
      %2186 = vmatpush1.msra.mxu0 0.0
      %2187 = vmatprep.subr.mxu0 0.0
      %2188 = vmatpush1.msra.mxu0 0.0
      %2189 = vmatprep.subr.mxu0 0.0
      %2190 = vmatpush1.msra.mxu0 0.0
      %2191 = vmatprep.subr.mxu0 0.0
      %2192 = vmatpush1.msra.mxu0 0.0
      %2193 = vmatprep.subr.mxu0 0.0
      %2194 = vmatpush1.msra.mxu0 0.0
      %2195 = vmatprep.subr.mxu0 %v2159
      %2196 = vmatpush1.msra.mxu0 %v2157
      %2197 = vmatprep.subr.mxu0 0.0
      %2198 = vmatpush2.msra.mxu0 0.0
      %2199 = vmatprep.subr.mxu0 0.0
      %2200 = vmatpush2.msra.mxu0 0.0
      %2201 = vmatprep.subr.mxu0 0.0
      %2202 = vmatpush2.msra.mxu0 0.0
      %2203 = vmatprep.subr.mxu0 0.0
      %2204 = vmatpush2.msra.mxu0 0.0
      %2205 = vmatprep.subr.mxu0 0.0
      %2206 = vmatpush2.msra.mxu0 0.0
      %2207 = vmatprep.subr.mxu0 0.0
      %2208 = vmatpush2.msra.mxu0 0.0
      %2209 = vmatprep.subr.mxu0 0.0
      %2210 = vmatpush2.msra.mxu0 0.0
      %2211 = vmatprep.subr.mxu0 0.0
      %2212 = vmatpush2.msra.mxu0 0.0
      %2213 = vmatprep.subr.mxu0 0.0
      %2214 = vmatpush2.msra.mxu0 0.0
      %2215 = vmatprep.subr.mxu0 0.0
      %2216 = vmatpush2.msra.mxu0 0.0
      %2217 = vmatprep.subr.mxu0 0.0
      %2218 = vmatpush2.msra.mxu0 0.0
      %2219 = vmatprep.subr.mxu0 0.0
      %2220 = vmatpush2.msra.mxu0 0.0
      %2221 = vmatprep.subr.mxu0 0.0
      %2222 = vmatpush2.msra.mxu0 0.0
      %2223 = vmatprep.subr.mxu0 0.0
      %2224 = vmatpush2.msra.mxu0 0.0
      %2225 = vmatprep.subr.mxu0 0.0
      %2226 = vmatpush2.msra.mxu0 0.0
      %2227 = vmatprep.subr.mxu0 0.0
      %2228 = vmatpush2.msra.mxu0 0.0
      %2229 = vmatprep.mubr.f32.mxu0 0.0
      %2230 = vmatmul.mubr.f32.gmra.mxu0 %v655
      %v2231 = vpop.f32.mrf.mxu0
      %v2232 = vadd.f32 %v636, %v2231
      %v2233 = vpop.f32.mrf.mxu0
      %v2234 = vadd.f32 %v636, %v2233
      %2235 = vmatprep.mubr.f32.mxu0 0.0
      %2236 = vmatmul.mubr.f32.gmra.mxu0 %v658
      %v2237 = vpop.f32.mrf.mxu0
      %v2238 = vadd.f32 %v641, %v2237
      %v2239 = vpop.f32.mrf.mxu0
      %v2240 = vadd.f32 %v641, %v2239
      %2241 = vmatprep.mubr.f32.mxu0 0.0
      %2242 = vmatmul.mubr.f32.gmra.mxu0 %v661
      %v2243 = vpop.f32.mrf.mxu0
      %v2244 = vadd.f32 %v646, %v2243
      %v2245 = vpop.f32.mrf.mxu0
      %v2246 = vadd.f32 %v646, %v2245
      %2247 = vmatprep.mubr.f32.mxu0 0.0
      %2248 = vmatmul.mubr.f32.gmra.mxu0 %v664
      %v2249 = vpop.f32.mrf.mxu0
      %v2250 = vadd.f32 %v651, %v2249
      %v2251 = vpop.f32.mrf.mxu0
      %v2252 = vadd.f32 %v651, %v2251
      %2253 = vdwg.mxu0
      %2254 = vmatprep.subr.mxu0 0.0
      %2255 = vmatpush1.msra.mxu0 0.0
      %2256 = vmatprep.subr.mxu0 0.0
      %2257 = vmatpush1.msra.mxu0 0.0
      %2258 = vmatprep.subr.mxu0 0.0
      %2259 = vmatpush1.msra.mxu0 0.0
      %2260 = vmatprep.subr.mxu0 0.0
      %2261 = vmatpush1.msra.mxu0 0.0
      %2262 = vmatprep.subr.mxu0 0.0
      %2263 = vmatpush1.msra.mxu0 0.0
      %2264 = vmatprep.subr.mxu0 0.0
      %2265 = vmatpush1.msra.mxu0 0.0
      %2266 = vmatprep.subr.mxu0 0.0
      %2267 = vmatpush1.msra.mxu0 0.0
      %2268 = vmatprep.subr.mxu0 0.0
      %2269 = vmatpush1.msra.mxu0 0.0
      %2270 = vmatprep.subr.mxu0 0.0
      %2271 = vmatpush1.msra.mxu0 0.0
      %2272 = vmatprep.subr.mxu0 0.0
      %2273 = vmatpush1.msra.mxu0 0.0
      %2274 = vmatprep.subr.mxu0 0.0
      %2275 = vmatpush1.msra.mxu0 0.0
      %2276 = vmatprep.subr.mxu0 0.0
      %2277 = vmatpush1.msra.mxu0 0.0
      %2278 = vmatprep.subr.mxu0 0.0
      %2279 = vmatpush1.msra.mxu0 0.0
      %2280 = vmatprep.subr.mxu0 0.0
      %2281 = vmatpush1.msra.mxu0 0.0
      %2282 = vmatprep.subr.mxu0 0.0
      %2283 = vmatpush1.msra.mxu0 0.0
      %2284 = vmatprep.subr.mxu0 %v2163
      %2285 = vmatpush1.msra.mxu0 %v2161
      %2286 = vmatprep.subr.mxu0 0.0
      %2287 = vmatpush2.msra.mxu0 0.0
      %2288 = vmatprep.subr.mxu0 0.0
      %2289 = vmatpush2.msra.mxu0 0.0
      %2290 = vmatprep.subr.mxu0 0.0
      %2291 = vmatpush2.msra.mxu0 0.0
      %2292 = vmatprep.subr.mxu0 0.0
      %2293 = vmatpush2.msra.mxu0 0.0
      %2294 = vmatprep.subr.mxu0 0.0
      %2295 = vmatpush2.msra.mxu0 0.0
      %2296 = vmatprep.subr.mxu0 0.0
      %2297 = vmatpush2.msra.mxu0 0.0
      %2298 = vmatprep.subr.mxu0 0.0
      %2299 = vmatpush2.msra.mxu0 0.0
      %2300 = vmatprep.subr.mxu0 0.0
      %2301 = vmatpush2.msra.mxu0 0.0
      %2302 = vmatprep.subr.mxu0 0.0
      %2303 = vmatpush2.msra.mxu0 0.0
      %2304 = vmatprep.subr.mxu0 0.0
      %2305 = vmatpush2.msra.mxu0 0.0
      %2306 = vmatprep.subr.mxu0 0.0
      %2307 = vmatpush2.msra.mxu0 0.0
      %2308 = vmatprep.subr.mxu0 0.0
      %2309 = vmatpush2.msra.mxu0 0.0
      %2310 = vmatprep.subr.mxu0 0.0
      %2311 = vmatpush2.msra.mxu0 0.0
      %2312 = vmatprep.subr.mxu0 0.0
      %2313 = vmatpush2.msra.mxu0 0.0
      %2314 = vmatprep.subr.mxu0 0.0
      %2315 = vmatpush2.msra.mxu0 0.0
      %2316 = vmatprep.subr.mxu0 0.0
      %2317 = vmatpush2.msra.mxu0 0.0
      %2318 = vmatprep.mubr.f32.mxu0 0.0
      %2319 = vmatmul.mubr.f32.gmra.mxu0 %v655
      %v2320 = vpop.f32.mrf.mxu0
      %v2321 = vadd.f32 %v636, %v2320
      %v2322 = vpop.f32.mrf.mxu0
      %v2323 = vadd.f32 %v636, %v2322
      %2324 = vmatprep.mubr.f32.mxu0 0.0
      %2325 = vmatmul.mubr.f32.gmra.mxu0 %v658
      %v2326 = vpop.f32.mrf.mxu0
      %v2327 = vadd.f32 %v641, %v2326
      %v2328 = vpop.f32.mrf.mxu0
      %v2329 = vadd.f32 %v641, %v2328
      %2330 = vmatprep.mubr.f32.mxu0 0.0
      %2331 = vmatmul.mubr.f32.gmra.mxu0 %v661
      %v2332 = vpop.f32.mrf.mxu0
      %v2333 = vadd.f32 %v646, %v2332
      %v2334 = vpop.f32.mrf.mxu0
      %v2335 = vadd.f32 %v646, %v2334
      %2336 = vmatprep.mubr.f32.mxu0 0.0
      %2337 = vmatmul.mubr.f32.gmra.mxu0 %v664
      %v2338 = vpop.f32.mrf.mxu0
      %v2339 = vadd.f32 %v651, %v2338
      %v2340 = vpop.f32.mrf.mxu0
      %v2341 = vadd.f32 %v651, %v2340
      %2342 = vdwg.mxu0
      %v2343 = vmul.f32 %v2232, 0.2
      %v2344 = vmul.f32 %v2234, 0.2
      %v2345 = vmul.f32 %v2321, 0.2
      %v2346 = vmul.f32 %v2323, 0.2
      %v2347 = vmul.f32 %v2238, 0.2
      %v2348 = vmul.f32 %v2240, 0.2
      %v2349 = vmul.f32 %v2327, 0.2
      %v2350 = vmul.f32 %v2329, 0.2
      %v2351 = vmul.f32 %v2244, 0.2
      %v2352 = vmul.f32 %v2246, 0.2
      %v2353 = vmul.f32 %v2333, 0.2
      %v2354 = vmul.f32 %v2335, 0.2
      %v2355 = vmul.f32 %v2250, 0.2
      %v2356 = vmul.f32 %v2252, 0.2
      %v2357 = vmul.f32 %v2339, 0.2
      %v2358 = vmul.f32 %v2341, 0.2
      %v2359 = vmax.f32 %v2232, %v2343
      %v2360 = vmax.f32 %v2234, %v2344
      %v2361 = vmax.f32 %v2321, %v2345
      %v2362 = vmax.f32 %v2323, %v2346
      %v2363 = vmax.f32 %v2238, %v2347
      %v2364 = vmax.f32 %v2240, %v2348
      %v2365 = vmax.f32 %v2327, %v2349
      %v2366 = vmax.f32 %v2329, %v2350
      %v2367 = vmax.f32 %v2244, %v2351
      %v2368 = vmax.f32 %v2246, %v2352
      %v2369 = vmax.f32 %v2333, %v2353
      %v2370 = vmax.f32 %v2335, %v2354
      %v2371 = vmax.f32 %v2250, %v2355
      %v2372 = vmax.f32 %v2252, %v2356
      %v2373 = vmax.f32 %v2339, %v2357
      %v2374 = vmax.f32 %v2341, %v2358
      %2375 = vmatprep.subr.mxu0 0.0
      %2376 = vmatpush1.msra.mxu0 0.0
      %2377 = vmatprep.subr.mxu0 0.0
      %2378 = vmatpush1.msra.mxu0 0.0
      %2379 = vmatprep.subr.mxu0 0.0
      %2380 = vmatpush1.msra.mxu0 0.0
      %2381 = vmatprep.subr.mxu0 0.0
      %2382 = vmatpush1.msra.mxu0 0.0
      %2383 = vmatprep.subr.mxu0 0.0
      %2384 = vmatpush1.msra.mxu0 0.0
      %2385 = vmatprep.subr.mxu0 0.0
      %2386 = vmatpush1.msra.mxu0 0.0
      %2387 = vmatprep.subr.mxu0 0.0
      %2388 = vmatpush1.msra.mxu0 0.0
      %2389 = vmatprep.subr.mxu0 0.0
      %2390 = vmatpush1.msra.mxu0 0.0
      %2391 = vmatprep.subr.mxu0 0.0
      %2392 = vmatpush1.msra.mxu0 0.0
      %2393 = vmatprep.subr.mxu0 0.0
      %2394 = vmatpush1.msra.mxu0 0.0
      %2395 = vmatprep.subr.mxu0 0.0
      %2396 = vmatpush1.msra.mxu0 0.0
      %2397 = vmatprep.subr.mxu0 0.0
      %2398 = vmatpush1.msra.mxu0 0.0
      %2399 = vmatprep.subr.mxu0 %v2372
      %2400 = vmatpush1.msra.mxu0 %v2371
      %2401 = vmatprep.subr.mxu0 %v2368
      %2402 = vmatpush1.msra.mxu0 %v2367
      %2403 = vmatprep.subr.mxu0 %v2364
      %2404 = vmatpush1.msra.mxu0 %v2363
      %2405 = vmatprep.subr.mxu0 %v2360
      %2406 = vmatpush1.msra.mxu0 %v2359
      %2407 = vmatprep.subr.mxu0 0.0
      %2408 = vmatpush2.msra.mxu0 0.0
      %2409 = vmatprep.subr.mxu0 0.0
      %2410 = vmatpush2.msra.mxu0 0.0
      %2411 = vmatprep.subr.mxu0 0.0
      %2412 = vmatpush2.msra.mxu0 0.0
      %2413 = vmatprep.subr.mxu0 0.0
      %2414 = vmatpush2.msra.mxu0 0.0
      %2415 = vmatprep.subr.mxu0 0.0
      %2416 = vmatpush2.msra.mxu0 0.0
      %2417 = vmatprep.subr.mxu0 0.0
      %2418 = vmatpush2.msra.mxu0 0.0
      %2419 = vmatprep.subr.mxu0 0.0
      %2420 = vmatpush2.msra.mxu0 0.0
      %2421 = vmatprep.subr.mxu0 0.0
      %2422 = vmatpush2.msra.mxu0 0.0
      %2423 = vmatprep.subr.mxu0 0.0
      %2424 = vmatpush2.msra.mxu0 0.0
      %2425 = vmatprep.subr.mxu0 0.0
      %2426 = vmatpush2.msra.mxu0 0.0
      %2427 = vmatprep.subr.mxu0 0.0
      %2428 = vmatpush2.msra.mxu0 0.0
      %2429 = vmatprep.subr.mxu0 0.0
      %2430 = vmatpush2.msra.mxu0 0.0
      %2431 = vmatprep.subr.mxu0 0.0
      %2432 = vmatpush2.msra.mxu0 0.0
      %2433 = vmatprep.subr.mxu0 0.0
      %2434 = vmatpush2.msra.mxu0 0.0
      %2435 = vmatprep.subr.mxu0 0.0
      %2436 = vmatpush2.msra.mxu0 0.0
      %2437 = vmatprep.subr.mxu0 0.0
      %2438 = vmatpush2.msra.mxu0 0.0
      %2439 = vmatprep.mubr.f32.mxu0 0.0
      %2440 = vmatmul.mubr.f32.gmra.mxu0 %v927
      %v2441 = vpop.f32.mrf.mxu0
      %v2442 = vadd.f32 %v888, %v2441
      %v2443 = vpop.f32.mrf.mxu0
      %v2444 = vadd.f32 %v888, %v2443
      %2445 = vmatprep.mubr.f32.mxu0 0.0
      %2446 = vmatmul.mubr.f32.gmra.mxu0 %v930
      %v2447 = vpop.f32.mrf.mxu0
      %v2448 = vadd.f32 %v893, %v2447
      %v2449 = vpop.f32.mrf.mxu0
      %v2450 = vadd.f32 %v893, %v2449
      %2451 = vmatprep.mubr.f32.mxu0 0.0
      %2452 = vmatmul.mubr.f32.gmra.mxu0 %v933
      %v2453 = vpop.f32.mrf.mxu0
      %v2454 = vadd.f32 %v898, %v2453
      %v2455 = vpop.f32.mrf.mxu0
      %v2456 = vadd.f32 %v898, %v2455
      %2457 = vmatprep.mubr.f32.mxu0 0.0
      %2458 = vmatmul.mubr.f32.gmra.mxu0 %v936
      %v2459 = vpop.f32.mrf.mxu0
      %v2460 = vadd.f32 %v903, %v2459
      %v2461 = vpop.f32.mrf.mxu0
      %v2462 = vadd.f32 %v903, %v2461
      %2463 = vmatprep.mubr.f32.mxu0 0.0
      %2464 = vmatmul.mubr.f32.gmra.mxu0 %v939
      %v2465 = vpop.f32.mrf.mxu0
      %v2466 = vadd.f32 %v908, %v2465
      %v2467 = vpop.f32.mrf.mxu0
      %v2468 = vadd.f32 %v908, %v2467
      %2469 = vmatprep.mubr.f32.mxu0 0.0
      %2470 = vmatmul.mubr.f32.gmra.mxu0 %v942
      %v2471 = vpop.f32.mrf.mxu0
      %v2472 = vadd.f32 %v913, %v2471
      %v2473 = vpop.f32.mrf.mxu0
      %v2474 = vadd.f32 %v913, %v2473
      %2475 = vmatprep.mubr.f32.mxu0 0.0
      %2476 = vmatmul.mubr.f32.gmra.mxu0 %v945
      %v2477 = vpop.f32.mrf.mxu0
      %v2478 = vadd.f32 %v918, %v2477
      %v2479 = vpop.f32.mrf.mxu0
      %v2480 = vadd.f32 %v918, %v2479
      %2481 = vmatprep.mubr.f32.mxu0 0.0
      %2482 = vmatmul.mubr.f32.gmra.mxu0 %v948
      %v2483 = vpop.f32.mrf.mxu0
      %v2484 = vadd.f32 %v923, %v2483
      %v2485 = vpop.f32.mrf.mxu0
      %v2486 = vadd.f32 %v923, %v2485
      %2487 = vdwg.mxu0
      %2488 = vmatprep.subr.mxu0 0.0
      %2489 = vmatpush1.msra.mxu0 0.0
      %2490 = vmatprep.subr.mxu0 0.0
      %2491 = vmatpush1.msra.mxu0 0.0
      %2492 = vmatprep.subr.mxu0 0.0
      %2493 = vmatpush1.msra.mxu0 0.0
      %2494 = vmatprep.subr.mxu0 0.0
      %2495 = vmatpush1.msra.mxu0 0.0
      %2496 = vmatprep.subr.mxu0 0.0
      %2497 = vmatpush1.msra.mxu0 0.0
      %2498 = vmatprep.subr.mxu0 0.0
      %2499 = vmatpush1.msra.mxu0 0.0
      %2500 = vmatprep.subr.mxu0 0.0
      %2501 = vmatpush1.msra.mxu0 0.0
      %2502 = vmatprep.subr.mxu0 0.0
      %2503 = vmatpush1.msra.mxu0 0.0
      %2504 = vmatprep.subr.mxu0 0.0
      %2505 = vmatpush1.msra.mxu0 0.0
      %2506 = vmatprep.subr.mxu0 0.0
      %2507 = vmatpush1.msra.mxu0 0.0
      %2508 = vmatprep.subr.mxu0 0.0
      %2509 = vmatpush1.msra.mxu0 0.0
      %2510 = vmatprep.subr.mxu0 0.0
      %2511 = vmatpush1.msra.mxu0 0.0
      %2512 = vmatprep.subr.mxu0 %v2374
      %2513 = vmatpush1.msra.mxu0 %v2373
      %2514 = vmatprep.subr.mxu0 %v2370
      %2515 = vmatpush1.msra.mxu0 %v2369
      %2516 = vmatprep.subr.mxu0 %v2366
      %2517 = vmatpush1.msra.mxu0 %v2365
      %2518 = vmatprep.subr.mxu0 %v2362
      %2519 = vmatpush1.msra.mxu0 %v2361
      %2520 = vmatprep.subr.mxu0 0.0
      %2521 = vmatpush2.msra.mxu0 0.0
      %2522 = vmatprep.subr.mxu0 0.0
      %2523 = vmatpush2.msra.mxu0 0.0
      %2524 = vmatprep.subr.mxu0 0.0
      %2525 = vmatpush2.msra.mxu0 0.0
      %2526 = vmatprep.subr.mxu0 0.0
      %2527 = vmatpush2.msra.mxu0 0.0
      %2528 = vmatprep.subr.mxu0 0.0
      %2529 = vmatpush2.msra.mxu0 0.0
      %2530 = vmatprep.subr.mxu0 0.0
      %2531 = vmatpush2.msra.mxu0 0.0
      %2532 = vmatprep.subr.mxu0 0.0
      %2533 = vmatpush2.msra.mxu0 0.0
      %2534 = vmatprep.subr.mxu0 0.0
      %2535 = vmatpush2.msra.mxu0 0.0
      %2536 = vmatprep.subr.mxu0 0.0
      %2537 = vmatpush2.msra.mxu0 0.0
      %2538 = vmatprep.subr.mxu0 0.0
      %2539 = vmatpush2.msra.mxu0 0.0
      %2540 = vmatprep.subr.mxu0 0.0
      %2541 = vmatpush2.msra.mxu0 0.0
      %2542 = vmatprep.subr.mxu0 0.0
      %2543 = vmatpush2.msra.mxu0 0.0
      %2544 = vmatprep.subr.mxu0 0.0
      %2545 = vmatpush2.msra.mxu0 0.0
      %2546 = vmatprep.subr.mxu0 0.0
      %2547 = vmatpush2.msra.mxu0 0.0
      %2548 = vmatprep.subr.mxu0 0.0
      %2549 = vmatpush2.msra.mxu0 0.0
      %2550 = vmatprep.subr.mxu0 0.0
      %2551 = vmatpush2.msra.mxu0 0.0
      %2552 = vmatprep.mubr.f32.mxu0 0.0
      %2553 = vmatmul.mubr.f32.gmra.mxu0 %v927
      %v2554 = vpop.f32.mrf.mxu0
      %v2555 = vadd.f32 %v888, %v2554
      %v2556 = vpop.f32.mrf.mxu0
      %v2557 = vadd.f32 %v888, %v2556
      %2558 = vmatprep.mubr.f32.mxu0 0.0
      %2559 = vmatmul.mubr.f32.gmra.mxu0 %v930
      %v2560 = vpop.f32.mrf.mxu0
      %v2561 = vadd.f32 %v893, %v2560
      %v2562 = vpop.f32.mrf.mxu0
      %v2563 = vadd.f32 %v893, %v2562
      %2564 = vmatprep.mubr.f32.mxu0 0.0
      %2565 = vmatmul.mubr.f32.gmra.mxu0 %v933
      %v2566 = vpop.f32.mrf.mxu0
      %v2567 = vadd.f32 %v898, %v2566
      %v2568 = vpop.f32.mrf.mxu0
      %v2569 = vadd.f32 %v898, %v2568
      %2570 = vmatprep.mubr.f32.mxu0 0.0
      %2571 = vmatmul.mubr.f32.gmra.mxu0 %v936
      %v2572 = vpop.f32.mrf.mxu0
      %v2573 = vadd.f32 %v903, %v2572
      %v2574 = vpop.f32.mrf.mxu0
      %v2575 = vadd.f32 %v903, %v2574
      %2576 = vmatprep.mubr.f32.mxu0 0.0
      %2577 = vmatmul.mubr.f32.gmra.mxu0 %v939
      %v2578 = vpop.f32.mrf.mxu0
      %v2579 = vadd.f32 %v908, %v2578
      %v2580 = vpop.f32.mrf.mxu0
      %v2581 = vadd.f32 %v908, %v2580
      %2582 = vmatprep.mubr.f32.mxu0 0.0
      %2583 = vmatmul.mubr.f32.gmra.mxu0 %v942
      %v2584 = vpop.f32.mrf.mxu0
      %v2585 = vadd.f32 %v913, %v2584
      %v2586 = vpop.f32.mrf.mxu0
      %v2587 = vadd.f32 %v913, %v2586
      %2588 = vmatprep.mubr.f32.mxu0 0.0
      %2589 = vmatmul.mubr.f32.gmra.mxu0 %v945
      %v2590 = vpop.f32.mrf.mxu0
      %v2591 = vadd.f32 %v918, %v2590
      %v2592 = vpop.f32.mrf.mxu0
      %v2593 = vadd.f32 %v918, %v2592
      %2594 = vmatprep.mubr.f32.mxu0 0.0
      %2595 = vmatmul.mubr.f32.gmra.mxu0 %v948
      %v2596 = vpop.f32.mrf.mxu0
      %v2597 = vadd.f32 %v923, %v2596
      %v2598 = vpop.f32.mrf.mxu0
      %v2599 = vadd.f32 %v923, %v2598
      %2600 = vdwg.mxu0
      %v2601 = vmul.f32 %v2442, 0.2
      %v2602 = vmul.f32 %v2444, 0.2
      %v2603 = vmul.f32 %v2555, 0.2
      %v2604 = vmul.f32 %v2557, 0.2
      %v2605 = vmul.f32 %v2448, 0.2
      %v2606 = vmul.f32 %v2450, 0.2
      %v2607 = vmul.f32 %v2561, 0.2
      %v2608 = vmul.f32 %v2563, 0.2
      %v2609 = vmul.f32 %v2454, 0.2
      %v2610 = vmul.f32 %v2456, 0.2
      %v2611 = vmul.f32 %v2567, 0.2
      %v2612 = vmul.f32 %v2569, 0.2
      %v2613 = vmul.f32 %v2460, 0.2
      %v2614 = vmul.f32 %v2462, 0.2
      %v2615 = vmul.f32 %v2573, 0.2
      %v2616 = vmul.f32 %v2575, 0.2
      %v2617 = vmul.f32 %v2466, 0.2
      %v2618 = vmul.f32 %v2468, 0.2
      %v2619 = vmul.f32 %v2579, 0.2
      %v2620 = vmul.f32 %v2581, 0.2
      %v2621 = vmul.f32 %v2472, 0.2
      %v2622 = vmul.f32 %v2474, 0.2
      %v2623 = vmul.f32 %v2585, 0.2
      %v2624 = vmul.f32 %v2587, 0.2
      %v2625 = vmul.f32 %v2478, 0.2
      %v2626 = vmul.f32 %v2480, 0.2
      %v2627 = vmul.f32 %v2591, 0.2
      %v2628 = vmul.f32 %v2593, 0.2
      %v2629 = vmul.f32 %v2484, 0.2
      %v2630 = vmul.f32 %v2486, 0.2
      %v2631 = vmul.f32 %v2597, 0.2
      %v2632 = vmul.f32 %v2599, 0.2
      %v2633 = vmax.f32 %v2442, %v2601
      %v2634 = vmax.f32 %v2444, %v2602
      %v2635 = vmax.f32 %v2555, %v2603
      %v2636 = vmax.f32 %v2557, %v2604
      %v2637 = vmax.f32 %v2448, %v2605
      %v2638 = vmax.f32 %v2450, %v2606
      %v2639 = vmax.f32 %v2561, %v2607
      %v2640 = vmax.f32 %v2563, %v2608
      %v2641 = vmax.f32 %v2454, %v2609
      %v2642 = vmax.f32 %v2456, %v2610
      %v2643 = vmax.f32 %v2567, %v2611
      %v2644 = vmax.f32 %v2569, %v2612
      %v2645 = vmax.f32 %v2460, %v2613
      %v2646 = vmax.f32 %v2462, %v2614
      %v2647 = vmax.f32 %v2573, %v2615
      %v2648 = vmax.f32 %v2575, %v2616
      %v2649 = vmax.f32 %v2466, %v2617
      %v2650 = vmax.f32 %v2468, %v2618
      %v2651 = vmax.f32 %v2579, %v2619
      %v2652 = vmax.f32 %v2581, %v2620
      %v2653 = vmax.f32 %v2472, %v2621
      %v2654 = vmax.f32 %v2474, %v2622
      %v2655 = vmax.f32 %v2585, %v2623
      %v2656 = vmax.f32 %v2587, %v2624
      %v2657 = vmax.f32 %v2478, %v2625
      %v2658 = vmax.f32 %v2480, %v2626
      %v2659 = vmax.f32 %v2591, %v2627
      %v2660 = vmax.f32 %v2593, %v2628
      %v2661 = vmax.f32 %v2484, %v2629
      %v2662 = vmax.f32 %v2486, %v2630
      %v2663 = vmax.f32 %v2597, %v2631
      %v2664 = vmax.f32 %v2599, %v2632
      %v2665 = vmax.f32 %v2633, %v2634
      %2666 = vmax.xlane.f32.xlu0 %v2665
      %v2667 = vpop.xlane.xlu0 %2666
      %v2668 = vmax.f32 %v2637, %v2638
      %2669 = vmax.xlane.f32.xlu0 %v2668
      %v2670 = vpop.xlane.xlu0 %2669
      %v2671 = vmax.f32 %v2641, %v2642
      %2672 = vmax.xlane.f32.xlu0 %v2671
      %v2673 = vpop.xlane.xlu0 %2672
      %v2674 = vmax.f32 %v2645, %v2646
      %2675 = vmax.xlane.f32.xlu0 %v2674
      %v2676 = vpop.xlane.xlu0 %2675
      %v2677 = vmax.f32 %v2649, %v2650
      %2678 = vmax.xlane.f32.xlu0 %v2677
      %v2679 = vpop.xlane.xlu0 %2678
      %v2680 = vmax.f32 %v2653, %v2654
      %2681 = vmax.xlane.f32.xlu0 %v2680
      %v2682 = vpop.xlane.xlu0 %2681
      %v2683 = vmax.f32 %v2657, %v2658
      %2684 = vmax.xlane.f32.xlu0 %v2683
      %v2685 = vpop.xlane.xlu0 %2684
      %v2686 = vmax.f32 %v2661, %v2662
      %2687 = vmax.xlane.f32.xlu0 %v2686
      %v2688 = vpop.xlane.xlu0 %2687
      %v2689 = vmax.f32 %v2635, %v2636
      %2690 = vmax.xlane.f32.xlu0 %v2689
      %v2691 = vpop.xlane.xlu0 %2690
      %v2692 = vmax.f32 %v2639, %v2640
      %2693 = vmax.xlane.f32.xlu0 %v2692
      %v2694 = vpop.xlane.xlu0 %2693
      %v2695 = vmax.f32 %v2643, %v2644
      %2696 = vmax.xlane.f32.xlu0 %v2695
      %v2697 = vpop.xlane.xlu0 %2696
      %v2698 = vmax.f32 %v2647, %v2648
      %2699 = vmax.xlane.f32.xlu0 %v2698
      %v2700 = vpop.xlane.xlu0 %2699
      %v2701 = vmax.f32 %v2651, %v2652
      %2702 = vmax.xlane.f32.xlu0 %v2701
      %v2703 = vpop.xlane.xlu0 %2702
      %v2704 = vmax.f32 %v2655, %v2656
      %2705 = vmax.xlane.f32.xlu0 %v2704
      %v2706 = vpop.xlane.xlu0 %2705
      %v2707 = vmax.f32 %v2659, %v2660
      %2708 = vmax.xlane.f32.xlu0 %v2707
      %v2709 = vpop.xlane.xlu0 %2708
      %v2710 = vmax.f32 %v2663, %v2664
      %2711 = vmax.xlane.f32.xlu0 %v2710
      %v2712 = vpop.xlane.xlu0 %2711
      %v2713 = vsel %vm1288, %v2667, %v2691
      %v2714 = vsel %vm1288, %v2670, %v2694
      %v2715 = vsel %vm1288, %v2673, %v2697
      %v2716 = vsel %vm1288, %v2676, %v2700
      %v2717 = vsel %vm1288, %v2679, %v2703
      %v2718 = vsel %vm1288, %v2682, %v2706
      %v2719 = vsel %vm1288, %v2685, %v2709
      %v2720 = vsel %vm1288, %v2688, %v2712
      %2721 = vmatprep.subr.mxu0 0.0
      %2722 = vmatpush1.msra.mxu0 0.0
      %2723 = vmatprep.subr.mxu0 0.0
      %2724 = vmatpush1.msra.mxu0 0.0
      %2725 = vmatprep.subr.mxu0 0.0
      %2726 = vmatpush1.msra.mxu0 0.0
      %2727 = vmatprep.subr.mxu0 0.0
      %2728 = vmatpush1.msra.mxu0 0.0
      %2729 = vmatprep.subr.mxu0 0.0
      %2730 = vmatpush1.msra.mxu0 0.0
      %2731 = vmatprep.subr.mxu0 0.0
      %2732 = vmatpush1.msra.mxu0 0.0
      %2733 = vmatprep.subr.mxu0 0.0
      %2734 = vmatpush1.msra.mxu0 0.0
      %2735 = vmatprep.subr.mxu0 0.0
      %2736 = vmatpush1.msra.mxu0 0.0
      %2737 = vmatprep.subr.mxu0 0.0
      %2738 = vmatpush1.msra.mxu0 %v2720
      %2739 = vmatprep.subr.mxu0 0.0
      %2740 = vmatpush1.msra.mxu0 %v2719
      %2741 = vmatprep.subr.mxu0 0.0
      %2742 = vmatpush1.msra.mxu0 %v2718
      %2743 = vmatprep.subr.mxu0 0.0
      %2744 = vmatpush1.msra.mxu0 %v2717
      %2745 = vmatprep.subr.mxu0 0.0
      %2746 = vmatpush1.msra.mxu0 %v2716
      %2747 = vmatprep.subr.mxu0 0.0
      %2748 = vmatpush1.msra.mxu0 %v2715
      %2749 = vmatprep.subr.mxu0 0.0
      %2750 = vmatpush1.msra.mxu0 %v2714
      %2751 = vmatprep.subr.mxu0 0.0
      %2752 = vmatpush1.msra.mxu0 %v2713
      %2753 = vmatprep.subr.mxu0 0.0
      %2754 = vmatpush2.msra.mxu0 0.0
      %2755 = vmatprep.subr.mxu0 0.0
      %2756 = vmatpush2.msra.mxu0 0.0
      %2757 = vmatprep.subr.mxu0 0.0
      %2758 = vmatpush2.msra.mxu0 0.0
      %2759 = vmatprep.subr.mxu0 0.0
      %2760 = vmatpush2.msra.mxu0 0.0
      %2761 = vmatprep.subr.mxu0 0.0
      %2762 = vmatpush2.msra.mxu0 0.0
      %2763 = vmatprep.subr.mxu0 0.0
      %2764 = vmatpush2.msra.mxu0 0.0
      %2765 = vmatprep.subr.mxu0 0.0
      %2766 = vmatpush2.msra.mxu0 0.0
      %2767 = vmatprep.subr.mxu0 0.0
      %2768 = vmatpush2.msra.mxu0 0.0
      %2769 = vmatprep.subr.mxu0 0.0
      %2770 = vmatpush2.msra.mxu0 0.0
      %2771 = vmatprep.subr.mxu0 0.0
      %2772 = vmatpush2.msra.mxu0 0.0
      %2773 = vmatprep.subr.mxu0 0.0
      %2774 = vmatpush2.msra.mxu0 0.0
      %2775 = vmatprep.subr.mxu0 0.0
      %2776 = vmatpush2.msra.mxu0 0.0
      %2777 = vmatprep.subr.mxu0 0.0
      %2778 = vmatpush2.msra.mxu0 0.0
      %2779 = vmatprep.subr.mxu0 0.0
      %2780 = vmatpush2.msra.mxu0 0.0
      %2781 = vmatprep.subr.mxu0 0.0
      %2782 = vmatpush2.msra.mxu0 0.0
      %2783 = vmatprep.subr.mxu0 0.0
      %2784 = vmatpush2.msra.mxu0 0.0
      %2785 = vmatprep.mubr.f32.mxu0 0.0
      %2786 = vmatmul.mubr.f32.gmra.mxu0 %v1319
      %v2787 = vpop.f32.mrf.mxu0
      %v2788 = vadd.f32 %v1300, %v2787
      %v2789 = vpop.f32.mrf.mxu0
      %2790 = vmatprep.mubr.f32.mxu0 0.0
      %2791 = vmatmul.mubr.f32.gmra.mxu0 %v1322
      %v2792 = vpop.f32.mrf.mxu0
      %v2793 = vadd.f32 %v1305, %v2792
      %v2794 = vpop.f32.mrf.mxu0
      %2795 = vmatprep.mubr.f32.mxu0 0.0
      %2796 = vmatmul.mubr.f32.gmra.mxu0 %v1325
      %v2797 = vpop.f32.mrf.mxu0
      %v2798 = vadd.f32 %v1310, %v2797
      %v2799 = vpop.f32.mrf.mxu0
      %2800 = vmatprep.mubr.f32.mxu0 0.0
      %2801 = vmatmul.mubr.f32.gmra.mxu0 %v1328
      %v2802 = vpop.f32.mrf.mxu0
      %v2803 = vadd.f32 %v1315, %v2802
      %v2804 = vpop.f32.mrf.mxu0
      %2805 = vdwg.mxu0
      %v2806 = vmul.f32 %v2788, 0.2
      %v2807 = vmul.f32 %v2793, 0.2
      %v2808 = vmul.f32 %v2798, 0.2
      %v2809 = vmul.f32 %v2803, 0.2
      %v2810 = vmax.f32 %v2788, %v2806
      %v2811 = vmax.f32 %v2793, %v2807
      %v2812 = vmax.f32 %v2798, %v2808
      %v2813 = vmax.f32 %v2803, %v2809
      %2814 = vmatprep.subr.mxu0 0.0
      %2815 = vmatpush1.msra.mxu0 0.0
      %2816 = vmatprep.subr.mxu0 0.0
      %2817 = vmatpush1.msra.mxu0 0.0
      %2818 = vmatprep.subr.mxu0 0.0
      %2819 = vmatpush1.msra.mxu0 0.0
      %2820 = vmatprep.subr.mxu0 0.0
      %2821 = vmatpush1.msra.mxu0 0.0
      %2822 = vmatprep.subr.mxu0 0.0
      %2823 = vmatpush1.msra.mxu0 0.0
      %2824 = vmatprep.subr.mxu0 0.0
      %2825 = vmatpush1.msra.mxu0 0.0
      %2826 = vmatprep.subr.mxu0 0.0
      %2827 = vmatpush1.msra.mxu0 0.0
      %2828 = vmatprep.subr.mxu0 0.0
      %2829 = vmatpush1.msra.mxu0 0.0
      %2830 = vmatprep.subr.mxu0 0.0
      %2831 = vmatpush1.msra.mxu0 0.0
      %2832 = vmatprep.subr.mxu0 0.0
      %2833 = vmatpush1.msra.mxu0 0.0
      %2834 = vmatprep.subr.mxu0 0.0
      %2835 = vmatpush1.msra.mxu0 0.0
      %2836 = vmatprep.subr.mxu0 0.0
      %2837 = vmatpush1.msra.mxu0 0.0
      %2838 = vmatprep.subr.mxu0 0.0
      %2839 = vmatpush1.msra.mxu0 %v2813
      %2840 = vmatprep.subr.mxu0 0.0
      %2841 = vmatpush1.msra.mxu0 %v2812
      %2842 = vmatprep.subr.mxu0 0.0
      %2843 = vmatpush1.msra.mxu0 %v2811
      %2844 = vmatprep.subr.mxu0 0.0
      %2845 = vmatpush1.msra.mxu0 %v2810
      %2846 = vmatprep.subr.mxu0 0.0
      %2847 = vmatpush2.msra.mxu0 0.0
      %2848 = vmatprep.subr.mxu0 0.0
      %2849 = vmatpush2.msra.mxu0 0.0
      %2850 = vmatprep.subr.mxu0 0.0
      %2851 = vmatpush2.msra.mxu0 0.0
      %2852 = vmatprep.subr.mxu0 0.0
      %2853 = vmatpush2.msra.mxu0 0.0
      %2854 = vmatprep.subr.mxu0 0.0
      %2855 = vmatpush2.msra.mxu0 0.0
      %2856 = vmatprep.subr.mxu0 0.0
      %2857 = vmatpush2.msra.mxu0 0.0
      %2858 = vmatprep.subr.mxu0 0.0
      %2859 = vmatpush2.msra.mxu0 0.0
      %2860 = vmatprep.subr.mxu0 0.0
      %2861 = vmatpush2.msra.mxu0 0.0
      %2862 = vmatprep.subr.mxu0 0.0
      %2863 = vmatpush2.msra.mxu0 0.0
      %2864 = vmatprep.subr.mxu0 0.0
      %2865 = vmatpush2.msra.mxu0 0.0
      %2866 = vmatprep.subr.mxu0 0.0
      %2867 = vmatpush2.msra.mxu0 0.0
      %2868 = vmatprep.subr.mxu0 0.0
      %2869 = vmatpush2.msra.mxu0 0.0
      %2870 = vmatprep.subr.mxu0 0.0
      %2871 = vmatpush2.msra.mxu0 0.0
      %2872 = vmatprep.subr.mxu0 0.0
      %2873 = vmatpush2.msra.mxu0 0.0
      %2874 = vmatprep.subr.mxu0 0.0
      %2875 = vmatpush2.msra.mxu0 0.0
      %2876 = vmatprep.subr.mxu0 0.0
      %2877 = vmatpush2.msra.mxu0 0.0
      %2878 = vmatprep.mubr.f32.mxu0 0.0
      %2879 = vmatmul.mubr.f32.gmra.mxu0 %v1434
      %v2880 = vpop.f32.mrf.mxu0
      %v2881 = vadd.f32 %v1426, %v2880
      %v2882 = vpop.f32.mrf.mxu0
      %2883 = vmatprep.mubr.f32.mxu0 0.0
      %2884 = vmatmul.mubr.f32.gmra.mxu0 %v1437
      %v2885 = vpop.f32.mrf.mxu0
      %v2886 = vadd.f32 %v1431, %v2885
      %v2887 = vpop.f32.mrf.mxu0
      %2888 = vdwg.mxu0
      %v2889 = vtanh.pop %v2881
      %v2890 = vtanh.pop %v2886
      %2893 = vrot.lane.b32.xlu0 %v2889, 1
      %v2894 = vpop.permute.xlu0 %2893
      %2895 = vrot.lane.b32.xlu0 %v2890, 1
      %v2896 = vpop.permute.xlu0 %2895
      %v2899 = vsub.f32 %v2889, %v2894
      %v2900 = vsub.f32 %v2890, %v2896
      %2901 = vmatprep.subr.mxu0 0.0
      %2902 = vmatpush1.msra.mxu0 0.0
      %2903 = vmatprep.subr.mxu0 0.0
      %2904 = vmatpush1.msra.mxu0 0.0
      %2905 = vmatprep.subr.mxu0 0.0
      %2906 = vmatpush1.msra.mxu0 0.0
      %2907 = vmatprep.subr.mxu0 0.0
      %2908 = vmatpush1.msra.mxu0 0.0
      %2909 = vmatprep.subr.mxu0 0.0
      %2910 = vmatpush1.msra.mxu0 0.0
      %2911 = vmatprep.subr.mxu0 0.0
      %2912 = vmatpush1.msra.mxu0 0.0
      %2913 = vmatprep.subr.mxu0 0.0
      %2914 = vmatpush1.msra.mxu0 0.0
      %2915 = vmatprep.subr.mxu0 0.0
      %2916 = vmatpush1.msra.mxu0 0.0
      %2917 = vmatprep.subr.mxu0 0.0
      %2918 = vmatpush1.msra.mxu0 0.0
      %2919 = vmatprep.subr.mxu0 0.0
      %2920 = vmatpush1.msra.mxu0 0.0
      %2921 = vmatprep.subr.mxu0 0.0
      %2922 = vmatpush1.msra.mxu0 0.0
      %2923 = vmatprep.subr.mxu0 0.0
      %2924 = vmatpush1.msra.mxu0 0.0
      %2925 = vmatprep.subr.mxu0 0.0
      %2926 = vmatpush1.msra.mxu0 0.0
      %2927 = vmatprep.subr.mxu0 0.0
      %2928 = vmatpush1.msra.mxu0 0.0
      %2929 = vmatprep.subr.mxu0 0.0
      %2930 = vmatpush1.msra.mxu0 0.0
      %2931 = vmatprep.subr.mxu0 %v2159
      %2932 = vmatpush1.msra.mxu0 %v2157
      %2933 = vmatprep.subr.mxu0 0.0
      %2934 = vmatpush2.msra.mxu0 0.0
      %2935 = vmatprep.subr.mxu0 0.0
      %2936 = vmatpush2.msra.mxu0 0.0
      %2937 = vmatprep.subr.mxu0 0.0
      %2938 = vmatpush2.msra.mxu0 0.0
      %2939 = vmatprep.subr.mxu0 0.0
      %2940 = vmatpush2.msra.mxu0 0.0
      %2941 = vmatprep.subr.mxu0 0.0
      %2942 = vmatpush2.msra.mxu0 0.0
      %2943 = vmatprep.subr.mxu0 0.0
      %2944 = vmatpush2.msra.mxu0 0.0
      %2945 = vmatprep.subr.mxu0 0.0
      %2946 = vmatpush2.msra.mxu0 0.0
      %2947 = vmatprep.subr.mxu0 0.0
      %2948 = vmatpush2.msra.mxu0 0.0
      %2949 = vmatprep.subr.mxu0 0.0
      %2950 = vmatpush2.msra.mxu0 0.0
      %2951 = vmatprep.subr.mxu0 0.0
      %2952 = vmatpush2.msra.mxu0 0.0
      %2953 = vmatprep.subr.mxu0 0.0
      %2954 = vmatpush2.msra.mxu0 0.0
      %2955 = vmatprep.subr.mxu0 0.0
      %2956 = vmatpush2.msra.mxu0 0.0
      %2957 = vmatprep.subr.mxu0 0.0
      %2958 = vmatpush2.msra.mxu0 0.0
      %2959 = vmatprep.subr.mxu0 0.0
      %2960 = vmatpush2.msra.mxu0 0.0
      %2961 = vmatprep.subr.mxu0 0.0
      %2962 = vmatpush2.msra.mxu0 0.0
      %2963 = vmatprep.subr.mxu0 0.0
      %2964 = vmatpush2.msra.mxu0 0.0
      %2965 = vmatprep.mubr.f32.mxu0 0.0
      %2966 = vmatmul.mubr.f32.gmra.mxu0 %v1547
      %v2967 = vpop.f32.mrf.mxu0
      %v2968 = vadd.f32 %v1529, %v2967
      %v2969 = vpop.f32.mrf.mxu0
      %v2970 = vadd.f32 %v1529, %v2969
      %2971 = vmatprep.mubr.f32.mxu0 0.0
      %2972 = vmatmul.mubr.f32.gmra.mxu0 %v1550
      %v2973 = vpop.f32.mrf.mxu0
      %v2974 = vadd.f32 %v1534, %v2973
      %v2975 = vpop.f32.mrf.mxu0
      %v2976 = vadd.f32 %v1534, %v2975
      %2977 = vmatprep.mubr.f32.mxu0 0.0
      %2978 = vmatmul.mubr.f32.gmra.mxu0 %v1553
      %v2979 = vpop.f32.mrf.mxu0
      %v2980 = vadd.f32 %v1539, %v2979
      %v2981 = vpop.f32.mrf.mxu0
      %v2982 = vadd.f32 %v1539, %v2981
      %2983 = vmatprep.mubr.f32.mxu0 0.0
      %2984 = vmatmul.mubr.f32.gmra.mxu0 %v1556
      %v2985 = vpop.f32.mrf.mxu0
      %v2986 = vadd.f32 %v1544, %v2985
      %v2987 = vpop.f32.mrf.mxu0
      %v2988 = vadd.f32 %v1544, %v2987
      %2989 = vdwg.mxu0
      %v2990 = vmul.f32 %v2968, 0.2
      %v2991 = vmul.f32 %v2970, 0.2
      %v2992 = vmul.f32 %v2974, 0.2
      %v2993 = vmul.f32 %v2976, 0.2
      %v2994 = vmul.f32 %v2980, 0.2
      %v2995 = vmul.f32 %v2982, 0.2
      %v2996 = vmul.f32 %v2986, 0.2
      %v2997 = vmul.f32 %v2988, 0.2
      %v2998 = vmax.f32 %v2968, %v2990
      %v2999 = vmax.f32 %v2970, %v2991
      %v3000 = vmax.f32 %v2974, %v2992
      %v3001 = vmax.f32 %v2976, %v2993
      %v3002 = vmax.f32 %v2980, %v2994
      %v3003 = vmax.f32 %v2982, %v2995
      %v3004 = vmax.f32 %v2986, %v2996
      %v3005 = vmax.f32 %v2988, %v2997
      %3006 = vmatprep.subr.mxu0 0.0
      %3007 = vmatpush1.msra.mxu0 0.0
      %3008 = vmatprep.subr.mxu0 0.0
      %3009 = vmatpush1.msra.mxu0 0.0
      %3010 = vmatprep.subr.mxu0 0.0
      %3011 = vmatpush1.msra.mxu0 0.0
      %3012 = vmatprep.subr.mxu0 0.0
      %3013 = vmatpush1.msra.mxu0 0.0
      %3014 = vmatprep.subr.mxu0 0.0
      %3015 = vmatpush1.msra.mxu0 0.0
      %3016 = vmatprep.subr.mxu0 0.0
      %3017 = vmatpush1.msra.mxu0 0.0
      %3018 = vmatprep.subr.mxu0 0.0
      %3019 = vmatpush1.msra.mxu0 0.0
      %3020 = vmatprep.subr.mxu0 0.0
      %3021 = vmatpush1.msra.mxu0 0.0
      %3022 = vmatprep.subr.mxu0 0.0
      %3023 = vmatpush1.msra.mxu0 0.0
      %3024 = vmatprep.subr.mxu0 0.0
      %3025 = vmatpush1.msra.mxu0 0.0
      %3026 = vmatprep.subr.mxu0 0.0
      %3027 = vmatpush1.msra.mxu0 0.0
      %3028 = vmatprep.subr.mxu0 0.0
      %3029 = vmatpush1.msra.mxu0 0.0
      %3030 = vmatprep.subr.mxu0 %v3005
      %3031 = vmatpush1.msra.mxu0 %v3004
      %3032 = vmatprep.subr.mxu0 %v3003
      %3033 = vmatpush1.msra.mxu0 %v3002
      %3034 = vmatprep.subr.mxu0 %v3001
      %3035 = vmatpush1.msra.mxu0 %v3000
      %3036 = vmatprep.subr.mxu0 %v2999
      %3037 = vmatpush1.msra.mxu0 %v2998
      %3038 = vmatprep.subr.mxu0 0.0
      %3039 = vmatpush2.msra.mxu0 0.0
      %3040 = vmatprep.subr.mxu0 0.0
      %3041 = vmatpush2.msra.mxu0 0.0
      %3042 = vmatprep.subr.mxu0 0.0
      %3043 = vmatpush2.msra.mxu0 0.0
      %3044 = vmatprep.subr.mxu0 0.0
      %3045 = vmatpush2.msra.mxu0 0.0
      %3046 = vmatprep.subr.mxu0 0.0
      %3047 = vmatpush2.msra.mxu0 0.0
      %3048 = vmatprep.subr.mxu0 0.0
      %3049 = vmatpush2.msra.mxu0 0.0
      %3050 = vmatprep.subr.mxu0 0.0
      %3051 = vmatpush2.msra.mxu0 0.0
      %3052 = vmatprep.subr.mxu0 0.0
      %3053 = vmatpush2.msra.mxu0 0.0
      %3054 = vmatprep.subr.mxu0 0.0
      %3055 = vmatpush2.msra.mxu0 0.0
      %3056 = vmatprep.subr.mxu0 0.0
      %3057 = vmatpush2.msra.mxu0 0.0
      %3058 = vmatprep.subr.mxu0 0.0
      %3059 = vmatpush2.msra.mxu0 0.0
      %3060 = vmatprep.subr.mxu0 0.0
      %3061 = vmatpush2.msra.mxu0 0.0
      %3062 = vmatprep.subr.mxu0 0.0
      %3063 = vmatpush2.msra.mxu0 0.0
      %3064 = vmatprep.subr.mxu0 0.0
      %3065 = vmatpush2.msra.mxu0 0.0
      %3066 = vmatprep.subr.mxu0 0.0
      %3067 = vmatpush2.msra.mxu0 0.0
      %3068 = vmatprep.subr.mxu0 0.0
      %3069 = vmatpush2.msra.mxu0 0.0
      %3070 = vmatprep.mubr.f32.mxu0 0.0
      %3071 = vmatmul.mubr.f32.gmra.mxu0 %v1704
      %v3072 = vpop.f32.mrf.mxu0
      %v3073 = vadd.f32 %v1666, %v3072
      %v3074 = vpop.f32.mrf.mxu0
      %v3075 = vadd.f32 %v1666, %v3074
      %3076 = vmatprep.mubr.f32.mxu0 0.0
      %3077 = vmatmul.mubr.f32.gmra.mxu0 %v1707
      %v3078 = vpop.f32.mrf.mxu0
      %v3079 = vadd.f32 %v1671, %v3078
      %v3080 = vpop.f32.mrf.mxu0
      %v3081 = vadd.f32 %v1671, %v3080
      %3082 = vmatprep.mubr.f32.mxu0 0.0
      %3083 = vmatmul.mubr.f32.gmra.mxu0 %v1710
      %v3084 = vpop.f32.mrf.mxu0
      %v3085 = vadd.f32 %v1676, %v3084
      %v3086 = vpop.f32.mrf.mxu0
      %v3087 = vadd.f32 %v1676, %v3086
      %3088 = vmatprep.mubr.f32.mxu0 0.0
      %3089 = vmatmul.mubr.f32.gmra.mxu0 %v1713
      %v3090 = vpop.f32.mrf.mxu0
      %v3091 = vadd.f32 %v1681, %v3090
      %v3092 = vpop.f32.mrf.mxu0
      %v3093 = vadd.f32 %v1681, %v3092
      %3094 = vmatprep.mubr.f32.mxu0 0.0
      %3095 = vmatmul.mubr.f32.gmra.mxu0 %v1716
      %v3096 = vpop.f32.mrf.mxu0
      %v3097 = vadd.f32 %v1686, %v3096
      %v3098 = vpop.f32.mrf.mxu0
      %v3099 = vadd.f32 %v1686, %v3098
      %3100 = vmatprep.mubr.f32.mxu0 0.0
      %3101 = vmatmul.mubr.f32.gmra.mxu0 %v1719
      %v3102 = vpop.f32.mrf.mxu0
      %v3103 = vadd.f32 %v1691, %v3102
      %v3104 = vpop.f32.mrf.mxu0
      %v3105 = vadd.f32 %v1691, %v3104
      %3106 = vmatprep.mubr.f32.mxu0 0.0
      %3107 = vmatmul.mubr.f32.gmra.mxu0 %v1722
      %v3108 = vpop.f32.mrf.mxu0
      %v3109 = vadd.f32 %v1696, %v3108
      %v3110 = vpop.f32.mrf.mxu0
      %v3111 = vadd.f32 %v1696, %v3110
      %3112 = vmatprep.mubr.f32.mxu0 0.0
      %3113 = vmatmul.mubr.f32.gmra.mxu0 %v1725
      %v3114 = vpop.f32.mrf.mxu0
      %v3115 = vadd.f32 %v1701, %v3114
      %v3116 = vpop.f32.mrf.mxu0
      %v3117 = vadd.f32 %v1701, %v3116
      %3118 = vdwg.mxu0
      %v3119 = vmul.f32 %v3073, 0.2
      %v3120 = vmul.f32 %v3075, 0.2
      %v3121 = vmul.f32 %v3079, 0.2
      %v3122 = vmul.f32 %v3081, 0.2
      %v3123 = vmul.f32 %v3085, 0.2
      %v3124 = vmul.f32 %v3087, 0.2
      %v3125 = vmul.f32 %v3091, 0.2
      %v3126 = vmul.f32 %v3093, 0.2
      %v3127 = vmul.f32 %v3097, 0.2
      %v3128 = vmul.f32 %v3099, 0.2
      %v3129 = vmul.f32 %v3103, 0.2
      %v3130 = vmul.f32 %v3105, 0.2
      %v3131 = vmul.f32 %v3109, 0.2
      %v3132 = vmul.f32 %v3111, 0.2
      %v3133 = vmul.f32 %v3115, 0.2
      %v3134 = vmul.f32 %v3117, 0.2
      %v3135 = vmax.f32 %v3073, %v3119
      %v3136 = vmax.f32 %v3075, %v3120
      %v3137 = vmax.f32 %v3079, %v3121
      %v3138 = vmax.f32 %v3081, %v3122
      %v3139 = vmax.f32 %v3085, %v3123
      %v3140 = vmax.f32 %v3087, %v3124
      %v3141 = vmax.f32 %v3091, %v3125
      %v3142 = vmax.f32 %v3093, %v3126
      %v3143 = vmax.f32 %v3097, %v3127
      %v3144 = vmax.f32 %v3099, %v3128
      %v3145 = vmax.f32 %v3103, %v3129
      %v3146 = vmax.f32 %v3105, %v3130
      %v3147 = vmax.f32 %v3109, %v3131
      %v3148 = vmax.f32 %v3111, %v3132
      %v3149 = vmax.f32 %v3115, %v3133
      %v3150 = vmax.f32 %v3117, %v3134
      %3151 = vmatprep.subr.mxu0 0.0
      %3152 = vmatpush1.msra.mxu0 0.0
      %3153 = vmatprep.subr.mxu0 0.0
      %3154 = vmatpush1.msra.mxu0 0.0
      %3155 = vmatprep.subr.mxu0 0.0
      %3156 = vmatpush1.msra.mxu0 0.0
      %3157 = vmatprep.subr.mxu0 0.0
      %3158 = vmatpush1.msra.mxu0 0.0
      %3159 = vmatprep.subr.mxu0 0.0
      %3160 = vmatpush1.msra.mxu0 0.0
      %3161 = vmatprep.subr.mxu0 0.0
      %3162 = vmatpush1.msra.mxu0 0.0
      %3163 = vmatprep.subr.mxu0 0.0
      %3164 = vmatpush1.msra.mxu0 0.0
      %3165 = vmatprep.subr.mxu0 0.0
      %3166 = vmatpush1.msra.mxu0 0.0
      %3167 = vmatprep.subr.mxu0 %v3150
      %3168 = vmatpush1.msra.mxu0 %v3149
      %3169 = vmatprep.subr.mxu0 %v3148
      %3170 = vmatpush1.msra.mxu0 %v3147
      %3171 = vmatprep.subr.mxu0 %v3146
      %3172 = vmatpush1.msra.mxu0 %v3145
      %3173 = vmatprep.subr.mxu0 %v3144
      %3174 = vmatpush1.msra.mxu0 %v3143
      %3175 = vmatprep.subr.mxu0 %v3142
      %3176 = vmatpush1.msra.mxu0 %v3141
      %3177 = vmatprep.subr.mxu0 %v3140
      %3178 = vmatpush1.msra.mxu0 %v3139
      %3179 = vmatprep.subr.mxu0 %v3138
      %3180 = vmatpush1.msra.mxu0 %v3137
      %3181 = vmatprep.subr.mxu0 %v3136
      %3182 = vmatpush1.msra.mxu0 %v3135
      %3183 = vmatprep.subr.mxu0 0.0
      %3184 = vmatpush2.msra.mxu0 0.0
      %3185 = vmatprep.subr.mxu0 0.0
      %3186 = vmatpush2.msra.mxu0 0.0
      %3187 = vmatprep.subr.mxu0 0.0
      %3188 = vmatpush2.msra.mxu0 0.0
      %3189 = vmatprep.subr.mxu0 0.0
      %3190 = vmatpush2.msra.mxu0 0.0
      %3191 = vmatprep.subr.mxu0 0.0
      %3192 = vmatpush2.msra.mxu0 0.0
      %3193 = vmatprep.subr.mxu0 0.0
      %3194 = vmatpush2.msra.mxu0 0.0
      %3195 = vmatprep.subr.mxu0 0.0
      %3196 = vmatpush2.msra.mxu0 0.0
      %3197 = vmatprep.subr.mxu0 0.0
      %3198 = vmatpush2.msra.mxu0 0.0
      %3199 = vmatprep.subr.mxu0 0.0
      %3200 = vmatpush2.msra.mxu0 0.0
      %3201 = vmatprep.subr.mxu0 0.0
      %3202 = vmatpush2.msra.mxu0 0.0
      %3203 = vmatprep.subr.mxu0 0.0
      %3204 = vmatpush2.msra.mxu0 0.0
      %3205 = vmatprep.subr.mxu0 0.0
      %3206 = vmatpush2.msra.mxu0 0.0
      %3207 = vmatprep.subr.mxu0 0.0
      %3208 = vmatpush2.msra.mxu0 0.0
      %3209 = vmatprep.subr.mxu0 0.0
      %3210 = vmatpush2.msra.mxu0 0.0
      %3211 = vmatprep.subr.mxu0 0.0
      %3212 = vmatpush2.msra.mxu0 0.0
      %3213 = vmatprep.subr.mxu0 0.0
      %3214 = vmatpush2.msra.mxu0 0.0
      %3215 = vmatprep.mubr.f32.mxu0 0.0
      %3216 = vmatmul.mubr.f32.gmra.mxu0 %v1903
      %v3217 = vpop.f32.mrf.mxu0
      %v3218 = vadd.f32 %v1875, %v3217
      %v3219 = vpop.f32.mrf.mxu0
      %v3220 = vadd.f32 %v1875, %v3219
      %3221 = vmatprep.mubr.f32.mxu0 0.0
      %3222 = vmatmul.mubr.f32.gmra.mxu0 %v1906
      %v3223 = vpop.f32.mrf.mxu0
      %v3224 = vadd.f32 %v1880, %v3223
      %v3225 = vpop.f32.mrf.mxu0
      %v3226 = vadd.f32 %v1880, %v3225
      %3227 = vmatprep.mubr.f32.mxu0 0.0
      %3228 = vmatmul.mubr.f32.gmra.mxu0 %v1909
      %v3229 = vpop.f32.mrf.mxu0
      %v3230 = vadd.f32 %v1885, %v3229
      %v3231 = vpop.f32.mrf.mxu0
      %v3232 = vadd.f32 %v1885, %v3231
      %3233 = vmatprep.mubr.f32.mxu0 0.0
      %3234 = vmatmul.mubr.f32.gmra.mxu0 %v1912
      %v3235 = vpop.f32.mrf.mxu0
      %v3236 = vadd.f32 %v1890, %v3235
      %v3237 = vpop.f32.mrf.mxu0
      %v3238 = vadd.f32 %v1890, %v3237
      %3239 = vmatprep.mubr.f32.mxu0 0.0
      %3240 = vmatmul.mubr.f32.gmra.mxu0 %v1915
      %v3241 = vpop.f32.mrf.mxu0
      %v3242 = vadd.f32 %v1895, %v3241
      %v3243 = vpop.f32.mrf.mxu0
      %v3244 = vadd.f32 %v1895, %v3243
      %3245 = vmatprep.mubr.f32.mxu0 0.0
      %3246 = vmatmul.mubr.f32.gmra.mxu0 %v1918
      %v3247 = vpop.f32.mrf.mxu0
      %v3248 = vadd.f32 %v1900, %v3247
      %v3249 = vpop.f32.mrf.mxu0
      %v3250 = vadd.f32 %v1900, %v3249
      %3251 = vdwg.mxu0
      %v3252 = vmul.f32 %v3218, %v3218
      %v3253 = vmul.f32 %v3220, %v3220
      %v3254 = vmul.f32 %v3224, %v3224
      %v3255 = vmul.f32 %v3226, %v3226
      %v3256 = vmul.f32 %v3230, %v3230
      %v3257 = vmul.f32 %v3232, %v3232
      %v3258 = vmul.f32 %v3236, %v3236
      %v3259 = vmul.f32 %v3238, %v3238
      %v3260 = vmul.f32 %v3242, %v3242
      %v3261 = vmul.f32 %v3244, %v3244
      %v3262 = vmul.f32 %v3248, %v3248
      %v3263 = vmul.f32 %v3250, %v3250
      %v3264 = vadd.f32 %v3252, %v3253
      %3265 = vadd.xlane.f32.xlu0 %v3264
      %v3266 = vpop.xlane.xlu0 %3265
      %v3267 = vadd.f32 %v3254, %v3255
      %3268 = vadd.xlane.f32.xlu0 %v3267
      %v3269 = vpop.xlane.xlu0 %3268
      %v3270 = vadd.f32 %v3256, %v3257
      %3271 = vadd.xlane.f32.xlu0 %v3270
      %v3272 = vpop.xlane.xlu0 %3271
      %v3273 = vadd.f32 %v3258, %v3259
      %3274 = vadd.xlane.f32.xlu0 %v3273
      %v3275 = vpop.xlane.xlu0 %3274
      %v3276 = vadd.f32 %v3260, %v3261
      %3277 = vadd.xlane.f32.xlu0 %v3276
      %v3278 = vpop.xlane.xlu0 %3277
      %v3279 = vadd.f32 %v3262, %v3263
      %3280 = vadd.xlane.f32.xlu0 %v3279
      %v3281 = vpop.xlane.xlu0 %3280
      %v3282 = vadd.f32 %v3266, %v3272
      %v3283 = vadd.f32 %v3269, %v3275
      %v3284 = vadd.f32 %v3282, %v3278
      %v3285 = vadd.f32 %v3283, %v3281
      %v3286 = vrsqrt.pop %v3284
      %v3287 = vmul.f32 %v3284, %v3286
      %vm3288 = vcmp.eq.f32.partialorder %v3284, inf
      %v3289 = vsel %vm3288, %v3284, %v3287
      %vm3290 = vcmp.eq.f32.partialorder %v3284, 0.0
      %v3291 = vand.u32 %v3284, 2147483648
      %v3292 = vsel %vm3290, %v3291, %v3289
      %v3293 = vrsqrt.pop %v3285
      %v3294 = vmul.f32 %v3285, %v3293
      %vm3295 = vcmp.eq.f32.partialorder %v3285, inf
      %v3296 = vsel %vm3295, %v3285, %v3294
      %vm3297 = vcmp.eq.f32.partialorder %v3285, 0.0
      %v3298 = vand.u32 %v3285, 2147483648
      %v3299 = vsel %vm3297, %v3298, %v3296
      %v3300 = vrcp.pop %v3292
      %v3301 = vmul.f32 %v2899, %v3300
      %v3302 = vrcp.pop %v3299
      %v3303 = vmul.f32 %v2900, %v3302
      %3305 = vset.pattern.permute.xlu0 1
      %3306 = vperm.xlu0 %3305, %v3301
      %v3307 = vpop.permute.xlu0 %3306
      %3310 = vset.pattern.permute.xlu0 1
      %3311 = vperm.xlu0 %3310, %v3303
      %v3312 = vpop.permute.xlu0 %3311
      %v3314 = vmul.f32 %v3218, %v3307
      %v3315 = vmul.f32 %v3220, %v3307
      %v3316 = vmul.f32 %v3224, %v3312
      %v3317 = vmul.f32 %v3226, %v3312
      %v3318 = vadd.f32 %v3314, %v3316
      %v3319 = vrot.slane %v3318, 4
      %v3320 = vadd.f32 %v3318, %v3319
      %v3321 = vrot.slane %v3320, 2
      %v3322 = vadd.f32 %v3320, %v3321
      %v3323 = vrot.slane %v3322, 1
      %v3324 = vadd.f32 %v3322, %v3323
      %v3325 = vadd.f32 %v3315, %v3317
      %v3326 = vrot.slane %v3325, 4
      %v3327 = vadd.f32 %v3325, %v3326
      %v3328 = vrot.slane %v3327, 2
      %v3329 = vadd.f32 %v3327, %v3328
      %v3330 = vrot.slane %v3329, 1
      %v3331 = vadd.f32 %v3329, %v3330
      %v3332 = vmul.f32 %v3230, %v3307
      %v3333 = vmul.f32 %v3232, %v3307
      %v3334 = vmul.f32 %v3236, %v3312
      %v3335 = vmul.f32 %v3238, %v3312
      %v3336 = vadd.f32 %v3332, %v3334
      %v3337 = vrot.slane %v3336, 4
      %v3338 = vadd.f32 %v3336, %v3337
      %v3339 = vrot.slane %v3338, 2
      %v3340 = vadd.f32 %v3338, %v3339
      %v3341 = vrot.slane %v3340, 1
      %v3342 = vadd.f32 %v3340, %v3341
      %v3343 = vadd.f32 %v3333, %v3335
      %v3344 = vrot.slane %v3343, 4
      %v3345 = vadd.f32 %v3343, %v3344
      %v3346 = vrot.slane %v3345, 2
      %v3347 = vadd.f32 %v3345, %v3346
      %v3348 = vrot.slane %v3347, 1
      %v3349 = vadd.f32 %v3347, %v3348
      %v3350 = vmul.f32 %v3242, %v3307
      %v3351 = vmul.f32 %v3244, %v3307
      %v3352 = vmul.f32 %v3248, %v3312
      %v3353 = vmul.f32 %v3250, %v3312
      %v3354 = vadd.f32 %v3350, %v3352
      %v3355 = vrot.slane %v3354, 4
      %v3356 = vadd.f32 %v3354, %v3355
      %v3357 = vrot.slane %v3356, 2
      %v3358 = vadd.f32 %v3356, %v3357
      %v3359 = vrot.slane %v3358, 1
      %v3360 = vadd.f32 %v3358, %v3359
      %v3361 = vadd.f32 %v3351, %v3353
      %v3362 = vrot.slane %v3361, 4
      %v3363 = vadd.f32 %v3361, %v3362
      %v3364 = vrot.slane %v3363, 2
      %v3365 = vadd.f32 %v3363, %v3364
      %v3366 = vrot.slane %v3365, 1
      %v3367 = vadd.f32 %v3365, %v3366
      %v3368 = vsel %vm2137, %v3324, %v3342
      %v3369 = vsel %vm2137, %v3331, %v3349
      %v3370 = vsel %vm2140, %v3368, %v3360
      %v3371 = vsel %vm2140, %v3369, %v3367
      %v3374 = vcombine.low %v3370, %v3371
      %v3376 = vadd.f32 %v2150, %v3374
      %s3377 = scalar_lea.vmem %s553, 8
      %3378 = vst [vmem:[%s3377] sm:$0x77] %v3376
      %s3379 = scalar_lea.vmem %s539, 16
      %v3380 = vld [vmem:[%s3379] sm:$0x77]
      %s3381 = scalar_lea.vmem %s546, 16
      %v3382 = vld [vmem:[%s3381] sm:$0x77]
      %v3384 = vcombine.high %v3380, %v3380
      %v3386 = vcombine.high %v3382, %v3382
      %v3387 = vsel %vm666, %v3380, 0
      %v3389 = vsel %vm666, %v3384, 0
      %v3391 = vsel %vm666, %v3382, 0
      %v3393 = vsel %vm666, %v3386, 0
      %3395 = vmatprep.subr.mxu0 0.0
      %3396 = vmatpush1.msra.mxu0 0.0
      %3397 = vmatprep.subr.mxu0 0.0
      %3398 = vmatpush1.msra.mxu0 0.0
      %3399 = vmatprep.subr.mxu0 0.0
      %3400 = vmatpush1.msra.mxu0 0.0
      %3401 = vmatprep.subr.mxu0 0.0
      %3402 = vmatpush1.msra.mxu0 0.0
      %3403 = vmatprep.subr.mxu0 0.0
      %3404 = vmatpush1.msra.mxu0 0.0
      %3405 = vmatprep.subr.mxu0 0.0
      %3406 = vmatpush1.msra.mxu0 0.0
      %3407 = vmatprep.subr.mxu0 0.0
      %3408 = vmatpush1.msra.mxu0 0.0
      %3409 = vmatprep.subr.mxu0 0.0
      %3410 = vmatpush1.msra.mxu0 0.0
      %3411 = vmatprep.subr.mxu0 0.0
      %3412 = vmatpush1.msra.mxu0 0.0
      %3413 = vmatprep.subr.mxu0 0.0
      %3414 = vmatpush1.msra.mxu0 0.0
      %3415 = vmatprep.subr.mxu0 0.0
      %3416 = vmatpush1.msra.mxu0 0.0
      %3417 = vmatprep.subr.mxu0 0.0
      %3418 = vmatpush1.msra.mxu0 0.0
      %3419 = vmatprep.subr.mxu0 0.0
      %3420 = vmatpush1.msra.mxu0 0.0
      %3421 = vmatprep.subr.mxu0 0.0
      %3422 = vmatpush1.msra.mxu0 0.0
      %3423 = vmatprep.subr.mxu0 0.0
      %3424 = vmatpush1.msra.mxu0 0.0
      %3425 = vmatprep.subr.mxu0 %v3389
      %3426 = vmatpush1.msra.mxu0 %v3387
      %3427 = vmatprep.subr.mxu0 0.0
      %3428 = vmatpush2.msra.mxu0 0.0
      %3429 = vmatprep.subr.mxu0 0.0
      %3430 = vmatpush2.msra.mxu0 0.0
      %3431 = vmatprep.subr.mxu0 0.0
      %3432 = vmatpush2.msra.mxu0 0.0
      %3433 = vmatprep.subr.mxu0 0.0
      %3434 = vmatpush2.msra.mxu0 0.0
      %3435 = vmatprep.subr.mxu0 0.0
      %3436 = vmatpush2.msra.mxu0 0.0
      %3437 = vmatprep.subr.mxu0 0.0
      %3438 = vmatpush2.msra.mxu0 0.0
      %3439 = vmatprep.subr.mxu0 0.0
      %3440 = vmatpush2.msra.mxu0 0.0
      %3441 = vmatprep.subr.mxu0 0.0
      %3442 = vmatpush2.msra.mxu0 0.0
      %3443 = vmatprep.subr.mxu0 0.0
      %3444 = vmatpush2.msra.mxu0 0.0
      %3445 = vmatprep.subr.mxu0 0.0
      %3446 = vmatpush2.msra.mxu0 0.0
      %3447 = vmatprep.subr.mxu0 0.0
      %3448 = vmatpush2.msra.mxu0 0.0
      %3449 = vmatprep.subr.mxu0 0.0
      %3450 = vmatpush2.msra.mxu0 0.0
      %3451 = vmatprep.subr.mxu0 0.0
      %3452 = vmatpush2.msra.mxu0 0.0
      %3453 = vmatprep.subr.mxu0 0.0
      %3454 = vmatpush2.msra.mxu0 0.0
      %3455 = vmatprep.subr.mxu0 0.0
      %3456 = vmatpush2.msra.mxu0 0.0
      %3457 = vmatprep.subr.mxu0 0.0
      %3458 = vmatpush2.msra.mxu0 0.0
      %3459 = vmatprep.mubr.f32.mxu0 0.0
      %3460 = vmatmul.mubr.f32.gmra.mxu0 %v655
      %v3461 = vpop.f32.mrf.mxu0
      %v3462 = vadd.f32 %v636, %v3461
      %v3463 = vpop.f32.mrf.mxu0
      %v3464 = vadd.f32 %v636, %v3463
      %3465 = vmatprep.mubr.f32.mxu0 0.0
      %3466 = vmatmul.mubr.f32.gmra.mxu0 %v658
      %v3467 = vpop.f32.mrf.mxu0
      %v3468 = vadd.f32 %v641, %v3467
      %v3469 = vpop.f32.mrf.mxu0
      %v3470 = vadd.f32 %v641, %v3469
      %3471 = vmatprep.mubr.f32.mxu0 0.0
      %3472 = vmatmul.mubr.f32.gmra.mxu0 %v661
      %v3473 = vpop.f32.mrf.mxu0
      %v3474 = vadd.f32 %v646, %v3473
      %v3475 = vpop.f32.mrf.mxu0
      %v3476 = vadd.f32 %v646, %v3475
      %3477 = vmatprep.mubr.f32.mxu0 0.0
      %3478 = vmatmul.mubr.f32.gmra.mxu0 %v664
      %v3479 = vpop.f32.mrf.mxu0
      %v3480 = vadd.f32 %v651, %v3479
      %v3481 = vpop.f32.mrf.mxu0
      %v3482 = vadd.f32 %v651, %v3481
      %3483 = vdwg.mxu0
      %3484 = vmatprep.subr.mxu0 0.0
      %3485 = vmatpush1.msra.mxu0 0.0
      %3486 = vmatprep.subr.mxu0 0.0
      %3487 = vmatpush1.msra.mxu0 0.0
      %3488 = vmatprep.subr.mxu0 0.0
      %3489 = vmatpush1.msra.mxu0 0.0
      %3490 = vmatprep.subr.mxu0 0.0
      %3491 = vmatpush1.msra.mxu0 0.0
      %3492 = vmatprep.subr.mxu0 0.0
      %3493 = vmatpush1.msra.mxu0 0.0
      %3494 = vmatprep.subr.mxu0 0.0
      %3495 = vmatpush1.msra.mxu0 0.0
      %3496 = vmatprep.subr.mxu0 0.0
      %3497 = vmatpush1.msra.mxu0 0.0
      %3498 = vmatprep.subr.mxu0 0.0
      %3499 = vmatpush1.msra.mxu0 0.0
      %3500 = vmatprep.subr.mxu0 0.0
      %3501 = vmatpush1.msra.mxu0 0.0
      %3502 = vmatprep.subr.mxu0 0.0
      %3503 = vmatpush1.msra.mxu0 0.0
      %3504 = vmatprep.subr.mxu0 0.0
      %3505 = vmatpush1.msra.mxu0 0.0
      %3506 = vmatprep.subr.mxu0 0.0
      %3507 = vmatpush1.msra.mxu0 0.0
      %3508 = vmatprep.subr.mxu0 0.0
      %3509 = vmatpush1.msra.mxu0 0.0
      %3510 = vmatprep.subr.mxu0 0.0
      %3511 = vmatpush1.msra.mxu0 0.0
      %3512 = vmatprep.subr.mxu0 0.0
      %3513 = vmatpush1.msra.mxu0 0.0
      %3514 = vmatprep.subr.mxu0 %v3393
      %3515 = vmatpush1.msra.mxu0 %v3391
      %3516 = vmatprep.subr.mxu0 0.0
      %3517 = vmatpush2.msra.mxu0 0.0
      %3518 = vmatprep.subr.mxu0 0.0
      %3519 = vmatpush2.msra.mxu0 0.0
      %3520 = vmatprep.subr.mxu0 0.0
      %3521 = vmatpush2.msra.mxu0 0.0
      %3522 = vmatprep.subr.mxu0 0.0
      %3523 = vmatpush2.msra.mxu0 0.0
      %3524 = vmatprep.subr.mxu0 0.0
      %3525 = vmatpush2.msra.mxu0 0.0
      %3526 = vmatprep.subr.mxu0 0.0
      %3527 = vmatpush2.msra.mxu0 0.0
      %3528 = vmatprep.subr.mxu0 0.0
      %3529 = vmatpush2.msra.mxu0 0.0
      %3530 = vmatprep.subr.mxu0 0.0
      %3531 = vmatpush2.msra.mxu0 0.0
      %3532 = vmatprep.subr.mxu0 0.0
      %3533 = vmatpush2.msra.mxu0 0.0
      %3534 = vmatprep.subr.mxu0 0.0
      %3535 = vmatpush2.msra.mxu0 0.0
      %3536 = vmatprep.subr.mxu0 0.0
      %3537 = vmatpush2.msra.mxu0 0.0
      %3538 = vmatprep.subr.mxu0 0.0
      %3539 = vmatpush2.msra.mxu0 0.0
      %3540 = vmatprep.subr.mxu0 0.0
      %3541 = vmatpush2.msra.mxu0 0.0
      %3542 = vmatprep.subr.mxu0 0.0
      %3543 = vmatpush2.msra.mxu0 0.0
      %3544 = vmatprep.subr.mxu0 0.0
      %3545 = vmatpush2.msra.mxu0 0.0
      %3546 = vmatprep.subr.mxu0 0.0
      %3547 = vmatpush2.msra.mxu0 0.0
      %3548 = vmatprep.mubr.f32.mxu0 0.0
      %3549 = vmatmul.mubr.f32.gmra.mxu0 %v655
      %v3550 = vpop.f32.mrf.mxu0
      %v3551 = vadd.f32 %v636, %v3550
      %v3552 = vpop.f32.mrf.mxu0
      %v3553 = vadd.f32 %v636, %v3552
      %3554 = vmatprep.mubr.f32.mxu0 0.0
      %3555 = vmatmul.mubr.f32.gmra.mxu0 %v658
      %v3556 = vpop.f32.mrf.mxu0
      %v3557 = vadd.f32 %v641, %v3556
      %v3558 = vpop.f32.mrf.mxu0
      %v3559 = vadd.f32 %v641, %v3558
      %3560 = vmatprep.mubr.f32.mxu0 0.0
      %3561 = vmatmul.mubr.f32.gmra.mxu0 %v661
      %v3562 = vpop.f32.mrf.mxu0
      %v3563 = vadd.f32 %v646, %v3562
      %v3564 = vpop.f32.mrf.mxu0
      %v3565 = vadd.f32 %v646, %v3564
      %3566 = vmatprep.mubr.f32.mxu0 0.0
      %3567 = vmatmul.mubr.f32.gmra.mxu0 %v664
      %v3568 = vpop.f32.mrf.mxu0
      %v3569 = vadd.f32 %v651, %v3568
      %v3570 = vpop.f32.mrf.mxu0
      %v3571 = vadd.f32 %v651, %v3570
      %3572 = vdwg.mxu0
      %v3573 = vmul.f32 %v3462, 0.2
      %v3574 = vmul.f32 %v3464, 0.2
      %v3575 = vmul.f32 %v3551, 0.2
      %v3576 = vmul.f32 %v3553, 0.2
      %v3577 = vmul.f32 %v3468, 0.2
      %v3578 = vmul.f32 %v3470, 0.2
      %v3579 = vmul.f32 %v3557, 0.2
      %v3580 = vmul.f32 %v3559, 0.2
      %v3581 = vmul.f32 %v3474, 0.2
      %v3582 = vmul.f32 %v3476, 0.2
      %v3583 = vmul.f32 %v3563, 0.2
      %v3584 = vmul.f32 %v3565, 0.2
      %v3585 = vmul.f32 %v3480, 0.2
      %v3586 = vmul.f32 %v3482, 0.2
      %v3587 = vmul.f32 %v3569, 0.2
      %v3588 = vmul.f32 %v3571, 0.2
      %v3589 = vmax.f32 %v3462, %v3573
      %v3590 = vmax.f32 %v3464, %v3574
      %v3591 = vmax.f32 %v3551, %v3575
      %v3592 = vmax.f32 %v3553, %v3576
      %v3593 = vmax.f32 %v3468, %v3577
      %v3594 = vmax.f32 %v3470, %v3578
      %v3595 = vmax.f32 %v3557, %v3579
      %v3596 = vmax.f32 %v3559, %v3580
      %v3597 = vmax.f32 %v3474, %v3581
      %v3598 = vmax.f32 %v3476, %v3582
      %v3599 = vmax.f32 %v3563, %v3583
      %v3600 = vmax.f32 %v3565, %v3584
      %v3601 = vmax.f32 %v3480, %v3585
      %v3602 = vmax.f32 %v3482, %v3586
      %v3603 = vmax.f32 %v3569, %v3587
      %v3604 = vmax.f32 %v3571, %v3588
      %3605 = vmatprep.subr.mxu0 0.0
      %3606 = vmatpush1.msra.mxu0 0.0
      %3607 = vmatprep.subr.mxu0 0.0
      %3608 = vmatpush1.msra.mxu0 0.0
      %3609 = vmatprep.subr.mxu0 0.0
      %3610 = vmatpush1.msra.mxu0 0.0
      %3611 = vmatprep.subr.mxu0 0.0
      %3612 = vmatpush1.msra.mxu0 0.0
      %3613 = vmatprep.subr.mxu0 0.0
      %3614 = vmatpush1.msra.mxu0 0.0
      %3615 = vmatprep.subr.mxu0 0.0
      %3616 = vmatpush1.msra.mxu0 0.0
      %3617 = vmatprep.subr.mxu0 0.0
      %3618 = vmatpush1.msra.mxu0 0.0
      %3619 = vmatprep.subr.mxu0 0.0
      %3620 = vmatpush1.msra.mxu0 0.0
      %3621 = vmatprep.subr.mxu0 0.0
      %3622 = vmatpush1.msra.mxu0 0.0
      %3623 = vmatprep.subr.mxu0 0.0
      %3624 = vmatpush1.msra.mxu0 0.0
      %3625 = vmatprep.subr.mxu0 0.0
      %3626 = vmatpush1.msra.mxu0 0.0
      %3627 = vmatprep.subr.mxu0 0.0
      %3628 = vmatpush1.msra.mxu0 0.0
      %3629 = vmatprep.subr.mxu0 %v3602
      %3630 = vmatpush1.msra.mxu0 %v3601
      %3631 = vmatprep.subr.mxu0 %v3598
      %3632 = vmatpush1.msra.mxu0 %v3597
      %3633 = vmatprep.subr.mxu0 %v3594
      %3634 = vmatpush1.msra.mxu0 %v3593
      %3635 = vmatprep.subr.mxu0 %v3590
      %3636 = vmatpush1.msra.mxu0 %v3589
      %3637 = vmatprep.subr.mxu0 0.0
      %3638 = vmatpush2.msra.mxu0 0.0
      %3639 = vmatprep.subr.mxu0 0.0
      %3640 = vmatpush2.msra.mxu0 0.0
      %3641 = vmatprep.subr.mxu0 0.0
      %3642 = vmatpush2.msra.mxu0 0.0
      %3643 = vmatprep.subr.mxu0 0.0
      %3644 = vmatpush2.msra.mxu0 0.0
      %3645 = vmatprep.subr.mxu0 0.0
      %3646 = vmatpush2.msra.mxu0 0.0
      %3647 = vmatprep.subr.mxu0 0.0
      %3648 = vmatpush2.msra.mxu0 0.0
      %3649 = vmatprep.subr.mxu0 0.0
      %3650 = vmatpush2.msra.mxu0 0.0
      %3651 = vmatprep.subr.mxu0 0.0
      %3652 = vmatpush2.msra.mxu0 0.0
      %3653 = vmatprep.subr.mxu0 0.0
      %3654 = vmatpush2.msra.mxu0 0.0
      %3655 = vmatprep.subr.mxu0 0.0
      %3656 = vmatpush2.msra.mxu0 0.0
      %3657 = vmatprep.subr.mxu0 0.0
      %3658 = vmatpush2.msra.mxu0 0.0
      %3659 = vmatprep.subr.mxu0 0.0
      %3660 = vmatpush2.msra.mxu0 0.0
      %3661 = vmatprep.subr.mxu0 0.0
      %3662 = vmatpush2.msra.mxu0 0.0
      %3663 = vmatprep.subr.mxu0 0.0
      %3664 = vmatpush2.msra.mxu0 0.0
      %3665 = vmatprep.subr.mxu0 0.0
      %3666 = vmatpush2.msra.mxu0 0.0
      %3667 = vmatprep.subr.mxu0 0.0
      %3668 = vmatpush2.msra.mxu0 0.0
      %3669 = vmatprep.mubr.f32.mxu0 0.0
      %3670 = vmatmul.mubr.f32.gmra.mxu0 %v927
      %v3671 = vpop.f32.mrf.mxu0
      %v3672 = vadd.f32 %v888, %v3671
      %v3673 = vpop.f32.mrf.mxu0
      %v3674 = vadd.f32 %v888, %v3673
      %3675 = vmatprep.mubr.f32.mxu0 0.0
      %3676 = vmatmul.mubr.f32.gmra.mxu0 %v930
      %v3677 = vpop.f32.mrf.mxu0
      %v3678 = vadd.f32 %v893, %v3677
      %v3679 = vpop.f32.mrf.mxu0
      %v3680 = vadd.f32 %v893, %v3679
      %3681 = vmatprep.mubr.f32.mxu0 0.0
      %3682 = vmatmul.mubr.f32.gmra.mxu0 %v933
      %v3683 = vpop.f32.mrf.mxu0
      %v3684 = vadd.f32 %v898, %v3683
      %v3685 = vpop.f32.mrf.mxu0
      %v3686 = vadd.f32 %v898, %v3685
      %3687 = vmatprep.mubr.f32.mxu0 0.0
      %3688 = vmatmul.mubr.f32.gmra.mxu0 %v936
      %v3689 = vpop.f32.mrf.mxu0
      %v3690 = vadd.f32 %v903, %v3689
      %v3691 = vpop.f32.mrf.mxu0
      %v3692 = vadd.f32 %v903, %v3691
      %3693 = vmatprep.mubr.f32.mxu0 0.0
      %3694 = vmatmul.mubr.f32.gmra.mxu0 %v939
      %v3695 = vpop.f32.mrf.mxu0
      %v3696 = vadd.f32 %v908, %v3695
      %v3697 = vpop.f32.mrf.mxu0
      %v3698 = vadd.f32 %v908, %v3697
      %3699 = vmatprep.mubr.f32.mxu0 0.0
      %3700 = vmatmul.mubr.f32.gmra.mxu0 %v942
      %v3701 = vpop.f32.mrf.mxu0
      %v3702 = vadd.f32 %v913, %v3701
      %v3703 = vpop.f32.mrf.mxu0
      %v3704 = vadd.f32 %v913, %v3703
      %3705 = vmatprep.mubr.f32.mxu0 0.0
      %3706 = vmatmul.mubr.f32.gmra.mxu0 %v945
      %v3707 = vpop.f32.mrf.mxu0
      %v3708 = vadd.f32 %v918, %v3707
      %v3709 = vpop.f32.mrf.mxu0
      %v3710 = vadd.f32 %v918, %v3709
      %3711 = vmatprep.mubr.f32.mxu0 0.0
      %3712 = vmatmul.mubr.f32.gmra.mxu0 %v948
      %v3713 = vpop.f32.mrf.mxu0
      %v3714 = vadd.f32 %v923, %v3713
      %v3715 = vpop.f32.mrf.mxu0
      %v3716 = vadd.f32 %v923, %v3715
      %3717 = vdwg.mxu0
      %3718 = vmatprep.subr.mxu0 0.0
      %3719 = vmatpush1.msra.mxu0 0.0
      %3720 = vmatprep.subr.mxu0 0.0
      %3721 = vmatpush1.msra.mxu0 0.0
      %3722 = vmatprep.subr.mxu0 0.0
      %3723 = vmatpush1.msra.mxu0 0.0
      %3724 = vmatprep.subr.mxu0 0.0
      %3725 = vmatpush1.msra.mxu0 0.0
      %3726 = vmatprep.subr.mxu0 0.0
      %3727 = vmatpush1.msra.mxu0 0.0
      %3728 = vmatprep.subr.mxu0 0.0
      %3729 = vmatpush1.msra.mxu0 0.0
      %3730 = vmatprep.subr.mxu0 0.0
      %3731 = vmatpush1.msra.mxu0 0.0
      %3732 = vmatprep.subr.mxu0 0.0
      %3733 = vmatpush1.msra.mxu0 0.0
      %3734 = vmatprep.subr.mxu0 0.0
      %3735 = vmatpush1.msra.mxu0 0.0
      %3736 = vmatprep.subr.mxu0 0.0
      %3737 = vmatpush1.msra.mxu0 0.0
      %3738 = vmatprep.subr.mxu0 0.0
      %3739 = vmatpush1.msra.mxu0 0.0
      %3740 = vmatprep.subr.mxu0 0.0
      %3741 = vmatpush1.msra.mxu0 0.0
      %3742 = vmatprep.subr.mxu0 %v3604
      %3743 = vmatpush1.msra.mxu0 %v3603
      %3744 = vmatprep.subr.mxu0 %v3600
      %3745 = vmatpush1.msra.mxu0 %v3599
      %3746 = vmatprep.subr.mxu0 %v3596
      %3747 = vmatpush1.msra.mxu0 %v3595
      %3748 = vmatprep.subr.mxu0 %v3592
      %3749 = vmatpush1.msra.mxu0 %v3591
      %3750 = vmatprep.subr.mxu0 0.0
      %3751 = vmatpush2.msra.mxu0 0.0
      %3752 = vmatprep.subr.mxu0 0.0
      %3753 = vmatpush2.msra.mxu0 0.0
      %3754 = vmatprep.subr.mxu0 0.0
      %3755 = vmatpush2.msra.mxu0 0.0
      %3756 = vmatprep.subr.mxu0 0.0
      %3757 = vmatpush2.msra.mxu0 0.0
      %3758 = vmatprep.subr.mxu0 0.0
      %3759 = vmatpush2.msra.mxu0 0.0
      %3760 = vmatprep.subr.mxu0 0.0
      %3761 = vmatpush2.msra.mxu0 0.0
      %3762 = vmatprep.subr.mxu0 0.0
      %3763 = vmatpush2.msra.mxu0 0.0
      %3764 = vmatprep.subr.mxu0 0.0
      %3765 = vmatpush2.msra.mxu0 0.0
      %3766 = vmatprep.subr.mxu0 0.0
      %3767 = vmatpush2.msra.mxu0 0.0
      %3768 = vmatprep.subr.mxu0 0.0
      %3769 = vmatpush2.msra.mxu0 0.0
      %3770 = vmatprep.subr.mxu0 0.0
      %3771 = vmatpush2.msra.mxu0 0.0
      %3772 = vmatprep.subr.mxu0 0.0
      %3773 = vmatpush2.msra.mxu0 0.0
      %3774 = vmatprep.subr.mxu0 0.0
      %3775 = vmatpush2.msra.mxu0 0.0
      %3776 = vmatprep.subr.mxu0 0.0
      %3777 = vmatpush2.msra.mxu0 0.0
      %3778 = vmatprep.subr.mxu0 0.0
      %3779 = vmatpush2.msra.mxu0 0.0
      %3780 = vmatprep.subr.mxu0 0.0
      %3781 = vmatpush2.msra.mxu0 0.0
      %3782 = vmatprep.mubr.f32.mxu0 0.0
      %3783 = vmatmul.mubr.f32.gmra.mxu0 %v927
      %v3784 = vpop.f32.mrf.mxu0
      %v3785 = vadd.f32 %v888, %v3784
      %v3786 = vpop.f32.mrf.mxu0
      %v3787 = vadd.f32 %v888, %v3786
      %3788 = vmatprep.mubr.f32.mxu0 0.0
      %3789 = vmatmul.mubr.f32.gmra.mxu0 %v930
      %v3790 = vpop.f32.mrf.mxu0
      %v3791 = vadd.f32 %v893, %v3790
      %v3792 = vpop.f32.mrf.mxu0
      %v3793 = vadd.f32 %v893, %v3792
      %3794 = vmatprep.mubr.f32.mxu0 0.0
      %3795 = vmatmul.mubr.f32.gmra.mxu0 %v933
      %v3796 = vpop.f32.mrf.mxu0
      %v3797 = vadd.f32 %v898, %v3796
      %v3798 = vpop.f32.mrf.mxu0
      %v3799 = vadd.f32 %v898, %v3798
      %3800 = vmatprep.mubr.f32.mxu0 0.0
      %3801 = vmatmul.mubr.f32.gmra.mxu0 %v936
      %v3802 = vpop.f32.mrf.mxu0
      %v3803 = vadd.f32 %v903, %v3802
      %v3804 = vpop.f32.mrf.mxu0
      %v3805 = vadd.f32 %v903, %v3804
      %3806 = vmatprep.mubr.f32.mxu0 0.0
      %3807 = vmatmul.mubr.f32.gmra.mxu0 %v939
      %v3808 = vpop.f32.mrf.mxu0
      %v3809 = vadd.f32 %v908, %v3808
      %v3810 = vpop.f32.mrf.mxu0
      %v3811 = vadd.f32 %v908, %v3810
      %3812 = vmatprep.mubr.f32.mxu0 0.0
      %3813 = vmatmul.mubr.f32.gmra.mxu0 %v942
      %v3814 = vpop.f32.mrf.mxu0
      %v3815 = vadd.f32 %v913, %v3814
      %v3816 = vpop.f32.mrf.mxu0
      %v3817 = vadd.f32 %v913, %v3816
      %3818 = vmatprep.mubr.f32.mxu0 0.0
      %3819 = vmatmul.mubr.f32.gmra.mxu0 %v945
      %v3820 = vpop.f32.mrf.mxu0
      %v3821 = vadd.f32 %v918, %v3820
      %v3822 = vpop.f32.mrf.mxu0
      %v3823 = vadd.f32 %v918, %v3822
      %3824 = vmatprep.mubr.f32.mxu0 0.0
      %3825 = vmatmul.mubr.f32.gmra.mxu0 %v948
      %v3826 = vpop.f32.mrf.mxu0
      %v3827 = vadd.f32 %v923, %v3826
      %v3828 = vpop.f32.mrf.mxu0
      %v3829 = vadd.f32 %v923, %v3828
      %3830 = vdwg.mxu0
      %v3831 = vmul.f32 %v3672, 0.2
      %v3832 = vmul.f32 %v3674, 0.2
      %v3833 = vmul.f32 %v3785, 0.2
      %v3834 = vmul.f32 %v3787, 0.2
      %v3835 = vmul.f32 %v3678, 0.2
      %v3836 = vmul.f32 %v3680, 0.2
      %v3837 = vmul.f32 %v3791, 0.2
      %v3838 = vmul.f32 %v3793, 0.2
      %v3839 = vmul.f32 %v3684, 0.2
      %v3840 = vmul.f32 %v3686, 0.2
      %v3841 = vmul.f32 %v3797, 0.2
      %v3842 = vmul.f32 %v3799, 0.2
      %v3843 = vmul.f32 %v3690, 0.2
      %v3844 = vmul.f32 %v3692, 0.2
      %v3845 = vmul.f32 %v3803, 0.2
      %v3846 = vmul.f32 %v3805, 0.2
      %v3847 = vmul.f32 %v3696, 0.2
      %v3848 = vmul.f32 %v3698, 0.2
      %v3849 = vmul.f32 %v3809, 0.2
      %v3850 = vmul.f32 %v3811, 0.2
      %v3851 = vmul.f32 %v3702, 0.2
      %v3852 = vmul.f32 %v3704, 0.2
      %v3853 = vmul.f32 %v3815, 0.2
      %v3854 = vmul.f32 %v3817, 0.2
      %v3855 = vmul.f32 %v3708, 0.2
      %v3856 = vmul.f32 %v3710, 0.2
      %v3857 = vmul.f32 %v3821, 0.2
      %v3858 = vmul.f32 %v3823, 0.2
      %v3859 = vmul.f32 %v3714, 0.2
      %v3860 = vmul.f32 %v3716, 0.2
      %v3861 = vmul.f32 %v3827, 0.2
      %v3862 = vmul.f32 %v3829, 0.2
      %v3863 = vmax.f32 %v3672, %v3831
      %v3864 = vmax.f32 %v3674, %v3832
      %v3865 = vmax.f32 %v3785, %v3833
      %v3866 = vmax.f32 %v3787, %v3834
      %v3867 = vmax.f32 %v3678, %v3835
      %v3868 = vmax.f32 %v3680, %v3836
      %v3869 = vmax.f32 %v3791, %v3837
      %v3870 = vmax.f32 %v3793, %v3838
      %v3871 = vmax.f32 %v3684, %v3839
      %v3872 = vmax.f32 %v3686, %v3840
      %v3873 = vmax.f32 %v3797, %v3841
      %v3874 = vmax.f32 %v3799, %v3842
      %v3875 = vmax.f32 %v3690, %v3843
      %v3876 = vmax.f32 %v3692, %v3844
      %v3877 = vmax.f32 %v3803, %v3845
      %v3878 = vmax.f32 %v3805, %v3846
      %v3879 = vmax.f32 %v3696, %v3847
      %v3880 = vmax.f32 %v3698, %v3848
      %v3881 = vmax.f32 %v3809, %v3849
      %v3882 = vmax.f32 %v3811, %v3850
      %v3883 = vmax.f32 %v3702, %v3851
      %v3884 = vmax.f32 %v3704, %v3852
      %v3885 = vmax.f32 %v3815, %v3853
      %v3886 = vmax.f32 %v3817, %v3854
      %v3887 = vmax.f32 %v3708, %v3855
      %v3888 = vmax.f32 %v3710, %v3856
      %v3889 = vmax.f32 %v3821, %v3857
      %v3890 = vmax.f32 %v3823, %v3858
      %v3891 = vmax.f32 %v3714, %v3859
      %v3892 = vmax.f32 %v3716, %v3860
      %v3893 = vmax.f32 %v3827, %v3861
      %v3894 = vmax.f32 %v3829, %v3862
      %v3895 = vmax.f32 %v3863, %v3864
      %3896 = vmax.xlane.f32.xlu0 %v3895
      %v3897 = vpop.xlane.xlu0 %3896
      %v3898 = vmax.f32 %v3867, %v3868
      %3899 = vmax.xlane.f32.xlu0 %v3898
      %v3900 = vpop.xlane.xlu0 %3899
      %v3901 = vmax.f32 %v3871, %v3872
      %3902 = vmax.xlane.f32.xlu0 %v3901
      %v3903 = vpop.xlane.xlu0 %3902
      %v3904 = vmax.f32 %v3875, %v3876
      %3905 = vmax.xlane.f32.xlu0 %v3904
      %v3906 = vpop.xlane.xlu0 %3905
      %v3907 = vmax.f32 %v3879, %v3880
      %3908 = vmax.xlane.f32.xlu0 %v3907
      %v3909 = vpop.xlane.xlu0 %3908
      %v3910 = vmax.f32 %v3883, %v3884
      %3911 = vmax.xlane.f32.xlu0 %v3910
      %v3912 = vpop.xlane.xlu0 %3911
      %v3913 = vmax.f32 %v3887, %v3888
      %3914 = vmax.xlane.f32.xlu0 %v3913
      %v3915 = vpop.xlane.xlu0 %3914
      %v3916 = vmax.f32 %v3891, %v3892
      %3917 = vmax.xlane.f32.xlu0 %v3916
      %v3918 = vpop.xlane.xlu0 %3917
      %v3919 = vmax.f32 %v3865, %v3866
      %3920 = vmax.xlane.f32.xlu0 %v3919
      %v3921 = vpop.xlane.xlu0 %3920
      %v3922 = vmax.f32 %v3869, %v3870
      %3923 = vmax.xlane.f32.xlu0 %v3922
      %v3924 = vpop.xlane.xlu0 %3923
      %v3925 = vmax.f32 %v3873, %v3874
      %3926 = vmax.xlane.f32.xlu0 %v3925
      %v3927 = vpop.xlane.xlu0 %3926
      %v3928 = vmax.f32 %v3877, %v3878
      %3929 = vmax.xlane.f32.xlu0 %v3928
      %v3930 = vpop.xlane.xlu0 %3929
      %v3931 = vmax.f32 %v3881, %v3882
      %3932 = vmax.xlane.f32.xlu0 %v3931
      %v3933 = vpop.xlane.xlu0 %3932
      %v3934 = vmax.f32 %v3885, %v3886
      %3935 = vmax.xlane.f32.xlu0 %v3934
      %v3936 = vpop.xlane.xlu0 %3935
      %v3937 = vmax.f32 %v3889, %v3890
      %3938 = vmax.xlane.f32.xlu0 %v3937
      %v3939 = vpop.xlane.xlu0 %3938
      %v3940 = vmax.f32 %v3893, %v3894
      %3941 = vmax.xlane.f32.xlu0 %v3940
      %v3942 = vpop.xlane.xlu0 %3941
      %v3943 = vsel %vm1288, %v3897, %v3921
      %v3944 = vsel %vm1288, %v3900, %v3924
      %v3945 = vsel %vm1288, %v3903, %v3927
      %v3946 = vsel %vm1288, %v3906, %v3930
      %v3947 = vsel %vm1288, %v3909, %v3933
      %v3948 = vsel %vm1288, %v3912, %v3936
      %v3949 = vsel %vm1288, %v3915, %v3939
      %v3950 = vsel %vm1288, %v3918, %v3942
      %3951 = vmatprep.subr.mxu0 0.0
      %3952 = vmatpush1.msra.mxu0 0.0
      %3953 = vmatprep.subr.mxu0 0.0
      %3954 = vmatpush1.msra.mxu0 0.0
      %3955 = vmatprep.subr.mxu0 0.0
      %3956 = vmatpush1.msra.mxu0 0.0
      %3957 = vmatprep.subr.mxu0 0.0
      %3958 = vmatpush1.msra.mxu0 0.0
      %3959 = vmatprep.subr.mxu0 0.0
      %3960 = vmatpush1.msra.mxu0 0.0
      %3961 = vmatprep.subr.mxu0 0.0
      %3962 = vmatpush1.msra.mxu0 0.0
      %3963 = vmatprep.subr.mxu0 0.0
      %3964 = vmatpush1.msra.mxu0 0.0
      %3965 = vmatprep.subr.mxu0 0.0
      %3966 = vmatpush1.msra.mxu0 0.0
      %3967 = vmatprep.subr.mxu0 0.0
      %3968 = vmatpush1.msra.mxu0 %v3950
      %3969 = vmatprep.subr.mxu0 0.0
      %3970 = vmatpush1.msra.mxu0 %v3949
      %3971 = vmatprep.subr.mxu0 0.0
      %3972 = vmatpush1.msra.mxu0 %v3948
      %3973 = vmatprep.subr.mxu0 0.0
      %3974 = vmatpush1.msra.mxu0 %v3947
      %3975 = vmatprep.subr.mxu0 0.0
      %3976 = vmatpush1.msra.mxu0 %v3946
      %3977 = vmatprep.subr.mxu0 0.0
      %3978 = vmatpush1.msra.mxu0 %v3945
      %3979 = vmatprep.subr.mxu0 0.0
      %3980 = vmatpush1.msra.mxu0 %v3944
      %3981 = vmatprep.subr.mxu0 0.0
      %3982 = vmatpush1.msra.mxu0 %v3943
      %3983 = vmatprep.subr.mxu0 0.0
      %3984 = vmatpush2.msra.mxu0 0.0
      %3985 = vmatprep.subr.mxu0 0.0
      %3986 = vmatpush2.msra.mxu0 0.0
      %3987 = vmatprep.subr.mxu0 0.0
      %3988 = vmatpush2.msra.mxu0 0.0
      %3989 = vmatprep.subr.mxu0 0.0
      %3990 = vmatpush2.msra.mxu0 0.0
      %3991 = vmatprep.subr.mxu0 0.0
      %3992 = vmatpush2.msra.mxu0 0.0
      %3993 = vmatprep.subr.mxu0 0.0
      %3994 = vmatpush2.msra.mxu0 0.0
      %3995 = vmatprep.subr.mxu0 0.0
      %3996 = vmatpush2.msra.mxu0 0.0
      %3997 = vmatprep.subr.mxu0 0.0
      %3998 = vmatpush2.msra.mxu0 0.0
      %3999 = vmatprep.subr.mxu0 0.0
      %4000 = vmatpush2.msra.mxu0 0.0
      %4001 = vmatprep.subr.mxu0 0.0
      %4002 = vmatpush2.msra.mxu0 0.0
      %4003 = vmatprep.subr.mxu0 0.0
      %4004 = vmatpush2.msra.mxu0 0.0
      %4005 = vmatprep.subr.mxu0 0.0
      %4006 = vmatpush2.msra.mxu0 0.0
      %4007 = vmatprep.subr.mxu0 0.0
      %4008 = vmatpush2.msra.mxu0 0.0
      %4009 = vmatprep.subr.mxu0 0.0
      %4010 = vmatpush2.msra.mxu0 0.0
      %4011 = vmatprep.subr.mxu0 0.0
      %4012 = vmatpush2.msra.mxu0 0.0
      %4013 = vmatprep.subr.mxu0 0.0
      %4014 = vmatpush2.msra.mxu0 0.0
      %4015 = vmatprep.mubr.f32.mxu0 0.0
      %4016 = vmatmul.mubr.f32.gmra.mxu0 %v1319
      %v4017 = vpop.f32.mrf.mxu0
      %v4018 = vadd.f32 %v1300, %v4017
      %v4019 = vpop.f32.mrf.mxu0
      %4020 = vmatprep.mubr.f32.mxu0 0.0
      %4021 = vmatmul.mubr.f32.gmra.mxu0 %v1322
      %v4022 = vpop.f32.mrf.mxu0
      %v4023 = vadd.f32 %v1305, %v4022
      %v4024 = vpop.f32.mrf.mxu0
      %4025 = vmatprep.mubr.f32.mxu0 0.0
      %4026 = vmatmul.mubr.f32.gmra.mxu0 %v1325
      %v4027 = vpop.f32.mrf.mxu0
      %v4028 = vadd.f32 %v1310, %v4027
      %v4029 = vpop.f32.mrf.mxu0
      %4030 = vmatprep.mubr.f32.mxu0 0.0
      %4031 = vmatmul.mubr.f32.gmra.mxu0 %v1328
      %v4032 = vpop.f32.mrf.mxu0
      %v4033 = vadd.f32 %v1315, %v4032
      %v4034 = vpop.f32.mrf.mxu0
      %4035 = vdwg.mxu0
      %v4036 = vmul.f32 %v4018, 0.2
      %v4037 = vmul.f32 %v4023, 0.2
      %v4038 = vmul.f32 %v4028, 0.2
      %v4039 = vmul.f32 %v4033, 0.2
      %v4040 = vmax.f32 %v4018, %v4036
      %v4041 = vmax.f32 %v4023, %v4037
      %v4042 = vmax.f32 %v4028, %v4038
      %v4043 = vmax.f32 %v4033, %v4039
      %4044 = vmatprep.subr.mxu0 0.0
      %4045 = vmatpush1.msra.mxu0 0.0
      %4046 = vmatprep.subr.mxu0 0.0
      %4047 = vmatpush1.msra.mxu0 0.0
      %4048 = vmatprep.subr.mxu0 0.0
      %4049 = vmatpush1.msra.mxu0 0.0
      %4050 = vmatprep.subr.mxu0 0.0
      %4051 = vmatpush1.msra.mxu0 0.0
      %4052 = vmatprep.subr.mxu0 0.0
      %4053 = vmatpush1.msra.mxu0 0.0
      %4054 = vmatprep.subr.mxu0 0.0
      %4055 = vmatpush1.msra.mxu0 0.0
      %4056 = vmatprep.subr.mxu0 0.0
      %4057 = vmatpush1.msra.mxu0 0.0
      %4058 = vmatprep.subr.mxu0 0.0
      %4059 = vmatpush1.msra.mxu0 0.0
      %4060 = vmatprep.subr.mxu0 0.0
      %4061 = vmatpush1.msra.mxu0 0.0
      %4062 = vmatprep.subr.mxu0 0.0
      %4063 = vmatpush1.msra.mxu0 0.0
      %4064 = vmatprep.subr.mxu0 0.0
      %4065 = vmatpush1.msra.mxu0 0.0
      %4066 = vmatprep.subr.mxu0 0.0
      %4067 = vmatpush1.msra.mxu0 0.0
      %4068 = vmatprep.subr.mxu0 0.0
      %4069 = vmatpush1.msra.mxu0 %v4043
      %4070 = vmatprep.subr.mxu0 0.0
      %4071 = vmatpush1.msra.mxu0 %v4042
      %4072 = vmatprep.subr.mxu0 0.0
      %4073 = vmatpush1.msra.mxu0 %v4041
      %4074 = vmatprep.subr.mxu0 0.0
      %4075 = vmatpush1.msra.mxu0 %v4040
      %4076 = vmatprep.subr.mxu0 0.0
      %4077 = vmatpush2.msra.mxu0 0.0
      %4078 = vmatprep.subr.mxu0 0.0
      %4079 = vmatpush2.msra.mxu0 0.0
      %4080 = vmatprep.subr.mxu0 0.0
      %4081 = vmatpush2.msra.mxu0 0.0
      %4082 = vmatprep.subr.mxu0 0.0
      %4083 = vmatpush2.msra.mxu0 0.0
      %4084 = vmatprep.subr.mxu0 0.0
      %4085 = vmatpush2.msra.mxu0 0.0
      %4086 = vmatprep.subr.mxu0 0.0
      %4087 = vmatpush2.msra.mxu0 0.0
      %4088 = vmatprep.subr.mxu0 0.0
      %4089 = vmatpush2.msra.mxu0 0.0
      %4090 = vmatprep.subr.mxu0 0.0
      %4091 = vmatpush2.msra.mxu0 0.0
      %4092 = vmatprep.subr.mxu0 0.0
      %4093 = vmatpush2.msra.mxu0 0.0
      %4094 = vmatprep.subr.mxu0 0.0
      %4095 = vmatpush2.msra.mxu0 0.0
      %4096 = vmatprep.subr.mxu0 0.0
      %4097 = vmatpush2.msra.mxu0 0.0
      %4098 = vmatprep.subr.mxu0 0.0
      %4099 = vmatpush2.msra.mxu0 0.0
      %4100 = vmatprep.subr.mxu0 0.0
      %4101 = vmatpush2.msra.mxu0 0.0
      %4102 = vmatprep.subr.mxu0 0.0
      %4103 = vmatpush2.msra.mxu0 0.0
      %4104 = vmatprep.subr.mxu0 0.0
      %4105 = vmatpush2.msra.mxu0 0.0
      %4106 = vmatprep.subr.mxu0 0.0
      %4107 = vmatpush2.msra.mxu0 0.0
      %4108 = vmatprep.mubr.f32.mxu0 0.0
      %4109 = vmatmul.mubr.f32.gmra.mxu0 %v1434
      %v4110 = vpop.f32.mrf.mxu0
      %v4111 = vadd.f32 %v1426, %v4110
      %v4112 = vpop.f32.mrf.mxu0
      %4113 = vmatprep.mubr.f32.mxu0 0.0
      %4114 = vmatmul.mubr.f32.gmra.mxu0 %v1437
      %v4115 = vpop.f32.mrf.mxu0
      %v4116 = vadd.f32 %v1431, %v4115
      %v4117 = vpop.f32.mrf.mxu0
      %4118 = vdwg.mxu0
      %v4119 = vtanh.pop %v4111
      %v4120 = vtanh.pop %v4116
      %4123 = vrot.lane.b32.xlu0 %v4119, 1
      %v4124 = vpop.permute.xlu0 %4123
      %4125 = vrot.lane.b32.xlu0 %v4120, 1
      %v4126 = vpop.permute.xlu0 %4125
      %v4129 = vsub.f32 %v4119, %v4124
      %v4130 = vsub.f32 %v4120, %v4126
      %4131 = vmatprep.subr.mxu0 0.0
      %4132 = vmatpush1.msra.mxu0 0.0
      %4133 = vmatprep.subr.mxu0 0.0
      %4134 = vmatpush1.msra.mxu0 0.0
      %4135 = vmatprep.subr.mxu0 0.0
      %4136 = vmatpush1.msra.mxu0 0.0
      %4137 = vmatprep.subr.mxu0 0.0
      %4138 = vmatpush1.msra.mxu0 0.0
      %4139 = vmatprep.subr.mxu0 0.0
      %4140 = vmatpush1.msra.mxu0 0.0
      %4141 = vmatprep.subr.mxu0 0.0
      %4142 = vmatpush1.msra.mxu0 0.0
      %4143 = vmatprep.subr.mxu0 0.0
      %4144 = vmatpush1.msra.mxu0 0.0
      %4145 = vmatprep.subr.mxu0 0.0
      %4146 = vmatpush1.msra.mxu0 0.0
      %4147 = vmatprep.subr.mxu0 0.0
      %4148 = vmatpush1.msra.mxu0 0.0
      %4149 = vmatprep.subr.mxu0 0.0
      %4150 = vmatpush1.msra.mxu0 0.0
      %4151 = vmatprep.subr.mxu0 0.0
      %4152 = vmatpush1.msra.mxu0 0.0
      %4153 = vmatprep.subr.mxu0 0.0
      %4154 = vmatpush1.msra.mxu0 0.0
      %4155 = vmatprep.subr.mxu0 0.0
      %4156 = vmatpush1.msra.mxu0 0.0
      %4157 = vmatprep.subr.mxu0 0.0
      %4158 = vmatpush1.msra.mxu0 0.0
      %4159 = vmatprep.subr.mxu0 0.0
      %4160 = vmatpush1.msra.mxu0 0.0
      %4161 = vmatprep.subr.mxu0 %v3389
      %4162 = vmatpush1.msra.mxu0 %v3387
      %4163 = vmatprep.subr.mxu0 0.0
      %4164 = vmatpush2.msra.mxu0 0.0
      %4165 = vmatprep.subr.mxu0 0.0
      %4166 = vmatpush2.msra.mxu0 0.0
      %4167 = vmatprep.subr.mxu0 0.0
      %4168 = vmatpush2.msra.mxu0 0.0
      %4169 = vmatprep.subr.mxu0 0.0
      %4170 = vmatpush2.msra.mxu0 0.0
      %4171 = vmatprep.subr.mxu0 0.0
      %4172 = vmatpush2.msra.mxu0 0.0
      %4173 = vmatprep.subr.mxu0 0.0
      %4174 = vmatpush2.msra.mxu0 0.0
      %4175 = vmatprep.subr.mxu0 0.0
      %4176 = vmatpush2.msra.mxu0 0.0
      %4177 = vmatprep.subr.mxu0 0.0
      %4178 = vmatpush2.msra.mxu0 0.0
      %4179 = vmatprep.subr.mxu0 0.0
      %4180 = vmatpush2.msra.mxu0 0.0
      %4181 = vmatprep.subr.mxu0 0.0
      %4182 = vmatpush2.msra.mxu0 0.0
      %4183 = vmatprep.subr.mxu0 0.0
      %4184 = vmatpush2.msra.mxu0 0.0
      %4185 = vmatprep.subr.mxu0 0.0
      %4186 = vmatpush2.msra.mxu0 0.0
      %4187 = vmatprep.subr.mxu0 0.0
      %4188 = vmatpush2.msra.mxu0 0.0
      %4189 = vmatprep.subr.mxu0 0.0
      %4190 = vmatpush2.msra.mxu0 0.0
      %4191 = vmatprep.subr.mxu0 0.0
      %4192 = vmatpush2.msra.mxu0 0.0
      %4193 = vmatprep.subr.mxu0 0.0
      %4194 = vmatpush2.msra.mxu0 0.0
      %4195 = vmatprep.mubr.f32.mxu0 0.0
      %4196 = vmatmul.mubr.f32.gmra.mxu0 %v1547
      %v4197 = vpop.f32.mrf.mxu0
      %v4198 = vadd.f32 %v1529, %v4197
      %v4199 = vpop.f32.mrf.mxu0
      %v4200 = vadd.f32 %v1529, %v4199
      %4201 = vmatprep.mubr.f32.mxu0 0.0
      %4202 = vmatmul.mubr.f32.gmra.mxu0 %v1550
      %v4203 = vpop.f32.mrf.mxu0
      %v4204 = vadd.f32 %v1534, %v4203
      %v4205 = vpop.f32.mrf.mxu0
      %v4206 = vadd.f32 %v1534, %v4205
      %4207 = vmatprep.mubr.f32.mxu0 0.0
      %4208 = vmatmul.mubr.f32.gmra.mxu0 %v1553
      %v4209 = vpop.f32.mrf.mxu0
      %v4210 = vadd.f32 %v1539, %v4209
      %v4211 = vpop.f32.mrf.mxu0
      %v4212 = vadd.f32 %v1539, %v4211
      %4213 = vmatprep.mubr.f32.mxu0 0.0
      %4214 = vmatmul.mubr.f32.gmra.mxu0 %v1556
      %v4215 = vpop.f32.mrf.mxu0
      %v4216 = vadd.f32 %v1544, %v4215
      %v4217 = vpop.f32.mrf.mxu0
      %v4218 = vadd.f32 %v1544, %v4217
      %4219 = vdwg.mxu0
      %v4220 = vmul.f32 %v4198, 0.2
      %v4221 = vmul.f32 %v4200, 0.2
      %v4222 = vmul.f32 %v4204, 0.2
      %v4223 = vmul.f32 %v4206, 0.2
      %v4224 = vmul.f32 %v4210, 0.2
      %v4225 = vmul.f32 %v4212, 0.2
      %v4226 = vmul.f32 %v4216, 0.2
      %v4227 = vmul.f32 %v4218, 0.2
      %v4228 = vmax.f32 %v4198, %v4220
      %v4229 = vmax.f32 %v4200, %v4221
      %v4230 = vmax.f32 %v4204, %v4222
      %v4231 = vmax.f32 %v4206, %v4223
      %v4232 = vmax.f32 %v4210, %v4224
      %v4233 = vmax.f32 %v4212, %v4225
      %v4234 = vmax.f32 %v4216, %v4226
      %v4235 = vmax.f32 %v4218, %v4227
      %4236 = vmatprep.subr.mxu0 0.0
      %4237 = vmatpush1.msra.mxu0 0.0
      %4238 = vmatprep.subr.mxu0 0.0
      %4239 = vmatpush1.msra.mxu0 0.0
      %4240 = vmatprep.subr.mxu0 0.0
      %4241 = vmatpush1.msra.mxu0 0.0
      %4242 = vmatprep.subr.mxu0 0.0
      %4243 = vmatpush1.msra.mxu0 0.0
      %4244 = vmatprep.subr.mxu0 0.0
      %4245 = vmatpush1.msra.mxu0 0.0
      %4246 = vmatprep.subr.mxu0 0.0
      %4247 = vmatpush1.msra.mxu0 0.0
      %4248 = vmatprep.subr.mxu0 0.0
      %4249 = vmatpush1.msra.mxu0 0.0
      %4250 = vmatprep.subr.mxu0 0.0
      %4251 = vmatpush1.msra.mxu0 0.0
      %4252 = vmatprep.subr.mxu0 0.0
      %4253 = vmatpush1.msra.mxu0 0.0
      %4254 = vmatprep.subr.mxu0 0.0
      %4255 = vmatpush1.msra.mxu0 0.0
      %4256 = vmatprep.subr.mxu0 0.0
      %4257 = vmatpush1.msra.mxu0 0.0
      %4258 = vmatprep.subr.mxu0 0.0
      %4259 = vmatpush1.msra.mxu0 0.0
      %4260 = vmatprep.subr.mxu0 %v4235
      %4261 = vmatpush1.msra.mxu0 %v4234
      %4262 = vmatprep.subr.mxu0 %v4233
      %4263 = vmatpush1.msra.mxu0 %v4232
      %4264 = vmatprep.subr.mxu0 %v4231
      %4265 = vmatpush1.msra.mxu0 %v4230
      %4266 = vmatprep.subr.mxu0 %v4229
      %4267 = vmatpush1.msra.mxu0 %v4228
      %4268 = vmatprep.subr.mxu0 0.0
      %4269 = vmatpush2.msra.mxu0 0.0
      %4270 = vmatprep.subr.mxu0 0.0
      %4271 = vmatpush2.msra.mxu0 0.0
      %4272 = vmatprep.subr.mxu0 0.0
      %4273 = vmatpush2.msra.mxu0 0.0
      %4274 = vmatprep.subr.mxu0 0.0
      %4275 = vmatpush2.msra.mxu0 0.0
      %4276 = vmatprep.subr.mxu0 0.0
      %4277 = vmatpush2.msra.mxu0 0.0
      %4278 = vmatprep.subr.mxu0 0.0
      %4279 = vmatpush2.msra.mxu0 0.0
      %4280 = vmatprep.subr.mxu0 0.0
      %4281 = vmatpush2.msra.mxu0 0.0
      %4282 = vmatprep.subr.mxu0 0.0
      %4283 = vmatpush2.msra.mxu0 0.0
      %4284 = vmatprep.subr.mxu0 0.0
      %4285 = vmatpush2.msra.mxu0 0.0
      %4286 = vmatprep.subr.mxu0 0.0
      %4287 = vmatpush2.msra.mxu0 0.0
      %4288 = vmatprep.subr.mxu0 0.0
      %4289 = vmatpush2.msra.mxu0 0.0
      %4290 = vmatprep.subr.mxu0 0.0
      %4291 = vmatpush2.msra.mxu0 0.0
      %4292 = vmatprep.subr.mxu0 0.0
      %4293 = vmatpush2.msra.mxu0 0.0
      %4294 = vmatprep.subr.mxu0 0.0
      %4295 = vmatpush2.msra.mxu0 0.0
      %4296 = vmatprep.subr.mxu0 0.0
      %4297 = vmatpush2.msra.mxu0 0.0
      %4298 = vmatprep.subr.mxu0 0.0
      %4299 = vmatpush2.msra.mxu0 0.0
      %4300 = vmatprep.mubr.f32.mxu0 0.0
      %4301 = vmatmul.mubr.f32.gmra.mxu0 %v1704
      %v4302 = vpop.f32.mrf.mxu0
      %v4303 = vadd.f32 %v1666, %v4302
      %v4304 = vpop.f32.mrf.mxu0
      %v4305 = vadd.f32 %v1666, %v4304
      %4306 = vmatprep.mubr.f32.mxu0 0.0
      %4307 = vmatmul.mubr.f32.gmra.mxu0 %v1707
      %v4308 = vpop.f32.mrf.mxu0
      %v4309 = vadd.f32 %v1671, %v4308
      %v4310 = vpop.f32.mrf.mxu0
      %v4311 = vadd.f32 %v1671, %v4310
      %4312 = vmatprep.mubr.f32.mxu0 0.0
      %4313 = vmatmul.mubr.f32.gmra.mxu0 %v1710
      %v4314 = vpop.f32.mrf.mxu0
      %v4315 = vadd.f32 %v1676, %v4314
      %v4316 = vpop.f32.mrf.mxu0
      %v4317 = vadd.f32 %v1676, %v4316
      %4318 = vmatprep.mubr.f32.mxu0 0.0
      %4319 = vmatmul.mubr.f32.gmra.mxu0 %v1713
      %v4320 = vpop.f32.mrf.mxu0
      %v4321 = vadd.f32 %v1681, %v4320
      %v4322 = vpop.f32.mrf.mxu0
      %v4323 = vadd.f32 %v1681, %v4322
      %4324 = vmatprep.mubr.f32.mxu0 0.0
      %4325 = vmatmul.mubr.f32.gmra.mxu0 %v1716
      %v4326 = vpop.f32.mrf.mxu0
      %v4327 = vadd.f32 %v1686, %v4326
      %v4328 = vpop.f32.mrf.mxu0
      %v4329 = vadd.f32 %v1686, %v4328
      %4330 = vmatprep.mubr.f32.mxu0 0.0
      %4331 = vmatmul.mubr.f32.gmra.mxu0 %v1719
      %v4332 = vpop.f32.mrf.mxu0
      %v4333 = vadd.f32 %v1691, %v4332
      %v4334 = vpop.f32.mrf.mxu0
      %v4335 = vadd.f32 %v1691, %v4334
      %4336 = vmatprep.mubr.f32.mxu0 0.0
      %4337 = vmatmul.mubr.f32.gmra.mxu0 %v1722
      %v4338 = vpop.f32.mrf.mxu0
      %v4339 = vadd.f32 %v1696, %v4338
      %v4340 = vpop.f32.mrf.mxu0
      %v4341 = vadd.f32 %v1696, %v4340
      %4342 = vmatprep.mubr.f32.mxu0 0.0
      %4343 = vmatmul.mubr.f32.gmra.mxu0 %v1725
      %v4344 = vpop.f32.mrf.mxu0
      %v4345 = vadd.f32 %v1701, %v4344
      %v4346 = vpop.f32.mrf.mxu0
      %v4347 = vadd.f32 %v1701, %v4346
      %4348 = vdwg.mxu0
      %v4349 = vmul.f32 %v4303, 0.2
      %v4350 = vmul.f32 %v4305, 0.2
      %v4351 = vmul.f32 %v4309, 0.2
      %v4352 = vmul.f32 %v4311, 0.2
      %v4353 = vmul.f32 %v4315, 0.2
      %v4354 = vmul.f32 %v4317, 0.2
      %v4355 = vmul.f32 %v4321, 0.2
      %v4356 = vmul.f32 %v4323, 0.2
      %v4357 = vmul.f32 %v4327, 0.2
      %v4358 = vmul.f32 %v4329, 0.2
      %v4359 = vmul.f32 %v4333, 0.2
      %v4360 = vmul.f32 %v4335, 0.2
      %v4361 = vmul.f32 %v4339, 0.2
      %v4362 = vmul.f32 %v4341, 0.2
      %v4363 = vmul.f32 %v4345, 0.2
      %v4364 = vmul.f32 %v4347, 0.2
      %v4365 = vmax.f32 %v4303, %v4349
      %v4366 = vmax.f32 %v4305, %v4350
      %v4367 = vmax.f32 %v4309, %v4351
      %v4368 = vmax.f32 %v4311, %v4352
      %v4369 = vmax.f32 %v4315, %v4353
      %v4370 = vmax.f32 %v4317, %v4354
      %v4371 = vmax.f32 %v4321, %v4355
      %v4372 = vmax.f32 %v4323, %v4356
      %v4373 = vmax.f32 %v4327, %v4357
      %v4374 = vmax.f32 %v4329, %v4358
      %v4375 = vmax.f32 %v4333, %v4359
      %v4376 = vmax.f32 %v4335, %v4360
      %v4377 = vmax.f32 %v4339, %v4361
      %v4378 = vmax.f32 %v4341, %v4362
      %v4379 = vmax.f32 %v4345, %v4363
      %v4380 = vmax.f32 %v4347, %v4364
      %4381 = vmatprep.subr.mxu0 0.0
      %4382 = vmatpush1.msra.mxu0 0.0
      %4383 = vmatprep.subr.mxu0 0.0
      %4384 = vmatpush1.msra.mxu0 0.0
      %4385 = vmatprep.subr.mxu0 0.0
      %4386 = vmatpush1.msra.mxu0 0.0
      %4387 = vmatprep.subr.mxu0 0.0
      %4388 = vmatpush1.msra.mxu0 0.0
      %4389 = vmatprep.subr.mxu0 0.0
      %4390 = vmatpush1.msra.mxu0 0.0
      %4391 = vmatprep.subr.mxu0 0.0
      %4392 = vmatpush1.msra.mxu0 0.0
      %4393 = vmatprep.subr.mxu0 0.0
      %4394 = vmatpush1.msra.mxu0 0.0
      %4395 = vmatprep.subr.mxu0 0.0
      %4396 = vmatpush1.msra.mxu0 0.0
      %4397 = vmatprep.subr.mxu0 %v4380
      %4398 = vmatpush1.msra.mxu0 %v4379
      %4399 = vmatprep.subr.mxu0 %v4378
      %4400 = vmatpush1.msra.mxu0 %v4377
      %4401 = vmatprep.subr.mxu0 %v4376
      %4402 = vmatpush1.msra.mxu0 %v4375
      %4403 = vmatprep.subr.mxu0 %v4374
      %4404 = vmatpush1.msra.mxu0 %v4373
      %4405 = vmatprep.subr.mxu0 %v4372
      %4406 = vmatpush1.msra.mxu0 %v4371
      %4407 = vmatprep.subr.mxu0 %v4370
      %4408 = vmatpush1.msra.mxu0 %v4369
      %4409 = vmatprep.subr.mxu0 %v4368
      %4410 = vmatpush1.msra.mxu0 %v4367
      %4411 = vmatprep.subr.mxu0 %v4366
      %4412 = vmatpush1.msra.mxu0 %v4365
      %4413 = vmatprep.subr.mxu0 0.0
      %4414 = vmatpush2.msra.mxu0 0.0
      %4415 = vmatprep.subr.mxu0 0.0
      %4416 = vmatpush2.msra.mxu0 0.0
      %4417 = vmatprep.subr.mxu0 0.0
      %4418 = vmatpush2.msra.mxu0 0.0
      %4419 = vmatprep.subr.mxu0 0.0
      %4420 = vmatpush2.msra.mxu0 0.0
      %4421 = vmatprep.subr.mxu0 0.0
      %4422 = vmatpush2.msra.mxu0 0.0
      %4423 = vmatprep.subr.mxu0 0.0
      %4424 = vmatpush2.msra.mxu0 0.0
      %4425 = vmatprep.subr.mxu0 0.0
      %4426 = vmatpush2.msra.mxu0 0.0
      %4427 = vmatprep.subr.mxu0 0.0
      %4428 = vmatpush2.msra.mxu0 0.0
      %4429 = vmatprep.subr.mxu0 0.0
      %4430 = vmatpush2.msra.mxu0 0.0
      %4431 = vmatprep.subr.mxu0 0.0
      %4432 = vmatpush2.msra.mxu0 0.0
      %4433 = vmatprep.subr.mxu0 0.0
      %4434 = vmatpush2.msra.mxu0 0.0
      %4435 = vmatprep.subr.mxu0 0.0
      %4436 = vmatpush2.msra.mxu0 0.0
      %4437 = vmatprep.subr.mxu0 0.0
      %4438 = vmatpush2.msra.mxu0 0.0
      %4439 = vmatprep.subr.mxu0 0.0
      %4440 = vmatpush2.msra.mxu0 0.0
      %4441 = vmatprep.subr.mxu0 0.0
      %4442 = vmatpush2.msra.mxu0 0.0
      %4443 = vmatprep.subr.mxu0 0.0
      %4444 = vmatpush2.msra.mxu0 0.0
      %4445 = vmatprep.mubr.f32.mxu0 0.0
      %4446 = vmatmul.mubr.f32.gmra.mxu0 %v1903
      %v4447 = vpop.f32.mrf.mxu0
      %v4448 = vadd.f32 %v1875, %v4447
      %v4449 = vpop.f32.mrf.mxu0
      %v4450 = vadd.f32 %v1875, %v4449
      %4451 = vmatprep.mubr.f32.mxu0 0.0
      %4452 = vmatmul.mubr.f32.gmra.mxu0 %v1906
      %v4453 = vpop.f32.mrf.mxu0
      %v4454 = vadd.f32 %v1880, %v4453
      %v4455 = vpop.f32.mrf.mxu0
      %v4456 = vadd.f32 %v1880, %v4455
      %4457 = vmatprep.mubr.f32.mxu0 0.0
      %4458 = vmatmul.mubr.f32.gmra.mxu0 %v1909
      %v4459 = vpop.f32.mrf.mxu0
      %v4460 = vadd.f32 %v1885, %v4459
      %v4461 = vpop.f32.mrf.mxu0
      %v4462 = vadd.f32 %v1885, %v4461
      %4463 = vmatprep.mubr.f32.mxu0 0.0
      %4464 = vmatmul.mubr.f32.gmra.mxu0 %v1912
      %v4465 = vpop.f32.mrf.mxu0
      %v4466 = vadd.f32 %v1890, %v4465
      %v4467 = vpop.f32.mrf.mxu0
      %v4468 = vadd.f32 %v1890, %v4467
      %4469 = vmatprep.mubr.f32.mxu0 0.0
      %4470 = vmatmul.mubr.f32.gmra.mxu0 %v1915
      %v4471 = vpop.f32.mrf.mxu0
      %v4472 = vadd.f32 %v1895, %v4471
      %v4473 = vpop.f32.mrf.mxu0
      %v4474 = vadd.f32 %v1895, %v4473
      %4475 = vmatprep.mubr.f32.mxu0 0.0
      %4476 = vmatmul.mubr.f32.gmra.mxu0 %v1918
      %v4477 = vpop.f32.mrf.mxu0
      %v4478 = vadd.f32 %v1900, %v4477
      %v4479 = vpop.f32.mrf.mxu0
      %v4480 = vadd.f32 %v1900, %v4479
      %4481 = vdwg.mxu0
      %v4482 = vmul.f32 %v4448, %v4448
      %v4483 = vmul.f32 %v4450, %v4450
      %v4484 = vmul.f32 %v4454, %v4454
      %v4485 = vmul.f32 %v4456, %v4456
      %v4486 = vmul.f32 %v4460, %v4460
      %v4487 = vmul.f32 %v4462, %v4462
      %v4488 = vmul.f32 %v4466, %v4466
      %v4489 = vmul.f32 %v4468, %v4468
      %v4490 = vmul.f32 %v4472, %v4472
      %v4491 = vmul.f32 %v4474, %v4474
      %v4492 = vmul.f32 %v4478, %v4478
      %v4493 = vmul.f32 %v4480, %v4480
      %v4494 = vadd.f32 %v4482, %v4483
      %4495 = vadd.xlane.f32.xlu0 %v4494
      %v4496 = vpop.xlane.xlu0 %4495
      %v4497 = vadd.f32 %v4484, %v4485
      %4498 = vadd.xlane.f32.xlu0 %v4497
      %v4499 = vpop.xlane.xlu0 %4498
      %v4500 = vadd.f32 %v4486, %v4487
      %4501 = vadd.xlane.f32.xlu0 %v4500
      %v4502 = vpop.xlane.xlu0 %4501
      %v4503 = vadd.f32 %v4488, %v4489
      %4504 = vadd.xlane.f32.xlu0 %v4503
      %v4505 = vpop.xlane.xlu0 %4504
      %v4506 = vadd.f32 %v4490, %v4491
      %4507 = vadd.xlane.f32.xlu0 %v4506
      %v4508 = vpop.xlane.xlu0 %4507
      %v4509 = vadd.f32 %v4492, %v4493
      %4510 = vadd.xlane.f32.xlu0 %v4509
      %v4511 = vpop.xlane.xlu0 %4510
      %v4512 = vadd.f32 %v4496, %v4502
      %v4513 = vadd.f32 %v4499, %v4505
      %v4514 = vadd.f32 %v4512, %v4508
      %v4515 = vadd.f32 %v4513, %v4511
      %v4516 = vrsqrt.pop %v4514
      %v4517 = vmul.f32 %v4514, %v4516
      %vm4518 = vcmp.eq.f32.partialorder %v4514, inf
      %v4519 = vsel %vm4518, %v4514, %v4517
      %vm4520 = vcmp.eq.f32.partialorder %v4514, 0.0
      %v4521 = vand.u32 %v4514, 2147483648
      %v4522 = vsel %vm4520, %v4521, %v4519
      %v4523 = vrsqrt.pop %v4515
      %v4524 = vmul.f32 %v4515, %v4523
      %vm4525 = vcmp.eq.f32.partialorder %v4515, inf
      %v4526 = vsel %vm4525, %v4515, %v4524
      %vm4527 = vcmp.eq.f32.partialorder %v4515, 0.0
      %v4528 = vand.u32 %v4515, 2147483648
      %v4529 = vsel %vm4527, %v4528, %v4526
      %v4530 = vrcp.pop %v4522
      %v4531 = vmul.f32 %v4129, %v4530
      %v4532 = vrcp.pop %v4529
      %v4533 = vmul.f32 %v4130, %v4532
      %4535 = vset.pattern.permute.xlu0 1
      %4536 = vperm.xlu0 %4535, %v4531
      %v4537 = vpop.permute.xlu0 %4536
      %4540 = vset.pattern.permute.xlu0 1
      %4541 = vperm.xlu0 %4540, %v4533
      %v4542 = vpop.permute.xlu0 %4541
      %v4544 = vmul.f32 %v4448, %v4537
      %v4545 = vmul.f32 %v4450, %v4537
      %v4546 = vmul.f32 %v4454, %v4542
      %v4547 = vmul.f32 %v4456, %v4542
      %v4548 = vadd.f32 %v4544, %v4546
      %v4549 = vrot.slane %v4548, 4
      %v4550 = vadd.f32 %v4548, %v4549
      %v4551 = vrot.slane %v4550, 2
      %v4552 = vadd.f32 %v4550, %v4551
      %v4553 = vrot.slane %v4552, 1
      %v4554 = vadd.f32 %v4552, %v4553
      %v4555 = vadd.f32 %v4545, %v4547
      %v4556 = vrot.slane %v4555, 4
      %v4557 = vadd.f32 %v4555, %v4556
      %v4558 = vrot.slane %v4557, 2
      %v4559 = vadd.f32 %v4557, %v4558
      %v4560 = vrot.slane %v4559, 1
      %v4561 = vadd.f32 %v4559, %v4560
      %v4562 = vmul.f32 %v4460, %v4537
      %v4563 = vmul.f32 %v4462, %v4537
      %v4564 = vmul.f32 %v4466, %v4542
      %v4565 = vmul.f32 %v4468, %v4542
      %v4566 = vadd.f32 %v4562, %v4564
      %v4567 = vrot.slane %v4566, 4
      %v4568 = vadd.f32 %v4566, %v4567
      %v4569 = vrot.slane %v4568, 2
      %v4570 = vadd.f32 %v4568, %v4569
      %v4571 = vrot.slane %v4570, 1
      %v4572 = vadd.f32 %v4570, %v4571
      %v4573 = vadd.f32 %v4563, %v4565
      %v4574 = vrot.slane %v4573, 4
      %v4575 = vadd.f32 %v4573, %v4574
      %v4576 = vrot.slane %v4575, 2
      %v4577 = vadd.f32 %v4575, %v4576
      %v4578 = vrot.slane %v4577, 1
      %v4579 = vadd.f32 %v4577, %v4578
      %v4580 = vmul.f32 %v4472, %v4537
      %v4581 = vmul.f32 %v4474, %v4537
      %v4582 = vmul.f32 %v4478, %v4542
      %v4583 = vmul.f32 %v4480, %v4542
      %v4584 = vadd.f32 %v4580, %v4582
      %v4585 = vrot.slane %v4584, 4
      %v4586 = vadd.f32 %v4584, %v4585
      %v4587 = vrot.slane %v4586, 2
      %v4588 = vadd.f32 %v4586, %v4587
      %v4589 = vrot.slane %v4588, 1
      %v4590 = vadd.f32 %v4588, %v4589
      %v4591 = vadd.f32 %v4581, %v4583
      %v4592 = vrot.slane %v4591, 4
      %v4593 = vadd.f32 %v4591, %v4592
      %v4594 = vrot.slane %v4593, 2
      %v4595 = vadd.f32 %v4593, %v4594
      %v4596 = vrot.slane %v4595, 1
      %v4597 = vadd.f32 %v4595, %v4596
      %v4598 = vsel %vm2137, %v4554, %v4572
      %v4599 = vsel %vm2137, %v4561, %v4579
      %v4600 = vsel %vm2140, %v4598, %v4590
      %v4601 = vsel %vm2140, %v4599, %v4597
      %v4604 = vcombine.low %v4600, %v4601
      %v4606 = vadd.f32 %v3380, %v4604
      %s4607 = scalar_lea.vmem %s553, 16
      %4608 = vst [vmem:[%s4607] sm:$0x77] %v4606
      %s4609 = scalar_lea.vmem %s539, 24
      %v4610 = vld [vmem:[%s4609] sm:$0x77]
      %s4611 = scalar_lea.vmem %s546, 24
      %v4612 = vld [vmem:[%s4611] sm:$0x77]
      %v4614 = vcombine.high %v4610, %v4610
      %v4616 = vcombine.high %v4612, %v4612
      %v4617 = vsel %vm666, %v4610, 0
      %v4619 = vsel %vm666, %v4614, 0
      %v4621 = vsel %vm666, %v4612, 0
      %v4623 = vsel %vm666, %v4616, 0
      %4625 = vmatprep.subr.mxu0 0.0
      %4626 = vmatpush1.msra.mxu0 0.0
      %4627 = vmatprep.subr.mxu0 0.0
      %4628 = vmatpush1.msra.mxu0 0.0
      %4629 = vmatprep.subr.mxu0 0.0
      %4630 = vmatpush1.msra.mxu0 0.0
      %4631 = vmatprep.subr.mxu0 0.0
      %4632 = vmatpush1.msra.mxu0 0.0
      %4633 = vmatprep.subr.mxu0 0.0
      %4634 = vmatpush1.msra.mxu0 0.0
      %4635 = vmatprep.subr.mxu0 0.0
      %4636 = vmatpush1.msra.mxu0 0.0
      %4637 = vmatprep.subr.mxu0 0.0
      %4638 = vmatpush1.msra.mxu0 0.0
      %4639 = vmatprep.subr.mxu0 0.0
      %4640 = vmatpush1.msra.mxu0 0.0
      %4641 = vmatprep.subr.mxu0 0.0
      %4642 = vmatpush1.msra.mxu0 0.0
      %4643 = vmatprep.subr.mxu0 0.0
      %4644 = vmatpush1.msra.mxu0 0.0
      %4645 = vmatprep.subr.mxu0 0.0
      %4646 = vmatpush1.msra.mxu0 0.0
      %4647 = vmatprep.subr.mxu0 0.0
      %4648 = vmatpush1.msra.mxu0 0.0
      %4649 = vmatprep.subr.mxu0 0.0
      %4650 = vmatpush1.msra.mxu0 0.0
      %4651 = vmatprep.subr.mxu0 0.0
      %4652 = vmatpush1.msra.mxu0 0.0
      %4653 = vmatprep.subr.mxu0 0.0
      %4654 = vmatpush1.msra.mxu0 0.0
      %4655 = vmatprep.subr.mxu0 %v4619
      %4656 = vmatpush1.msra.mxu0 %v4617
      %4657 = vmatprep.subr.mxu0 0.0
      %4658 = vmatpush2.msra.mxu0 0.0
      %4659 = vmatprep.subr.mxu0 0.0
      %4660 = vmatpush2.msra.mxu0 0.0
      %4661 = vmatprep.subr.mxu0 0.0
      %4662 = vmatpush2.msra.mxu0 0.0
      %4663 = vmatprep.subr.mxu0 0.0
      %4664 = vmatpush2.msra.mxu0 0.0
      %4665 = vmatprep.subr.mxu0 0.0
      %4666 = vmatpush2.msra.mxu0 0.0
      %4667 = vmatprep.subr.mxu0 0.0
      %4668 = vmatpush2.msra.mxu0 0.0
      %4669 = vmatprep.subr.mxu0 0.0
      %4670 = vmatpush2.msra.mxu0 0.0
      %4671 = vmatprep.subr.mxu0 0.0
      %4672 = vmatpush2.msra.mxu0 0.0
      %4673 = vmatprep.subr.mxu0 0.0
      %4674 = vmatpush2.msra.mxu0 0.0
      %4675 = vmatprep.subr.mxu0 0.0
      %4676 = vmatpush2.msra.mxu0 0.0
      %4677 = vmatprep.subr.mxu0 0.0
      %4678 = vmatpush2.msra.mxu0 0.0
      %4679 = vmatprep.subr.mxu0 0.0
      %4680 = vmatpush2.msra.mxu0 0.0
      %4681 = vmatprep.subr.mxu0 0.0
      %4682 = vmatpush2.msra.mxu0 0.0
      %4683 = vmatprep.subr.mxu0 0.0
      %4684 = vmatpush2.msra.mxu0 0.0
      %4685 = vmatprep.subr.mxu0 0.0
      %4686 = vmatpush2.msra.mxu0 0.0
      %4687 = vmatprep.subr.mxu0 0.0
      %4688 = vmatpush2.msra.mxu0 0.0
      %4689 = vmatprep.mubr.f32.mxu0 0.0
      %4690 = vmatmul.mubr.f32.gmra.mxu0 %v655
      %v4691 = vpop.f32.mrf.mxu0
      %v4692 = vadd.f32 %v636, %v4691
      %v4693 = vpop.f32.mrf.mxu0
      %v4694 = vadd.f32 %v636, %v4693
      %4695 = vmatprep.mubr.f32.mxu0 0.0
      %4696 = vmatmul.mubr.f32.gmra.mxu0 %v658
      %v4697 = vpop.f32.mrf.mxu0
      %v4698 = vadd.f32 %v641, %v4697
      %v4699 = vpop.f32.mrf.mxu0
      %v4700 = vadd.f32 %v641, %v4699
      %4701 = vmatprep.mubr.f32.mxu0 0.0
      %4702 = vmatmul.mubr.f32.gmra.mxu0 %v661
      %v4703 = vpop.f32.mrf.mxu0
      %v4704 = vadd.f32 %v646, %v4703
      %v4705 = vpop.f32.mrf.mxu0
      %v4706 = vadd.f32 %v646, %v4705
      %4707 = vmatprep.mubr.f32.mxu0 0.0
      %4708 = vmatmul.mubr.f32.gmra.mxu0 %v664
      %v4709 = vpop.f32.mrf.mxu0
      %v4710 = vadd.f32 %v651, %v4709
      %v4711 = vpop.f32.mrf.mxu0
      %v4712 = vadd.f32 %v651, %v4711
      %4713 = vdwg.mxu0
      %4714 = vmatprep.subr.mxu0 0.0
      %4715 = vmatpush1.msra.mxu0 0.0
      %4716 = vmatprep.subr.mxu0 0.0
      %4717 = vmatpush1.msra.mxu0 0.0
      %4718 = vmatprep.subr.mxu0 0.0
      %4719 = vmatpush1.msra.mxu0 0.0
      %4720 = vmatprep.subr.mxu0 0.0
      %4721 = vmatpush1.msra.mxu0 0.0
      %4722 = vmatprep.subr.mxu0 0.0
      %4723 = vmatpush1.msra.mxu0 0.0
      %4724 = vmatprep.subr.mxu0 0.0
      %4725 = vmatpush1.msra.mxu0 0.0
      %4726 = vmatprep.subr.mxu0 0.0
      %4727 = vmatpush1.msra.mxu0 0.0
      %4728 = vmatprep.subr.mxu0 0.0
      %4729 = vmatpush1.msra.mxu0 0.0
      %4730 = vmatprep.subr.mxu0 0.0
      %4731 = vmatpush1.msra.mxu0 0.0
      %4732 = vmatprep.subr.mxu0 0.0
      %4733 = vmatpush1.msra.mxu0 0.0
      %4734 = vmatprep.subr.mxu0 0.0
      %4735 = vmatpush1.msra.mxu0 0.0
      %4736 = vmatprep.subr.mxu0 0.0
      %4737 = vmatpush1.msra.mxu0 0.0
      %4738 = vmatprep.subr.mxu0 0.0
      %4739 = vmatpush1.msra.mxu0 0.0
      %4740 = vmatprep.subr.mxu0 0.0
      %4741 = vmatpush1.msra.mxu0 0.0
      %4742 = vmatprep.subr.mxu0 0.0
      %4743 = vmatpush1.msra.mxu0 0.0
      %4744 = vmatprep.subr.mxu0 %v4623
      %4745 = vmatpush1.msra.mxu0 %v4621
      %4746 = vmatprep.subr.mxu0 0.0
      %4747 = vmatpush2.msra.mxu0 0.0
      %4748 = vmatprep.subr.mxu0 0.0
      %4749 = vmatpush2.msra.mxu0 0.0
      %4750 = vmatprep.subr.mxu0 0.0
      %4751 = vmatpush2.msra.mxu0 0.0
      %4752 = vmatprep.subr.mxu0 0.0
      %4753 = vmatpush2.msra.mxu0 0.0
      %4754 = vmatprep.subr.mxu0 0.0
      %4755 = vmatpush2.msra.mxu0 0.0
      %4756 = vmatprep.subr.mxu0 0.0
      %4757 = vmatpush2.msra.mxu0 0.0
      %4758 = vmatprep.subr.mxu0 0.0
      %4759 = vmatpush2.msra.mxu0 0.0
      %4760 = vmatprep.subr.mxu0 0.0
      %4761 = vmatpush2.msra.mxu0 0.0
      %4762 = vmatprep.subr.mxu0 0.0
      %4763 = vmatpush2.msra.mxu0 0.0
      %4764 = vmatprep.subr.mxu0 0.0
      %4765 = vmatpush2.msra.mxu0 0.0
      %4766 = vmatprep.subr.mxu0 0.0
      %4767 = vmatpush2.msra.mxu0 0.0
      %4768 = vmatprep.subr.mxu0 0.0
      %4769 = vmatpush2.msra.mxu0 0.0
      %4770 = vmatprep.subr.mxu0 0.0
      %4771 = vmatpush2.msra.mxu0 0.0
      %4772 = vmatprep.subr.mxu0 0.0
      %4773 = vmatpush2.msra.mxu0 0.0
      %4774 = vmatprep.subr.mxu0 0.0
      %4775 = vmatpush2.msra.mxu0 0.0
      %4776 = vmatprep.subr.mxu0 0.0
      %4777 = vmatpush2.msra.mxu0 0.0
      %4778 = vmatprep.mubr.f32.mxu0 0.0
      %4779 = vmatmul.mubr.f32.gmra.mxu0 %v655
      %v4780 = vpop.f32.mrf.mxu0
      %v4781 = vadd.f32 %v636, %v4780
      %v4782 = vpop.f32.mrf.mxu0
      %v4783 = vadd.f32 %v636, %v4782
      %4784 = vmatprep.mubr.f32.mxu0 0.0
      %4785 = vmatmul.mubr.f32.gmra.mxu0 %v658
      %v4786 = vpop.f32.mrf.mxu0
      %v4787 = vadd.f32 %v641, %v4786
      %v4788 = vpop.f32.mrf.mxu0
      %v4789 = vadd.f32 %v641, %v4788
      %4790 = vmatprep.mubr.f32.mxu0 0.0
      %4791 = vmatmul.mubr.f32.gmra.mxu0 %v661
      %v4792 = vpop.f32.mrf.mxu0
      %v4793 = vadd.f32 %v646, %v4792
      %v4794 = vpop.f32.mrf.mxu0
      %v4795 = vadd.f32 %v646, %v4794
      %4796 = vmatprep.mubr.f32.mxu0 0.0
      %4797 = vmatmul.mubr.f32.gmra.mxu0 %v664
      %v4798 = vpop.f32.mrf.mxu0
      %v4799 = vadd.f32 %v651, %v4798
      %v4800 = vpop.f32.mrf.mxu0
      %v4801 = vadd.f32 %v651, %v4800
      %4802 = vdwg.mxu0
      %v4803 = vmul.f32 %v4692, 0.2
      %v4804 = vmul.f32 %v4694, 0.2
      %v4805 = vmul.f32 %v4781, 0.2
      %v4806 = vmul.f32 %v4783, 0.2
      %v4807 = vmul.f32 %v4698, 0.2
      %v4808 = vmul.f32 %v4700, 0.2
      %v4809 = vmul.f32 %v4787, 0.2
      %v4810 = vmul.f32 %v4789, 0.2
      %v4811 = vmul.f32 %v4704, 0.2
      %v4812 = vmul.f32 %v4706, 0.2
      %v4813 = vmul.f32 %v4793, 0.2
      %v4814 = vmul.f32 %v4795, 0.2
      %v4815 = vmul.f32 %v4710, 0.2
      %v4816 = vmul.f32 %v4712, 0.2
      %v4817 = vmul.f32 %v4799, 0.2
      %v4818 = vmul.f32 %v4801, 0.2
      %v4819 = vmax.f32 %v4692, %v4803
      %v4820 = vmax.f32 %v4694, %v4804
      %v4821 = vmax.f32 %v4781, %v4805
      %v4822 = vmax.f32 %v4783, %v4806
      %v4823 = vmax.f32 %v4698, %v4807
      %v4824 = vmax.f32 %v4700, %v4808
      %v4825 = vmax.f32 %v4787, %v4809
      %v4826 = vmax.f32 %v4789, %v4810
      %v4827 = vmax.f32 %v4704, %v4811
      %v4828 = vmax.f32 %v4706, %v4812
      %v4829 = vmax.f32 %v4793, %v4813
      %v4830 = vmax.f32 %v4795, %v4814
      %v4831 = vmax.f32 %v4710, %v4815
      %v4832 = vmax.f32 %v4712, %v4816
      %v4833 = vmax.f32 %v4799, %v4817
      %v4834 = vmax.f32 %v4801, %v4818
      %4835 = vmatprep.subr.mxu0 0.0
      %4836 = vmatpush1.msra.mxu0 0.0
      %4837 = vmatprep.subr.mxu0 0.0
      %4838 = vmatpush1.msra.mxu0 0.0
      %4839 = vmatprep.subr.mxu0 0.0
      %4840 = vmatpush1.msra.mxu0 0.0
      %4841 = vmatprep.subr.mxu0 0.0
      %4842 = vmatpush1.msra.mxu0 0.0
      %4843 = vmatprep.subr.mxu0 0.0
      %4844 = vmatpush1.msra.mxu0 0.0
      %4845 = vmatprep.subr.mxu0 0.0
      %4846 = vmatpush1.msra.mxu0 0.0
      %4847 = vmatprep.subr.mxu0 0.0
      %4848 = vmatpush1.msra.mxu0 0.0
      %4849 = vmatprep.subr.mxu0 0.0
      %4850 = vmatpush1.msra.mxu0 0.0
      %4851 = vmatprep.subr.mxu0 0.0
      %4852 = vmatpush1.msra.mxu0 0.0
      %4853 = vmatprep.subr.mxu0 0.0
      %4854 = vmatpush1.msra.mxu0 0.0
      %4855 = vmatprep.subr.mxu0 0.0
      %4856 = vmatpush1.msra.mxu0 0.0
      %4857 = vmatprep.subr.mxu0 0.0
      %4858 = vmatpush1.msra.mxu0 0.0
      %4859 = vmatprep.subr.mxu0 %v4832
      %4860 = vmatpush1.msra.mxu0 %v4831
      %4861 = vmatprep.subr.mxu0 %v4828
      %4862 = vmatpush1.msra.mxu0 %v4827
      %4863 = vmatprep.subr.mxu0 %v4824
      %4864 = vmatpush1.msra.mxu0 %v4823
      %4865 = vmatprep.subr.mxu0 %v4820
      %4866 = vmatpush1.msra.mxu0 %v4819
      %4867 = vmatprep.subr.mxu0 0.0
      %4868 = vmatpush2.msra.mxu0 0.0
      %4869 = vmatprep.subr.mxu0 0.0
      %4870 = vmatpush2.msra.mxu0 0.0
      %4871 = vmatprep.subr.mxu0 0.0
      %4872 = vmatpush2.msra.mxu0 0.0
      %4873 = vmatprep.subr.mxu0 0.0
      %4874 = vmatpush2.msra.mxu0 0.0
      %4875 = vmatprep.subr.mxu0 0.0
      %4876 = vmatpush2.msra.mxu0 0.0
      %4877 = vmatprep.subr.mxu0 0.0
      %4878 = vmatpush2.msra.mxu0 0.0
      %4879 = vmatprep.subr.mxu0 0.0
      %4880 = vmatpush2.msra.mxu0 0.0
      %4881 = vmatprep.subr.mxu0 0.0
      %4882 = vmatpush2.msra.mxu0 0.0
      %4883 = vmatprep.subr.mxu0 0.0
      %4884 = vmatpush2.msra.mxu0 0.0
      %4885 = vmatprep.subr.mxu0 0.0
      %4886 = vmatpush2.msra.mxu0 0.0
      %4887 = vmatprep.subr.mxu0 0.0
      %4888 = vmatpush2.msra.mxu0 0.0
      %4889 = vmatprep.subr.mxu0 0.0
      %4890 = vmatpush2.msra.mxu0 0.0
      %4891 = vmatprep.subr.mxu0 0.0
      %4892 = vmatpush2.msra.mxu0 0.0
      %4893 = vmatprep.subr.mxu0 0.0
      %4894 = vmatpush2.msra.mxu0 0.0
      %4895 = vmatprep.subr.mxu0 0.0
      %4896 = vmatpush2.msra.mxu0 0.0
      %4897 = vmatprep.subr.mxu0 0.0
      %4898 = vmatpush2.msra.mxu0 0.0
      %4899 = vmatprep.mubr.f32.mxu0 0.0
      %4900 = vmatmul.mubr.f32.gmra.mxu0 %v927
      %v4901 = vpop.f32.mrf.mxu0
      %v4902 = vadd.f32 %v888, %v4901
      %v4903 = vpop.f32.mrf.mxu0
      %v4904 = vadd.f32 %v888, %v4903
      %4905 = vmatprep.mubr.f32.mxu0 0.0
      %4906 = vmatmul.mubr.f32.gmra.mxu0 %v930
      %v4907 = vpop.f32.mrf.mxu0
      %v4908 = vadd.f32 %v893, %v4907
      %v4909 = vpop.f32.mrf.mxu0
      %v4910 = vadd.f32 %v893, %v4909
      %4911 = vmatprep.mubr.f32.mxu0 0.0
      %4912 = vmatmul.mubr.f32.gmra.mxu0 %v933
      %v4913 = vpop.f32.mrf.mxu0
      %v4914 = vadd.f32 %v898, %v4913
      %v4915 = vpop.f32.mrf.mxu0
      %v4916 = vadd.f32 %v898, %v4915
      %4917 = vmatprep.mubr.f32.mxu0 0.0
      %4918 = vmatmul.mubr.f32.gmra.mxu0 %v936
      %v4919 = vpop.f32.mrf.mxu0
      %v4920 = vadd.f32 %v903, %v4919
      %v4921 = vpop.f32.mrf.mxu0
      %v4922 = vadd.f32 %v903, %v4921
      %4923 = vmatprep.mubr.f32.mxu0 0.0
      %4924 = vmatmul.mubr.f32.gmra.mxu0 %v939
      %v4925 = vpop.f32.mrf.mxu0
      %v4926 = vadd.f32 %v908, %v4925
      %v4927 = vpop.f32.mrf.mxu0
      %v4928 = vadd.f32 %v908, %v4927
      %4929 = vmatprep.mubr.f32.mxu0 0.0
      %4930 = vmatmul.mubr.f32.gmra.mxu0 %v942
      %v4931 = vpop.f32.mrf.mxu0
      %v4932 = vadd.f32 %v913, %v4931
      %v4933 = vpop.f32.mrf.mxu0
      %v4934 = vadd.f32 %v913, %v4933
      %4935 = vmatprep.mubr.f32.mxu0 0.0
      %4936 = vmatmul.mubr.f32.gmra.mxu0 %v945
      %v4937 = vpop.f32.mrf.mxu0
      %v4938 = vadd.f32 %v918, %v4937
      %v4939 = vpop.f32.mrf.mxu0
      %v4940 = vadd.f32 %v918, %v4939
      %4941 = vmatprep.mubr.f32.mxu0 0.0
      %4942 = vmatmul.mubr.f32.gmra.mxu0 %v948
      %v4943 = vpop.f32.mrf.mxu0
      %v4944 = vadd.f32 %v923, %v4943
      %v4945 = vpop.f32.mrf.mxu0
      %v4946 = vadd.f32 %v923, %v4945
      %4947 = vdwg.mxu0
      %4948 = vmatprep.subr.mxu0 0.0
      %4949 = vmatpush1.msra.mxu0 0.0
      %4950 = vmatprep.subr.mxu0 0.0
      %4951 = vmatpush1.msra.mxu0 0.0
      %4952 = vmatprep.subr.mxu0 0.0
      %4953 = vmatpush1.msra.mxu0 0.0
      %4954 = vmatprep.subr.mxu0 0.0
      %4955 = vmatpush1.msra.mxu0 0.0
      %4956 = vmatprep.subr.mxu0 0.0
      %4957 = vmatpush1.msra.mxu0 0.0
      %4958 = vmatprep.subr.mxu0 0.0
      %4959 = vmatpush1.msra.mxu0 0.0
      %4960 = vmatprep.subr.mxu0 0.0
      %4961 = vmatpush1.msra.mxu0 0.0
      %4962 = vmatprep.subr.mxu0 0.0
      %4963 = vmatpush1.msra.mxu0 0.0
      %4964 = vmatprep.subr.mxu0 0.0
      %4965 = vmatpush1.msra.mxu0 0.0
      %4966 = vmatprep.subr.mxu0 0.0
      %4967 = vmatpush1.msra.mxu0 0.0
      %4968 = vmatprep.subr.mxu0 0.0
      %4969 = vmatpush1.msra.mxu0 0.0
      %4970 = vmatprep.subr.mxu0 0.0
      %4971 = vmatpush1.msra.mxu0 0.0
      %4972 = vmatprep.subr.mxu0 %v4834
      %4973 = vmatpush1.msra.mxu0 %v4833
      %4974 = vmatprep.subr.mxu0 %v4830
      %4975 = vmatpush1.msra.mxu0 %v4829
      %4976 = vmatprep.subr.mxu0 %v4826
      %4977 = vmatpush1.msra.mxu0 %v4825
      %4978 = vmatprep.subr.mxu0 %v4822
      %4979 = vmatpush1.msra.mxu0 %v4821
      %4980 = vmatprep.subr.mxu0 0.0
      %4981 = vmatpush2.msra.mxu0 0.0
      %4982 = vmatprep.subr.mxu0 0.0
      %4983 = vmatpush2.msra.mxu0 0.0
      %4984 = vmatprep.subr.mxu0 0.0
      %4985 = vmatpush2.msra.mxu0 0.0
      %4986 = vmatprep.subr.mxu0 0.0
      %4987 = vmatpush2.msra.mxu0 0.0
      %4988 = vmatprep.subr.mxu0 0.0
      %4989 = vmatpush2.msra.mxu0 0.0
      %4990 = vmatprep.subr.mxu0 0.0
      %4991 = vmatpush2.msra.mxu0 0.0
      %4992 = vmatprep.subr.mxu0 0.0
      %4993 = vmatpush2.msra.mxu0 0.0
      %4994 = vmatprep.subr.mxu0 0.0
      %4995 = vmatpush2.msra.mxu0 0.0
      %4996 = vmatprep.subr.mxu0 0.0
      %4997 = vmatpush2.msra.mxu0 0.0
      %4998 = vmatprep.subr.mxu0 0.0
      %4999 = vmatpush2.msra.mxu0 0.0
      %5000 = vmatprep.subr.mxu0 0.0
      %5001 = vmatpush2.msra.mxu0 0.0
      %5002 = vmatprep.subr.mxu0 0.0
      %5003 = vmatpush2.msra.mxu0 0.0
      %5004 = vmatprep.subr.mxu0 0.0
      %5005 = vmatpush2.msra.mxu0 0.0
      %5006 = vmatprep.subr.mxu0 0.0
      %5007 = vmatpush2.msra.mxu0 0.0
      %5008 = vmatprep.subr.mxu0 0.0
      %5009 = vmatpush2.msra.mxu0 0.0
      %5010 = vmatprep.subr.mxu0 0.0
      %5011 = vmatpush2.msra.mxu0 0.0
      %5012 = vmatprep.mubr.f32.mxu0 0.0
      %5013 = vmatmul.mubr.f32.gmra.mxu0 %v927
      %v5014 = vpop.f32.mrf.mxu0
      %v5015 = vadd.f32 %v888, %v5014
      %v5016 = vpop.f32.mrf.mxu0
      %v5017 = vadd.f32 %v888, %v5016
      %5018 = vmatprep.mubr.f32.mxu0 0.0
      %5019 = vmatmul.mubr.f32.gmra.mxu0 %v930
      %v5020 = vpop.f32.mrf.mxu0
      %v5021 = vadd.f32 %v893, %v5020
      %v5022 = vpop.f32.mrf.mxu0
      %v5023 = vadd.f32 %v893, %v5022
      %5024 = vmatprep.mubr.f32.mxu0 0.0
      %5025 = vmatmul.mubr.f32.gmra.mxu0 %v933
      %v5026 = vpop.f32.mrf.mxu0
      %v5027 = vadd.f32 %v898, %v5026
      %v5028 = vpop.f32.mrf.mxu0
      %v5029 = vadd.f32 %v898, %v5028
      %5030 = vmatprep.mubr.f32.mxu0 0.0
      %5031 = vmatmul.mubr.f32.gmra.mxu0 %v936
      %v5032 = vpop.f32.mrf.mxu0
      %v5033 = vadd.f32 %v903, %v5032
      %v5034 = vpop.f32.mrf.mxu0
      %v5035 = vadd.f32 %v903, %v5034
      %5036 = vmatprep.mubr.f32.mxu0 0.0
      %5037 = vmatmul.mubr.f32.gmra.mxu0 %v939
      %v5038 = vpop.f32.mrf.mxu0
      %v5039 = vadd.f32 %v908, %v5038
      %v5040 = vpop.f32.mrf.mxu0
      %v5041 = vadd.f32 %v908, %v5040
      %5042 = vmatprep.mubr.f32.mxu0 0.0
      %5043 = vmatmul.mubr.f32.gmra.mxu0 %v942
      %v5044 = vpop.f32.mrf.mxu0
      %v5045 = vadd.f32 %v913, %v5044
      %v5046 = vpop.f32.mrf.mxu0
      %v5047 = vadd.f32 %v913, %v5046
      %5048 = vmatprep.mubr.f32.mxu0 0.0
      %5049 = vmatmul.mubr.f32.gmra.mxu0 %v945
      %v5050 = vpop.f32.mrf.mxu0
      %v5051 = vadd.f32 %v918, %v5050
      %v5052 = vpop.f32.mrf.mxu0
      %v5053 = vadd.f32 %v918, %v5052
      %5054 = vmatprep.mubr.f32.mxu0 0.0
      %5055 = vmatmul.mubr.f32.gmra.mxu0 %v948
      %v5056 = vpop.f32.mrf.mxu0
      %v5057 = vadd.f32 %v923, %v5056
      %v5058 = vpop.f32.mrf.mxu0
      %v5059 = vadd.f32 %v923, %v5058
      %5060 = vdwg.mxu0
      %v5061 = vmul.f32 %v4902, 0.2
      %v5062 = vmul.f32 %v4904, 0.2
      %v5063 = vmul.f32 %v5015, 0.2
      %v5064 = vmul.f32 %v5017, 0.2
      %v5065 = vmul.f32 %v4908, 0.2
      %v5066 = vmul.f32 %v4910, 0.2
      %v5067 = vmul.f32 %v5021, 0.2
      %v5068 = vmul.f32 %v5023, 0.2
      %v5069 = vmul.f32 %v4914, 0.2
      %v5070 = vmul.f32 %v4916, 0.2
      %v5071 = vmul.f32 %v5027, 0.2
      %v5072 = vmul.f32 %v5029, 0.2
      %v5073 = vmul.f32 %v4920, 0.2
      %v5074 = vmul.f32 %v4922, 0.2
      %v5075 = vmul.f32 %v5033, 0.2
      %v5076 = vmul.f32 %v5035, 0.2
      %v5077 = vmul.f32 %v4926, 0.2
      %v5078 = vmul.f32 %v4928, 0.2
      %v5079 = vmul.f32 %v5039, 0.2
      %v5080 = vmul.f32 %v5041, 0.2
      %v5081 = vmul.f32 %v4932, 0.2
      %v5082 = vmul.f32 %v4934, 0.2
      %v5083 = vmul.f32 %v5045, 0.2
      %v5084 = vmul.f32 %v5047, 0.2
      %v5085 = vmul.f32 %v4938, 0.2
      %v5086 = vmul.f32 %v4940, 0.2
      %v5087 = vmul.f32 %v5051, 0.2
      %v5088 = vmul.f32 %v5053, 0.2
      %v5089 = vmul.f32 %v4944, 0.2
      %v5090 = vmul.f32 %v4946, 0.2
      %v5091 = vmul.f32 %v5057, 0.2
      %v5092 = vmul.f32 %v5059, 0.2
      %v5093 = vmax.f32 %v4902, %v5061
      %v5094 = vmax.f32 %v4904, %v5062
      %v5095 = vmax.f32 %v5015, %v5063
      %v5096 = vmax.f32 %v5017, %v5064
      %v5097 = vmax.f32 %v4908, %v5065
      %v5098 = vmax.f32 %v4910, %v5066
      %v5099 = vmax.f32 %v5021, %v5067
      %v5100 = vmax.f32 %v5023, %v5068
      %v5101 = vmax.f32 %v4914, %v5069
      %v5102 = vmax.f32 %v4916, %v5070
      %v5103 = vmax.f32 %v5027, %v5071
      %v5104 = vmax.f32 %v5029, %v5072
      %v5105 = vmax.f32 %v4920, %v5073
      %v5106 = vmax.f32 %v4922, %v5074
      %v5107 = vmax.f32 %v5033, %v5075
      %v5108 = vmax.f32 %v5035, %v5076
      %v5109 = vmax.f32 %v4926, %v5077
      %v5110 = vmax.f32 %v4928, %v5078
      %v5111 = vmax.f32 %v5039, %v5079
      %v5112 = vmax.f32 %v5041, %v5080
      %v5113 = vmax.f32 %v4932, %v5081
      %v5114 = vmax.f32 %v4934, %v5082
      %v5115 = vmax.f32 %v5045, %v5083
      %v5116 = vmax.f32 %v5047, %v5084
      %v5117 = vmax.f32 %v4938, %v5085
      %v5118 = vmax.f32 %v4940, %v5086
      %v5119 = vmax.f32 %v5051, %v5087
      %v5120 = vmax.f32 %v5053, %v5088
      %v5121 = vmax.f32 %v4944, %v5089
      %v5122 = vmax.f32 %v4946, %v5090
      %v5123 = vmax.f32 %v5057, %v5091
      %v5124 = vmax.f32 %v5059, %v5092
      %v5125 = vmax.f32 %v5093, %v5094
      %5126 = vmax.xlane.f32.xlu0 %v5125
      %v5127 = vpop.xlane.xlu0 %5126
      %v5128 = vmax.f32 %v5097, %v5098
      %5129 = vmax.xlane.f32.xlu0 %v5128
      %v5130 = vpop.xlane.xlu0 %5129
      %v5131 = vmax.f32 %v5101, %v5102
      %5132 = vmax.xlane.f32.xlu0 %v5131
      %v5133 = vpop.xlane.xlu0 %5132
      %v5134 = vmax.f32 %v5105, %v5106
      %5135 = vmax.xlane.f32.xlu0 %v5134
      %v5136 = vpop.xlane.xlu0 %5135
      %v5137 = vmax.f32 %v5109, %v5110
      %5138 = vmax.xlane.f32.xlu0 %v5137
      %v5139 = vpop.xlane.xlu0 %5138
      %v5140 = vmax.f32 %v5113, %v5114
      %5141 = vmax.xlane.f32.xlu0 %v5140
      %v5142 = vpop.xlane.xlu0 %5141
      %v5143 = vmax.f32 %v5117, %v5118
      %5144 = vmax.xlane.f32.xlu0 %v5143
      %v5145 = vpop.xlane.xlu0 %5144
      %v5146 = vmax.f32 %v5121, %v5122
      %5147 = vmax.xlane.f32.xlu0 %v5146
      %v5148 = vpop.xlane.xlu0 %5147
      %v5149 = vmax.f32 %v5095, %v5096
      %5150 = vmax.xlane.f32.xlu0 %v5149
      %v5151 = vpop.xlane.xlu0 %5150
      %v5152 = vmax.f32 %v5099, %v5100
      %5153 = vmax.xlane.f32.xlu0 %v5152
      %v5154 = vpop.xlane.xlu0 %5153
      %v5155 = vmax.f32 %v5103, %v5104
      %5156 = vmax.xlane.f32.xlu0 %v5155
      %v5157 = vpop.xlane.xlu0 %5156
      %v5158 = vmax.f32 %v5107, %v5108
      %5159 = vmax.xlane.f32.xlu0 %v5158
      %v5160 = vpop.xlane.xlu0 %5159
      %v5161 = vmax.f32 %v5111, %v5112
      %5162 = vmax.xlane.f32.xlu0 %v5161
      %v5163 = vpop.xlane.xlu0 %5162
      %v5164 = vmax.f32 %v5115, %v5116
      %5165 = vmax.xlane.f32.xlu0 %v5164
      %v5166 = vpop.xlane.xlu0 %5165
      %v5167 = vmax.f32 %v5119, %v5120
      %5168 = vmax.xlane.f32.xlu0 %v5167
      %v5169 = vpop.xlane.xlu0 %5168
      %v5170 = vmax.f32 %v5123, %v5124
      %5171 = vmax.xlane.f32.xlu0 %v5170
      %v5172 = vpop.xlane.xlu0 %5171
      %v5173 = vsel %vm1288, %v5127, %v5151
      %v5174 = vsel %vm1288, %v5130, %v5154
      %v5175 = vsel %vm1288, %v5133, %v5157
      %v5176 = vsel %vm1288, %v5136, %v5160
      %v5177 = vsel %vm1288, %v5139, %v5163
      %v5178 = vsel %vm1288, %v5142, %v5166
      %v5179 = vsel %vm1288, %v5145, %v5169
      %v5180 = vsel %vm1288, %v5148, %v5172
      %5181 = vmatprep.subr.mxu0 0.0
      %5182 = vmatpush1.msra.mxu0 0.0
      %5183 = vmatprep.subr.mxu0 0.0
      %5184 = vmatpush1.msra.mxu0 0.0
      %5185 = vmatprep.subr.mxu0 0.0
      %5186 = vmatpush1.msra.mxu0 0.0
      %5187 = vmatprep.subr.mxu0 0.0
      %5188 = vmatpush1.msra.mxu0 0.0
      %5189 = vmatprep.subr.mxu0 0.0
      %5190 = vmatpush1.msra.mxu0 0.0
      %5191 = vmatprep.subr.mxu0 0.0
      %5192 = vmatpush1.msra.mxu0 0.0
      %5193 = vmatprep.subr.mxu0 0.0
      %5194 = vmatpush1.msra.mxu0 0.0
      %5195 = vmatprep.subr.mxu0 0.0
      %5196 = vmatpush1.msra.mxu0 0.0
      %5197 = vmatprep.subr.mxu0 0.0
      %5198 = vmatpush1.msra.mxu0 %v5180
      %5199 = vmatprep.subr.mxu0 0.0
      %5200 = vmatpush1.msra.mxu0 %v5179
      %5201 = vmatprep.subr.mxu0 0.0
      %5202 = vmatpush1.msra.mxu0 %v5178
      %5203 = vmatprep.subr.mxu0 0.0
      %5204 = vmatpush1.msra.mxu0 %v5177
      %5205 = vmatprep.subr.mxu0 0.0
      %5206 = vmatpush1.msra.mxu0 %v5176
      %5207 = vmatprep.subr.mxu0 0.0
      %5208 = vmatpush1.msra.mxu0 %v5175
      %5209 = vmatprep.subr.mxu0 0.0
      %5210 = vmatpush1.msra.mxu0 %v5174
      %5211 = vmatprep.subr.mxu0 0.0
      %5212 = vmatpush1.msra.mxu0 %v5173
      %5213 = vmatprep.subr.mxu0 0.0
      %5214 = vmatpush2.msra.mxu0 0.0
      %5215 = vmatprep.subr.mxu0 0.0
      %5216 = vmatpush2.msra.mxu0 0.0
      %5217 = vmatprep.subr.mxu0 0.0
      %5218 = vmatpush2.msra.mxu0 0.0
      %5219 = vmatprep.subr.mxu0 0.0
      %5220 = vmatpush2.msra.mxu0 0.0
      %5221 = vmatprep.subr.mxu0 0.0
      %5222 = vmatpush2.msra.mxu0 0.0
      %5223 = vmatprep.subr.mxu0 0.0
      %5224 = vmatpush2.msra.mxu0 0.0
      %5225 = vmatprep.subr.mxu0 0.0
      %5226 = vmatpush2.msra.mxu0 0.0
      %5227 = vmatprep.subr.mxu0 0.0
      %5228 = vmatpush2.msra.mxu0 0.0
      %5229 = vmatprep.subr.mxu0 0.0
      %5230 = vmatpush2.msra.mxu0 0.0
      %5231 = vmatprep.subr.mxu0 0.0
      %5232 = vmatpush2.msra.mxu0 0.0
      %5233 = vmatprep.subr.mxu0 0.0
      %5234 = vmatpush2.msra.mxu0 0.0
      %5235 = vmatprep.subr.mxu0 0.0
      %5236 = vmatpush2.msra.mxu0 0.0
      %5237 = vmatprep.subr.mxu0 0.0
      %5238 = vmatpush2.msra.mxu0 0.0
      %5239 = vmatprep.subr.mxu0 0.0
      %5240 = vmatpush2.msra.mxu0 0.0
      %5241 = vmatprep.subr.mxu0 0.0
      %5242 = vmatpush2.msra.mxu0 0.0
      %5243 = vmatprep.subr.mxu0 0.0
      %5244 = vmatpush2.msra.mxu0 0.0
      %5245 = vmatprep.mubr.f32.mxu0 0.0
      %5246 = vmatmul.mubr.f32.gmra.mxu0 %v1319
      %v5247 = vpop.f32.mrf.mxu0
      %v5248 = vadd.f32 %v1300, %v5247
      %v5249 = vpop.f32.mrf.mxu0
      %5250 = vmatprep.mubr.f32.mxu0 0.0
      %5251 = vmatmul.mubr.f32.gmra.mxu0 %v1322
      %v5252 = vpop.f32.mrf.mxu0
      %v5253 = vadd.f32 %v1305, %v5252
      %v5254 = vpop.f32.mrf.mxu0
      %5255 = vmatprep.mubr.f32.mxu0 0.0
      %5256 = vmatmul.mubr.f32.gmra.mxu0 %v1325
      %v5257 = vpop.f32.mrf.mxu0
      %v5258 = vadd.f32 %v1310, %v5257
      %v5259 = vpop.f32.mrf.mxu0
      %5260 = vmatprep.mubr.f32.mxu0 0.0
      %5261 = vmatmul.mubr.f32.gmra.mxu0 %v1328
      %v5262 = vpop.f32.mrf.mxu0
      %v5263 = vadd.f32 %v1315, %v5262
      %v5264 = vpop.f32.mrf.mxu0
      %5265 = vdwg.mxu0
      %v5266 = vmul.f32 %v5248, 0.2
      %v5267 = vmul.f32 %v5253, 0.2
      %v5268 = vmul.f32 %v5258, 0.2
      %v5269 = vmul.f32 %v5263, 0.2
      %v5270 = vmax.f32 %v5248, %v5266
      %v5271 = vmax.f32 %v5253, %v5267
      %v5272 = vmax.f32 %v5258, %v5268
      %v5273 = vmax.f32 %v5263, %v5269
      %5274 = vmatprep.subr.mxu0 0.0
      %5275 = vmatpush1.msra.mxu0 0.0
      %5276 = vmatprep.subr.mxu0 0.0
      %5277 = vmatpush1.msra.mxu0 0.0
      %5278 = vmatprep.subr.mxu0 0.0
      %5279 = vmatpush1.msra.mxu0 0.0
      %5280 = vmatprep.subr.mxu0 0.0
      %5281 = vmatpush1.msra.mxu0 0.0
      %5282 = vmatprep.subr.mxu0 0.0
      %5283 = vmatpush1.msra.mxu0 0.0
      %5284 = vmatprep.subr.mxu0 0.0
      %5285 = vmatpush1.msra.mxu0 0.0
      %5286 = vmatprep.subr.mxu0 0.0
      %5287 = vmatpush1.msra.mxu0 0.0
      %5288 = vmatprep.subr.mxu0 0.0
      %5289 = vmatpush1.msra.mxu0 0.0
      %5290 = vmatprep.subr.mxu0 0.0
      %5291 = vmatpush1.msra.mxu0 0.0
      %5292 = vmatprep.subr.mxu0 0.0
      %5293 = vmatpush1.msra.mxu0 0.0
      %5294 = vmatprep.subr.mxu0 0.0
      %5295 = vmatpush1.msra.mxu0 0.0
      %5296 = vmatprep.subr.mxu0 0.0
      %5297 = vmatpush1.msra.mxu0 0.0
      %5298 = vmatprep.subr.mxu0 0.0
      %5299 = vmatpush1.msra.mxu0 %v5273
      %5300 = vmatprep.subr.mxu0 0.0
      %5301 = vmatpush1.msra.mxu0 %v5272
      %5302 = vmatprep.subr.mxu0 0.0
      %5303 = vmatpush1.msra.mxu0 %v5271
      %5304 = vmatprep.subr.mxu0 0.0
      %5305 = vmatpush1.msra.mxu0 %v5270
      %5306 = vmatprep.subr.mxu0 0.0
      %5307 = vmatpush2.msra.mxu0 0.0
      %5308 = vmatprep.subr.mxu0 0.0
      %5309 = vmatpush2.msra.mxu0 0.0
      %5310 = vmatprep.subr.mxu0 0.0
      %5311 = vmatpush2.msra.mxu0 0.0
      %5312 = vmatprep.subr.mxu0 0.0
      %5313 = vmatpush2.msra.mxu0 0.0
      %5314 = vmatprep.subr.mxu0 0.0
      %5315 = vmatpush2.msra.mxu0 0.0
      %5316 = vmatprep.subr.mxu0 0.0
      %5317 = vmatpush2.msra.mxu0 0.0
      %5318 = vmatprep.subr.mxu0 0.0
      %5319 = vmatpush2.msra.mxu0 0.0
      %5320 = vmatprep.subr.mxu0 0.0
      %5321 = vmatpush2.msra.mxu0 0.0
      %5322 = vmatprep.subr.mxu0 0.0
      %5323 = vmatpush2.msra.mxu0 0.0
      %5324 = vmatprep.subr.mxu0 0.0
      %5325 = vmatpush2.msra.mxu0 0.0
      %5326 = vmatprep.subr.mxu0 0.0
      %5327 = vmatpush2.msra.mxu0 0.0
      %5328 = vmatprep.subr.mxu0 0.0
      %5329 = vmatpush2.msra.mxu0 0.0
      %5330 = vmatprep.subr.mxu0 0.0
      %5331 = vmatpush2.msra.mxu0 0.0
      %5332 = vmatprep.subr.mxu0 0.0
      %5333 = vmatpush2.msra.mxu0 0.0
      %5334 = vmatprep.subr.mxu0 0.0
      %5335 = vmatpush2.msra.mxu0 0.0
      %5336 = vmatprep.subr.mxu0 0.0
      %5337 = vmatpush2.msra.mxu0 0.0
      %5338 = vmatprep.mubr.f32.mxu0 0.0
      %5339 = vmatmul.mubr.f32.gmra.mxu0 %v1434
      %v5340 = vpop.f32.mrf.mxu0
      %v5341 = vadd.f32 %v1426, %v5340
      %v5342 = vpop.f32.mrf.mxu0
      %5343 = vmatprep.mubr.f32.mxu0 0.0
      %5344 = vmatmul.mubr.f32.gmra.mxu0 %v1437
      %v5345 = vpop.f32.mrf.mxu0
      %v5346 = vadd.f32 %v1431, %v5345
      %v5347 = vpop.f32.mrf.mxu0
      %5348 = vdwg.mxu0
      %v5349 = vtanh.pop %v5341
      %v5350 = vtanh.pop %v5346
      %5353 = vrot.lane.b32.xlu0 %v5349, 1
      %v5354 = vpop.permute.xlu0 %5353
      %5355 = vrot.lane.b32.xlu0 %v5350, 1
      %v5356 = vpop.permute.xlu0 %5355
      %v5359 = vsub.f32 %v5349, %v5354
      %v5360 = vsub.f32 %v5350, %v5356
      %5361 = vmatprep.subr.mxu0 0.0
      %5362 = vmatpush1.msra.mxu0 0.0
      %5363 = vmatprep.subr.mxu0 0.0
      %5364 = vmatpush1.msra.mxu0 0.0
      %5365 = vmatprep.subr.mxu0 0.0
      %5366 = vmatpush1.msra.mxu0 0.0
      %5367 = vmatprep.subr.mxu0 0.0
      %5368 = vmatpush1.msra.mxu0 0.0
      %5369 = vmatprep.subr.mxu0 0.0
      %5370 = vmatpush1.msra.mxu0 0.0
      %5371 = vmatprep.subr.mxu0 0.0
      %5372 = vmatpush1.msra.mxu0 0.0
      %5373 = vmatprep.subr.mxu0 0.0
      %5374 = vmatpush1.msra.mxu0 0.0
      %5375 = vmatprep.subr.mxu0 0.0
      %5376 = vmatpush1.msra.mxu0 0.0
      %5377 = vmatprep.subr.mxu0 0.0
      %5378 = vmatpush1.msra.mxu0 0.0
      %5379 = vmatprep.subr.mxu0 0.0
      %5380 = vmatpush1.msra.mxu0 0.0
      %5381 = vmatprep.subr.mxu0 0.0
      %5382 = vmatpush1.msra.mxu0 0.0
      %5383 = vmatprep.subr.mxu0 0.0
      %5384 = vmatpush1.msra.mxu0 0.0
      %5385 = vmatprep.subr.mxu0 0.0
      %5386 = vmatpush1.msra.mxu0 0.0
      %5387 = vmatprep.subr.mxu0 0.0
      %5388 = vmatpush1.msra.mxu0 0.0
      %5389 = vmatprep.subr.mxu0 0.0
      %5390 = vmatpush1.msra.mxu0 0.0
      %5391 = vmatprep.subr.mxu0 %v4619
      %5392 = vmatpush1.msra.mxu0 %v4617
      %5393 = vmatprep.subr.mxu0 0.0
      %5394 = vmatpush2.msra.mxu0 0.0
      %5395 = vmatprep.subr.mxu0 0.0
      %5396 = vmatpush2.msra.mxu0 0.0
      %5397 = vmatprep.subr.mxu0 0.0
      %5398 = vmatpush2.msra.mxu0 0.0
      %5399 = vmatprep.subr.mxu0 0.0
      %5400 = vmatpush2.msra.mxu0 0.0
      %5401 = vmatprep.subr.mxu0 0.0
      %5402 = vmatpush2.msra.mxu0 0.0
      %5403 = vmatprep.subr.mxu0 0.0
      %5404 = vmatpush2.msra.mxu0 0.0
      %5405 = vmatprep.subr.mxu0 0.0
      %5406 = vmatpush2.msra.mxu0 0.0
      %5407 = vmatprep.subr.mxu0 0.0
      %5408 = vmatpush2.msra.mxu0 0.0
      %5409 = vmatprep.subr.mxu0 0.0
      %5410 = vmatpush2.msra.mxu0 0.0
      %5411 = vmatprep.subr.mxu0 0.0
      %5412 = vmatpush2.msra.mxu0 0.0
      %5413 = vmatprep.subr.mxu0 0.0
      %5414 = vmatpush2.msra.mxu0 0.0
      %5415 = vmatprep.subr.mxu0 0.0
      %5416 = vmatpush2.msra.mxu0 0.0
      %5417 = vmatprep.subr.mxu0 0.0
      %5418 = vmatpush2.msra.mxu0 0.0
      %5419 = vmatprep.subr.mxu0 0.0
      %5420 = vmatpush2.msra.mxu0 0.0
      %5421 = vmatprep.subr.mxu0 0.0
      %5422 = vmatpush2.msra.mxu0 0.0
      %5423 = vmatprep.subr.mxu0 0.0
      %5424 = vmatpush2.msra.mxu0 0.0
      %5425 = vmatprep.mubr.f32.mxu0 0.0
      %5426 = vmatmul.mubr.f32.gmra.mxu0 %v1547
      %v5427 = vpop.f32.mrf.mxu0
      %v5428 = vadd.f32 %v1529, %v5427
      %v5429 = vpop.f32.mrf.mxu0
      %v5430 = vadd.f32 %v1529, %v5429
      %5431 = vmatprep.mubr.f32.mxu0 0.0
      %5432 = vmatmul.mubr.f32.gmra.mxu0 %v1550
      %v5433 = vpop.f32.mrf.mxu0
      %v5434 = vadd.f32 %v1534, %v5433
      %v5435 = vpop.f32.mrf.mxu0
      %v5436 = vadd.f32 %v1534, %v5435
      %5437 = vmatprep.mubr.f32.mxu0 0.0
      %5438 = vmatmul.mubr.f32.gmra.mxu0 %v1553
      %v5439 = vpop.f32.mrf.mxu0
      %v5440 = vadd.f32 %v1539, %v5439
      %v5441 = vpop.f32.mrf.mxu0
      %v5442 = vadd.f32 %v1539, %v5441
      %5443 = vmatprep.mubr.f32.mxu0 0.0
      %5444 = vmatmul.mubr.f32.gmra.mxu0 %v1556
      %v5445 = vpop.f32.mrf.mxu0
      %v5446 = vadd.f32 %v1544, %v5445
      %v5447 = vpop.f32.mrf.mxu0
      %v5448 = vadd.f32 %v1544, %v5447
      %5449 = vdwg.mxu0
      %v5450 = vmul.f32 %v5428, 0.2
      %v5451 = vmul.f32 %v5430, 0.2
      %v5452 = vmul.f32 %v5434, 0.2
      %v5453 = vmul.f32 %v5436, 0.2
      %v5454 = vmul.f32 %v5440, 0.2
      %v5455 = vmul.f32 %v5442, 0.2
      %v5456 = vmul.f32 %v5446, 0.2
      %v5457 = vmul.f32 %v5448, 0.2
      %v5458 = vmax.f32 %v5428, %v5450
      %v5459 = vmax.f32 %v5430, %v5451
      %v5460 = vmax.f32 %v5434, %v5452
      %v5461 = vmax.f32 %v5436, %v5453
      %v5462 = vmax.f32 %v5440, %v5454
      %v5463 = vmax.f32 %v5442, %v5455
      %v5464 = vmax.f32 %v5446, %v5456
      %v5465 = vmax.f32 %v5448, %v5457
      %5466 = vmatprep.subr.mxu0 0.0
      %5467 = vmatpush1.msra.mxu0 0.0
      %5468 = vmatprep.subr.mxu0 0.0
      %5469 = vmatpush1.msra.mxu0 0.0
      %5470 = vmatprep.subr.mxu0 0.0
      %5471 = vmatpush1.msra.mxu0 0.0
      %5472 = vmatprep.subr.mxu0 0.0
      %5473 = vmatpush1.msra.mxu0 0.0
      %5474 = vmatprep.subr.mxu0 0.0
      %5475 = vmatpush1.msra.mxu0 0.0
      %5476 = vmatprep.subr.mxu0 0.0
      %5477 = vmatpush1.msra.mxu0 0.0
      %5478 = vmatprep.subr.mxu0 0.0
      %5479 = vmatpush1.msra.mxu0 0.0
      %5480 = vmatprep.subr.mxu0 0.0
      %5481 = vmatpush1.msra.mxu0 0.0
      %5482 = vmatprep.subr.mxu0 0.0
      %5483 = vmatpush1.msra.mxu0 0.0
      %5484 = vmatprep.subr.mxu0 0.0
      %5485 = vmatpush1.msra.mxu0 0.0
      %5486 = vmatprep.subr.mxu0 0.0
      %5487 = vmatpush1.msra.mxu0 0.0
      %5488 = vmatprep.subr.mxu0 0.0
      %5489 = vmatpush1.msra.mxu0 0.0
      %5490 = vmatprep.subr.mxu0 %v5465
      %5491 = vmatpush1.msra.mxu0 %v5464
      %5492 = vmatprep.subr.mxu0 %v5463
      %5493 = vmatpush1.msra.mxu0 %v5462
      %5494 = vmatprep.subr.mxu0 %v5461
      %5495 = vmatpush1.msra.mxu0 %v5460
      %5496 = vmatprep.subr.mxu0 %v5459
      %5497 = vmatpush1.msra.mxu0 %v5458
      %5498 = vmatprep.subr.mxu0 0.0
      %5499 = vmatpush2.msra.mxu0 0.0
      %5500 = vmatprep.subr.mxu0 0.0
      %5501 = vmatpush2.msra.mxu0 0.0
      %5502 = vmatprep.subr.mxu0 0.0
      %5503 = vmatpush2.msra.mxu0 0.0
      %5504 = vmatprep.subr.mxu0 0.0
      %5505 = vmatpush2.msra.mxu0 0.0
      %5506 = vmatprep.subr.mxu0 0.0
      %5507 = vmatpush2.msra.mxu0 0.0
      %5508 = vmatprep.subr.mxu0 0.0
      %5509 = vmatpush2.msra.mxu0 0.0
      %5510 = vmatprep.subr.mxu0 0.0
      %5511 = vmatpush2.msra.mxu0 0.0
      %5512 = vmatprep.subr.mxu0 0.0
      %5513 = vmatpush2.msra.mxu0 0.0
      %5514 = vmatprep.subr.mxu0 0.0
      %5515 = vmatpush2.msra.mxu0 0.0
      %5516 = vmatprep.subr.mxu0 0.0
      %5517 = vmatpush2.msra.mxu0 0.0
      %5518 = vmatprep.subr.mxu0 0.0
      %5519 = vmatpush2.msra.mxu0 0.0
      %5520 = vmatprep.subr.mxu0 0.0
      %5521 = vmatpush2.msra.mxu0 0.0
      %5522 = vmatprep.subr.mxu0 0.0
      %5523 = vmatpush2.msra.mxu0 0.0
      %5524 = vmatprep.subr.mxu0 0.0
      %5525 = vmatpush2.msra.mxu0 0.0
      %5526 = vmatprep.subr.mxu0 0.0
      %5527 = vmatpush2.msra.mxu0 0.0
      %5528 = vmatprep.subr.mxu0 0.0
      %5529 = vmatpush2.msra.mxu0 0.0
      %5530 = vmatprep.mubr.f32.mxu0 0.0
      %5531 = vmatmul.mubr.f32.gmra.mxu0 %v1704
      %v5532 = vpop.f32.mrf.mxu0
      %v5533 = vadd.f32 %v1666, %v5532
      %v5534 = vpop.f32.mrf.mxu0
      %v5535 = vadd.f32 %v1666, %v5534
      %5536 = vmatprep.mubr.f32.mxu0 0.0
      %5537 = vmatmul.mubr.f32.gmra.mxu0 %v1707
      %v5538 = vpop.f32.mrf.mxu0
      %v5539 = vadd.f32 %v1671, %v5538
      %v5540 = vpop.f32.mrf.mxu0
      %v5541 = vadd.f32 %v1671, %v5540
      %5542 = vmatprep.mubr.f32.mxu0 0.0
      %5543 = vmatmul.mubr.f32.gmra.mxu0 %v1710
      %v5544 = vpop.f32.mrf.mxu0
      %v5545 = vadd.f32 %v1676, %v5544
      %v5546 = vpop.f32.mrf.mxu0
      %v5547 = vadd.f32 %v1676, %v5546
      %5548 = vmatprep.mubr.f32.mxu0 0.0
      %5549 = vmatmul.mubr.f32.gmra.mxu0 %v1713
      %v5550 = vpop.f32.mrf.mxu0
      %v5551 = vadd.f32 %v1681, %v5550
      %v5552 = vpop.f32.mrf.mxu0
      %v5553 = vadd.f32 %v1681, %v5552
      %5554 = vmatprep.mubr.f32.mxu0 0.0
      %5555 = vmatmul.mubr.f32.gmra.mxu0 %v1716
      %v5556 = vpop.f32.mrf.mxu0
      %v5557 = vadd.f32 %v1686, %v5556
      %v5558 = vpop.f32.mrf.mxu0
      %v5559 = vadd.f32 %v1686, %v5558
      %5560 = vmatprep.mubr.f32.mxu0 0.0
      %5561 = vmatmul.mubr.f32.gmra.mxu0 %v1719
      %v5562 = vpop.f32.mrf.mxu0
      %v5563 = vadd.f32 %v1691, %v5562
      %v5564 = vpop.f32.mrf.mxu0
      %v5565 = vadd.f32 %v1691, %v5564
      %5566 = vmatprep.mubr.f32.mxu0 0.0
      %5567 = vmatmul.mubr.f32.gmra.mxu0 %v1722
      %v5568 = vpop.f32.mrf.mxu0
      %v5569 = vadd.f32 %v1696, %v5568
      %v5570 = vpop.f32.mrf.mxu0
      %v5571 = vadd.f32 %v1696, %v5570
      %5572 = vmatprep.mubr.f32.mxu0 0.0
      %5573 = vmatmul.mubr.f32.gmra.mxu0 %v1725
      %v5574 = vpop.f32.mrf.mxu0
      %v5575 = vadd.f32 %v1701, %v5574
      %v5576 = vpop.f32.mrf.mxu0
      %v5577 = vadd.f32 %v1701, %v5576
      %5578 = vdwg.mxu0
      %v5579 = vmul.f32 %v5533, 0.2
      %v5580 = vmul.f32 %v5535, 0.2
      %v5581 = vmul.f32 %v5539, 0.2
      %v5582 = vmul.f32 %v5541, 0.2
      %v5583 = vmul.f32 %v5545, 0.2
      %v5584 = vmul.f32 %v5547, 0.2
      %v5585 = vmul.f32 %v5551, 0.2
      %v5586 = vmul.f32 %v5553, 0.2
      %v5587 = vmul.f32 %v5557, 0.2
      %v5588 = vmul.f32 %v5559, 0.2
      %v5589 = vmul.f32 %v5563, 0.2
      %v5590 = vmul.f32 %v5565, 0.2
      %v5591 = vmul.f32 %v5569, 0.2
      %v5592 = vmul.f32 %v5571, 0.2
      %v5593 = vmul.f32 %v5575, 0.2
      %v5594 = vmul.f32 %v5577, 0.2
      %v5595 = vmax.f32 %v5533, %v5579
      %v5596 = vmax.f32 %v5535, %v5580
      %v5597 = vmax.f32 %v5539, %v5581
      %v5598 = vmax.f32 %v5541, %v5582
      %v5599 = vmax.f32 %v5545, %v5583
      %v5600 = vmax.f32 %v5547, %v5584
      %v5601 = vmax.f32 %v5551, %v5585
      %v5602 = vmax.f32 %v5553, %v5586
      %v5603 = vmax.f32 %v5557, %v5587
      %v5604 = vmax.f32 %v5559, %v5588
      %v5605 = vmax.f32 %v5563, %v5589
      %v5606 = vmax.f32 %v5565, %v5590
      %v5607 = vmax.f32 %v5569, %v5591
      %v5608 = vmax.f32 %v5571, %v5592
      %v5609 = vmax.f32 %v5575, %v5593
      %v5610 = vmax.f32 %v5577, %v5594
      %5611 = vmatprep.subr.mxu0 0.0
      %5612 = vmatpush1.msra.mxu0 0.0
      %5613 = vmatprep.subr.mxu0 0.0
      %5614 = vmatpush1.msra.mxu0 0.0
      %5615 = vmatprep.subr.mxu0 0.0
      %5616 = vmatpush1.msra.mxu0 0.0
      %5617 = vmatprep.subr.mxu0 0.0
      %5618 = vmatpush1.msra.mxu0 0.0
      %5619 = vmatprep.subr.mxu0 0.0
      %5620 = vmatpush1.msra.mxu0 0.0
      %5621 = vmatprep.subr.mxu0 0.0
      %5622 = vmatpush1.msra.mxu0 0.0
      %5623 = vmatprep.subr.mxu0 0.0
      %5624 = vmatpush1.msra.mxu0 0.0
      %5625 = vmatprep.subr.mxu0 0.0
      %5626 = vmatpush1.msra.mxu0 0.0
      %5627 = vmatprep.subr.mxu0 %v5610
      %5628 = vmatpush1.msra.mxu0 %v5609
      %5629 = vmatprep.subr.mxu0 %v5608
      %5630 = vmatpush1.msra.mxu0 %v5607
      %5631 = vmatprep.subr.mxu0 %v5606
      %5632 = vmatpush1.msra.mxu0 %v5605
      %5633 = vmatprep.subr.mxu0 %v5604
      %5634 = vmatpush1.msra.mxu0 %v5603
      %5635 = vmatprep.subr.mxu0 %v5602
      %5636 = vmatpush1.msra.mxu0 %v5601
      %5637 = vmatprep.subr.mxu0 %v5600
      %5638 = vmatpush1.msra.mxu0 %v5599
      %5639 = vmatprep.subr.mxu0 %v5598
      %5640 = vmatpush1.msra.mxu0 %v5597
      %5641 = vmatprep.subr.mxu0 %v5596
      %5642 = vmatpush1.msra.mxu0 %v5595
      %5643 = vmatprep.subr.mxu0 0.0
      %5644 = vmatpush2.msra.mxu0 0.0
      %5645 = vmatprep.subr.mxu0 0.0
      %5646 = vmatpush2.msra.mxu0 0.0
      %5647 = vmatprep.subr.mxu0 0.0
      %5648 = vmatpush2.msra.mxu0 0.0
      %5649 = vmatprep.subr.mxu0 0.0
      %5650 = vmatpush2.msra.mxu0 0.0
      %5651 = vmatprep.subr.mxu0 0.0
      %5652 = vmatpush2.msra.mxu0 0.0
      %5653 = vmatprep.subr.mxu0 0.0
      %5654 = vmatpush2.msra.mxu0 0.0
      %5655 = vmatprep.subr.mxu0 0.0
      %5656 = vmatpush2.msra.mxu0 0.0
      %5657 = vmatprep.subr.mxu0 0.0
      %5658 = vmatpush2.msra.mxu0 0.0
      %5659 = vmatprep.subr.mxu0 0.0
      %5660 = vmatpush2.msra.mxu0 0.0
      %5661 = vmatprep.subr.mxu0 0.0
      %5662 = vmatpush2.msra.mxu0 0.0
      %5663 = vmatprep.subr.mxu0 0.0
      %5664 = vmatpush2.msra.mxu0 0.0
      %5665 = vmatprep.subr.mxu0 0.0
      %5666 = vmatpush2.msra.mxu0 0.0
      %5667 = vmatprep.subr.mxu0 0.0
      %5668 = vmatpush2.msra.mxu0 0.0
      %5669 = vmatprep.subr.mxu0 0.0
      %5670 = vmatpush2.msra.mxu0 0.0
      %5671 = vmatprep.subr.mxu0 0.0
      %5672 = vmatpush2.msra.mxu0 0.0
      %5673 = vmatprep.subr.mxu0 0.0
      %5674 = vmatpush2.msra.mxu0 0.0
      %5675 = vmatprep.mubr.f32.mxu0 0.0
      %5676 = vmatmul.mubr.f32.gmra.mxu0 %v1903
      %v5677 = vpop.f32.mrf.mxu0
      %v5678 = vadd.f32 %v1875, %v5677
      %v5679 = vpop.f32.mrf.mxu0
      %v5680 = vadd.f32 %v1875, %v5679
      %5681 = vmatprep.mubr.f32.mxu0 0.0
      %5682 = vmatmul.mubr.f32.gmra.mxu0 %v1906
      %v5683 = vpop.f32.mrf.mxu0
      %v5684 = vadd.f32 %v1880, %v5683
      %v5685 = vpop.f32.mrf.mxu0
      %v5686 = vadd.f32 %v1880, %v5685
      %5687 = vmatprep.mubr.f32.mxu0 0.0
      %5688 = vmatmul.mubr.f32.gmra.mxu0 %v1909
      %v5689 = vpop.f32.mrf.mxu0
      %v5690 = vadd.f32 %v1885, %v5689
      %v5691 = vpop.f32.mrf.mxu0
      %v5692 = vadd.f32 %v1885, %v5691
      %5693 = vmatprep.mubr.f32.mxu0 0.0
      %5694 = vmatmul.mubr.f32.gmra.mxu0 %v1912
      %v5695 = vpop.f32.mrf.mxu0
      %v5696 = vadd.f32 %v1890, %v5695
      %v5697 = vpop.f32.mrf.mxu0
      %v5698 = vadd.f32 %v1890, %v5697
      %5699 = vmatprep.mubr.f32.mxu0 0.0
      %5700 = vmatmul.mubr.f32.gmra.mxu0 %v1915
      %v5701 = vpop.f32.mrf.mxu0
      %v5702 = vadd.f32 %v1895, %v5701
      %v5703 = vpop.f32.mrf.mxu0
      %v5704 = vadd.f32 %v1895, %v5703
      %5705 = vmatprep.mubr.f32.mxu0 0.0
      %5706 = vmatmul.mubr.f32.gmra.mxu0 %v1918
      %v5707 = vpop.f32.mrf.mxu0
      %v5708 = vadd.f32 %v1900, %v5707
      %v5709 = vpop.f32.mrf.mxu0
      %v5710 = vadd.f32 %v1900, %v5709
      %5711 = vdwg.mxu0
      %v5712 = vmul.f32 %v5678, %v5678
      %v5713 = vmul.f32 %v5680, %v5680
      %v5714 = vmul.f32 %v5684, %v5684
      %v5715 = vmul.f32 %v5686, %v5686
      %v5716 = vmul.f32 %v5690, %v5690
      %v5717 = vmul.f32 %v5692, %v5692
      %v5718 = vmul.f32 %v5696, %v5696
      %v5719 = vmul.f32 %v5698, %v5698
      %v5720 = vmul.f32 %v5702, %v5702
      %v5721 = vmul.f32 %v5704, %v5704
      %v5722 = vmul.f32 %v5708, %v5708
      %v5723 = vmul.f32 %v5710, %v5710
      %v5724 = vadd.f32 %v5712, %v5713
      %5725 = vadd.xlane.f32.xlu0 %v5724
      %v5726 = vpop.xlane.xlu0 %5725
      %v5727 = vadd.f32 %v5714, %v5715
      %5728 = vadd.xlane.f32.xlu0 %v5727
      %v5729 = vpop.xlane.xlu0 %5728
      %v5730 = vadd.f32 %v5716, %v5717
      %5731 = vadd.xlane.f32.xlu0 %v5730
      %v5732 = vpop.xlane.xlu0 %5731
      %v5733 = vadd.f32 %v5718, %v5719
      %5734 = vadd.xlane.f32.xlu0 %v5733
      %v5735 = vpop.xlane.xlu0 %5734
      %v5736 = vadd.f32 %v5720, %v5721
      %5737 = vadd.xlane.f32.xlu0 %v5736
      %v5738 = vpop.xlane.xlu0 %5737
      %v5739 = vadd.f32 %v5722, %v5723
      %5740 = vadd.xlane.f32.xlu0 %v5739
      %v5741 = vpop.xlane.xlu0 %5740
      %v5742 = vadd.f32 %v5726, %v5732
      %v5743 = vadd.f32 %v5729, %v5735
      %v5744 = vadd.f32 %v5742, %v5738
      %v5745 = vadd.f32 %v5743, %v5741
      %v5746 = vrsqrt.pop %v5744
      %v5747 = vmul.f32 %v5744, %v5746
      %vm5748 = vcmp.eq.f32.partialorder %v5744, inf
      %v5749 = vsel %vm5748, %v5744, %v5747
      %vm5750 = vcmp.eq.f32.partialorder %v5744, 0.0
      %v5751 = vand.u32 %v5744, 2147483648
      %v5752 = vsel %vm5750, %v5751, %v5749
      %v5753 = vrsqrt.pop %v5745
      %v5754 = vmul.f32 %v5745, %v5753
      %vm5755 = vcmp.eq.f32.partialorder %v5745, inf
      %v5756 = vsel %vm5755, %v5745, %v5754
      %vm5757 = vcmp.eq.f32.partialorder %v5745, 0.0
      %v5758 = vand.u32 %v5745, 2147483648
      %v5759 = vsel %vm5757, %v5758, %v5756
      %v5760 = vrcp.pop %v5752
      %v5761 = vmul.f32 %v5359, %v5760
      %v5762 = vrcp.pop %v5759
      %v5763 = vmul.f32 %v5360, %v5762
      %5765 = vset.pattern.permute.xlu0 1
      %5766 = vperm.xlu0 %5765, %v5761
      %v5767 = vpop.permute.xlu0 %5766
      %5770 = vset.pattern.permute.xlu0 1
      %5771 = vperm.xlu0 %5770, %v5763
      %v5772 = vpop.permute.xlu0 %5771
      %v5774 = vmul.f32 %v5678, %v5767
      %v5775 = vmul.f32 %v5680, %v5767
      %v5776 = vmul.f32 %v5684, %v5772
      %v5777 = vmul.f32 %v5686, %v5772
      %v5778 = vadd.f32 %v5774, %v5776
      %v5779 = vrot.slane %v5778, 4
      %v5780 = vadd.f32 %v5778, %v5779
      %v5781 = vrot.slane %v5780, 2
      %v5782 = vadd.f32 %v5780, %v5781
      %v5783 = vrot.slane %v5782, 1
      %v5784 = vadd.f32 %v5782, %v5783
      %v5785 = vadd.f32 %v5775, %v5777
      %v5786 = vrot.slane %v5785, 4
      %v5787 = vadd.f32 %v5785, %v5786
      %v5788 = vrot.slane %v5787, 2
      %v5789 = vadd.f32 %v5787, %v5788
      %v5790 = vrot.slane %v5789, 1
      %v5791 = vadd.f32 %v5789, %v5790
      %v5792 = vmul.f32 %v5690, %v5767
      %v5793 = vmul.f32 %v5692, %v5767
      %v5794 = vmul.f32 %v5696, %v5772
      %v5795 = vmul.f32 %v5698, %v5772
      %v5796 = vadd.f32 %v5792, %v5794
      %v5797 = vrot.slane %v5796, 4
      %v5798 = vadd.f32 %v5796, %v5797
      %v5799 = vrot.slane %v5798, 2
      %v5800 = vadd.f32 %v5798, %v5799
      %v5801 = vrot.slane %v5800, 1
      %v5802 = vadd.f32 %v5800, %v5801
      %v5803 = vadd.f32 %v5793, %v5795
      %v5804 = vrot.slane %v5803, 4
      %v5805 = vadd.f32 %v5803, %v5804
      %v5806 = vrot.slane %v5805, 2
      %v5807 = vadd.f32 %v5805, %v5806
      %v5808 = vrot.slane %v5807, 1
      %v5809 = vadd.f32 %v5807, %v5808
      %v5810 = vmul.f32 %v5702, %v5767
      %v5811 = vmul.f32 %v5704, %v5767
      %v5812 = vmul.f32 %v5708, %v5772
      %v5813 = vmul.f32 %v5710, %v5772
      %v5814 = vadd.f32 %v5810, %v5812
      %v5815 = vrot.slane %v5814, 4
      %v5816 = vadd.f32 %v5814, %v5815
      %v5817 = vrot.slane %v5816, 2
      %v5818 = vadd.f32 %v5816, %v5817
      %v5819 = vrot.slane %v5818, 1
      %v5820 = vadd.f32 %v5818, %v5819
      %v5821 = vadd.f32 %v5811, %v5813
      %v5822 = vrot.slane %v5821, 4
      %v5823 = vadd.f32 %v5821, %v5822
      %v5824 = vrot.slane %v5823, 2
      %v5825 = vadd.f32 %v5823, %v5824
      %v5826 = vrot.slane %v5825, 1
      %v5827 = vadd.f32 %v5825, %v5826
      %v5828 = vsel %vm2137, %v5784, %v5802
      %v5829 = vsel %vm2137, %v5791, %v5809
      %v5830 = vsel %vm2140, %v5828, %v5820
      %v5831 = vsel %vm2140, %v5829, %v5827
      %v5834 = vcombine.low %v5830, %v5831
      %v5836 = vadd.f32 %v4610, %v5834
      %s5837 = scalar_lea.vmem %s553, 24
      %5838 = vst [vmem:[%s5837] sm:$0x77] %v5836
      %s5839 = smul.u32 4, %s27
      %p5840 = scmp.lt.s32.totalorder %s5839, 7
      %s5841 = scalar_select %p5840, %s5839, 7
      %s5842 = smul.addr %s5841, 2
      %s5843 = smul.addr %s5842, 4
      %s5844 = scalar_lea.vmem %s16, %s5843
      // Predicated region
      $region85: #{tpu_custom_call.1} parent=83 // pred_check
        %p5845 = pneg %p391
      $region86: #{tpu_custom_call.1} parent=83 // pred_check_branch
        %5847 = sbr.rel (%p5845) target = $region88
      $region87: #{tpu_custom_call.1} parent=83 // pred_region
        %s5848 = smul.u32 4, %s27
      $region88: #{tpu_custom_call.1} parent=83 // pred_fallthru
        _
    $region84: #{tpu_custom_call.1} parent=5 // pred_fallthru
      _
    %p5849 = scmp.le.s32.totalorder 2, %s22
    // Predicated region
    $region89: #{tpu_custom_call.1} parent=5 // pred_check
      %p5850 = pneg %p5849
    $region90: #{tpu_custom_call.1} parent=5 // pred_check_branch
      %5852 = sbr.rel (%p5850) target = $region92
    $region91: #{tpu_custom_call.1} parent=5 // pred_region
      %s5853 = ssub.s32 %s22, 2
      // Predicated region
      $region93: #{tpu_custom_call.1} parent=91 // pred_check
        %p5854 = pneg %p397
      $region94: #{tpu_custom_call.1} parent=91 // pred_check_branch
        %5856 = sbr.rel (%p5854) target = $region96
      $region95: #{tpu_custom_call.1} parent=91 // pred_region
        %s5857 = smul.u32 4, %s28
        %p5858 = scmp.lt.s32.totalorder %s5857, 7
        %s5859 = scalar_select %p5858, %s5857, 7
        %s5860 = smul.addr %s5859, 2
        %s5861 = smul.addr %s5860, 4
        %s5862 = scalar_lea.vmem %s16, %s5861
      $region96: #{tpu_custom_call.1} parent=91 // pred_fallthru
        _
    $region92: #{tpu_custom_call.1} parent=5 // pred_fallthru
      _
  $region6: #{tpu_custom_call.1} parent=0 // loop_footer
    %s26 = sadd.s32 1, %s22
  $region7: #{tpu_custom_call.1} parent=0 // loop_footer_branch
    %21 = sbr.rel target = $region3
  $region8: #{tpu_custom_call.1} parent=0 // loop_exit
    _

</llo_original>
